<compile_context>
chip_gen: v7x
topology: tpu7x:2x2x1
jax: 0.10.0
libtpu: 0.0.40
codegen_flags: <defaults>
</compile_context>

<pallas_src>
import functools

import jax
import jax.numpy as jnp
from jax.experimental import pallas as pl
from jax.experimental.pallas import tpu as pltpu


# ----------------------------------------------------------------------------
# helpers
# ----------------------------------------------------------------------------
def _round_up(x, m):
    return ((x + m - 1) // m) * m


# measured relative HBM-roofline efficiency of square tiles (512→85%, 256→63%,
# 128→~30%); choose (pad, tile) minimizing padded_work / efficiency.
_TILE_EFF = {512: 0.85, 256: 0.63, 128: 0.30}


def _grid_tile(n):
    best_t, best_pad, best_cost = None, None, None
    for t in (512, 256, 128):
        npad = _round_up(n, t)
        cost = (npad * npad) / _TILE_EFF[t]
        if best_cost is None or cost < best_cost:
            best_t, best_pad, best_cost = t, npad, cost
    return best_pad, min(best_t, best_pad)


def _pad2(x, rows, cols):
    return jnp.pad(x, ((0, rows - x.shape[0]), (0, cols - x.shape[1])))


def _cparams(sem):
    # 48 MiB scoped VMEM: headroom on v7x (64 MiB/TC); portable to v5e/v6e
    # (128 MiB) without retuning tile sizes.
    return pltpu.CompilerParams(
        dimension_semantics=sem,
        vmem_limit_bytes=48 * 1024 * 1024,
    )


# ----------------------------------------------------------------------------
# Kernel 1: feat_mapping (Linear + bias) followed by ReLU, tiled over rows
# ----------------------------------------------------------------------------
def _linear_relu_kernel(x_ref, w_ref, b_ref, o_ref):
    y = jnp.dot(x_ref[...], w_ref[...], preferred_element_type=jnp.float32)
    o_ref[...] = jnp.maximum(y + b_ref[...], 0.0)


def linear_relu(x, w, b, tile_m):
    n, f = x.shape
    h = w.shape[1]
    return pl.pallas_call(
        _linear_relu_kernel,
        out_shape=jax.ShapeDtypeStruct((n, h), jnp.float32),
        grid=(n // tile_m,),
        in_specs=[
            pl.BlockSpec((tile_m, f), lambda i: (i, 0)),
            pl.BlockSpec((f, h), lambda i: (0, 0)),
            pl.BlockSpec((1, h), lambda i: (0, 0)),
        ],
        out_specs=pl.BlockSpec((tile_m, h), lambda i: (i, 0)),
        compiler_params=_cparams(("parallel",)),
    )(x, w, b)


# ----------------------------------------------------------------------------
# Kernel 2: A = concat_c( row_l2_normalize(h * w_c) ), written channel-by-channel
#           into lane-aligned slices (MetricCalcLayer + cos_sim row norm, eps=1e-8)
# ----------------------------------------------------------------------------
def _prep_kernel(h_ref, w_ref, a_ref, *, num_channel, chan_dim):
    h = h_ref[0]                                     # (tm, D) f32
    w = w_ref[0]                                     # (C, D)  f32
    for c in range(num_channel):                     # static unroll, C tiny
        hw = h * w[c:c + 1, :]
        ss = jnp.sum(hw * hw, axis=1, keepdims=True)
        an = hw * jax.lax.rsqrt(jnp.maximum(ss, 1e-16))   # == hw / max(|hw|,1e-8)
        a_ref[0, :, c * chan_dim:(c + 1) * chan_dim] = an.astype(a_ref.dtype)


def prep_rows(h, w, tile_m, out_dtype):
    # h: (Mh, Np, D) with Mh in {1 (shared), M}; w: (M, C, D)
    mcount, c, d = w.shape
    npad = h.shape[1]
    shared = h.shape[0] == 1
    h_map = (lambda m, i: (0, i, 0)) if shared else (lambda m, i: (m, i, 0))
    kernel = functools.partial(_prep_kernel, num_channel=c, chan_dim=d)
    return pl.pallas_call(
        kernel,
        out_shape=jax.ShapeDtypeStruct((mcount, npad, c * d), out_dtype),
        grid=(mcount, npad // tile_m),
        in_specs=[
            pl.BlockSpec((1, tile_m, d), h_map),
            pl.BlockSpec((1, c, d), lambda m, i: (m, 0, 0)),
        ],
        out_specs=pl.BlockSpec((1, tile_m, c * d), lambda m, i: (m, i, 0)),
        compiler_params=_cparams(("parallel", "parallel")),
    )(h, w)


# ----------------------------------------------------------------------------
# Kernel 3: Gram matrix  S = (A @ A.T) / C, thresholded (optionally fused * G3).
#           K fits one block -> single matmul per output tile, no accumulator.
# ----------------------------------------------------------------------------
def _gram_kernel(a_ref, b_ref, thr_ref, o_ref, *, inv_c):
    s = jax.lax.dot_general(a_ref[0], b_ref[0], (((1,), (1,)), ((), ())),
                            preferred_element_type=jnp.float32) * inv_c
    o_ref[0] = jnp.where(s < thr_ref[0], 0.0, s).astype(o_ref.dtype)


def _gram_g3_kernel(a_ref, b_ref, thr_ref, g3_ref, o_ref, *, inv_c):
    s = jax.lax.dot_general(a_ref[0], b_ref[0], (((1,), (1,)), ((), ())),
                            preferred_element_type=jnp.float32) * inv_c
    s = jnp.where(s < thr_ref[0], 0.0, s)
    o_ref[0] = (s * g3_ref[0].astype(jnp.float32)).astype(o_ref.dtype)


def gram_graphs(a, thr, tile, num_channel, g3=None, out_dtype=jnp.bfloat16):
    m, npad, ktot = a.shape
    if ktot > 2048:
        # TODO(synk): re-introduce a K grid axis + f32 accumulator for huge C*D.
        raise NotImplementedError("channel-concat dim too large for one K block")
    a_spec = pl.BlockSpec((1, tile, ktot), lambda m_, i, j: (m_, i, 0))
    b_spec = pl.BlockSpec((1, tile, ktot), lambda m_, i, j: (m_, j, 0))
    thr_spec = pl.BlockSpec((1, 1, 1), lambda m_, i, j: (m_, 0, 0))
    big = pl.BlockSpec((1, tile, tile), lambda m_, i, j: (m_, i, j))
    inv_c = 1.0 / float(num_channel)
    if g3 is None:
        kernel = functools.partial(_gram_kernel, inv_c=inv_c)
        in_specs = [a_spec, b_spec, thr_spec]
        args = (a, a, thr)
    else:
        kernel = functools.partial(_gram_g3_kernel, inv_c=inv_c)
        in_specs = [a_spec, b_spec, thr_spec, big]
        args = (a, a, thr, g3)
    return pl.pallas_call(
        kernel,
        out_shape=jax.ShapeDtypeStruct((m, npad, npad), out_dtype),
        grid=(m, npad // tile, npad // tile),
        in_specs=in_specs,
        out_specs=big,
        compiler_params=_cparams(("parallel", "parallel", "parallel")),
    )(*args)


# ----------------------------------------------------------------------------
# Kernel 4: row statistics (old_G row L2^2, |feat_graph*G3| row L1), f32 accum
# ----------------------------------------------------------------------------
def _row_stats_kernel(old_ref, fgs_ref, rso_ref, rsf_ref):
    j = pl.program_id(2)          # top-level only (never inside pl.when bodies)

    @pl.when(j == 0)
    def _():
        rso_ref[...] = jnp.zeros(rso_ref.shape, rso_ref.dtype)
        rsf_ref[...] = jnp.zeros(rsf_ref.shape, rsf_ref.dtype)

    og = old_ref[0].astype(jnp.float32)
    rso_ref[0] += jnp.sum(og * og, axis=1, keepdims=True)
    rsf_ref[0] += jnp.sum(jnp.abs(fgs_ref[0].astype(jnp.float32)),
                          axis=1, keepdims=True)


def row_stats(old_g, fgs, tile):
    m, npad, _ = old_g.shape
    big = lambda m_, i, j: (m_, i, j)
    vec = lambda m_, i, j: (m_, i, 0)
    return pl.pallas_call(
        _row_stats_kernel,
        out_shape=(jax.ShapeDtypeStruct((m, npad, 1), jnp.float32),
                   jax.ShapeDtypeStruct((m, npad, 1), jnp.float32)),
        grid=(m, npad // tile, npad // tile),
        in_specs=[pl.BlockSpec((1, tile, tile), big)] * 2,
        out_specs=(pl.BlockSpec((1, tile, 1), vec),
                   pl.BlockSpec((1, tile, 1), vec)),
        compiler_params=_cparams(("parallel", "parallel", "arbitrary")),
    )(old_g, fgs)


# ----------------------------------------------------------------------------
# Kernel 5: column L2^2 statistics of the three (row-normalized) channels
# ----------------------------------------------------------------------------
def _col_stats_kernel(old_ref, fgs_ref, sg_ref, iro_ref, irf_ref,
                      co_ref, cf_ref, cs_ref):
    i = pl.program_id(2)

    @pl.when(i == 0)
    def _():
        co_ref[...] = jnp.zeros(co_ref.shape, co_ref.dtype)
        cf_ref[...] = jnp.zeros(cf_ref.shape, cf_ref.dtype)
        cs_ref[...] = jnp.zeros(cs_ref.shape, cs_ref.dtype)

    old_n = old_ref[0].astype(jnp.float32) * iro_ref[0]
    co_ref[0] += jnp.sum(old_n * old_n, axis=0, keepdims=True)
    f = fgs_ref[0].astype(jnp.float32) * irf_ref[0]
    cf_ref[0] += jnp.sum(f * f, axis=0, keepdims=True)
    s = sg_ref[0].astype(jnp.float32)
    cs_ref[0] += jnp.sum(s * s, axis=0, keepdims=True)


def col_stats(old_g, fgs, sg, inv_ro, inv_rf, tile):
    m, npad, _ = old_g.shape
    big = lambda m_, j, i: (m_, i, j)
    rvec = lambda m_, j, i: (m_, i, 0)
    cvec = lambda m_, j, i: (m_, 0, j)
    return pl.pallas_call(
        _col_stats_kernel,
        out_shape=(jax.ShapeDtypeStruct((m, 1, npad), jnp.float32),) * 3,
        grid=(m, npad // tile, npad // tile),      # (m, j, i): i is reduction
        in_specs=[pl.BlockSpec((1, tile, tile), big)] * 3
                 + [pl.BlockSpec((1, tile, 1), rvec)] * 2,
        out_specs=(pl.BlockSpec((1, 1, tile), cvec),) * 3,
        compiler_params=_cparams(("parallel", "parallel", "arbitrary")),
    )(old_g, fgs, sg, inv_ro, inv_rf)


# ----------------------------------------------------------------------------
# Kernel 6: g = sum_c softmax_w[c] * col_l2_normalize(channel_c)
#           (softmax weights pre-folded into the c_* column vectors)
# ----------------------------------------------------------------------------
def _make_g_kernel(old_ref, fgs_ref, sg_ref, iro_ref, irf_ref,
                   co_ref, cf_ref, cs_ref, g_ref):
    old_n = old_ref[0].astype(jnp.float32) * iro_ref[0]
    fgs_n = fgs_ref[0].astype(jnp.float32) * irf_ref[0]
    sg = sg_ref[0].astype(jnp.float32)
    g = old_n * co_ref[0] + fgs_n * cf_ref[0] + sg * cs_ref[0]
    g_ref[0] = g.astype(g_ref.dtype)


def make_g(old_g, fgs, sg, inv_ro, inv_rf, c_old, c_fgs, c_sg, tile):
    m, npad, _ = old_g.shape
    big = lambda m_, i, j: (m_, i, j)
    rvec = lambda m_, i, j: (m_, i, 0)
    cvec = lambda m_, i, j: (m_, 0, j)
    return pl.pallas_call(
        _make_g_kernel,
        out_shape=jax.ShapeDtypeStruct((m, npad, npad), jnp.bfloat16),
        grid=(m, npad // tile, npad // tile),
        in_specs=[pl.BlockSpec((1, tile, tile), big)] * 3
                 + [pl.BlockSpec((1, tile, 1), rvec)] * 2
                 + [pl.BlockSpec((1, 1, tile), cvec)] * 3,
        out_specs=pl.BlockSpec((1, tile, tile), big),
        compiler_params=_cparams(("parallel", "parallel", "parallel")),
    )(old_g, fgs, sg, inv_ro, inv_rf, c_old, c_fgs, c_sg)


# ----------------------------------------------------------------------------
# Kernel 7: row L1 sums of (g.T + g), reading block (j, i) via swapped index_map
# ----------------------------------------------------------------------------
def _sym_rowsum_kernel(gij_ref, gji_ref, sr_ref):
    j = pl.program_id(2)

    @pl.when(j == 0)
    def _():
        sr_ref[...] = jnp.zeros(sr_ref.shape, sr_ref.dtype)

    sym = gij_ref[0].astype(jnp.float32) + gji_ref[0].astype(jnp.float32).T
    sr_ref[0] += jnp.sum(jnp.abs(sym), axis=1, keepdims=True)


def sym_rowsum(g, tile):
    m, npad, _ = g.shape
    return pl.pallas_call(
        _sym_rowsum_kernel,
        out_shape=jax.ShapeDtypeStruct((m, npad, 1), jnp.float32),
        grid=(m, npad // tile, npad // tile),
        in_specs=[pl.BlockSpec((1, tile, tile), lambda m_, i, j: (m_, i, j)),
                  pl.BlockSpec((1, tile, tile), lambda m_, i, j: (m_, j, i))],
        out_specs=pl.BlockSpec((1, tile, 1), lambda m_, i, j: (m_, i, 0)),
        compiler_params=_cparams(("parallel", "parallel", "arbitrary")),
    )(g, g)


# ----------------------------------------------------------------------------
# Kernel 8: new_G = (g.T + g) * inv_row_l1   (final row-L1 normalization)
# ----------------------------------------------------------------------------
def _sym_final_kernel(gij_ref, gji_ref, inv_ref, o_ref):
    sym = gij_ref[0].astype(jnp.float32) + gji_ref[0].astype(jnp.float32).T
    o_ref[0] = (sym * inv_ref[0]).astype(o_ref.dtype)


def sym_final(g, inv_sym, tile):
    m, npad, _ = g.shape
    return pl.pallas_call(
        _sym_final_kernel,
        out_shape=jax.ShapeDtypeStruct((m, npad, npad), jnp.float32),
        grid=(m, npad // tile, npad // tile),
        in_specs=[pl.BlockSpec((1, tile, tile), lambda m_, i, j: (m_, i, j)),
                  pl.BlockSpec((1, tile, tile), lambda m_, i, j: (m_, j, i)),
                  pl.BlockSpec((1, tile, 1), lambda m_, i, j: (m_, i, 0))],
        out_specs=pl.BlockSpec((1, tile, tile), lambda m_, i, j: (m_, i, j)),
        compiler_params=_cparams(("parallel", "parallel", "parallel")),
    )(g, g, inv_sym)


# ----------------------------------------------------------------------------
# HetGSL_HAN forward (graph structure learning part)
# ----------------------------------------------------------------------------
def hetgsl_forward(params, features_v1, features_v2, old_G, G2, G3, mp_emb,
                   pos, metapath, sema_th):
    del features_v1, pos  # consumed only by HAN / Contrast (not provided)

    n = features_v2.shape[0]
    npad, tile = _grid_tile(n)
    f_dim = features_v2.shape[1]
    h_dim = params["W_fm"].shape[1]
    mp_dim = mp_emb[metapath[0]].shape[1]
    fp = _round_up(f_dim, 128)
    hp = _round_up(h_dim, 128)
    mpp = _round_up(mp_dim, 128)
    mcount = len(metapath)
    num_channel = params["feat_metric_w"][metapath[0]].shape[0]

    # ---- feat_mapping + ReLU (padded rows are harmless downstream) ----
    x_p = _pad2(features_v2, npad, fp)
    w_p = _pad2(params["W_fm"], fp, hp)
    b_p = jnp.pad(params["b_fm"], (0, hp - h_dim)).reshape(1, hp)
    feat_map_p = linear_relu(x_p, w_p, b_p, tile)
    feat_map = feat_map_p[:n, :h_dim]

    # ---- stack per-metapath inputs; pad + bf16 cast in the same wrapper pass ----
    old_s = jnp.stack([_pad2(old_G[mp].astype(jnp.bfloat16), npad, npad)
                       for mp in metapath])
    g3_s = jnp.stack([_pad2(G3[mp].astype(jnp.bfloat16), npad, npad)
                      for mp in metapath])
    mp_s = jnp.stack([_pad2(mp_emb[mp], npad, mpp) for mp in metapath])
    fw_s = jnp.stack([jnp.pad(params["feat_metric_w"][mp],
                              ((0, 0), (0, hp - h_dim))) for mp in metapath])
    sw_s = jnp.stack([jnp.pad(params["sema_metric_w"][mp],
                              ((0, 0), (0, mpp - mp_dim))) for mp in metapath])
    thr_feat = jnp.zeros((mcount, 1, 1), jnp.float32)
    thr_sema = jnp.asarray([sema_th[mp] for mp in metapath],
                           jnp.float32).reshape(mcount, 1, 1)
    # channel softmax hoisted out of the kernels (tiny (3,) vectors)
    sm = jax.nn.softmax(
        jnp.stack([params["channel_w"][mp] for mp in metapath]), axis=1)  # (M,3,1)

    # ---- GraphGenerator: one Gram matmul of the channel-concatenated rows.
    #      feat A in bf16 (threshold 0 -> safe); sema A in f32 (nonzero threshold
    #      must not flip), both Gram outputs stored bf16. ----
    a_feat = prep_rows(feat_map_p[None], fw_s, tile, jnp.bfloat16)  # (M,Np,C*Hp)
    a_sema = prep_rows(mp_s, sw_s, tile, jnp.float32)               # (M,Np,C*MPp)
    fgs_raw = gram_graphs(a_feat, thr_feat, tile, num_channel, g3=g3_s)  # fused *G3
    sema_graph = gram_graphs(a_sema, thr_sema, tile, num_channel)

    # ---- combine: row stats -> col stats -> g -> symmetrize + row-L1 ----
    rs_old, rs_fgs = row_stats(old_s, fgs_raw, tile)
    inv_ro = 1.0 / jnp.maximum(jnp.sqrt(rs_old), 1e-12)     # (M, Np, 1) f32
    inv_rf = 1.0 / jnp.maximum(rs_fgs, 1e-12)

    cs_old, cs_fgs, cs_sg = col_stats(old_s, fgs_raw, sema_graph,
                                      inv_ro, inv_rf, tile)
    w0 = sm[:, 0, :].reshape(mcount, 1, 1)
    w1 = sm[:, 1, :].reshape(mcount, 1, 1)
    w2 = sm[:, 2, :].reshape(mcount, 1, 1)
    c_old = w0 / jnp.maximum(jnp.sqrt(cs_old), 1e-12)        # (M, 1, Np) f32
    c_fgs = w1 / jnp.maximum(jnp.sqrt(cs_fgs), 1e-12)
    c_sg = w2 / jnp.maximum(jnp.sqrt(cs_sg), 1e-12)

    g = make_g(old_s, fgs_raw, sema_graph, inv_ro, inv_rf,
               c_old, c_fgs, c_sg, tile)                     # bf16

    sr = sym_rowsum(g, tile)
    inv_sym = 1.0 / jnp.maximum(sr, 1e-12)
    newg_s = sym_final(g, inv_sym, tile)                     # f32

    new_G = [newg_s[t, :n, :n] for t in range(mcount)]

    # TODO(synk): logits_an/h_an/logits_le/h_le/loss require HAN + Contrast
    #             definitions which were not supplied with the reference module.
    h_an = None
    logits_le = None
    h_le = None
    loss = None
    return G2, new_G, h_an, logits_le, h_le, loss, feat_map


# ----------------------------------------------------------------------------
# Pure-JAX reference for correctness check
# ----------------------------------------------------------------------------
def _ref_new_G(params, features_v2, old_G, G3, mp_emb, metapath, sema_th):
    feat_map = jnp.maximum(features_v2 @ params["W_fm"] + params["b_fm"], 0.0)

    def gen(h, w, thr):
        s = jnp.zeros((h.shape[0], h.shape[0]), jnp.float32)
        for i in range(w.shape[0]):
            hw = h * w[i:i + 1]
            a = hw / jnp.maximum(
                jnp.linalg.norm(hw, axis=1, keepdims=True), 1e-8)
            s = s + a @ a.T
        s = s / w.shape[0]
        return jnp.where(s < thr, 0.0, s)

    outs = []
    for mp in metapath:
        old_n = old_G[mp] / jnp.maximum(
            jnp.linalg.norm(old_G[mp], axis=1, keepdims=True), 1e-12)
        fg = gen(feat_map, params["feat_metric_w"][mp], 0.0)
        fgs = fg * G3[mp]
        fgs = fgs / jnp.maximum(
            jnp.sum(jnp.abs(fgs), axis=1, keepdims=True), 1e-12)
        sg = gen(mp_emb[mp], params["sema_metric_w"][mp], sema_th[mp])
        sm = jax.nn.softmax(params["channel_w"][mp], axis=0)

        def coln(a):
            return a / jnp.maximum(
                jnp.linalg.norm(a, axis=0, keepdims=True), 1e-12)

        g = sm[0, 0] * coln(old_n) + sm[1, 0] * coln(fgs) + sm[2, 0] * coln(sg)
        g = g.T + g
        g = g / jnp.maximum(jnp.sum(jnp.abs(g), axis=1, keepdims=True), 1e-12)
        outs.append(g)
    return feat_map, outs


# ----------------------------------------------------------------------------
if __name__ == "__main__":
    key = jax.random.PRNGKey(0)
    ks = jax.random.split(key, 20)

    N = 16            # nodes
    FEAT_DIM = 8      # raw feature dim
    FEAT_HID = 32     # feat_hid_dim
    MP_DIM = 16       # mp_emb_dim
    NUM_CHANNEL = 2   # GraphGenerator channels
    metapath = [0, 1]
    sema_th = [0.2, 0.3]

    xav_fm = (6.0 / (FEAT_DIM + FEAT_HID)) ** 0.5
    params = {
        "W_fm": jax.random.uniform(ks[0], (FEAT_DIM, FEAT_HID),
                                   minval=-xav_fm, maxval=xav_fm
                                   ).astype(jnp.float32),
        "b_fm": (0.01 * jax.random.normal(ks[1], (FEAT_HID,))
                 ).astype(jnp.float32),
        "feat_metric_w": [
            jax.random.uniform(ks[2 + mp], (NUM_CHANNEL, FEAT_HID),
                               minval=-(6.0 / (1 + FEAT_HID)) ** 0.5,
                               maxval=(6.0 / (1 + FEAT_HID)) ** 0.5
                               ).astype(jnp.float32)
            for mp in metapath
        ],
        "sema_metric_w": [
            jax.random.uniform(ks[4 + mp], (NUM_CHANNEL, MP_DIM),
                               minval=-(6.0 / (1 + MP_DIM)) ** 0.5,
                               maxval=(6.0 / (1 + MP_DIM)) ** 0.5
                               ).astype(jnp.float32)
            for mp in metapath
        ],
        "channel_w": [jnp.full((3, 1), 0.1, jnp.float32) for _ in metapath],
    }

    features_v1 = jax.random.normal(ks[6], (N, FEAT_DIM)).astype(jnp.float32)
    features_v2 = jax.random.normal(ks[7], (N, FEAT_DIM)).astype(jnp.float32)
    old_G = [jnp.abs(jax.random.normal(ks[8 + mp], (N, N))).astype(jnp.float32)
             for mp in metapath]
    G2 = [jnp.abs(jax.random.normal(ks[10 + mp], (N, N))).astype(jnp.float32)
          for mp in metapath]
    G3 = [jax.random.uniform(ks[12 + mp], (N, N)).astype(jnp.float32)
          for mp in metapath]
    mp_emb = [jax.random.normal(ks[14 + mp], (N, MP_DIM)).astype(jnp.float32)
              for mp in metapath]
    pos = (jax.random.uniform(ks[16], (N, N)) > 0.8).astype(jnp.float32)

    fwd = jax.jit(functools.partial(hetgsl_forward,
                                    metapath=metapath, sema_th=sema_th))
    out = fwd(params, features_v1, features_v2, old_G, G2, G3, mp_emb, pos)
    jax.block_until_ready(out[1])
    G2_out, new_G, h_an, logits_le, h_le, loss, feat_map = out

    ref_feat_map, ref_new_G = _ref_new_G(params, features_v2, old_G, G3,
                                         mp_emb, metapath, sema_th)
    assert jnp.allclose(feat_map, ref_feat_map, atol=2e-2, rtol=2e-2)
    for t in range(len(metapath)):
        assert jnp.all(jnp.isfinite(new_G[t]))
        assert jnp.allclose(new_G[t], ref_new_G[t], atol=2e-2, rtol=2e-2)

    print("KERNEL_OK")
</pallas_src>

<mosaic_0001>
module attributes {stable_mosaic.version = 11 : i64} {
  func.func @_linear_relu_kernel(%arg0: i32, %arg1: memref<128x128xf32, #tpu.memory_space<vmem>>, %arg2: memref<128x128xf32, #tpu.memory_space<vmem>>, %arg3: memref<1x128xf32, #tpu.memory_space<vmem>>, %arg4: memref<128x128xf32, #tpu.memory_space<vmem>>) attributes {dimension_semantics = [#tpu.dimension_semantics<parallel>], iteration_bounds = array<i64: 1>, scalar_prefetch = 0 : i64, scratch_operands = 0 : i64, tpu.core_type = #tpu.core_type<tc>, window_params = [{transform_indices = @transform_0, window_bounds = array<i64: 128, 128>}, {pipeline_mode = #tpu.pipeline_mode<synchronous>, transform_indices = @transform_1, window_bounds = array<i64: 128, 128>}, {pipeline_mode = #tpu.pipeline_mode<synchronous>, transform_indices = @transform_2, window_bounds = array<i64: 1, 128>}, {transform_indices = @transform_3, window_bounds = array<i64: 128, 128>}]} {
    %c0 = arith.constant 0 : index
    %c0_0 = arith.constant 0 : index
    %0 = vector.load %arg1[%c0, %c0_0] : memref<128x128xf32, #tpu.memory_space<vmem>>, vector<128x128xf32>
    %c0_1 = arith.constant 0 : index
    %c0_2 = arith.constant 0 : index
    %1 = vector.load %arg2[%c0_1, %c0_2] : memref<128x128xf32, #tpu.memory_space<vmem>>, vector<128x128xf32>
    %cst = arith.constant dense<0.000000e+00> : vector<128x128xf32>
    %2 = tpu.matmul %0, %1, %cst {dimension_numbers = #tpu.dot_dimension_numbers<[1], [0], [0], [1], [0, 0, 1, 1], [], []>} : vector<128x128xf32>, vector<128x128xf32>, vector<128x128xf32> -> vector<128x128xf32>
    %c0_3 = arith.constant 0 : index
    %c0_4 = arith.constant 0 : index
    %3 = vector.load %arg3[%c0_3, %c0_4] : memref<1x128xf32, #tpu.memory_space<vmem>>, vector<1x128xf32>
    %4 = vector.broadcast %3 : vector<1x128xf32> to vector<128x128xf32>
    %5 = arith.addf %2, %4 : vector<128x128xf32>
    %cst_5 = arith.constant 0.000000e+00 : f32
    %6 = vector.broadcast %cst_5 : f32 to vector<128x128xf32>
    %7 = arith.maximumf %5, %6 : vector<128x128xf32>
    %c0_6 = arith.constant 0 : index
    %c0_7 = arith.constant 0 : index
    %8 = vector.load %arg4[%c0_6, %c0_7] : memref<128x128xf32, #tpu.memory_space<vmem>>, vector<128x128xf32>
    tpu.vector_store %arg4[%c0_6, %c0_7], %7 {strides = array<i32>} : memref<128x128xf32, #tpu.memory_space<vmem>>, vector<128x128xf32>,
    return
  }
  func.func @transform_0(%arg0: i32) -> (i32, i32) {
    %c0_i32 = arith.constant 0 : i32
    %c0_i32_0 = arith.constant 0 : i32
    return %arg0, %c0_i32 : i32, i32
  }
  func.func @transform_1(%arg0: i32) -> (i32, i32) {
    %c0_i32 = arith.constant 0 : i32
    %c0_i32_0 = arith.constant 0 : i32
    %c0_i32_1 = arith.constant 0 : i32
    return %c0_i32, %c0_i32_0 : i32, i32
  }
  func.func @transform_2(%arg0: i32) -> (i32, i32) {
    %c0_i32 = arith.constant 0 : i32
    %c0_i32_0 = arith.constant 0 : i32
    %c0_i32_1 = arith.constant 0 : i32
    return %c0_i32, %c0_i32_0 : i32, i32
  }
  func.func @transform_3(%arg0: i32) -> (i32, i32) {
    %c0_i32 = arith.constant 0 : i32
    %c0_i32_0 = arith.constant 0 : i32
    return %arg0, %c0_i32 : i32, i32
  }
}

module attributes {stable_mosaic.version = 11 : i64} {
  func.func @_prep_kernel(%arg0: i32, %arg1: i32, %arg2: memref<1x128x128xf32, #tpu.memory_space<vmem>>, %arg3: memref<1x2x128xf32, #tpu.memory_space<vmem>>, %arg4: memref<1x128x256xbf16, #tpu.memory_space<vmem>>) attributes {dimension_semantics = [#tpu.dimension_semantics<parallel>, #tpu.dimension_semantics<parallel>], iteration_bounds = array<i64: 2, 1>, scalar_prefetch = 0 : i64, scratch_operands = 0 : i64, tpu.core_type = #tpu.core_type<tc>, window_params = [{transform_indices = @transform_0, window_bounds = array<i64: 1, 128, 128>}, {transform_indices = @transform_1, window_bounds = array<i64: 1, 2, 128>}, {transform_indices = @transform_2, window_bounds = array<i64: 1, 128, 256>}]} {
    %c0 = arith.constant 0 : index
    %c0_0 = arith.constant 0 : index
    %c0_1 = arith.constant 0 : index
    %0 = vector.load %arg2[%c0, %c0_0, %c0_1] : memref<1x128x128xf32, #tpu.memory_space<vmem>>, vector<1x128x128xf32>
    %1 = vector.shape_cast %0 : vector<1x128x128xf32> to vector<128x128xf32>
    %c0_2 = arith.constant 0 : index
    %c0_3 = arith.constant 0 : index
    %c0_4 = arith.constant 0 : index
    %2 = vector.load %arg3[%c0_2, %c0_3, %c0_4] : memref<1x2x128xf32, #tpu.memory_space<vmem>>, vector<1x2x128xf32>
    %3 = vector.shape_cast %2 : vector<1x2x128xf32> to vector<2x128xf32>
    %4 = vector.extract_strided_slice %3 {offsets = [0, 0], sizes = [1, 128], strides = [1, 1]} : vector<2x128xf32> to vector<1x128xf32>
    %5 = vector.broadcast %4 : vector<1x128xf32> to vector<128x128xf32>
    %6 = arith.mulf %1, %5 : vector<128x128xf32>
    %7 = arith.mulf %6, %6 : vector<128x128xf32>
    %cst = arith.constant dense<0.000000e+00> : vector<128xf32>
    %8 = vector.multi_reduction <add>, %7, %cst [1] : vector<128x128xf32> to vector<128xf32>
    %9 = vector.shape_cast %8 : vector<128xf32> to vector<128x1xf32>
    %cst_5 = arith.constant 1.000000e-16 : f32
    %10 = vector.broadcast %cst_5 : f32 to vector<128x1xf32>
    %11 = arith.maximumf %9, %10 : vector<128x1xf32>
    %12 = math.rsqrt %11 : vector<128x1xf32>
    %13 = vector.broadcast %12 : vector<128x1xf32> to vector<128x128xf32>
    %14 = arith.mulf %6, %13 : vector<128x128xf32>
    %15 = arith.truncf %14 : vector<128x128xf32> to vector<128x128xbf16>
    %c0_6 = arith.constant 0 : index
    %c0_7 = arith.constant 0 : index
    %c0_8 = arith.constant 0 : index
    %16 = vector.load %arg4[%c0_6, %c0_7, %c0_8] : memref<1x128x256xbf16, #tpu.memory_space<vmem>>, vector<1x128x128xbf16>
    %17 = vector.shape_cast %16 : vector<1x128x128xbf16> to vector<128x128xbf16>
    %18 = vector.shape_cast %15 : vector<128x128xbf16> to vector<1x128x128xbf16>
    tpu.vector_store %arg4[%c0_6, %c0_7, %c0_8], %18 {strides = array<i32>} : memref<1x128x256xbf16, #tpu.memory_space<vmem>>, vector<1x128x128xbf16>,
    %19 = vector.extract_strided_slice %3 {offsets = [1, 0], sizes = [1, 128], strides = [1, 1]} : vector<2x128xf32> to vector<1x128xf32>
    %20 = vector.broadcast %19 : vector<1x128xf32> to vector<128x128xf32>
    %21 = arith.mulf %1, %20 : vector<128x128xf32>
    %22 = arith.mulf %21, %21 : vector<128x128xf32>
    %cst_9 = arith.constant dense<0.000000e+00> : vector<128xf32>
    %23 = vector.multi_reduction <add>, %22, %cst_9 [1] : vector<128x128xf32> to vector<128xf32>
    %24 = vector.shape_cast %23 : vector<128xf32> to vector<128x1xf32>
    %cst_10 = arith.constant 1.000000e-16 : f32
    %25 = vector.broadcast %cst_10 : f32 to vector<128x1xf32>
    %26 = arith.maximumf %24, %25 : vector<128x1xf32>
    %27 = math.rsqrt %26 : vector<128x1xf32>
    %28 = vector.broadcast %27 : vector<128x1xf32> to vector<128x128xf32>
    %29 = arith.mulf %21, %28 : vector<128x128xf32>
    %30 = arith.truncf %29 : vector<128x128xf32> to vector<128x128xbf16>
    %c0_11 = arith.constant 0 : index
    %c0_12 = arith.constant 0 : index
    %c128 = arith.constant 128 : index
    %31 = vector.load %arg4[%c0_11, %c0_12, %c128] : memref<1x128x256xbf16, #tpu.memory_space<vmem>>, vector<1x128x128xbf16>
    %32 = vector.shape_cast %31 : vector<1x128x128xbf16> to vector<128x128xbf16>
    %33 = vector.shape_cast %30 : vector<128x128xbf16> to vector<1x128x128xbf16>
    tpu.vector_store %arg4[%c0_11, %c0_12, %c128], %33 {strides = array<i32>} : memref<1x128x256xbf16, #tpu.memory_space<vmem>>, vector<1x128x128xbf16>,
    return
  }
  func.func @transform_0(%arg0: i32, %arg1: i32) -> (i32, i32, i32) {
    %c0_i32 = arith.constant 0 : i32
    %c0_i32_0 = arith.constant 0 : i32
    %c0_i32_1 = arith.constant 0 : i32
    return %c0_i32, %arg1, %c0_i32_0 : i32, i32, i32
  }
  func.func @transform_1(%arg0: i32, %arg1: i32) -> (i32, i32, i32) {
    %c0_i32 = arith.constant 0 : i32
    %c0_i32_0 = arith.constant 0 : i32
    %c0_i32_1 = arith.constant 0 : i32
    return %arg0, %c0_i32, %c0_i32_0 : i32, i32, i32
  }
  func.func @transform_2(%arg0: i32, %arg1: i32) -> (i32, i32, i32) {
    %c0_i32 = arith.constant 0 : i32
    %c0_i32_0 = arith.constant 0 : i32
    return %arg0, %arg1, %c0_i32 : i32, i32, i32
  }
}

module attributes {stable_mosaic.version = 11 : i64} {
  func.func @_gram_g3_kernel(%arg0: i32, %arg1: i32, %arg2: i32, %arg3: memref<1x128x256xbf16, #tpu.memory_space<vmem>>, %arg4: memref<1x128x256xbf16, #tpu.memory_space<vmem>>, %arg5: memref<1x1x1xf32, #tpu.memory_space<vmem>>, %arg6: memref<1x128x128xbf16, #tpu.memory_space<vmem>>, %arg7: memref<1x128x128xbf16, #tpu.memory_space<vmem>>) attributes {dimension_semantics = [#tpu.dimension_semantics<parallel>, #tpu.dimension_semantics<parallel>, #tpu.dimension_semantics<parallel>], iteration_bounds = array<i64: 2, 1, 1>, scalar_prefetch = 0 : i64, scratch_operands = 0 : i64, tpu.core_type = #tpu.core_type<tc>, window_params = [{transform_indices = @transform_0, window_bounds = array<i64: 1, 128, 256>}, {transform_indices = @transform_1, window_bounds = array<i64: 1, 128, 256>}, {transform_indices = @transform_2, window_bounds = array<i64: 1, 1, 1>}, {transform_indices = @transform_3, window_bounds = array<i64: 1, 128, 128>}, {transform_indices = @transform_4, window_bounds = array<i64: 1, 128, 128>}]} {
    %c0 = arith.constant 0 : index
    %c0_0 = arith.constant 0 : index
    %c0_1 = arith.constant 0 : index
    %0 = vector.load %arg3[%c0, %c0_0, %c0_1] : memref<1x128x256xbf16, #tpu.memory_space<vmem>>, vector<1x128x256xbf16>
    %1 = vector.shape_cast %0 : vector<1x128x256xbf16> to vector<128x256xbf16>
    %c0_2 = arith.constant 0 : index
    %c0_3 = arith.constant 0 : index
    %c0_4 = arith.constant 0 : index
    %2 = vector.load %arg4[%c0_2, %c0_3, %c0_4] : memref<1x128x256xbf16, #tpu.memory_space<vmem>>, vector<1x128x256xbf16>
    %3 = vector.shape_cast %2 : vector<1x128x256xbf16> to vector<128x256xbf16>
    %cst = arith.constant dense<0.000000e+00> : vector<128x128xf32>
    %4 = tpu.matmul %1, %3, %cst {dimension_numbers = #tpu.dot_dimension_numbers<[1], [1], [0], [0], [0, 0, 1, 0], [], []>} : vector<128x256xbf16>, vector<128x256xbf16>, vector<128x128xf32> -> vector<128x128xf32>
    %cst_5 = arith.constant 5.000000e-01 : f32
    %5 = vector.broadcast %cst_5 : f32 to vector<128x128xf32>
    %6 = arith.mulf %4, %5 : vector<128x128xf32>
    %c0_6 = arith.constant 0 : index
    %c0_7 = arith.constant 0 : index
    %c0_8 = arith.constant 0 : index
    %7 = vector.load %arg5[%c0_6, %c0_7, %c0_8] : memref<1x1x1xf32, #tpu.memory_space<vmem>>, vector<1x1x1xf32>
    %8 = vector.shape_cast %7 : vector<1x1x1xf32> to vector<1x1xf32>
    %9 = vector.broadcast %8 : vector<1x1xf32> to vector<128x128xf32>
    %10 = arith.cmpf olt, %6, %9 : vector<128x128xf32>
    %cst_9 = arith.constant 0.000000e+00 : f32
    %11 = vector.broadcast %cst_9 : f32 to vector<128x128xf32>
    %12 = arith.select %10, %11, %6 : vector<128x128xi1>, vector<128x128xf32>
    %c0_10 = arith.constant 0 : index
    %c0_11 = arith.constant 0 : index
    %c0_12 = arith.constant 0 : index
    %13 = vector.load %arg6[%c0_10, %c0_11, %c0_12] : memref<1x128x128xbf16, #tpu.memory_space<vmem>>, vector<1x128x128xbf16>
    %14 = vector.shape_cast %13 : vector<1x128x128xbf16> to vector<128x128xbf16>
    %15 = arith.extf %14 : vector<128x128xbf16> to vector<128x128xf32>
    %16 = arith.mulf %12, %15 : vector<128x128xf32>
    %17 = arith.truncf %16 : vector<128x128xf32> to vector<128x128xbf16>
    %c0_13 = arith.constant 0 : index
    %c0_14 = arith.constant 0 : index
    %c0_15 = arith.constant 0 : index
    %18 = vector.load %arg7[%c0_13, %c0_14, %c0_15] : memref<1x128x128xbf16, #tpu.memory_space<vmem>>, vector<1x128x128xbf16>
    %19 = vector.shape_cast %18 : vector<1x128x128xbf16> to vector<128x128xbf16>
    %20 = vector.shape_cast %17 : vector<128x128xbf16> to vector<1x128x128xbf16>
    tpu.vector_store %arg7[%c0_13, %c0_14, %c0_15], %20 {strides = array<i32>} : memref<1x128x128xbf16, #tpu.memory_space<vmem>>, vector<1x128x128xbf16>,
    return
  }
  func.func @transform_0(%arg0: i32, %arg1: i32, %arg2: i32) -> (i32, i32, i32) {
    %c0_i32 = arith.constant 0 : i32
    %c0_i32_0 = arith.constant 0 : i32
    return %arg0, %arg1, %c0_i32 : i32, i32, i32
  }
  func.func @transform_1(%arg0: i32, %arg1: i32, %arg2: i32) -> (i32, i32, i32) {
    %c0_i32 = arith.constant 0 : i32
    %c0_i32_0 = arith.constant 0 : i32
    return %arg0, %arg2, %c0_i32 : i32, i32, i32
  }
  func.func @transform_2(%arg0: i32, %arg1: i32, %arg2: i32) -> (i32, i32, i32) {
    %c0_i32 = arith.constant 0 : i32
    %c0_i32_0 = arith.constant 0 : i32
    %c0_i32_1 = arith.constant 0 : i32
    return %arg0, %c0_i32, %c0_i32_0 : i32, i32, i32
  }
  func.func @transform_3(%arg0: i32, %arg1: i32, %arg2: i32) -> (i32, i32, i32) {
    %c0_i32 = arith.constant 0 : i32
    return %arg0, %arg1, %arg2 : i32, i32, i32
  }
  func.func @transform_4(%arg0: i32, %arg1: i32, %arg2: i32) -> (i32, i32, i32) {
    %c0_i32 = arith.constant 0 : i32
    return %arg0, %arg1, %arg2 : i32, i32, i32
  }
}

module attributes {stable_mosaic.version = 11 : i64} {
  func.func @_prep_kernel(%arg0: i32, %arg1: i32, %arg2: memref<1x128x128xf32, #tpu.memory_space<vmem>>, %arg3: memref<1x2x128xf32, #tpu.memory_space<vmem>>, %arg4: memref<1x128x256xf32, #tpu.memory_space<vmem>>) attributes {dimension_semantics = [#tpu.dimension_semantics<parallel>, #tpu.dimension_semantics<parallel>], iteration_bounds = array<i64: 2, 1>, scalar_prefetch = 0 : i64, scratch_operands = 0 : i64, tpu.core_type = #tpu.core_type<tc>, window_params = [{transform_indices = @transform_0, window_bounds = array<i64: 1, 128, 128>}, {transform_indices = @transform_1, window_bounds = array<i64: 1, 2, 128>}, {transform_indices = @transform_2, window_bounds = array<i64: 1, 128, 256>}]} {
    %c0 = arith.constant 0 : index
    %c0_0 = arith.constant 0 : index
    %c0_1 = arith.constant 0 : index
    %0 = vector.load %arg2[%c0, %c0_0, %c0_1] : memref<1x128x128xf32, #tpu.memory_space<vmem>>, vector<1x128x128xf32>
    %1 = vector.shape_cast %0 : vector<1x128x128xf32> to vector<128x128xf32>
    %c0_2 = arith.constant 0 : index
    %c0_3 = arith.constant 0 : index
    %c0_4 = arith.constant 0 : index
    %2 = vector.load %arg3[%c0_2, %c0_3, %c0_4] : memref<1x2x128xf32, #tpu.memory_space<vmem>>, vector<1x2x128xf32>
    %3 = vector.shape_cast %2 : vector<1x2x128xf32> to vector<2x128xf32>
    %4 = vector.extract_strided_slice %3 {offsets = [0, 0], sizes = [1, 128], strides = [1, 1]} : vector<2x128xf32> to vector<1x128xf32>
    %5 = vector.broadcast %4 : vector<1x128xf32> to vector<128x128xf32>
    %6 = arith.mulf %1, %5 : vector<128x128xf32>
    %7 = arith.mulf %6, %6 : vector<128x128xf32>
    %cst = arith.constant dense<0.000000e+00> : vector<128xf32>
    %8 = vector.multi_reduction <add>, %7, %cst [1] : vector<128x128xf32> to vector<128xf32>
    %9 = vector.shape_cast %8 : vector<128xf32> to vector<128x1xf32>
    %cst_5 = arith.constant 1.000000e-16 : f32
    %10 = vector.broadcast %cst_5 : f32 to vector<128x1xf32>
    %11 = arith.maximumf %9, %10 : vector<128x1xf32>
    %12 = math.rsqrt %11 : vector<128x1xf32>
    %13 = vector.broadcast %12 : vector<128x1xf32> to vector<128x128xf32>
    %14 = arith.mulf %6, %13 : vector<128x128xf32>
    %c0_6 = arith.constant 0 : index
    %c0_7 = arith.constant 0 : index
    %c0_8 = arith.constant 0 : index
    %15 = vector.load %arg4[%c0_6, %c0_7, %c0_8] : memref<1x128x256xf32, #tpu.memory_space<vmem>>, vector<1x128x128xf32>
    %16 = vector.shape_cast %15 : vector<1x128x128xf32> to vector<128x128xf32>
    %17 = vector.shape_cast %14 : vector<128x128xf32> to vector<1x128x128xf32>
    tpu.vector_store %arg4[%c0_6, %c0_7, %c0_8], %17 {strides = array<i32>} : memref<1x128x256xf32, #tpu.memory_space<vmem>>, vector<1x128x128xf32>,
    %18 = vector.extract_strided_slice %3 {offsets = [1, 0], sizes = [1, 128], strides = [1, 1]} : vector<2x128xf32> to vector<1x128xf32>
    %19 = vector.broadcast %18 : vector<1x128xf32> to vector<128x128xf32>
    %20 = arith.mulf %1, %19 : vector<128x128xf32>
    %21 = arith.mulf %20, %20 : vector<128x128xf32>
    %cst_9 = arith.constant dense<0.000000e+00> : vector<128xf32>
    %22 = vector.multi_reduction <add>, %21, %cst_9 [1] : vector<128x128xf32> to vector<128xf32>
    %23 = vector.shape_cast %22 : vector<128xf32> to vector<128x1xf32>
    %cst_10 = arith.constant 1.000000e-16 : f32
    %24 = vector.broadcast %cst_10 : f32 to vector<128x1xf32>
    %25 = arith.maximumf %23, %24 : vector<128x1xf32>
    %26 = math.rsqrt %25 : vector<128x1xf32>
    %27 = vector.broadcast %26 : vector<128x1xf32> to vector<128x128xf32>
    %28 = arith.mulf %20, %27 : vector<128x128xf32>
    %c0_11 = arith.constant 0 : index
    %c0_12 = arith.constant 0 : index
    %c128 = arith.constant 128 : index
    %29 = vector.load %arg4[%c0_11, %c0_12, %c128] : memref<1x128x256xf32, #tpu.memory_space<vmem>>, vector<1x128x128xf32>
    %30 = vector.shape_cast %29 : vector<1x128x128xf32> to vector<128x128xf32>
    %31 = vector.shape_cast %28 : vector<128x128xf32> to vector<1x128x128xf32>
    tpu.vector_store %arg4[%c0_11, %c0_12, %c128], %31 {strides = array<i32>} : memref<1x128x256xf32, #tpu.memory_space<vmem>>, vector<1x128x128xf32>,
    return
  }
  func.func @transform_0(%arg0: i32, %arg1: i32) -> (i32, i32, i32) {
    %c0_i32 = arith.constant 0 : i32
    %c0_i32_0 = arith.constant 0 : i32
    return %arg0, %arg1, %c0_i32 : i32, i32, i32
  }
  func.func @transform_1(%arg0: i32, %arg1: i32) -> (i32, i32, i32) {
    %c0_i32 = arith.constant 0 : i32
    %c0_i32_0 = arith.constant 0 : i32
    %c0_i32_1 = arith.constant 0 : i32
    return %arg0, %c0_i32, %c0_i32_0 : i32, i32, i32
  }
  func.func @transform_2(%arg0: i32, %arg1: i32) -> (i32, i32, i32) {
    %c0_i32 = arith.constant 0 : i32
    %c0_i32_0 = arith.constant 0 : i32
    return %arg0, %arg1, %c0_i32 : i32, i32, i32
  }
}

module attributes {stable_mosaic.version = 11 : i64} {
  func.func @_gram_kernel(%arg0: i32, %arg1: i32, %arg2: i32, %arg3: memref<1x128x256xf32, #tpu.memory_space<vmem>>, %arg4: memref<1x128x256xf32, #tpu.memory_space<vmem>>, %arg5: memref<1x1x1xf32, #tpu.memory_space<vmem>>, %arg6: memref<1x128x128xbf16, #tpu.memory_space<vmem>>) attributes {dimension_semantics = [#tpu.dimension_semantics<parallel>, #tpu.dimension_semantics<parallel>, #tpu.dimension_semantics<parallel>], iteration_bounds = array<i64: 2, 1, 1>, scalar_prefetch = 0 : i64, scratch_operands = 0 : i64, tpu.core_type = #tpu.core_type<tc>, window_params = [{transform_indices = @transform_0, window_bounds = array<i64: 1, 128, 256>}, {transform_indices = @transform_1, window_bounds = array<i64: 1, 128, 256>}, {transform_indices = @transform_2, window_bounds = array<i64: 1, 1, 1>}, {transform_indices = @transform_3, window_bounds = array<i64: 1, 128, 128>}]} {
    %c0 = arith.constant 0 : index
    %c0_0 = arith.constant 0 : index
    %c0_1 = arith.constant 0 : index
    %0 = vector.load %arg3[%c0, %c0_0, %c0_1] : memref<1x128x256xf32, #tpu.memory_space<vmem>>, vector<1x128x256xf32>
    %1 = vector.shape_cast %0 : vector<1x128x256xf32> to vector<128x256xf32>
    %c0_2 = arith.constant 0 : index
    %c0_3 = arith.constant 0 : index
    %c0_4 = arith.constant 0 : index
    %2 = vector.load %arg4[%c0_2, %c0_3, %c0_4] : memref<1x128x256xf32, #tpu.memory_space<vmem>>, vector<1x128x256xf32>
    %3 = vector.shape_cast %2 : vector<1x128x256xf32> to vector<128x256xf32>
    %cst = arith.constant dense<0.000000e+00> : vector<128x128xf32>
    %4 = tpu.matmul %1, %3, %cst {dimension_numbers = #tpu.dot_dimension_numbers<[1], [1], [0], [0], [0, 0, 1, 0], [], []>} : vector<128x256xf32>, vector<128x256xf32>, vector<128x128xf32> -> vector<128x128xf32>
    %cst_5 = arith.constant 5.000000e-01 : f32
    %5 = vector.broadcast %cst_5 : f32 to vector<128x128xf32>
    %6 = arith.mulf %4, %5 : vector<128x128xf32>
    %c0_6 = arith.constant 0 : index
    %c0_7 = arith.constant 0 : index
    %c0_8 = arith.constant 0 : index
    %7 = vector.load %arg5[%c0_6, %c0_7, %c0_8] : memref<1x1x1xf32, #tpu.memory_space<vmem>>, vector<1x1x1xf32>
    %8 = vector.shape_cast %7 : vector<1x1x1xf32> to vector<1x1xf32>
    %9 = vector.broadcast %8 : vector<1x1xf32> to vector<128x128xf32>
    %10 = arith.cmpf olt, %6, %9 : vector<128x128xf32>
    %cst_9 = arith.constant 0.000000e+00 : f32
    %11 = vector.broadcast %cst_9 : f32 to vector<128x128xf32>
    %12 = arith.select %10, %11, %6 : vector<128x128xi1>, vector<128x128xf32>
    %13 = arith.truncf %12 : vector<128x128xf32> to vector<128x128xbf16>
    %c0_10 = arith.constant 0 : index
    %c0_11 = arith.constant 0 : index
    %c0_12 = arith.constant 0 : index
    %14 = vector.load %arg6[%c0_10, %c0_11, %c0_12] : memref<1x128x128xbf16, #tpu.memory_space<vmem>>, vector<1x128x128xbf16>
    %15 = vector.shape_cast %14 : vector<1x128x128xbf16> to vector<128x128xbf16>
    %16 = vector.shape_cast %13 : vector<128x128xbf16> to vector<1x128x128xbf16>
    tpu.vector_store %arg6[%c0_10, %c0_11, %c0_12], %16 {strides = array<i32>} : memref<1x128x128xbf16, #tpu.memory_space<vmem>>, vector<1x128x128xbf16>,
    return
  }
  func.func @transform_0(%arg0: i32, %arg1: i32, %arg2: i32) -> (i32, i32, i32) {
    %c0_i32 = arith.constant 0 : i32
    %c0_i32_0 = arith.constant 0 : i32
    return %arg0, %arg1, %c0_i32 : i32, i32, i32
  }
  func.func @transform_1(%arg0: i32, %arg1: i32, %arg2: i32) -> (i32, i32, i32) {
    %c0_i32 = arith.constant 0 : i32
    %c0_i32_0 = arith.constant 0 : i32
    return %arg0, %arg2, %c0_i32 : i32, i32, i32
  }
  func.func @transform_2(%arg0: i32, %arg1: i32, %arg2: i32) -> (i32, i32, i32) {
    %c0_i32 = arith.constant 0 : i32
    %c0_i32_0 = arith.constant 0 : i32
    %c0_i32_1 = arith.constant 0 : i32
    return %arg0, %c0_i32, %c0_i32_0 : i32, i32, i32
  }
  func.func @transform_3(%arg0: i32, %arg1: i32, %arg2: i32) -> (i32, i32, i32) {
    %c0_i32 = arith.constant 0 : i32
    return %arg0, %arg1, %arg2 : i32, i32, i32
  }
}

module attributes {stable_mosaic.version = 11 : i64} {
  func.func @_row_stats_kernel(%arg0: i32, %arg1: i32, %arg2: i32, %arg3: memref<1x128x128xbf16, #tpu.memory_space<vmem>>, %arg4: memref<1x128x128xbf16, #tpu.memory_space<vmem>>, %arg5: memref<1x128x1xf32, #tpu.memory_space<vmem>>, %arg6: memref<1x128x1xf32, #tpu.memory_space<vmem>>) attributes {dimension_semantics = [#tpu.dimension_semantics<parallel>, #tpu.dimension_semantics<parallel>, #tpu.dimension_semantics<arbitrary>], iteration_bounds = array<i64: 2, 1, 1>, scalar_prefetch = 0 : i64, scratch_operands = 0 : i64, tpu.core_type = #tpu.core_type<tc>, window_params = [{transform_indices = @transform_0, window_bounds = array<i64: 1, 128, 128>}, {transform_indices = @transform_1, window_bounds = array<i64: 1, 128, 128>}, {transform_indices = @transform_2, window_bounds = array<i64: 1, 128, 1>}, {transform_indices = @transform_3, window_bounds = array<i64: 1, 128, 1>}]} {
    %c0_i32 = arith.constant 0 : i32
    %0 = arith.cmpi eq, %arg2, %c0_i32 : i32
    %1 = arith.extui %0 : i1 to i32
    %c0_i32_0 = arith.constant 0 : i32
    %2 = arith.cmpi ne, %1, %c0_i32_0 : i32
    scf.if %2 {
      %cst_19 = arith.constant 0.000000e+00 : f32
      %27 = vector.broadcast %cst_19 : f32 to vector<1x128x1xf32>
      %c0_20 = arith.constant 0 : index
      %c0_21 = arith.constant 0 : index
      %c0_22 = arith.constant 0 : index
      %28 = vector.load %arg5[%c0_20, %c0_21, %c0_22] : memref<1x128x1xf32, #tpu.memory_space<vmem>>, vector<1x128x1xf32>
      tpu.vector_store %arg5[%c0_20, %c0_21, %c0_22], %27 {strides = array<i32>} : memref<1x128x1xf32, #tpu.memory_space<vmem>>, vector<1x128x1xf32>,
      %cst_23 = arith.constant 0.000000e+00 : f32
      %29 = vector.broadcast %cst_23 : f32 to vector<1x128x1xf32>
      %c0_24 = arith.constant 0 : index
      %c0_25 = arith.constant 0 : index
      %c0_26 = arith.constant 0 : index
      %30 = vector.load %arg6[%c0_24, %c0_25, %c0_26] : memref<1x128x1xf32, #tpu.memory_space<vmem>>, vector<1x128x1xf32>
      tpu.vector_store %arg6[%c0_24, %c0_25, %c0_26], %29 {strides = array<i32>} : memref<1x128x1xf32, #tpu.memory_space<vmem>>, vector<1x128x1xf32>,
    } else {
    }
    %c0 = arith.constant 0 : index
    %c0_1 = arith.constant 0 : index
    %c0_2 = arith.constant 0 : index
    %3 = vector.load %arg3[%c0, %c0_1, %c0_2] : memref<1x128x128xbf16, #tpu.memory_space<vmem>>, vector<1x128x128xbf16>
    %4 = vector.shape_cast %3 : vector<1x128x128xbf16> to vector<128x128xbf16>
    %5 = arith.extf %4 : vector<128x128xbf16> to vector<128x128xf32>
    %c0_3 = arith.constant 0 : index
    %c0_4 = arith.constant 0 : index
    %c0_5 = arith.constant 0 : index
    %6 = vector.load %arg5[%c0_3, %c0_4, %c0_5] : memref<1x128x1xf32, #tpu.memory_space<vmem>>, vector<1x128x1xf32>
    %7 = vector.shape_cast %6 : vector<1x128x1xf32> to vector<128x1xf32>
    %8 = arith.mulf %5, %5 : vector<128x128xf32>
    %cst = arith.constant dense<0.000000e+00> : vector<128xf32>
    %9 = vector.multi_reduction <add>, %8, %cst [1] : vector<128x128xf32> to vector<128xf32>
    %10 = vector.shape_cast %9 : vector<128xf32> to vector<128x1xf32>
    %11 = arith.addf %7, %10 : vector<128x1xf32>
    %c0_6 = arith.constant 0 : index
    %c0_7 = arith.constant 0 : index
    %c0_8 = arith.constant 0 : index
    %12 = vector.load %arg5[%c0_6, %c0_7, %c0_8] : memref<1x128x1xf32, #tpu.memory_space<vmem>>, vector<1x128x1xf32>
    %13 = vector.shape_cast %12 : vector<1x128x1xf32> to vector<128x1xf32>
    %14 = vector.shape_cast %11 : vector<128x1xf32> to vector<1x128x1xf32>
    tpu.vector_store %arg5[%c0_6, %c0_7, %c0_8], %14 {strides = array<i32>} : memref<1x128x1xf32, #tpu.memory_space<vmem>>, vector<1x128x1xf32>,
    %c0_9 = arith.constant 0 : index
    %c0_10 = arith.constant 0 : index
    %c0_11 = arith.constant 0 : index
    %15 = vector.load %arg6[%c0_9, %c0_10, %c0_11] : memref<1x128x1xf32, #tpu.memory_space<vmem>>, vector<1x128x1xf32>
    %16 = vector.shape_cast %15 : vector<1x128x1xf32> to vector<128x1xf32>
    %c0_12 = arith.constant 0 : index
    %c0_13 = arith.constant 0 : index
    %c0_14 = arith.constant 0 : index
    %17 = vector.load %arg4[%c0_12, %c0_13, %c0_14] : memref<1x128x128xbf16, #tpu.memory_space<vmem>>, vector<1x128x128xbf16>
    %18 = vector.shape_cast %17 : vector<1x128x128xbf16> to vector<128x128xbf16>
    %19 = arith.extf %18 : vector<128x128xbf16> to vector<128x128xf32>
    %20 = math.absf %19 : vector<128x128xf32>
    %cst_15 = arith.constant dense<0.000000e+00> : vector<128xf32>
    %21 = vector.multi_reduction <add>, %20, %cst_15 [1] : vector<128x128xf32> to vector<128xf32>
    %22 = vector.shape_cast %21 : vector<128xf32> to vector<128x1xf32>
    %23 = arith.addf %16, %22 : vector<128x1xf32>
    %c0_16 = arith.constant 0 : index
    %c0_17 = arith.constant 0 : index
    %c0_18 = arith.constant 0 : index
    %24 = vector.load %arg6[%c0_16, %c0_17, %c0_18] : memref<1x128x1xf32, #tpu.memory_space<vmem>>, vector<1x128x1xf32>
    %25 = vector.shape_cast %24 : vector<1x128x1xf32> to vector<128x1xf32>
    %26 = vector.shape_cast %23 : vector<128x1xf32> to vector<1x128x1xf32>
    tpu.vector_store %arg6[%c0_16, %c0_17, %c0_18], %26 {strides = array<i32>} : memref<1x128x1xf32, #tpu.memory_space<vmem>>, vector<1x128x1xf32>,
    return
  }
  func.func @transform_0(%arg0: i32, %arg1: i32, %arg2: i32) -> (i32, i32, i32) {
    %c0_i32 = arith.constant 0 : i32
    return %arg0, %arg1, %arg2 : i32, i32, i32
  }
  func.func @transform_1(%arg0: i32, %arg1: i32, %arg2: i32) -> (i32, i32, i32) {
    %c0_i32 = arith.constant 0 : i32
    return %arg0, %arg1, %arg2 : i32, i32, i32
  }
  func.func @transform_2(%arg0: i32, %arg1: i32, %arg2: i32) -> (i32, i32, i32) {
    %c0_i32 = arith.constant 0 : i32
    %c0_i32_0 = arith.constant 0 : i32
    return %arg0, %arg1, %c0_i32 : i32, i32, i32
  }
  func.func @transform_3(%arg0: i32, %arg1: i32, %arg2: i32) -> (i32, i32, i32) {
    %c0_i32 = arith.constant 0 : i32
    %c0_i32_0 = arith.constant 0 : i32
    return %arg0, %arg1, %c0_i32 : i32, i32, i32
  }
}

module attributes {stable_mosaic.version = 11 : i64} {
  func.func @_col_stats_kernel(%arg0: i32, %arg1: i32, %arg2: i32, %arg3: memref<1x128x128xbf16, #tpu.memory_space<vmem>>, %arg4: memref<1x128x128xbf16, #tpu.memory_space<vmem>>, %arg5: memref<1x128x128xbf16, #tpu.memory_space<vmem>>, %arg6: memref<1x128x1xf32, #tpu.memory_space<vmem>>, %arg7: memref<1x128x1xf32, #tpu.memory_space<vmem>>, %arg8: memref<1x1x128xf32, #tpu.memory_space<vmem>>, %arg9: memref<1x1x128xf32, #tpu.memory_space<vmem>>, %arg10: memref<1x1x128xf32, #tpu.memory_space<vmem>>) attributes {dimension_semantics = [#tpu.dimension_semantics<parallel>, #tpu.dimension_semantics<parallel>, #tpu.dimension_semantics<arbitrary>], iteration_bounds = array<i64: 2, 1, 1>, scalar_prefetch = 0 : i64, scratch_operands = 0 : i64, tpu.core_type = #tpu.core_type<tc>, window_params = [{transform_indices = @transform_0, window_bounds = array<i64: 1, 128, 128>}, {transform_indices = @transform_1, window_bounds = array<i64: 1, 128, 128>}, {transform_indices = @transform_2, window_bounds = array<i64: 1, 128, 128>}, {transform_indices = @transform_3, window_bounds = array<i64: 1, 128, 1>}, {transform_indices = @transform_4, window_bounds = array<i64: 1, 128, 1>}, {transform_indices = @transform_5, window_bounds = array<i64: 1, 1, 128>}, {transform_indices = @transform_6, window_bounds = array<i64: 1, 1, 128>}, {transform_indices = @transform_7, window_bounds = array<i64: 1, 1, 128>}]} {
    %c0_i32 = arith.constant 0 : i32
    %0 = arith.cmpi eq, %arg2, %c0_i32 : i32
    %1 = arith.extui %0 : i1 to i32
    %c0_i32_0 = arith.constant 0 : i32
    %2 = arith.cmpi ne, %1, %c0_i32_0 : i32
    scf.if %2 {
      %cst_35 = arith.constant 0.000000e+00 : f32
      %47 = vector.broadcast %cst_35 : f32 to vector<1x1x128xf32>
      %c0_36 = arith.constant 0 : index
      %c0_37 = arith.constant 0 : index
      %c0_38 = arith.constant 0 : index
      %48 = vector.load %arg8[%c0_36, %c0_37, %c0_38] : memref<1x1x128xf32, #tpu.memory_space<vmem>>, vector<1x1x128xf32>
      tpu.vector_store %arg8[%c0_36, %c0_37, %c0_38], %47 {strides = array<i32>} : memref<1x1x128xf32, #tpu.memory_space<vmem>>, vector<1x1x128xf32>,
      %cst_39 = arith.constant 0.000000e+00 : f32
      %49 = vector.broadcast %cst_39 : f32 to vector<1x1x128xf32>
      %c0_40 = arith.constant 0 : index
      %c0_41 = arith.constant 0 : index
      %c0_42 = arith.constant 0 : index
      %50 = vector.load %arg9[%c0_40, %c0_41, %c0_42] : memref<1x1x128xf32, #tpu.memory_space<vmem>>, vector<1x1x128xf32>
      tpu.vector_store %arg9[%c0_40, %c0_41, %c0_42], %49 {strides = array<i32>} : memref<1x1x128xf32, #tpu.memory_space<vmem>>, vector<1x1x128xf32>,
      %cst_43 = arith.constant 0.000000e+00 : f32
      %51 = vector.broadcast %cst_43 : f32 to vector<1x1x128xf32>
      %c0_44 = arith.constant 0 : index
      %c0_45 = arith.constant 0 : index
      %c0_46 = arith.constant 0 : index
      %52 = vector.load %arg10[%c0_44, %c0_45, %c0_46] : memref<1x1x128xf32, #tpu.memory_space<vmem>>, vector<1x1x128xf32>
      tpu.vector_store %arg10[%c0_44, %c0_45, %c0_46], %51 {strides = array<i32>} : memref<1x1x128xf32, #tpu.memory_space<vmem>>, vector<1x1x128xf32>,
    } else {
    }
    %c0 = arith.constant 0 : index
    %c0_1 = arith.constant 0 : index
    %c0_2 = arith.constant 0 : index
    %3 = vector.load %arg3[%c0, %c0_1, %c0_2] : memref<1x128x128xbf16, #tpu.memory_space<vmem>>, vector<1x128x128xbf16>
    %4 = vector.shape_cast %3 : vector<1x128x128xbf16> to vector<128x128xbf16>
    %5 = arith.extf %4 : vector<128x128xbf16> to vector<128x128xf32>
    %c0_3 = arith.constant 0 : index
    %c0_4 = arith.constant 0 : index
    %c0_5 = arith.constant 0 : index
    %6 = vector.load %arg6[%c0_3, %c0_4, %c0_5] : memref<1x128x1xf32, #tpu.memory_space<vmem>>, vector<1x128x1xf32>
    %7 = vector.shape_cast %6 : vector<1x128x1xf32> to vector<128x1xf32>
    %8 = vector.broadcast %7 : vector<128x1xf32> to vector<128x128xf32>
    %9 = arith.mulf %5, %8 : vector<128x128xf32>
    %c0_6 = arith.constant 0 : index
    %c0_7 = arith.constant 0 : index
    %c0_8 = arith.constant 0 : index
    %10 = vector.load %arg8[%c0_6, %c0_7, %c0_8] : memref<1x1x128xf32, #tpu.memory_space<vmem>>, vector<1x1x128xf32>
    %11 = vector.shape_cast %10 : vector<1x1x128xf32> to vector<1x128xf32>
    %12 = arith.mulf %9, %9 : vector<128x128xf32>
    %cst = arith.constant dense<0.000000e+00> : vector<128xf32>
    %13 = vector.multi_reduction <add>, %12, %cst [0] : vector<128x128xf32> to vector<128xf32>
    %14 = vector.shape_cast %13 : vector<128xf32> to vector<1x128xf32>
    %15 = arith.addf %11, %14 : vector<1x128xf32>
    %c0_9 = arith.constant 0 : index
    %c0_10 = arith.constant 0 : index
    %c0_11 = arith.constant 0 : index
    %16 = vector.load %arg8[%c0_9, %c0_10, %c0_11] : memref<1x1x128xf32, #tpu.memory_space<vmem>>, vector<1x1x128xf32>
    %17 = vector.shape_cast %16 : vector<1x1x128xf32> to vector<1x128xf32>
    %18 = vector.shape_cast %15 : vector<1x128xf32> to vector<1x1x128xf32>
    tpu.vector_store %arg8[%c0_9, %c0_10, %c0_11], %18 {strides = array<i32>} : memref<1x1x128xf32, #tpu.memory_space<vmem>>, vector<1x1x128xf32>,
    %c0_12 = arith.constant 0 : index
    %c0_13 = arith.constant 0 : index
    %c0_14 = arith.constant 0 : index
    %19 = vector.load %arg4[%c0_12, %c0_13, %c0_14] : memref<1x128x128xbf16, #tpu.memory_space<vmem>>, vector<1x128x128xbf16>
    %20 = vector.shape_cast %19 : vector<1x128x128xbf16> to vector<128x128xbf16>
    %21 = arith.extf %20 : vector<128x128xbf16> to vector<128x128xf32>
    %c0_15 = arith.constant 0 : index
    %c0_16 = arith.constant 0 : index
    %c0_17 = arith.constant 0 : index
    %22 = vector.load %arg7[%c0_15, %c0_16, %c0_17] : memref<1x128x1xf32, #tpu.memory_space<vmem>>, vector<1x128x1xf32>
    %23 = vector.shape_cast %22 : vector<1x128x1xf32> to vector<128x1xf32>
    %24 = vector.broadcast %23 : vector<128x1xf32> to vector<128x128xf32>
    %25 = arith.mulf %21, %24 : vector<128x128xf32>
    %c0_18 = arith.constant 0 : index
    %c0_19 = arith.constant 0 : index
    %c0_20 = arith.constant 0 : index
    %26 = vector.load %arg9[%c0_18, %c0_19, %c0_20] : memref<1x1x128xf32, #tpu.memory_space<vmem>>, vector<1x1x128xf32>
    %27 = vector.shape_cast %26 : vector<1x1x128xf32> to vector<1x128xf32>
    %28 = arith.mulf %25, %25 : vector<128x128xf32>
    %cst_21 = arith.constant dense<0.000000e+00> : vector<128xf32>
    %29 = vector.multi_reduction <add>, %28, %cst_21 [0] : vector<128x128xf32> to vector<128xf32>
    %30 = vector.shape_cast %29 : vector<128xf32> to vector<1x128xf32>
    %31 = arith.addf %27, %30 : vector<1x128xf32>
    %c0_22 = arith.constant 0 : index
    %c0_23 = arith.constant 0 : index
    %c0_24 = arith.constant 0 : index
    %32 = vector.load %arg9[%c0_22, %c0_23, %c0_24] : memref<1x1x128xf32, #tpu.memory_space<vmem>>, vector<1x1x128xf32>
    %33 = vector.shape_cast %32 : vector<1x1x128xf32> to vector<1x128xf32>
    %34 = vector.shape_cast %31 : vector<1x128xf32> to vector<1x1x128xf32>
    tpu.vector_store %arg9[%c0_22, %c0_23, %c0_24], %34 {strides = array<i32>} : memref<1x1x128xf32, #tpu.memory_space<vmem>>, vector<1x1x128xf32>,
    %c0_25 = arith.constant 0 : index
    %c0_26 = arith.constant 0 : index
    %c0_27 = arith.constant 0 : index
    %35 = vector.load %arg5[%c0_25, %c0_26, %c0_27] : memref<1x128x128xbf16, #tpu.memory_space<vmem>>, vector<1x128x128xbf16>
    %36 = vector.shape_cast %35 : vector<1x128x128xbf16> to vector<128x128xbf16>
    %37 = arith.extf %36 : vector<128x128xbf16> to vector<128x128xf32>
    %c0_28 = arith.constant 0 : index
    %c0_29 = arith.constant 0 : index
    %c0_30 = arith.constant 0 : index
    %38 = vector.load %arg10[%c0_28, %c0_29, %c0_30] : memref<1x1x128xf32, #tpu.memory_space<vmem>>, vector<1x1x128xf32>
    %39 = vector.shape_cast %38 : vector<1x1x128xf32> to vector<1x128xf32>
    %40 = arith.mulf %37, %37 : vector<128x128xf32>
    %cst_31 = arith.constant dense<0.000000e+00> : vector<128xf32>
    %41 = vector.multi_reduction <add>, %40, %cst_31 [0] : vector<128x128xf32> to vector<128xf32>
    %42 = vector.shape_cast %41 : vector<128xf32> to vector<1x128xf32>
    %43 = arith.addf %39, %42 : vector<1x128xf32>
    %c0_32 = arith.constant 0 : index
    %c0_33 = arith.constant 0 : index
    %c0_34 = arith.constant 0 : index
    %44 = vector.load %arg10[%c0_32, %c0_33, %c0_34] : memref<1x1x128xf32, #tpu.memory_space<vmem>>, vector<1x1x128xf32>
    %45 = vector.shape_cast %44 : vector<1x1x128xf32> to vector<1x128xf32>
    %46 = vector.shape_cast %43 : vector<1x128xf32> to vector<1x1x128xf32>
    tpu.vector_store %arg10[%c0_32, %c0_33, %c0_34], %46 {strides = array<i32>} : memref<1x1x128xf32, #tpu.memory_space<vmem>>, vector<1x1x128xf32>,
    return
  }
  func.func @transform_0(%arg0: i32, %arg1: i32, %arg2: i32) -> (i32, i32, i32) {
    %c0_i32 = arith.constant 0 : i32
    return %arg0, %arg2, %arg1 : i32, i32, i32
  }
  func.func @transform_1(%arg0: i32, %arg1: i32, %arg2: i32) -> (i32, i32, i32) {
    %c0_i32 = arith.constant 0 : i32
    return %arg0, %arg2, %arg1 : i32, i32, i32
  }
  func.func @transform_2(%arg0: i32, %arg1: i32, %arg2: i32) -> (i32, i32, i32) {
    %c0_i32 = arith.constant 0 : i32
    return %arg0, %arg2, %arg1 : i32, i32, i32
  }
  func.func @transform_3(%arg0: i32, %arg1: i32, %arg2: i32) -> (i32, i32, i32) {
    %c0_i32 = arith.constant 0 : i32
    %c0_i32_0 = arith.constant 0 : i32
    return %arg0, %arg2, %c0_i32 : i32, i32, i32
  }
  func.func @transform_4(%arg0: i32, %arg1: i32, %arg2: i32) -> (i32, i32, i32) {
    %c0_i32 = arith.constant 0 : i32
    %c0_i32_0 = arith.constant 0 : i32
    return %arg0, %arg2, %c0_i32 : i32, i32, i32
  }
  func.func @transform_5(%arg0: i32, %arg1: i32, %arg2: i32) -> (i32, i32, i32) {
    %c0_i32 = arith.constant 0 : i32
    %c0_i32_0 = arith.constant 0 : i32
    return %arg0, %c0_i32, %arg1 : i32, i32, i32
  }
  func.func @transform_6(%arg0: i32, %arg1: i32, %arg2: i32) -> (i32, i32, i32) {
    %c0_i32 = arith.constant 0 : i32
    %c0_i32_0 = arith.constant 0 : i32
    return %arg0, %c0_i32, %arg1 : i32, i32, i32
  }
  func.func @transform_7(%arg0: i32, %arg1: i32, %arg2: i32) -> (i32, i32, i32) {
    %c0_i32 = arith.constant 0 : i32
    %c0_i32_0 = arith.constant 0 : i32
    return %arg0, %c0_i32, %arg1 : i32, i32, i32
  }
}

module attributes {stable_mosaic.version = 11 : i64} {
  func.func @_make_g_kernel(%arg0: i32, %arg1: i32, %arg2: i32, %arg3: memref<1x128x128xbf16, #tpu.memory_space<vmem>>, %arg4: memref<1x128x128xbf16, #tpu.memory_space<vmem>>, %arg5: memref<1x128x128xbf16, #tpu.memory_space<vmem>>, %arg6: memref<1x128x1xf32, #tpu.memory_space<vmem>>, %arg7: memref<1x128x1xf32, #tpu.memory_space<vmem>>, %arg8: memref<1x1x128xf32, #tpu.memory_space<vmem>>, %arg9: memref<1x1x128xf32, #tpu.memory_space<vmem>>, %arg10: memref<1x1x128xf32, #tpu.memory_space<vmem>>, %arg11: memref<1x128x128xbf16, #tpu.memory_space<vmem>>) attributes {dimension_semantics = [#tpu.dimension_semantics<parallel>, #tpu.dimension_semantics<parallel>, #tpu.dimension_semantics<parallel>], iteration_bounds = array<i64: 2, 1, 1>, scalar_prefetch = 0 : i64, scratch_operands = 0 : i64, tpu.core_type = #tpu.core_type<tc>, window_params = [{transform_indices = @transform_0, window_bounds = array<i64: 1, 128, 128>}, {transform_indices = @transform_1, window_bounds = array<i64: 1, 128, 128>}, {transform_indices = @transform_2, window_bounds = array<i64: 1, 128, 128>}, {transform_indices = @transform_3, window_bounds = array<i64: 1, 128, 1>}, {transform_indices = @transform_4, window_bounds = array<i64: 1, 128, 1>}, {transform_indices = @transform_5, window_bounds = array<i64: 1, 1, 128>}, {transform_indices = @transform_6, window_bounds = array<i64: 1, 1, 128>}, {transform_indices = @transform_7, window_bounds = array<i64: 1, 1, 128>}, {transform_indices = @transform_8, window_bounds = array<i64: 1, 128, 128>}]} {
    %c0 = arith.constant 0 : index
    %c0_0 = arith.constant 0 : index
    %c0_1 = arith.constant 0 : index
    %0 = vector.load %arg3[%c0, %c0_0, %c0_1] : memref<1x128x128xbf16, #tpu.memory_space<vmem>>, vector<1x128x128xbf16>
    %1 = vector.shape_cast %0 : vector<1x128x128xbf16> to vector<128x128xbf16>
    %2 = arith.extf %1 : vector<128x128xbf16> to vector<128x128xf32>
    %c0_2 = arith.constant 0 : index
    %c0_3 = arith.constant 0 : index
    %c0_4 = arith.constant 0 : index
    %3 = vector.load %arg6[%c0_2, %c0_3, %c0_4] : memref<1x128x1xf32, #tpu.memory_space<vmem>>, vector<1x128x1xf32>
    %4 = vector.shape_cast %3 : vector<1x128x1xf32> to vector<128x1xf32>
    %5 = vector.broadcast %4 : vector<128x1xf32> to vector<128x128xf32>
    %6 = arith.mulf %2, %5 : vector<128x128xf32>
    %c0_5 = arith.constant 0 : index
    %c0_6 = arith.constant 0 : index
    %c0_7 = arith.constant 0 : index
    %7 = vector.load %arg4[%c0_5, %c0_6, %c0_7] : memref<1x128x128xbf16, #tpu.memory_space<vmem>>, vector<1x128x128xbf16>
    %8 = vector.shape_cast %7 : vector<1x128x128xbf16> to vector<128x128xbf16>
    %9 = arith.extf %8 : vector<128x128xbf16> to vector<128x128xf32>
    %c0_8 = arith.constant 0 : index
    %c0_9 = arith.constant 0 : index
    %c0_10 = arith.constant 0 : index
    %10 = vector.load %arg7[%c0_8, %c0_9, %c0_10] : memref<1x128x1xf32, #tpu.memory_space<vmem>>, vector<1x128x1xf32>
    %11 = vector.shape_cast %10 : vector<1x128x1xf32> to vector<128x1xf32>
    %12 = vector.broadcast %11 : vector<128x1xf32> to vector<128x128xf32>
    %13 = arith.mulf %9, %12 : vector<128x128xf32>
    %c0_11 = arith.constant 0 : index
    %c0_12 = arith.constant 0 : index
    %c0_13 = arith.constant 0 : index
    %14 = vector.load %arg5[%c0_11, %c0_12, %c0_13] : memref<1x128x128xbf16, #tpu.memory_space<vmem>>, vector<1x128x128xbf16>
    %15 = vector.shape_cast %14 : vector<1x128x128xbf16> to vector<128x128xbf16>
    %16 = arith.extf %15 : vector<128x128xbf16> to vector<128x128xf32>
    %c0_14 = arith.constant 0 : index
    %c0_15 = arith.constant 0 : index
    %c0_16 = arith.constant 0 : index
    %17 = vector.load %arg8[%c0_14, %c0_15, %c0_16] : memref<1x1x128xf32, #tpu.memory_space<vmem>>, vector<1x1x128xf32>
    %18 = vector.shape_cast %17 : vector<1x1x128xf32> to vector<1x128xf32>
    %19 = vector.broadcast %18 : vector<1x128xf32> to vector<128x128xf32>
    %20 = arith.mulf %6, %19 : vector<128x128xf32>
    %c0_17 = arith.constant 0 : index
    %c0_18 = arith.constant 0 : index
    %c0_19 = arith.constant 0 : index
    %21 = vector.load %arg9[%c0_17, %c0_18, %c0_19] : memref<1x1x128xf32, #tpu.memory_space<vmem>>, vector<1x1x128xf32>
    %22 = vector.shape_cast %21 : vector<1x1x128xf32> to vector<1x128xf32>
    %23 = vector.broadcast %22 : vector<1x128xf32> to vector<128x128xf32>
    %24 = arith.mulf %13, %23 : vector<128x128xf32>
    %25 = arith.addf %20, %24 : vector<128x128xf32>
    %c0_20 = arith.constant 0 : index
    %c0_21 = arith.constant 0 : index
    %c0_22 = arith.constant 0 : index
    %26 = vector.load %arg10[%c0_20, %c0_21, %c0_22] : memref<1x1x128xf32, #tpu.memory_space<vmem>>, vector<1x1x128xf32>
    %27 = vector.shape_cast %26 : vector<1x1x128xf32> to vector<1x128xf32>
    %28 = vector.broadcast %27 : vector<1x128xf32> to vector<128x128xf32>
    %29 = arith.mulf %16, %28 : vector<128x128xf32>
    %30 = arith.addf %25, %29 : vector<128x128xf32>
    %31 = arith.truncf %30 : vector<128x128xf32> to vector<128x128xbf16>
    %c0_23 = arith.constant 0 : index
    %c0_24 = arith.constant 0 : index
    %c0_25 = arith.constant 0 : index
    %32 = vector.load %arg11[%c0_23, %c0_24, %c0_25] : memref<1x128x128xbf16, #tpu.memory_space<vmem>>, vector<1x128x128xbf16>
    %33 = vector.shape_cast %32 : vector<1x128x128xbf16> to vector<128x128xbf16>
    %34 = vector.shape_cast %31 : vector<128x128xbf16> to vector<1x128x128xbf16>
    tpu.vector_store %arg11[%c0_23, %c0_24, %c0_25], %34 {strides = array<i32>} : memref<1x128x128xbf16, #tpu.memory_space<vmem>>, vector<1x128x128xbf16>,
    return
  }
  func.func @transform_0(%arg0: i32, %arg1: i32, %arg2: i32) -> (i32, i32, i32) {
    %c0_i32 = arith.constant 0 : i32
    return %arg0, %arg1, %arg2 : i32, i32, i32
  }
  func.func @transform_1(%arg0: i32, %arg1: i32, %arg2: i32) -> (i32, i32, i32) {
    %c0_i32 = arith.constant 0 : i32
    return %arg0, %arg1, %arg2 : i32, i32, i32
  }
  func.func @transform_2(%arg0: i32, %arg1: i32, %arg2: i32) -> (i32, i32, i32) {
    %c0_i32 = arith.constant 0 : i32
    return %arg0, %arg1, %arg2 : i32, i32, i32
  }
  func.func @transform_3(%arg0: i32, %arg1: i32, %arg2: i32) -> (i32, i32, i32) {
    %c0_i32 = arith.constant 0 : i32
    %c0_i32_0 = arith.constant 0 : i32
    return %arg0, %arg1, %c0_i32 : i32, i32, i32
  }
  func.func @transform_4(%arg0: i32, %arg1: i32, %arg2: i32) -> (i32, i32, i32) {
    %c0_i32 = arith.constant 0 : i32
    %c0_i32_0 = arith.constant 0 : i32
    return %arg0, %arg1, %c0_i32 : i32, i32, i32
  }
  func.func @transform_5(%arg0: i32, %arg1: i32, %arg2: i32) -> (i32, i32, i32) {
    %c0_i32 = arith.constant 0 : i32
    %c0_i32_0 = arith.constant 0 : i32
    return %arg0, %c0_i32, %arg2 : i32, i32, i32
  }
  func.func @transform_6(%arg0: i32, %arg1: i32, %arg2: i32) -> (i32, i32, i32) {
    %c0_i32 = arith.constant 0 : i32
    %c0_i32_0 = arith.constant 0 : i32
    return %arg0, %c0_i32, %arg2 : i32, i32, i32
  }
  func.func @transform_7(%arg0: i32, %arg1: i32, %arg2: i32) -> (i32, i32, i32) {
    %c0_i32 = arith.constant 0 : i32
    %c0_i32_0 = arith.constant 0 : i32
    return %arg0, %c0_i32, %arg2 : i32, i32, i32
  }
  func.func @transform_8(%arg0: i32, %arg1: i32, %arg2: i32) -> (i32, i32, i32) {
    %c0_i32 = arith.constant 0 : i32
    return %arg0, %arg1, %arg2 : i32, i32, i32
  }
}

module attributes {stable_mosaic.version = 11 : i64} {
  func.func @_sym_rowsum_kernel(%arg0: i32, %arg1: i32, %arg2: i32, %arg3: memref<1x128x128xbf16, #tpu.memory_space<vmem>>, %arg4: memref<1x128x128xbf16, #tpu.memory_space<vmem>>, %arg5: memref<1x128x1xf32, #tpu.memory_space<vmem>>) attributes {dimension_semantics = [#tpu.dimension_semantics<parallel>, #tpu.dimension_semantics<parallel>, #tpu.dimension_semantics<arbitrary>], iteration_bounds = array<i64: 2, 1, 1>, scalar_prefetch = 0 : i64, scratch_operands = 0 : i64, tpu.core_type = #tpu.core_type<tc>, window_params = [{transform_indices = @transform_0, window_bounds = array<i64: 1, 128, 128>}, {transform_indices = @transform_1, window_bounds = array<i64: 1, 128, 128>}, {transform_indices = @transform_2, window_bounds = array<i64: 1, 128, 1>}]} {
    %c0_i32 = arith.constant 0 : i32
    %0 = arith.cmpi eq, %arg2, %c0_i32 : i32
    %1 = arith.extui %0 : i1 to i32
    %c0_i32_0 = arith.constant 0 : i32
    %2 = arith.cmpi ne, %1, %c0_i32_0 : i32
    scf.if %2 {
      %cst_12 = arith.constant 0.000000e+00 : f32
      %20 = vector.broadcast %cst_12 : f32 to vector<1x128x1xf32>
      %c0_13 = arith.constant 0 : index
      %c0_14 = arith.constant 0 : index
      %c0_15 = arith.constant 0 : index
      %21 = vector.load %arg5[%c0_13, %c0_14, %c0_15] : memref<1x128x1xf32, #tpu.memory_space<vmem>>, vector<1x128x1xf32>
      tpu.vector_store %arg5[%c0_13, %c0_14, %c0_15], %20 {strides = array<i32>} : memref<1x128x1xf32, #tpu.memory_space<vmem>>, vector<1x128x1xf32>,
    } else {
    }
    %c0 = arith.constant 0 : index
    %c0_1 = arith.constant 0 : index
    %c0_2 = arith.constant 0 : index
    %3 = vector.load %arg3[%c0, %c0_1, %c0_2] : memref<1x128x128xbf16, #tpu.memory_space<vmem>>, vector<1x128x128xbf16>
    %4 = vector.shape_cast %3 : vector<1x128x128xbf16> to vector<128x128xbf16>
    %5 = arith.extf %4 : vector<128x128xbf16> to vector<128x128xf32>
    %c0_3 = arith.constant 0 : index
    %c0_4 = arith.constant 0 : index
    %c0_5 = arith.constant 0 : index
    %6 = vector.load %arg4[%c0_3, %c0_4, %c0_5] : memref<1x128x128xbf16, #tpu.memory_space<vmem>>, vector<1x128x128xbf16>
    %7 = vector.shape_cast %6 : vector<1x128x128xbf16> to vector<128x128xbf16>
    %8 = arith.extf %7 : vector<128x128xbf16> to vector<128x128xf32>
    %9 = tpu.transpose %8, [1, 0] : vector<128x128xf32> -> vector<128x128xf32>
    %10 = arith.addf %5, %9 : vector<128x128xf32>
    %c0_6 = arith.constant 0 : index
    %c0_7 = arith.constant 0 : index
    %c0_8 = arith.constant 0 : index
    %11 = vector.load %arg5[%c0_6, %c0_7, %c0_8] : memref<1x128x1xf32, #tpu.memory_space<vmem>>, vector<1x128x1xf32>
    %12 = vector.shape_cast %11 : vector<1x128x1xf32> to vector<128x1xf32>
    %13 = math.absf %10 : vector<128x128xf32>
    %cst = arith.constant dense<0.000000e+00> : vector<128xf32>
    %14 = vector.multi_reduction <add>, %13, %cst [1] : vector<128x128xf32> to vector<128xf32>
    %15 = vector.shape_cast %14 : vector<128xf32> to vector<128x1xf32>
    %16 = arith.addf %12, %15 : vector<128x1xf32>
    %c0_9 = arith.constant 0 : index
    %c0_10 = arith.constant 0 : index
    %c0_11 = arith.constant 0 : index
    %17 = vector.load %arg5[%c0_9, %c0_10, %c0_11] : memref<1x128x1xf32, #tpu.memory_space<vmem>>, vector<1x128x1xf32>
    %18 = vector.shape_cast %17 : vector<1x128x1xf32> to vector<128x1xf32>
    %19 = vector.shape_cast %16 : vector<128x1xf32> to vector<1x128x1xf32>
    tpu.vector_store %arg5[%c0_9, %c0_10, %c0_11], %19 {strides = array<i32>} : memref<1x128x1xf32, #tpu.memory_space<vmem>>, vector<1x128x1xf32>,
    return
  }
  func.func @transform_0(%arg0: i32, %arg1: i32, %arg2: i32) -> (i32, i32, i32) {
    %c0_i32 = arith.constant 0 : i32
    return %arg0, %arg1, %arg2 : i32, i32, i32
  }
  func.func @transform_1(%arg0: i32, %arg1: i32, %arg2: i32) -> (i32, i32, i32) {
    %c0_i32 = arith.constant 0 : i32
    return %arg0, %arg2, %arg1 : i32, i32, i32
  }
  func.func @transform_2(%arg0: i32, %arg1: i32, %arg2: i32) -> (i32, i32, i32) {
    %c0_i32 = arith.constant 0 : i32
    %c0_i32_0 = arith.constant 0 : i32
    return %arg0, %arg1, %c0_i32 : i32, i32, i32
  }
}

module attributes {stable_mosaic.version = 11 : i64} {
  func.func @_sym_final_kernel(%arg0: i32, %arg1: i32, %arg2: i32, %arg3: memref<1x128x128xbf16, #tpu.memory_space<vmem>>, %arg4: memref<1x128x128xbf16, #tpu.memory_space<vmem>>, %arg5: memref<1x128x1xf32, #tpu.memory_space<vmem>>, %arg6: memref<1x128x128xf32, #tpu.memory_space<vmem>>) attributes {dimension_semantics = [#tpu.dimension_semantics<parallel>, #tpu.dimension_semantics<parallel>, #tpu.dimension_semantics<parallel>], iteration_bounds = array<i64: 2, 1, 1>, scalar_prefetch = 0 : i64, scratch_operands = 0 : i64, tpu.core_type = #tpu.core_type<tc>, window_params = [{transform_indices = @transform_0, window_bounds = array<i64: 1, 128, 128>}, {transform_indices = @transform_1, window_bounds = array<i64: 1, 128, 128>}, {transform_indices = @transform_2, window_bounds = array<i64: 1, 128, 1>}, {transform_indices = @transform_3, window_bounds = array<i64: 1, 128, 128>}]} {
    %c0 = arith.constant 0 : index
    %c0_0 = arith.constant 0 : index
    %c0_1 = arith.constant 0 : index
    %0 = vector.load %arg3[%c0, %c0_0, %c0_1] : memref<1x128x128xbf16, #tpu.memory_space<vmem>>, vector<1x128x128xbf16>
    %1 = vector.shape_cast %0 : vector<1x128x128xbf16> to vector<128x128xbf16>
    %2 = arith.extf %1 : vector<128x128xbf16> to vector<128x128xf32>
    %c0_2 = arith.constant 0 : index
    %c0_3 = arith.constant 0 : index
    %c0_4 = arith.constant 0 : index
    %3 = vector.load %arg4[%c0_2, %c0_3, %c0_4] : memref<1x128x128xbf16, #tpu.memory_space<vmem>>, vector<1x128x128xbf16>
    %4 = vector.shape_cast %3 : vector<1x128x128xbf16> to vector<128x128xbf16>
    %5 = arith.extf %4 : vector<128x128xbf16> to vector<128x128xf32>
    %6 = tpu.transpose %5, [1, 0] : vector<128x128xf32> -> vector<128x128xf32>
    %7 = arith.addf %2, %6 : vector<128x128xf32>
    %c0_5 = arith.constant 0 : index
    %c0_6 = arith.constant 0 : index
    %c0_7 = arith.constant 0 : index
    %8 = vector.load %arg5[%c0_5, %c0_6, %c0_7] : memref<1x128x1xf32, #tpu.memory_space<vmem>>, vector<1x128x1xf32>
    %9 = vector.shape_cast %8 : vector<1x128x1xf32> to vector<128x1xf32>
    %10 = vector.broadcast %9 : vector<128x1xf32> to vector<128x128xf32>
    %11 = arith.mulf %7, %10 : vector<128x128xf32>
    %c0_8 = arith.constant 0 : index
    %c0_9 = arith.constant 0 : index
    %c0_10 = arith.constant 0 : index
    %12 = vector.load %arg6[%c0_8, %c0_9, %c0_10] : memref<1x128x128xf32, #tpu.memory_space<vmem>>, vector<1x128x128xf32>
    %13 = vector.shape_cast %12 : vector<1x128x128xf32> to vector<128x128xf32>
    %14 = vector.shape_cast %11 : vector<128x128xf32> to vector<1x128x128xf32>
    tpu.vector_store %arg6[%c0_8, %c0_9, %c0_10], %14 {strides = array<i32>} : memref<1x128x128xf32, #tpu.memory_space<vmem>>, vector<1x128x128xf32>,
    return
  }
  func.func @transform_0(%arg0: i32, %arg1: i32, %arg2: i32) -> (i32, i32, i32) {
    %c0_i32 = arith.constant 0 : i32
    return %arg0, %arg1, %arg2 : i32, i32, i32
  }
  func.func @transform_1(%arg0: i32, %arg1: i32, %arg2: i32) -> (i32, i32, i32) {
    %c0_i32 = arith.constant 0 : i32
    return %arg0, %arg2, %arg1 : i32, i32, i32
  }
  func.func @transform_2(%arg0: i32, %arg1: i32, %arg2: i32) -> (i32, i32, i32) {
    %c0_i32 = arith.constant 0 : i32
    %c0_i32_0 = arith.constant 0 : i32
    return %arg0, %arg1, %c0_i32 : i32, i32, i32
  }
  func.func @transform_3(%arg0: i32, %arg1: i32, %arg2: i32) -> (i32, i32, i32) {
    %c0_i32 = arith.constant 0 : i32
    return %arg0, %arg1, %arg2 : i32, i32, i32
  }
}

</mosaic_0001>

<llo_original>
// kernel: hetgsl_forward.10
$region0: #{hetgsl_forward.10}
  #allocation0 [shape = 'u32[]', space=smem, size = 0x4, offset = 0x4, fixed_abs, tag = 'smem constant byte address 0x4 - core index']
  #allocation1 [shape = 'u32[144,128]{1,0:T(1,128)}', space=vmem, size = 0x12000, scoped, tag = 'internal scratch']
  %s0 = inlined_call_operand.vmem [shape: f32[128,128], index: 0, kind: input, shape index: {}]
  %s1 = inlined_call_operand.vmem [shape: f32[128,128], index: 1, kind: input, shape index: {}]
  %s2 = inlined_call_operand.vmem [shape: f32[1,128], index: 2, kind: input, shape index: {}]
  %s3 = inlined_call_operand.vmem [shape: f32[128,128], index: 3, kind: output, shape index: {}]
  %s4 = sld [smem:[#allocation0]]
  $region22: #{hetgsl_forward.10} parent=0
    _
  %s6 = ssub.s32 1, %s4
  %s7 = scalar_select 0, %s6, %s4
  // Predicated region
  $region2: #{hetgsl_forward.10} parent=0 // pred_check
    _
  $region3: #{hetgsl_forward.10} parent=0 // pred_check_branch
    %9 = sbr.rel (0) target = $region5
  $region4: #{hetgsl_forward.10} parent=0 // pred_region
    _
  $region5: #{hetgsl_forward.10} parent=0 // pred_fallthru
    _
  // Predicated region
  $region6: #{hetgsl_forward.10} parent=0 // pred_check
    _
  $region7: #{hetgsl_forward.10} parent=0 // pred_check_branch
    %11 = sbr.rel (0) target = $region9
  $region8: #{hetgsl_forward.10} parent=0 // pred_region
    _
  $region9: #{hetgsl_forward.10} parent=0 // pred_fallthru
    _
  // Predicated region
  $region10: #{hetgsl_forward.10} parent=0 // pred_check
    _
  $region11: #{hetgsl_forward.10} parent=0 // pred_check_branch
    %13 = sbr.rel (0) target = $region13
  $region12: #{hetgsl_forward.10} parent=0 // pred_region
    _
  $region13: #{hetgsl_forward.10} parent=0 // pred_fallthru
    _
  %v14 = vld [vmem:[%s0] sm:$0xff]
  %v15 = vld [vmem:[%s0 + $0x8] sm:$0xff]
  %v16 = vld [vmem:[%s0 + $0x10] sm:$0xff]
  %v17 = vld [vmem:[%s0 + $0x18] sm:$0xff]
  %v18 = vld [vmem:[%s0 + $0x20] sm:$0xff]
  %v19 = vld [vmem:[%s0 + $0x28] sm:$0xff]
  %v20 = vld [vmem:[%s0 + $0x30] sm:$0xff]
  %v21 = vld [vmem:[%s0 + $0x38] sm:$0xff]
  %v22 = vld [vmem:[%s0 + $0x40] sm:$0xff]
  %v23 = vld [vmem:[%s0 + $0x48] sm:$0xff]
  %v24 = vld [vmem:[%s0 + $0x50] sm:$0xff]
  %v25 = vld [vmem:[%s0 + $0x58] sm:$0xff]
  %v26 = vld [vmem:[%s0 + $0x60] sm:$0xff]
  %v27 = vld [vmem:[%s0 + $0x68] sm:$0xff]
  %v28 = vld [vmem:[%s0 + $0x70] sm:$0xff]
  %v29 = vld [vmem:[%s0 + $0x78] sm:$0xff]
  %v30 = vld [vmem:[%s1] sm:$0xff]
  %v31 = vld [vmem:[%s1 + $0x8] sm:$0xff]
  %v32 = vld [vmem:[%s1 + $0x10] sm:$0xff]
  %v33 = vld [vmem:[%s1 + $0x18] sm:$0xff]
  %v34 = vld [vmem:[%s1 + $0x20] sm:$0xff]
  %v35 = vld [vmem:[%s1 + $0x28] sm:$0xff]
  %v36 = vld [vmem:[%s1 + $0x30] sm:$0xff]
  %v37 = vld [vmem:[%s1 + $0x38] sm:$0xff]
  %v38 = vld [vmem:[%s1 + $0x40] sm:$0xff]
  %v39 = vld [vmem:[%s1 + $0x48] sm:$0xff]
  %v40 = vld [vmem:[%s1 + $0x50] sm:$0xff]
  %v41 = vld [vmem:[%s1 + $0x58] sm:$0xff]
  %v42 = vld [vmem:[%s1 + $0x60] sm:$0xff]
  %v43 = vld [vmem:[%s1 + $0x68] sm:$0xff]
  %v44 = vld [vmem:[%s1 + $0x70] sm:$0xff]
  %v45 = vld [vmem:[%s1 + $0x78] sm:$0xff]
  %v46 = vld [vmem:[%s2] sm:$0x1]
  %v48 = vlaneseq
  %v49 = vshrl.u32 %v48, 7
  %v50 = vsub.s32 0, %v49
  %v51 = vrot.slane %v46, %v50
  %53 = vmatprep.subr.mxu0 0.0
  %54 = vmatpush1.msra.mxu0 %v30
  %55 = vmatprep.subr.mxu0 0.0
  %56 = vmatpush1.msra.mxu0 %v31
  %57 = vmatprep.subr.mxu0 0.0
  %58 = vmatpush1.msra.mxu0 %v32
  %59 = vmatprep.subr.mxu0 0.0
  %60 = vmatpush1.msra.mxu0 %v33
  %61 = vmatprep.subr.mxu0 0.0
  %62 = vmatpush1.msra.mxu0 %v34
  %63 = vmatprep.subr.mxu0 0.0
  %64 = vmatpush1.msra.mxu0 %v35
  %65 = vmatprep.subr.mxu0 0.0
  %66 = vmatpush1.msra.mxu0 %v36
  %67 = vmatprep.subr.mxu0 0.0
  %68 = vmatpush1.msra.mxu0 %v37
  %69 = vmatprep.subr.mxu0 0.0
  %70 = vmatpush1.msra.mxu0 %v38
  %71 = vmatprep.subr.mxu0 0.0
  %72 = vmatpush1.msra.mxu0 %v39
  %73 = vmatprep.subr.mxu0 0.0
  %74 = vmatpush1.msra.mxu0 %v40
  %75 = vmatprep.subr.mxu0 0.0
  %76 = vmatpush1.msra.mxu0 %v41
  %77 = vmatprep.subr.mxu0 0.0
  %78 = vmatpush1.msra.mxu0 %v42
  %79 = vmatprep.subr.mxu0 0.0
  %80 = vmatpush1.msra.mxu0 %v43
  %81 = vmatprep.subr.mxu0 0.0
  %82 = vmatpush1.msra.mxu0 %v44
  %83 = vmatprep.subr.mxu0 0.0
  %84 = vmatpush1.msra.mxu0 %v45
  %85 = vmatprep.subr.mxu0 0.0
  %86 = vmatpush1.msra.mxu0 0.0
  %87 = vmatprep.subr.mxu0 0.0
  %88 = vmatpush1.msra.mxu0 0.0
  %89 = vmatprep.subr.mxu0 0.0
  %90 = vmatpush1.msra.mxu0 0.0
  %91 = vmatprep.subr.mxu0 0.0
  %92 = vmatpush1.msra.mxu0 0.0
  %93 = vmatprep.subr.mxu0 0.0
  %94 = vmatpush1.msra.mxu0 0.0
  %95 = vmatprep.subr.mxu0 0.0
  %96 = vmatpush1.msra.mxu0 0.0
  %97 = vmatprep.subr.mxu0 0.0
  %98 = vmatpush1.msra.mxu0 0.0
  %99 = vmatprep.subr.mxu0 0.0
  %100 = vmatpush1.msra.mxu0 0.0
  %101 = vmatprep.subr.mxu0 0.0
  %102 = vmatpush1.msra.mxu0 0.0
  %103 = vmatprep.subr.mxu0 0.0
  %104 = vmatpush1.msra.mxu0 0.0
  %105 = vmatprep.subr.mxu0 0.0
  %106 = vmatpush1.msra.mxu0 0.0
  %107 = vmatprep.subr.mxu0 0.0
  %108 = vmatpush1.msra.mxu0 0.0
  %109 = vmatprep.subr.mxu0 0.0
  %110 = vmatpush1.msra.mxu0 0.0
  %111 = vmatprep.subr.mxu0 0.0
  %112 = vmatpush1.msra.mxu0 0.0
  %113 = vmatprep.subr.mxu0 0.0
  %114 = vmatpush1.msra.mxu0 0.0
  %115 = vmatprep.subr.mxu0 0.0
  %116 = vmatpush1.msra.mxu0 0.0
  %117 = vmatprep.mubr.f32.mxu0 0.0
  %118 = vmatmul.mubr.f32.gmra.mrb[0].mxu0 %v14
  %v119 = vpop.f32.mrb[0].mxu0
  %v120 = vadd.f32 %v51, %v119
  %v121 = vpop.f32.mrb[0].mxu0
  %122 = vmatprep.mubr.f32.mxu0 0.0
  %123 = vmatmul.mubr.f32.gmra.mrb[0].mxu0 %v15
  %v124 = vpop.f32.mrb[0].mxu0
  %v125 = vadd.f32 %v51, %v124
  %v126 = vpop.f32.mrb[0].mxu0
  %127 = vmatprep.mubr.f32.mxu0 0.0
  %128 = vmatmul.mubr.f32.gmra.mrb[0].mxu0 %v16
  %v129 = vpop.f32.mrb[0].mxu0
  %v130 = vadd.f32 %v51, %v129
  %v131 = vpop.f32.mrb[0].mxu0
  %132 = vmatprep.mubr.f32.mxu0 0.0
  %133 = vmatmul.mubr.f32.gmra.mrb[0].mxu0 %v17
  %v134 = vpop.f32.mrb[0].mxu0
  %v135 = vadd.f32 %v51, %v134
  %v136 = vpop.f32.mrb[0].mxu0
  %137 = vmatprep.mubr.f32.mxu0 0.0
  %138 = vmatmul.mubr.f32.gmra.mrb[0].mxu0 %v18
  %v139 = vpop.f32.mrb[0].mxu0
  %v140 = vadd.f32 %v51, %v139
  %v141 = vpop.f32.mrb[0].mxu0
  %142 = vmatprep.mubr.f32.mxu0 0.0
  %143 = vmatmul.mubr.f32.gmra.mrb[0].mxu0 %v19
  %v144 = vpop.f32.mrb[0].mxu0
  %v145 = vadd.f32 %v51, %v144
  %v146 = vpop.f32.mrb[0].mxu0
  %147 = vmatprep.mubr.f32.mxu0 0.0
  %148 = vmatmul.mubr.f32.gmra.mrb[0].mxu0 %v20
  %v149 = vpop.f32.mrb[0].mxu0
  %v150 = vadd.f32 %v51, %v149
  %v151 = vpop.f32.mrb[0].mxu0
  %152 = vmatprep.mubr.f32.mxu0 0.0
  %153 = vmatmul.mubr.f32.gmra.mrb[0].mxu0 %v21
  %v154 = vpop.f32.mrb[0].mxu0
  %v155 = vadd.f32 %v51, %v154
  %v156 = vpop.f32.mrb[0].mxu0
  %157 = vmatprep.mubr.f32.mxu0 0.0
  %158 = vmatmul.mubr.f32.gmra.mrb[0].mxu0 %v22
  %v159 = vpop.f32.mrb[0].mxu0
  %v160 = vadd.f32 %v51, %v159
  %v161 = vpop.f32.mrb[0].mxu0
  %162 = vmatprep.mubr.f32.mxu0 0.0
  %163 = vmatmul.mubr.f32.gmra.mrb[0].mxu0 %v23
  %v164 = vpop.f32.mrb[0].mxu0
  %v165 = vadd.f32 %v51, %v164
  %v166 = vpop.f32.mrb[0].mxu0
  %167 = vmatprep.mubr.f32.mxu0 0.0
  %168 = vmatmul.mubr.f32.gmra.mrb[0].mxu0 %v24
  %v169 = vpop.f32.mrb[0].mxu0
  %v170 = vadd.f32 %v51, %v169
  %v171 = vpop.f32.mrb[0].mxu0
  %172 = vmatprep.mubr.f32.mxu0 0.0
  %173 = vmatmul.mubr.f32.gmra.mrb[0].mxu0 %v25
  %v174 = vpop.f32.mrb[0].mxu0
  %v175 = vadd.f32 %v51, %v174
  %v176 = vpop.f32.mrb[0].mxu0
  %177 = vmatprep.mubr.f32.mxu0 0.0
  %178 = vmatmul.mubr.f32.gmra.mrb[0].mxu0 %v26
  %v179 = vpop.f32.mrb[0].mxu0
  %v180 = vadd.f32 %v51, %v179
  %v181 = vpop.f32.mrb[0].mxu0
  %182 = vmatprep.mubr.f32.mxu0 0.0
  %183 = vmatmul.mubr.f32.gmra.mrb[0].mxu0 %v27
  %v184 = vpop.f32.mrb[0].mxu0
  %v185 = vadd.f32 %v51, %v184
  %v186 = vpop.f32.mrb[0].mxu0
  %187 = vmatprep.mubr.f32.mxu0 0.0
  %188 = vmatmul.mubr.f32.gmra.mrb[0].mxu0 %v28
  %v189 = vpop.f32.mrb[0].mxu0
  %v190 = vadd.f32 %v51, %v189
  %v191 = vpop.f32.mrb[0].mxu0
  %192 = vmatprep.mubr.f32.mxu0 0.0
  %193 = vmatmul.mubr.f32.gmra.mrb[0].mxu0 %v29
  %v194 = vpop.f32.mrb[0].mxu0
  %v195 = vadd.f32 %v51, %v194
  %v196 = vpop.f32.mrb[0].mxu0
  %197 = vdwg.mxu0
  %v198 = vmax.f32 %v120, 0.0
  %v199 = vmax.f32 %v125, 0.0
  %v200 = vmax.f32 %v130, 0.0
  %v201 = vmax.f32 %v135, 0.0
  %v202 = vmax.f32 %v140, 0.0
  %v203 = vmax.f32 %v145, 0.0
  %v204 = vmax.f32 %v150, 0.0
  %v205 = vmax.f32 %v155, 0.0
  %v206 = vmax.f32 %v160, 0.0
  %v207 = vmax.f32 %v165, 0.0
  %v208 = vmax.f32 %v170, 0.0
  %v209 = vmax.f32 %v175, 0.0
  %v210 = vmax.f32 %v180, 0.0
  %v211 = vmax.f32 %v185, 0.0
  %v212 = vmax.f32 %v190, 0.0
  %v213 = vmax.f32 %v195, 0.0
  %214 = vst [vmem:[%s3] sm:$0xff] %v198
  %215 = vst [vmem:[%s3 + $0x8] sm:$0xff] %v199
  %216 = vst [vmem:[%s3 + $0x10] sm:$0xff] %v200
  %217 = vst [vmem:[%s3 + $0x18] sm:$0xff] %v201
  %218 = vst [vmem:[%s3 + $0x20] sm:$0xff] %v202
  %219 = vst [vmem:[%s3 + $0x28] sm:$0xff] %v203
  %220 = vst [vmem:[%s3 + $0x30] sm:$0xff] %v204
  %221 = vst [vmem:[%s3 + $0x38] sm:$0xff] %v205
  %222 = vst [vmem:[%s3 + $0x40] sm:$0xff] %v206
  %223 = vst [vmem:[%s3 + $0x48] sm:$0xff] %v207
  %224 = vst [vmem:[%s3 + $0x50] sm:$0xff] %v208
  %225 = vst [vmem:[%s3 + $0x58] sm:$0xff] %v209
  %226 = vst [vmem:[%s3 + $0x60] sm:$0xff] %v210
  %227 = vst [vmem:[%s3 + $0x68] sm:$0xff] %v211
  %228 = vst [vmem:[%s3 + $0x70] sm:$0xff] %v212
  %229 = vst [vmem:[%s3 + $0x78] sm:$0xff] %v213
  // Predicated region
  $region14: #{hetgsl_forward.10} parent=0 // pred_check
    _
  $region15: #{hetgsl_forward.10} parent=0 // pred_check_branch
    %231 = sbr.rel (0) target = $region17
  $region16: #{hetgsl_forward.10} parent=0 // pred_region
    _
  $region17: #{hetgsl_forward.10} parent=0 // pred_fallthru
    _
  // Predicated region
  $region18: #{hetgsl_forward.10} parent=0 // pred_check
    _
  $region19: #{hetgsl_forward.10} parent=0 // pred_check_branch
    %233 = sbr.rel (0) target = $region21
  $region20: #{hetgsl_forward.10} parent=0 // pred_region
    _
  $region21: #{hetgsl_forward.10} parent=0 // pred_fallthru
    _

// kernel: hetgsl_forward.11
$region0: #{hetgsl_forward.11}
  #allocation0 [shape = 'u32[]', space=smem, size = 0x4, offset = 0x4, fixed_abs, tag = 'smem constant byte address 0x4 - core index']
  #allocation1 [shape = 'u32[144,128]{1,0:T(1,128)}', space=vmem, size = 0x12000, scoped, tag = 'internal scratch']
  %s0 = inlined_call_operand.vmem [shape: f32[1,128,128], index: 0, kind: input, shape index: {}]
  %s1 = inlined_call_operand.vmem [shape: f32[2,2,128], index: 1, kind: input, shape index: {}]
  %s2 = inlined_call_operand.vmem [shape: bf16[2,128,256], index: 2, kind: output, shape index: {}]
  %s3 = sld [smem:[#allocation0]]
  $region41: #{hetgsl_forward.11} parent=0
    _
  %s5 = ssub.s32 1, %s3
  %s6 = scalar_select 0, %s5, %s3
  loop: start=0, step=1, limit=4
  $region2: #{hetgsl_forward.11} parent=0 // loop_pre_header
    _
  $region3: #{hetgsl_forward.11} parent=0 // loop_header
    %s8 = sphi 0, %s12
    %p9 = scmp.ge.s32.totalorder %s8, 4
    %s15 = sphi 0, %s27
    %s16 = sphi 0, %s23
    %s17 = sphi 0, %s15
    %s18 = sphi 0, %s16
    %s19 = sphi 0, %s17
    %s20 = sphi 0, %s18
    %s30 = sphi 0, %s32
    %s33 = sphi 0, %s30
    %s34 = sphi 0, %s33
    %s50 = sphi 0, %s34
    %s56 = sphi 0, %s58
    %s59 = sphi 0, %s56
    %s60 = sphi 0, %s59
    %s76 = sphi 0, %s60
    %s84 = sphi 0, %s86
    %s87 = sphi 0, %s84
    %s88 = sphi 0, %s87
    %s104 = sphi 0, %s88
  $region4: #{hetgsl_forward.11} parent=0 // loop_header_branch
    %11 = sbr.rel (%p9) target = $region8
  $region5: #{hetgsl_forward.11} parent=0 // loop_body
    %s13 = ssub.s32 %s8, 1
    %s14 = ssub.s32 %s8, 2
    %s21 = sadd.s32 1, %s16
    %p22 = scmp.ge.s32.totalorder %s21, 1
    %s23 = scalar_select %p22, 0, %s21
    %s24 = sadd.s32 1, %s15
    %s25 = scalar_select %p22, %s24, %s15
    %p26 = scmp.ge.s32.totalorder %s25, 2
    %s27 = scalar_select %p26, 0, %s25
    %s28 = ssub.s32 %s16, %s23
    %p29 = scmp.eq.s32.totalorder %s28, 0
    %s31 = sadd.s32 %s30, 1
    %s32 = scalar_select %p29, %s30, %s31
    %p35 = pneg %p29
    %p36 = scmp.eq.s32.totalorder %s8, 1
    %p37 = por %p35, %p36
    %p38 = scmp.ne.s32.totalorder %s30, %s33
    %p39 = scmp.eq.s32.totalorder %s8, 0
    %p40 = por %p38, %p39
    %p41 = scmp.ne.s32.totalorder %s30, %s33
    %p42 = scmp.eq.s32.totalorder %s13, 1
    %p43 = por %p41, %p42
    %p44 = scmp.ne.s32.totalorder %s33, %s34
    %p45 = scmp.eq.s32.totalorder %s13, 0
    %p46 = por %p44, %p45
    %p47 = scmp.ne.s32.totalorder %s33, %s34
    %p48 = scmp.eq.s32.totalorder %s14, 1
    %p49 = por %p47, %p48
    %p51 = scmp.ne.s32.totalorder %s34, %s50
    %p52 = scmp.eq.s32.totalorder %s14, 0
    %p53 = por %p51, %p52
    %s54 = ssub.s32 %s15, %s27
    %p55 = scmp.eq.s32.totalorder %s54, 0
    %s57 = sadd.s32 %s56, 1
    %s58 = scalar_select %p55, %s56, %s57
    %p61 = pneg %p55
    %p62 = scmp.eq.s32.totalorder %s8, 1
    %p63 = por %p61, %p62
    %p64 = scmp.ne.s32.totalorder %s56, %s59
    %p65 = scmp.eq.s32.totalorder %s8, 0
    %p66 = por %p64, %p65
    %p67 = scmp.ne.s32.totalorder %s56, %s59
    %p68 = scmp.eq.s32.totalorder %s13, 1
    %p69 = por %p67, %p68
    %p70 = scmp.ne.s32.totalorder %s59, %s60
    %p71 = scmp.eq.s32.totalorder %s13, 0
    %p72 = por %p70, %p71
    %p73 = scmp.ne.s32.totalorder %s59, %s60
    %p74 = scmp.eq.s32.totalorder %s14, 1
    %p75 = por %p73, %p74
    %p77 = scmp.ne.s32.totalorder %s60, %s76
    %p78 = scmp.eq.s32.totalorder %s14, 0
    %p79 = por %p77, %p78
    %s80 = ssub.s32 %s15, %s27
    %s81 = ssub.s32 %s16, %s23
    %s82 = sor.u32 %s80, %s81
    %p83 = scmp.eq.s32.totalorder %s82, 0
    %s85 = sadd.s32 %s84, 1
    %s86 = scalar_select %p83, %s84, %s85
    %p89 = pneg %p83
    %p90 = scmp.eq.s32.totalorder %s8, 1
    %p91 = por %p89, %p90
    %p92 = scmp.ne.s32.totalorder %s84, %s87
    %p93 = scmp.eq.s32.totalorder %s8, 0
    %p94 = por %p92, %p93
    %p95 = scmp.ne.s32.totalorder %s84, %s87
    %p96 = scmp.eq.s32.totalorder %s13, 1
    %p97 = por %p95, %p96
    %p98 = scmp.ne.s32.totalorder %s87, %s88
    %p99 = scmp.eq.s32.totalorder %s13, 0
    %p100 = por %p98, %p99
    %p101 = scmp.ne.s32.totalorder %s87, %s88
    %p102 = scmp.eq.s32.totalorder %s14, 1
    %p103 = por %p101, %p102
    %p105 = scmp.ne.s32.totalorder %s88, %s104
    %p106 = scmp.eq.s32.totalorder %s14, 0
    %p107 = por %p105, %p106
    %p108 = scmp.le.s32.totalorder 1, %s8
    %p109 = scmp.lt.s32.totalorder %s8, 3
    %p110 = pnand %p108, %p109
    %p111 = pneg %p110
    // Predicated region
    $region9: #{hetgsl_forward.11} parent=5 // pred_check
      _
    $region10: #{hetgsl_forward.11} parent=5 // pred_check_branch
      %113 = sbr.rel (%p110) target = $region12
    $region11: #{hetgsl_forward.11} parent=5 // pred_region
      %s114 = ssub.s32 %s8, 1
      // Predicated region
      $region13: #{hetgsl_forward.11} parent=11 // pred_check
        %p115 = pneg %p46
      $region14: #{hetgsl_forward.11} parent=11 // pred_check_branch
        %117 = sbr.rel (%p115) target = $region16
      $region15: #{hetgsl_forward.11} parent=11 // pred_region
        %s118 = smul.u32 16, %s18
        %p119 = scmp.lt.s32.totalorder %s118, 15
        %s120 = scalar_select %p119, %s118, 15
        %s121 = smul.addr %s120, 8
        %s122 = scalar_lea.vmem %s0, %s121
        %s123 = smul.u32 16, %s18
      $region16: #{hetgsl_forward.11} parent=11 // pred_fallthru
        _
    $region12: #{hetgsl_forward.11} parent=5 // pred_fallthru
      _
    %p124 = scmp.lt.s32.totalorder %s8, 2
    // Predicated region
    $region17: #{hetgsl_forward.11} parent=5 // pred_check
      %p125 = pneg %p124
    $region18: #{hetgsl_forward.11} parent=5 // pred_check_branch
      %127 = sbr.rel (%p125) target = $region20
    $region19: #{hetgsl_forward.11} parent=5 // pred_region
      // Predicated region
      $region21: #{hetgsl_forward.11} parent=19 // pred_check
        %p128 = pneg %p66
      $region22: #{hetgsl_forward.11} parent=19 // pred_check_branch
        %130 = sbr.rel (%p128) target = $region24
      $region23: #{hetgsl_forward.11} parent=19 // pred_region
        %p131 = scmp.lt.s32.totalorder %s15, 1
        %s132 = scalar_select %p131, %s15, 1
        %s133 = smul.addr %s132, 2
        %s134 = scalar_lea.vmem %s1, %s133
      $region24: #{hetgsl_forward.11} parent=19 // pred_fallthru
        _
    $region20: #{hetgsl_forward.11} parent=5 // pred_fallthru
      _
    %p135 = scmp.le.s32.totalorder 1, %s8
    %p136 = scmp.lt.s32.totalorder %s8, 3
    %p137 = pnand %p135, %p136
    %p138 = pneg %p137
    // Predicated region
    $region25: #{hetgsl_forward.11} parent=5 // pred_check
      _
    $region26: #{hetgsl_forward.11} parent=5 // pred_check_branch
      %140 = sbr.rel (%p137) target = $region28
    $region27: #{hetgsl_forward.11} parent=5 // pred_region
      %s141 = ssub.s32 %s8, 1
      %s142 = smul.u32 16, %s18
      %p143 = scmp.lt.s32.totalorder %s142, 15
      %s144 = scalar_select %p143, %s142, 15
      %s145 = smul.addr %s144, 8
      %s146 = scalar_lea.vmem %s0, %s145
      %p147 = pneg %p46
      %p148 = pneg %p43
      %p149 = scmp.lt.s32.totalorder %s17, 1
      %s150 = scalar_select %p149, %s17, 1
      %s151 = smul.addr %s150, 2
      %s152 = scalar_lea.vmem %s1, %s151
      %p153 = pneg %p72
      %p154 = pneg %p69
      %p155 = pneg %p100
      %p156 = pneg %p97
      %s157 = smul.u32 16, %s18
      %p158 = scmp.lt.s32.totalorder %s17, 1
      %s159 = scalar_select %p158, %s17, 1
      %p160 = scmp.lt.s32.totalorder %s157, 15
      %s161 = scalar_select %p160, %s157, 15
      %s162 = smul.addr %s161, 2
      %s163 = smul.addr %s159, 32
      %s164 = sadd.s32 %s162, %s163
      %s165 = smul.addr %s164, 4
      %s166 = scalar_lea.vmem %s2, %s165
      %s167 = smul.u32 16, %s18
      %p168 = scmp.lt.s32.totalorder %s167, 15
      %s169 = scalar_select %p168, %s167, 15
      %s170 = smul.addr %s169, 8
      %s171 = scalar_lea.vmem %s0, %s170
      %s172 = smul.u32 16, %s18
      %p173 = scmp.lt.s32.totalorder %s17, 1
      %s174 = scalar_select %p173, %s17, 1
      %s175 = smul.addr %s174, 2
      %s176 = scalar_lea.vmem %s1, %s175
      %s177 = smul.u32 16, %s18
      %p178 = scmp.lt.s32.totalorder %s17, 1
      %s179 = scalar_select %p178, %s17, 1
      %p180 = scmp.lt.s32.totalorder %s177, 15
      %s181 = scalar_select %p180, %s177, 15
      %s182 = smul.addr %s181, 2
      %s183 = smul.addr %s179, 32
      %s184 = sadd.s32 %s182, %s183
      %s185 = smul.addr %s184, 4
      %s186 = scalar_lea.vmem %s2, %s185
      %s187 = smul.u32 16, %s18
      %v188 = vld [vmem:[%s171] sm:$0xff]
      %v189 = vld [vmem:[%s171 + $0x8] sm:$0xff]
      %v190 = vld [vmem:[%s171 + $0x10] sm:$0xff]
      %v191 = vld [vmem:[%s171 + $0x18] sm:$0xff]
      %v192 = vld [vmem:[%s171 + $0x20] sm:$0xff]
      %v193 = vld [vmem:[%s171 + $0x28] sm:$0xff]
      %v194 = vld [vmem:[%s171 + $0x30] sm:$0xff]
      %v195 = vld [vmem:[%s171 + $0x38] sm:$0xff]
      %v196 = vld [vmem:[%s171 + $0x40] sm:$0xff]
      %v197 = vld [vmem:[%s171 + $0x48] sm:$0xff]
      %v198 = vld [vmem:[%s171 + $0x50] sm:$0xff]
      %v199 = vld [vmem:[%s171 + $0x58] sm:$0xff]
      %v200 = vld [vmem:[%s171 + $0x60] sm:$0xff]
      %v201 = vld [vmem:[%s171 + $0x68] sm:$0xff]
      %v202 = vld [vmem:[%s171 + $0x70] sm:$0xff]
      %v203 = vld [vmem:[%s171 + $0x78] sm:$0xff]
      %v204 = vld [vmem:[%s176] sm:$0x3]
      %v205 = vlaneseq
      %v206 = vshrl.u32 %v205, 7
      %v207 = vsub.s32 0, %v206
      %v208 = vrot.slane %v204, %v207
      %v209 = vmul.f32 %v188, %v208
      %v210 = vmul.f32 %v189, %v208
      %v211 = vmul.f32 %v190, %v208
      %v212 = vmul.f32 %v191, %v208
      %v213 = vmul.f32 %v192, %v208
      %v214 = vmul.f32 %v193, %v208
      %v215 = vmul.f32 %v194, %v208
      %v216 = vmul.f32 %v195, %v208
      %v217 = vmul.f32 %v196, %v208
      %v218 = vmul.f32 %v197, %v208
      %v219 = vmul.f32 %v198, %v208
      %v220 = vmul.f32 %v199, %v208
      %v221 = vmul.f32 %v200, %v208
      %v222 = vmul.f32 %v201, %v208
      %v223 = vmul.f32 %v202, %v208
      %v224 = vmul.f32 %v203, %v208
      %v225 = vmul.f32 %v209, %v209
      %v226 = vmul.f32 %v210, %v210
      %v227 = vmul.f32 %v211, %v211
      %v228 = vmul.f32 %v212, %v212
      %v229 = vmul.f32 %v213, %v213
      %v230 = vmul.f32 %v214, %v214
      %v231 = vmul.f32 %v215, %v215
      %v232 = vmul.f32 %v216, %v216
      %v233 = vmul.f32 %v217, %v217
      %v234 = vmul.f32 %v218, %v218
      %v235 = vmul.f32 %v219, %v219
      %v236 = vmul.f32 %v220, %v220
      %v237 = vmul.f32 %v221, %v221
      %v238 = vmul.f32 %v222, %v222
      %v239 = vmul.f32 %v223, %v223
      %v240 = vmul.f32 %v224, %v224
      %241 = vadd.xlane.f32.xlu0 %v225
      %v242 = vpop.xlane.xlu0 %241
      %243 = vadd.xlane.f32.xlu0 %v226
      %v244 = vpop.xlane.xlu0 %243
      %245 = vadd.xlane.f32.xlu0 %v227
      %v246 = vpop.xlane.xlu0 %245
      %247 = vadd.xlane.f32.xlu0 %v228
      %v248 = vpop.xlane.xlu0 %247
      %249 = vadd.xlane.f32.xlu0 %v229
      %v250 = vpop.xlane.xlu0 %249
      %251 = vadd.xlane.f32.xlu0 %v230
      %v252 = vpop.xlane.xlu0 %251
      %253 = vadd.xlane.f32.xlu0 %v231
      %v254 = vpop.xlane.xlu0 %253
      %255 = vadd.xlane.f32.xlu0 %v232
      %v256 = vpop.xlane.xlu0 %255
      %257 = vadd.xlane.f32.xlu0 %v233
      %v258 = vpop.xlane.xlu0 %257
      %259 = vadd.xlane.f32.xlu0 %v234
      %v260 = vpop.xlane.xlu0 %259
      %261 = vadd.xlane.f32.xlu0 %v235
      %v262 = vpop.xlane.xlu0 %261
      %263 = vadd.xlane.f32.xlu0 %v236
      %v264 = vpop.xlane.xlu0 %263
      %265 = vadd.xlane.f32.xlu0 %v237
      %v266 = vpop.xlane.xlu0 %265
      %267 = vadd.xlane.f32.xlu0 %v238
      %v268 = vpop.xlane.xlu0 %267
      %269 = vadd.xlane.f32.xlu0 %v239
      %v270 = vpop.xlane.xlu0 %269
      %271 = vadd.xlane.f32.xlu0 %v240
      %v272 = vpop.xlane.xlu0 %271
      %v273 = vmax.f32 %v242, 1e-16
      %v274 = vmax.f32 %v244, 1e-16
      %v275 = vmax.f32 %v246, 1e-16
      %v276 = vmax.f32 %v248, 1e-16
      %v277 = vmax.f32 %v250, 1e-16
      %v278 = vmax.f32 %v252, 1e-16
      %v279 = vmax.f32 %v254, 1e-16
      %v280 = vmax.f32 %v256, 1e-16
      %v281 = vmax.f32 %v258, 1e-16
      %v282 = vmax.f32 %v260, 1e-16
      %v283 = vmax.f32 %v262, 1e-16
      %v284 = vmax.f32 %v264, 1e-16
      %v285 = vmax.f32 %v266, 1e-16
      %v286 = vmax.f32 %v268, 1e-16
      %v287 = vmax.f32 %v270, 1e-16
      %v288 = vmax.f32 %v272, 1e-16
      %v289 = vrsqrt.pop %v273
      %v290 = vrsqrt.pop %v274
      %v291 = vrsqrt.pop %v275
      %v292 = vrsqrt.pop %v276
      %v293 = vrsqrt.pop %v277
      %v294 = vrsqrt.pop %v278
      %v295 = vrsqrt.pop %v279
      %v296 = vrsqrt.pop %v280
      %v297 = vrsqrt.pop %v281
      %v298 = vrsqrt.pop %v282
      %v299 = vrsqrt.pop %v283
      %v300 = vrsqrt.pop %v284
      %v301 = vrsqrt.pop %v285
      %v302 = vrsqrt.pop %v286
      %v303 = vrsqrt.pop %v287
      %v304 = vrsqrt.pop %v288
      %v305 = vmul.f32 %v209, %v289
      %v306 = vmul.f32 %v210, %v290
      %v307 = vmul.f32 %v211, %v291
      %v308 = vmul.f32 %v212, %v292
      %v309 = vmul.f32 %v213, %v293
      %v310 = vmul.f32 %v214, %v294
      %v311 = vmul.f32 %v215, %v295
      %v312 = vmul.f32 %v216, %v296
      %v313 = vmul.f32 %v217, %v297
      %v314 = vmul.f32 %v218, %v298
      %v315 = vmul.f32 %v219, %v299
      %v316 = vmul.f32 %v220, %v300
      %v317 = vmul.f32 %v221, %v301
      %v318 = vmul.f32 %v222, %v302
      %v319 = vmul.f32 %v223, %v303
      %v320 = vmul.f32 %v224, %v304
      %v321 = vpack.c.bf16 %v306, %v305
      %v322 = vpack.c.bf16 %v308, %v307
      %v323 = vpack.c.bf16 %v310, %v309
      %v324 = vpack.c.bf16 %v312, %v311
      %v325 = vpack.c.bf16 %v314, %v313
      %v326 = vpack.c.bf16 %v316, %v315
      %v327 = vpack.c.bf16 %v318, %v317
      %v328 = vpack.c.bf16 %v320, %v319
      %v337 = vunpack.c.l.b16 %v321
      %v338 = vunpack.c.h.b16 %v321
      %v339 = vunpack.c.l.b16 %v322
      %v340 = vunpack.c.h.b16 %v322
      %v341 = vunpack.c.l.b16 %v323
      %v342 = vunpack.c.h.b16 %v323
      %v343 = vunpack.c.l.b16 %v324
      %v344 = vunpack.c.h.b16 %v324
      %v345 = vunpack.c.l.b16 %v325
      %v346 = vunpack.c.h.b16 %v325
      %v347 = vunpack.c.l.b16 %v326
      %v348 = vunpack.c.h.b16 %v326
      %v349 = vunpack.c.l.b16 %v327
      %v350 = vunpack.c.h.b16 %v327
      %v351 = vunpack.c.l.b16 %v328
      %v352 = vunpack.c.h.b16 %v328
      %v353 = vpack.c.b16 %v337, %v337
      %v354 = vpack.c.b16 %v338, %v338
      %v355 = vpack.c.b16 %v339, %v339
      %v356 = vpack.c.b16 %v340, %v340
      %v357 = vpack.c.b16 %v341, %v341
      %v358 = vpack.c.b16 %v342, %v342
      %v359 = vpack.c.b16 %v343, %v343
      %v360 = vpack.c.b16 %v344, %v344
      %v361 = vpack.c.b16 %v345, %v345
      %v362 = vpack.c.b16 %v346, %v346
      %v363 = vpack.c.b16 %v347, %v347
      %v364 = vpack.c.b16 %v348, %v348
      %v365 = vpack.c.b16 %v349, %v349
      %v366 = vpack.c.b16 %v350, %v350
      %v367 = vpack.c.b16 %v351, %v351
      %v368 = vpack.c.b16 %v352, %v352
      %385 = vst [vmem:[%s186] sm:$0xf] %v353
      %386 = vst [vmem:[%s186 + $0x8] sm:$0xf] %v354
      %387 = vst [vmem:[%s186 + $0x10] sm:$0xf] %v355
      %388 = vst [vmem:[%s186 + $0x18] sm:$0xf] %v356
      %389 = vst [vmem:[%s186 + $0x20] sm:$0xf] %v357
      %390 = vst [vmem:[%s186 + $0x28] sm:$0xf] %v358
      %391 = vst [vmem:[%s186 + $0x30] sm:$0xf] %v359
      %392 = vst [vmem:[%s186 + $0x38] sm:$0xf] %v360
      %393 = vst [vmem:[%s186 + $0x40] sm:$0xf] %v361
      %394 = vst [vmem:[%s186 + $0x48] sm:$0xf] %v362
      %395 = vst [vmem:[%s186 + $0x50] sm:$0xf] %v363
      %396 = vst [vmem:[%s186 + $0x58] sm:$0xf] %v364
      %397 = vst [vmem:[%s186 + $0x60] sm:$0xf] %v365
      %398 = vst [vmem:[%s186 + $0x68] sm:$0xf] %v366
      %399 = vst [vmem:[%s186 + $0x70] sm:$0xf] %v367
      %400 = vst [vmem:[%s186 + $0x78] sm:$0xf] %v368
      %v401 = vlaneseq
      %v402 = vshrl.u32 %v401, 7
      %v403 = vsub.s32 1, %v402
      %v404 = vrot.slane %v204, %v403
      %v405 = vmul.f32 %v188, %v404
      %v406 = vmul.f32 %v189, %v404
      %v407 = vmul.f32 %v190, %v404
      %v408 = vmul.f32 %v191, %v404
      %v409 = vmul.f32 %v192, %v404
      %v410 = vmul.f32 %v193, %v404
      %v411 = vmul.f32 %v194, %v404
      %v412 = vmul.f32 %v195, %v404
      %v413 = vmul.f32 %v196, %v404
      %v414 = vmul.f32 %v197, %v404
      %v415 = vmul.f32 %v198, %v404
      %v416 = vmul.f32 %v199, %v404
      %v417 = vmul.f32 %v200, %v404
      %v418 = vmul.f32 %v201, %v404
      %v419 = vmul.f32 %v202, %v404
      %v420 = vmul.f32 %v203, %v404
      %v421 = vmul.f32 %v405, %v405
      %v422 = vmul.f32 %v406, %v406
      %v423 = vmul.f32 %v407, %v407
      %v424 = vmul.f32 %v408, %v408
      %v425 = vmul.f32 %v409, %v409
      %v426 = vmul.f32 %v410, %v410
      %v427 = vmul.f32 %v411, %v411
      %v428 = vmul.f32 %v412, %v412
      %v429 = vmul.f32 %v413, %v413
      %v430 = vmul.f32 %v414, %v414
      %v431 = vmul.f32 %v415, %v415
      %v432 = vmul.f32 %v416, %v416
      %v433 = vmul.f32 %v417, %v417
      %v434 = vmul.f32 %v418, %v418
      %v435 = vmul.f32 %v419, %v419
      %v436 = vmul.f32 %v420, %v420
      %437 = vadd.xlane.f32.xlu0 %v421
      %v438 = vpop.xlane.xlu0 %437
      %439 = vadd.xlane.f32.xlu0 %v422
      %v440 = vpop.xlane.xlu0 %439
      %441 = vadd.xlane.f32.xlu0 %v423
      %v442 = vpop.xlane.xlu0 %441
      %443 = vadd.xlane.f32.xlu0 %v424
      %v444 = vpop.xlane.xlu0 %443
      %445 = vadd.xlane.f32.xlu0 %v425
      %v446 = vpop.xlane.xlu0 %445
      %447 = vadd.xlane.f32.xlu0 %v426
      %v448 = vpop.xlane.xlu0 %447
      %449 = vadd.xlane.f32.xlu0 %v427
      %v450 = vpop.xlane.xlu0 %449
      %451 = vadd.xlane.f32.xlu0 %v428
      %v452 = vpop.xlane.xlu0 %451
      %453 = vadd.xlane.f32.xlu0 %v429
      %v454 = vpop.xlane.xlu0 %453
      %455 = vadd.xlane.f32.xlu0 %v430
      %v456 = vpop.xlane.xlu0 %455
      %457 = vadd.xlane.f32.xlu0 %v431
      %v458 = vpop.xlane.xlu0 %457
      %459 = vadd.xlane.f32.xlu0 %v432
      %v460 = vpop.xlane.xlu0 %459
      %461 = vadd.xlane.f32.xlu0 %v433
      %v462 = vpop.xlane.xlu0 %461
      %463 = vadd.xlane.f32.xlu0 %v434
      %v464 = vpop.xlane.xlu0 %463
      %465 = vadd.xlane.f32.xlu0 %v435
      %v466 = vpop.xlane.xlu0 %465
      %467 = vadd.xlane.f32.xlu0 %v436
      %v468 = vpop.xlane.xlu0 %467
      %v469 = vmax.f32 %v438, 1e-16
      %v470 = vmax.f32 %v440, 1e-16
      %v471 = vmax.f32 %v442, 1e-16
      %v472 = vmax.f32 %v444, 1e-16
      %v473 = vmax.f32 %v446, 1e-16
      %v474 = vmax.f32 %v448, 1e-16
      %v475 = vmax.f32 %v450, 1e-16
      %v476 = vmax.f32 %v452, 1e-16
      %v477 = vmax.f32 %v454, 1e-16
      %v478 = vmax.f32 %v456, 1e-16
      %v479 = vmax.f32 %v458, 1e-16
      %v480 = vmax.f32 %v460, 1e-16
      %v481 = vmax.f32 %v462, 1e-16
      %v482 = vmax.f32 %v464, 1e-16
      %v483 = vmax.f32 %v466, 1e-16
      %v484 = vmax.f32 %v468, 1e-16
      %v485 = vrsqrt.pop %v469
      %v486 = vrsqrt.pop %v470
      %v487 = vrsqrt.pop %v471
      %v488 = vrsqrt.pop %v472
      %v489 = vrsqrt.pop %v473
      %v490 = vrsqrt.pop %v474
      %v491 = vrsqrt.pop %v475
      %v492 = vrsqrt.pop %v476
      %v493 = vrsqrt.pop %v477
      %v494 = vrsqrt.pop %v478
      %v495 = vrsqrt.pop %v479
      %v496 = vrsqrt.pop %v480
      %v497 = vrsqrt.pop %v481
      %v498 = vrsqrt.pop %v482
      %v499 = vrsqrt.pop %v483
      %v500 = vrsqrt.pop %v484
      %v501 = vmul.f32 %v405, %v485
      %v502 = vmul.f32 %v406, %v486
      %v503 = vmul.f32 %v407, %v487
      %v504 = vmul.f32 %v408, %v488
      %v505 = vmul.f32 %v409, %v489
      %v506 = vmul.f32 %v410, %v490
      %v507 = vmul.f32 %v411, %v491
      %v508 = vmul.f32 %v412, %v492
      %v509 = vmul.f32 %v413, %v493
      %v510 = vmul.f32 %v414, %v494
      %v511 = vmul.f32 %v415, %v495
      %v512 = vmul.f32 %v416, %v496
      %v513 = vmul.f32 %v417, %v497
      %v514 = vmul.f32 %v418, %v498
      %v515 = vmul.f32 %v419, %v499
      %v516 = vmul.f32 %v420, %v500
      %v517 = vpack.c.bf16 %v502, %v501
      %v518 = vpack.c.bf16 %v504, %v503
      %v519 = vpack.c.bf16 %v506, %v505
      %v520 = vpack.c.bf16 %v508, %v507
      %v521 = vpack.c.bf16 %v510, %v509
      %v522 = vpack.c.bf16 %v512, %v511
      %v523 = vpack.c.bf16 %v514, %v513
      %v524 = vpack.c.bf16 %v516, %v515
      %v533 = vunpack.c.l.b16 %v517
      %v534 = vunpack.c.h.b16 %v517
      %v535 = vunpack.c.l.b16 %v518
      %v536 = vunpack.c.h.b16 %v518
      %v537 = vunpack.c.l.b16 %v519
      %v538 = vunpack.c.h.b16 %v519
      %v539 = vunpack.c.l.b16 %v520
      %v540 = vunpack.c.h.b16 %v520
      %v541 = vunpack.c.l.b16 %v521
      %v542 = vunpack.c.h.b16 %v521
      %v543 = vunpack.c.l.b16 %v522
      %v544 = vunpack.c.h.b16 %v522
      %v545 = vunpack.c.l.b16 %v523
      %v546 = vunpack.c.h.b16 %v523
      %v547 = vunpack.c.l.b16 %v524
      %v548 = vunpack.c.h.b16 %v524
      %v549 = vpack.c.b16 %v533, %v533
      %v550 = vpack.c.b16 %v534, %v534
      %v551 = vpack.c.b16 %v535, %v535
      %v552 = vpack.c.b16 %v536, %v536
      %v553 = vpack.c.b16 %v537, %v537
      %v554 = vpack.c.b16 %v538, %v538
      %v555 = vpack.c.b16 %v539, %v539
      %v556 = vpack.c.b16 %v540, %v540
      %v557 = vpack.c.b16 %v541, %v541
      %v558 = vpack.c.b16 %v542, %v542
      %v559 = vpack.c.b16 %v543, %v543
      %v560 = vpack.c.b16 %v544, %v544
      %v561 = vpack.c.b16 %v545, %v545
      %v562 = vpack.c.b16 %v546, %v546
      %v563 = vpack.c.b16 %v547, %v547
      %v564 = vpack.c.b16 %v548, %v548
      %581 = vst [vmem:[%s186 + $0x4] sm:$0xf] %v549
      %582 = vst [vmem:[%s186 + $0xc] sm:$0xf] %v550
      %583 = vst [vmem:[%s186 + $0x14] sm:$0xf] %v551
      %584 = vst [vmem:[%s186 + $0x1c] sm:$0xf] %v552
      %585 = vst [vmem:[%s186 + $0x24] sm:$0xf] %v553
      %586 = vst [vmem:[%s186 + $0x2c] sm:$0xf] %v554
      %587 = vst [vmem:[%s186 + $0x34] sm:$0xf] %v555
      %588 = vst [vmem:[%s186 + $0x3c] sm:$0xf] %v556
      %589 = vst [vmem:[%s186 + $0x44] sm:$0xf] %v557
      %590 = vst [vmem:[%s186 + $0x4c] sm:$0xf] %v558
      %591 = vst [vmem:[%s186 + $0x54] sm:$0xf] %v559
      %592 = vst [vmem:[%s186 + $0x5c] sm:$0xf] %v560
      %593 = vst [vmem:[%s186 + $0x64] sm:$0xf] %v561
      %594 = vst [vmem:[%s186 + $0x6c] sm:$0xf] %v562
      %595 = vst [vmem:[%s186 + $0x74] sm:$0xf] %v563
      %596 = vst [vmem:[%s186 + $0x7c] sm:$0xf] %v564
      %s597 = smul.u32 16, %s18
      %p598 = scmp.lt.s32.totalorder %s17, 1
      %s599 = scalar_select %p598, %s17, 1
      %p600 = scmp.lt.s32.totalorder %s597, 15
      %s601 = scalar_select %p600, %s597, 15
      %s602 = smul.addr %s601, 2
      %s603 = smul.addr %s599, 32
      %s604 = sadd.s32 %s602, %s603
      %s605 = smul.addr %s604, 4
      %s606 = scalar_lea.vmem %s2, %s605
      // Predicated region
      $region29: #{hetgsl_forward.11} parent=27 // pred_check
        %p607 = pneg %p97
      $region30: #{hetgsl_forward.11} parent=27 // pred_check_branch
        %609 = sbr.rel (%p607) target = $region32
      $region31: #{hetgsl_forward.11} parent=27 // pred_region
        %s610 = smul.u32 16, %s18
      $region32: #{hetgsl_forward.11} parent=27 // pred_fallthru
        _
    $region28: #{hetgsl_forward.11} parent=5 // pred_fallthru
      _
    %p611 = scmp.le.s32.totalorder 2, %s8
    // Predicated region
    $region33: #{hetgsl_forward.11} parent=5 // pred_check
      %p612 = pneg %p611
    $region34: #{hetgsl_forward.11} parent=5 // pred_check_branch
      %614 = sbr.rel (%p612) target = $region36
    $region35: #{hetgsl_forward.11} parent=5 // pred_region
      %s615 = ssub.s32 %s8, 2
      // Predicated region
      $region37: #{hetgsl_forward.11} parent=35 // pred_check
        %p616 = pneg %p103
      $region38: #{hetgsl_forward.11} parent=35 // pred_check_branch
        %618 = sbr.rel (%p616) target = $region40
      $region39: #{hetgsl_forward.11} parent=35 // pred_region
        %s619 = smul.u32 16, %s20
        %p620 = scmp.lt.s32.totalorder %s19, 1
        %s621 = scalar_select %p620, %s19, 1
        %p622 = scmp.lt.s32.totalorder %s619, 15
        %s623 = scalar_select %p622, %s619, 15
        %s624 = smul.addr %s623, 2
        %s625 = smul.addr %s621, 32
        %s626 = sadd.s32 %s624, %s625
        %s627 = smul.addr %s626, 4
        %s628 = scalar_lea.vmem %s2, %s627
      $region40: #{hetgsl_forward.11} parent=35 // pred_fallthru
        _
    $region36: #{hetgsl_forward.11} parent=5 // pred_fallthru
      _
  $region6: #{hetgsl_forward.11} parent=0 // loop_footer
    %s12 = sadd.s32 1, %s8
  $region7: #{hetgsl_forward.11} parent=0 // loop_footer_branch
    %7 = sbr.rel target = $region3
  $region8: #{hetgsl_forward.11} parent=0 // loop_exit
    _

// kernel: hetgsl_forward.13
$region0: #{hetgsl_forward.13}
  #allocation0 [shape = 'u32[]', space=smem, size = 0x4, offset = 0x4, fixed_abs, tag = 'smem constant byte address 0x4 - core index']
  #allocation1 [shape = 'u32[144,128]{1,0:T(1,128)}', space=vmem, size = 0x12000, scoped, tag = 'internal scratch']
  %s0 = inlined_call_operand.vmem [shape: bf16[2,128,256], index: 0, kind: input, shape index: {}, may-alias: {0,1}]
  %s1 = inlined_call_operand.vmem [shape: bf16[2,128,256], index: 1, kind: input, shape index: {}, may-alias: {0,1}]
  %s2 = inlined_call_operand.vmem [shape: f32[2,1,1], index: 2, kind: input, shape index: {}]
  %s3 = inlined_call_operand.vmem [shape: bf16[2,128,128], index: 3, kind: input, shape index: {}]
  %s4 = inlined_call_operand.vmem [shape: bf16[2,128,128], index: 4, kind: output, shape index: {}]
  %s5 = sld [smem:[#allocation0]]
  $region49: #{hetgsl_forward.13} parent=0
    _
  %s7 = ssub.s32 1, %s5
  %s8 = scalar_select 0, %s7, %s5
  loop: start=0, step=1, limit=4
  $region2: #{hetgsl_forward.13} parent=0 // loop_pre_header
    _
  $region3: #{hetgsl_forward.13} parent=0 // loop_header
    %s10 = sphi 0, %s14
    %p11 = scmp.ge.s32.totalorder %s10, 4
    %s17 = sphi 0, %s36
    %s18 = sphi 0, %s32
    %s19 = sphi 0, %s28
    %s20 = sphi 0, %s17
    %s21 = sphi 0, %s18
    %s22 = sphi 0, %s19
    %s23 = sphi 0, %s20
    %s24 = sphi 0, %s21
    %s25 = sphi 0, %s22
    %s41 = sphi 0, %s43
    %s44 = sphi 0, %s41
    %s45 = sphi 0, %s44
    %s61 = sphi 0, %s45
    %s69 = sphi 0, %s71
    %s72 = sphi 0, %s69
    %s73 = sphi 0, %s72
    %s89 = sphi 0, %s73
    %s95 = sphi 0, %s97
    %s98 = sphi 0, %s95
    %s99 = sphi 0, %s98
    %s115 = sphi 0, %s99
    %s125 = sphi 0, %s127
    %s128 = sphi 0, %s125
    %s129 = sphi 0, %s128
    %s145 = sphi 0, %s129
    %s155 = sphi 0, %s157
    %s158 = sphi 0, %s155
    %s159 = sphi 0, %s158
    %s175 = sphi 0, %s159
  $region4: #{hetgsl_forward.13} parent=0 // loop_header_branch
    %13 = sbr.rel (%p11) target = $region8
  $region5: #{hetgsl_forward.13} parent=0 // loop_body
    %s15 = ssub.s32 %s10, 1
    %s16 = ssub.s32 %s10, 2
    %s26 = sadd.s32 1, %s19
    %p27 = scmp.ge.s32.totalorder %s26, 1
    %s28 = scalar_select %p27, 0, %s26
    %s29 = sadd.s32 1, %s18
    %s30 = scalar_select %p27, %s29, %s18
    %p31 = scmp.ge.s32.totalorder %s30, 1
    %s32 = scalar_select %p31, 0, %s30
    %s33 = sadd.s32 1, %s17
    %s34 = scalar_select %p31, %s33, %s17
    %p35 = scmp.ge.s32.totalorder %s34, 2
    %s36 = scalar_select %p35, 0, %s34
    %s37 = ssub.s32 %s17, %s36
    %s38 = ssub.s32 %s18, %s32
    %s39 = sor.u32 %s37, %s38
    %p40 = scmp.eq.s32.totalorder %s39, 0
    %s42 = sadd.s32 %s41, 1
    %s43 = scalar_select %p40, %s41, %s42
    %p46 = pneg %p40
    %p47 = scmp.eq.s32.totalorder %s10, 1
    %p48 = por %p46, %p47
    %p49 = scmp.ne.s32.totalorder %s41, %s44
    %p50 = scmp.eq.s32.totalorder %s10, 0
    %p51 = por %p49, %p50
    %p52 = scmp.ne.s32.totalorder %s41, %s44
    %p53 = scmp.eq.s32.totalorder %s15, 1
    %p54 = por %p52, %p53
    %p55 = scmp.ne.s32.totalorder %s44, %s45
    %p56 = scmp.eq.s32.totalorder %s15, 0
    %p57 = por %p55, %p56
    %p58 = scmp.ne.s32.totalorder %s44, %s45
    %p59 = scmp.eq.s32.totalorder %s16, 1
    %p60 = por %p58, %p59
    %p62 = scmp.ne.s32.totalorder %s45, %s61
    %p63 = scmp.eq.s32.totalorder %s16, 0
    %p64 = por %p62, %p63
    %s65 = ssub.s32 %s17, %s36
    %s66 = ssub.s32 %s19, %s28
    %s67 = sor.u32 %s65, %s66
    %p68 = scmp.eq.s32.totalorder %s67, 0
    %s70 = sadd.s32 %s69, 1
    %s71 = scalar_select %p68, %s69, %s70
    %p74 = pneg %p68
    %p75 = scmp.eq.s32.totalorder %s10, 1
    %p76 = por %p74, %p75
    %p77 = scmp.ne.s32.totalorder %s69, %s72
    %p78 = scmp.eq.s32.totalorder %s10, 0
    %p79 = por %p77, %p78
    %p80 = scmp.ne.s32.totalorder %s69, %s72
    %p81 = scmp.eq.s32.totalorder %s15, 1
    %p82 = por %p80, %p81
    %p83 = scmp.ne.s32.totalorder %s72, %s73
    %p84 = scmp.eq.s32.totalorder %s15, 0
    %p85 = por %p83, %p84
    %p86 = scmp.ne.s32.totalorder %s72, %s73
    %p87 = scmp.eq.s32.totalorder %s16, 1
    %p88 = por %p86, %p87
    %p90 = scmp.ne.s32.totalorder %s73, %s89
    %p91 = scmp.eq.s32.totalorder %s16, 0
    %p92 = por %p90, %p91
    %s93 = ssub.s32 %s17, %s36
    %p94 = scmp.eq.s32.totalorder %s93, 0
    %s96 = sadd.s32 %s95, 1
    %s97 = scalar_select %p94, %s95, %s96
    %p100 = pneg %p94
    %p101 = scmp.eq.s32.totalorder %s10, 1
    %p102 = por %p100, %p101
    %p103 = scmp.ne.s32.totalorder %s95, %s98
    %p104 = scmp.eq.s32.totalorder %s10, 0
    %p105 = por %p103, %p104
    %p106 = scmp.ne.s32.totalorder %s95, %s98
    %p107 = scmp.eq.s32.totalorder %s15, 1
    %p108 = por %p106, %p107
    %p109 = scmp.ne.s32.totalorder %s98, %s99
    %p110 = scmp.eq.s32.totalorder %s15, 0
    %p111 = por %p109, %p110
    %p112 = scmp.ne.s32.totalorder %s98, %s99
    %p113 = scmp.eq.s32.totalorder %s16, 1
    %p114 = por %p112, %p113
    %p116 = scmp.ne.s32.totalorder %s99, %s115
    %p117 = scmp.eq.s32.totalorder %s16, 0
    %p118 = por %p116, %p117
    %s119 = ssub.s32 %s17, %s36
    %s120 = ssub.s32 %s18, %s32
    %s121 = sor.u32 %s119, %s120
    %s122 = ssub.s32 %s19, %s28
    %s123 = sor.u32 %s121, %s122
    %p124 = scmp.eq.s32.totalorder %s123, 0
    %s126 = sadd.s32 %s125, 1
    %s127 = scalar_select %p124, %s125, %s126
    %p130 = pneg %p124
    %p131 = scmp.eq.s32.totalorder %s10, 1
    %p132 = por %p130, %p131
    %p133 = scmp.ne.s32.totalorder %s125, %s128
    %p134 = scmp.eq.s32.totalorder %s10, 0
    %p135 = por %p133, %p134
    %p136 = scmp.ne.s32.totalorder %s125, %s128
    %p137 = scmp.eq.s32.totalorder %s15, 1
    %p138 = por %p136, %p137
    %p139 = scmp.ne.s32.totalorder %s128, %s129
    %p140 = scmp.eq.s32.totalorder %s15, 0
    %p141 = por %p139, %p140
    %p142 = scmp.ne.s32.totalorder %s128, %s129
    %p143 = scmp.eq.s32.totalorder %s16, 1
    %p144 = por %p142, %p143
    %p146 = scmp.ne.s32.totalorder %s129, %s145
    %p147 = scmp.eq.s32.totalorder %s16, 0
    %p148 = por %p146, %p147
    %s149 = ssub.s32 %s17, %s36
    %s150 = ssub.s32 %s18, %s32
    %s151 = sor.u32 %s149, %s150
    %s152 = ssub.s32 %s19, %s28
    %s153 = sor.u32 %s151, %s152
    %p154 = scmp.eq.s32.totalorder %s153, 0
    %s156 = sadd.s32 %s155, 1
    %s157 = scalar_select %p154, %s155, %s156
    %p160 = pneg %p154
    %p161 = scmp.eq.s32.totalorder %s10, 1
    %p162 = por %p160, %p161
    %p163 = scmp.ne.s32.totalorder %s155, %s158
    %p164 = scmp.eq.s32.totalorder %s10, 0
    %p165 = por %p163, %p164
    %p166 = scmp.ne.s32.totalorder %s155, %s158
    %p167 = scmp.eq.s32.totalorder %s15, 1
    %p168 = por %p166, %p167
    %p169 = scmp.ne.s32.totalorder %s158, %s159
    %p170 = scmp.eq.s32.totalorder %s15, 0
    %p171 = por %p169, %p170
    %p172 = scmp.ne.s32.totalorder %s158, %s159
    %p173 = scmp.eq.s32.totalorder %s16, 1
    %p174 = por %p172, %p173
    %p176 = scmp.ne.s32.totalorder %s159, %s175
    %p177 = scmp.eq.s32.totalorder %s16, 0
    %p178 = por %p176, %p177
    %p179 = scmp.le.s32.totalorder 1, %s10
    %p180 = scmp.lt.s32.totalorder %s10, 3
    %p181 = pnand %p179, %p180
    %p182 = pneg %p181
    // Predicated region
    $region9: #{hetgsl_forward.13} parent=5 // pred_check
      _
    $region10: #{hetgsl_forward.13} parent=5 // pred_check_branch
      %184 = sbr.rel (%p181) target = $region12
    $region11: #{hetgsl_forward.13} parent=5 // pred_region
      %s185 = ssub.s32 %s10, 1
    $region12: #{hetgsl_forward.13} parent=5 // pred_fallthru
      _
    %p186 = scmp.lt.s32.totalorder %s10, 2
    // Predicated region
    $region13: #{hetgsl_forward.13} parent=5 // pred_check
      %p187 = pneg %p186
    $region14: #{hetgsl_forward.13} parent=5 // pred_check_branch
      %189 = sbr.rel (%p187) target = $region16
    $region15: #{hetgsl_forward.13} parent=5 // pred_region
      // Predicated region
      $region17: #{hetgsl_forward.13} parent=15 // pred_check
        %p190 = pneg %p51
      $region18: #{hetgsl_forward.13} parent=15 // pred_check_branch
        %192 = sbr.rel (%p190) target = $region20
      $region19: #{hetgsl_forward.13} parent=15 // pred_region
        %s193 = smul.u32 16, %s18
        %p194 = scmp.lt.s32.totalorder %s17, 1
        %s195 = scalar_select %p194, %s17, 1
        %p196 = scmp.lt.s32.totalorder %s193, 15
        %s197 = scalar_select %p196, %s193, 15
        %s198 = smul.addr %s197, 2
        %s199 = smul.addr %s195, 32
        %s200 = sadd.s32 %s198, %s199
        %s201 = smul.addr %s200, 4
        %s202 = scalar_lea.vmem %s0, %s201
        %s203 = smul.u32 16, %s18
      $region20: #{hetgsl_forward.13} parent=15 // pred_fallthru
        _
      // Predicated region
      $region21: #{hetgsl_forward.13} parent=15 // pred_check
        %p204 = pneg %p79
      $region22: #{hetgsl_forward.13} parent=15 // pred_check_branch
        %206 = sbr.rel (%p204) target = $region24
      $region23: #{hetgsl_forward.13} parent=15 // pred_region
        %s207 = smul.u32 16, %s19
        %p208 = scmp.lt.s32.totalorder %s17, 1
        %s209 = scalar_select %p208, %s17, 1
        %p210 = scmp.lt.s32.totalorder %s207, 15
        %s211 = scalar_select %p210, %s207, 15
        %s212 = smul.addr %s211, 2
        %s213 = smul.addr %s209, 32
        %s214 = sadd.s32 %s212, %s213
        %s215 = smul.addr %s214, 4
        %s216 = scalar_lea.vmem %s1, %s215
        %s217 = smul.u32 16, %s19
      $region24: #{hetgsl_forward.13} parent=15 // pred_fallthru
        _
      // Predicated region
      $region25: #{hetgsl_forward.13} parent=15 // pred_check
        %p218 = pneg %p105
      $region26: #{hetgsl_forward.13} parent=15 // pred_check_branch
        %220 = sbr.rel (%p218) target = $region28
      $region27: #{hetgsl_forward.13} parent=15 // pred_region
        %p221 = scmp.lt.s32.totalorder %s17, 1
        %s222 = scalar_select %p221, %s17, 1
        %s223 = scalar_lea.vmem %s2, %s222
      $region28: #{hetgsl_forward.13} parent=15 // pred_fallthru
        _
      // Predicated region
      $region29: #{hetgsl_forward.13} parent=15 // pred_check
        %p224 = pneg %p135
      $region30: #{hetgsl_forward.13} parent=15 // pred_check_branch
        %226 = sbr.rel (%p224) target = $region32
      $region31: #{hetgsl_forward.13} parent=15 // pred_region
        %s227 = smul.u32 16, %s18
        %p228 = scmp.lt.s32.totalorder %s17, 1
        %s229 = scalar_select %p228, %s17, 1
        %p230 = scmp.lt.s32.totalorder %s227, 15
        %s231 = scalar_select %p230, %s227, 15
        %p232 = scmp.lt.s32.totalorder %s19, 0
        %s233 = scalar_select %p232, %s19, 0
        %s234 = sadd.s32 %s233, %s231
        %s235 = smul.addr %s229, 16
        %s236 = sadd.s32 %s234, %s235
        %s237 = smul.addr %s236, 4
        %s238 = scalar_lea.vmem %s3, %s237
        %s239 = smul.u32 16, %s18
      $region32: #{hetgsl_forward.13} parent=15 // pred_fallthru
        _
    $region16: #{hetgsl_forward.13} parent=5 // pred_fallthru
      _
    %p240 = scmp.le.s32.totalorder 1, %s10
    %p241 = scmp.lt.s32.totalorder %s10, 3
    %p242 = pnand %p240, %p241
    %p243 = pneg %p242
    // Predicated region
    $region33: #{hetgsl_forward.13} parent=5 // pred_check
      _
    $region34: #{hetgsl_forward.13} parent=5 // pred_check_branch
      %245 = sbr.rel (%p242) target = $region36
    $region35: #{hetgsl_forward.13} parent=5 // pred_region
      %s246 = ssub.s32 %s10, 1
      %s247 = smul.u32 16, %s21
      %p248 = scmp.lt.s32.totalorder %s20, 1
      %s249 = scalar_select %p248, %s20, 1
      %p250 = scmp.lt.s32.totalorder %s247, 15
      %s251 = scalar_select %p250, %s247, 15
      %s252 = smul.addr %s251, 2
      %s253 = smul.addr %s249, 32
      %s254 = sadd.s32 %s252, %s253
      %s255 = smul.addr %s254, 4
      %s256 = scalar_lea.vmem %s0, %s255
      %p257 = pneg %p57
      %p258 = pneg %p54
      %s259 = smul.u32 16, %s22
      %p260 = scmp.lt.s32.totalorder %s20, 1
      %s261 = scalar_select %p260, %s20, 1
      %p262 = scmp.lt.s32.totalorder %s259, 15
      %s263 = scalar_select %p262, %s259, 15
      %s264 = smul.addr %s263, 2
      %s265 = smul.addr %s261, 32
      %s266 = sadd.s32 %s264, %s265
      %s267 = smul.addr %s266, 4
      %s268 = scalar_lea.vmem %s1, %s267
      %p269 = pneg %p85
      %p270 = pneg %p82
      %p271 = scmp.lt.s32.totalorder %s20, 1
      %s272 = scalar_select %p271, %s20, 1
      %s273 = scalar_lea.vmem %s2, %s272
      %p274 = pneg %p111
      %p275 = pneg %p108
      %s276 = smul.u32 16, %s21
      %p277 = scmp.lt.s32.totalorder %s20, 1
      %s278 = scalar_select %p277, %s20, 1
      %p279 = scmp.lt.s32.totalorder %s276, 15
      %s280 = scalar_select %p279, %s276, 15
      %p281 = scmp.lt.s32.totalorder %s22, 0
      %s282 = scalar_select %p281, %s22, 0
      %s283 = sadd.s32 %s282, %s280
      %s284 = smul.addr %s278, 16
      %s285 = sadd.s32 %s283, %s284
      %s286 = smul.addr %s285, 4
      %s287 = scalar_lea.vmem %s3, %s286
      %p288 = pneg %p141
      %p289 = pneg %p138
      %p290 = pneg %p171
      %p291 = pneg %p168
      %s292 = smul.u32 16, %s21
      %p293 = scmp.lt.s32.totalorder %s20, 1
      %s294 = scalar_select %p293, %s20, 1
      %p295 = scmp.lt.s32.totalorder %s292, 15
      %s296 = scalar_select %p295, %s292, 15
      %p297 = scmp.lt.s32.totalorder %s22, 0
      %s298 = scalar_select %p297, %s22, 0
      %s299 = sadd.s32 %s298, %s296
      %s300 = smul.addr %s294, 16
      %s301 = sadd.s32 %s299, %s300
      %s302 = smul.addr %s301, 4
      %s303 = scalar_lea.vmem %s4, %s302
      %s304 = smul.u32 16, %s21
      %p305 = scmp.lt.s32.totalorder %s20, 1
      %s306 = scalar_select %p305, %s20, 1
      %p307 = scmp.lt.s32.totalorder %s304, 15
      %s308 = scalar_select %p307, %s304, 15
      %s309 = smul.addr %s308, 2
      %s310 = smul.addr %s306, 32
      %s311 = sadd.s32 %s309, %s310
      %s312 = smul.addr %s311, 4
      %s313 = scalar_lea.vmem %s0, %s312
      %s314 = smul.u32 16, %s21
      %s315 = smul.u32 16, %s22
      %p316 = scmp.lt.s32.totalorder %s20, 1
      %s317 = scalar_select %p316, %s20, 1
      %p318 = scmp.lt.s32.totalorder %s315, 15
      %s319 = scalar_select %p318, %s315, 15
      %s320 = smul.addr %s319, 2
      %s321 = smul.addr %s317, 32
      %s322 = sadd.s32 %s320, %s321
      %s323 = smul.addr %s322, 4
      %s324 = scalar_lea.vmem %s1, %s323
      %s325 = smul.u32 16, %s22
      %p326 = scmp.lt.s32.totalorder %s20, 1
      %s327 = scalar_select %p326, %s20, 1
      %s328 = scalar_lea.vmem %s2, %s327
      %s329 = smul.u32 16, %s21
      %p330 = scmp.lt.s32.totalorder %s20, 1
      %s331 = scalar_select %p330, %s20, 1
      %p332 = scmp.lt.s32.totalorder %s329, 15
      %s333 = scalar_select %p332, %s329, 15
      %p334 = scmp.lt.s32.totalorder %s22, 0
      %s335 = scalar_select %p334, %s22, 0
      %s336 = sadd.s32 %s335, %s333
      %s337 = smul.addr %s331, 16
      %s338 = sadd.s32 %s336, %s337
      %s339 = smul.addr %s338, 4
      %s340 = scalar_lea.vmem %s3, %s339
      %s341 = smul.u32 16, %s21
      %s342 = smul.u32 16, %s21
      %p343 = scmp.lt.s32.totalorder %s20, 1
      %s344 = scalar_select %p343, %s20, 1
      %p345 = scmp.lt.s32.totalorder %s342, 15
      %s346 = scalar_select %p345, %s342, 15
      %p347 = scmp.lt.s32.totalorder %s22, 0
      %s348 = scalar_select %p347, %s22, 0
      %s349 = sadd.s32 %s348, %s346
      %s350 = smul.addr %s344, 16
      %s351 = sadd.s32 %s349, %s350
      %s352 = smul.addr %s351, 4
      %s353 = scalar_lea.vmem %s4, %s352
      %s354 = smul.u32 16, %s21
      %v356 = vld [vmem:[%s313] sm:$0xff]
      %v357 = vld [vmem:[%s313 + $0x8] sm:$0xff]
      %v358 = vld [vmem:[%s313 + $0x10] sm:$0xff]
      %v359 = vld [vmem:[%s313 + $0x18] sm:$0xff]
      %v360 = vld [vmem:[%s313 + $0x20] sm:$0xff]
      %v361 = vld [vmem:[%s313 + $0x28] sm:$0xff]
      %v362 = vld [vmem:[%s313 + $0x30] sm:$0xff]
      %v363 = vld [vmem:[%s313 + $0x38] sm:$0xff]
      %v364 = vld [vmem:[%s313 + $0x40] sm:$0xff]
      %v365 = vld [vmem:[%s313 + $0x48] sm:$0xff]
      %v366 = vld [vmem:[%s313 + $0x50] sm:$0xff]
      %v367 = vld [vmem:[%s313 + $0x58] sm:$0xff]
      %v368 = vld [vmem:[%s313 + $0x60] sm:$0xff]
      %v369 = vld [vmem:[%s313 + $0x68] sm:$0xff]
      %v370 = vld [vmem:[%s313 + $0x70] sm:$0xff]
      %v371 = vld [vmem:[%s313 + $0x78] sm:$0xff]
      %v372 = vld [vmem:[%s324] sm:$0xff]
      %v373 = vld [vmem:[%s324 + $0x8] sm:$0xff]
      %v374 = vld [vmem:[%s324 + $0x10] sm:$0xff]
      %v375 = vld [vmem:[%s324 + $0x18] sm:$0xff]
      %v376 = vld [vmem:[%s324 + $0x20] sm:$0xff]
      %v377 = vld [vmem:[%s324 + $0x28] sm:$0xff]
      %v378 = vld [vmem:[%s324 + $0x30] sm:$0xff]
      %v379 = vld [vmem:[%s324 + $0x38] sm:$0xff]
      %v380 = vld [vmem:[%s324 + $0x40] sm:$0xff]
      %v381 = vld [vmem:[%s324 + $0x48] sm:$0xff]
      %v382 = vld [vmem:[%s324 + $0x50] sm:$0xff]
      %v383 = vld [vmem:[%s324 + $0x58] sm:$0xff]
      %v384 = vld [vmem:[%s324 + $0x60] sm:$0xff]
      %v385 = vld [vmem:[%s324 + $0x68] sm:$0xff]
      %v386 = vld [vmem:[%s324 + $0x70] sm:$0xff]
      %v387 = vld [vmem:[%s324 + $0x78] sm:$0xff]
      %v404 = vunpack.c.l.b16 %v356
      %v405 = vunpack.c.h.b16 %v356
      %v406 = vunpack.c.l.b16 %v357
      %v407 = vunpack.c.h.b16 %v357
      %v408 = vunpack.c.l.b16 %v358
      %v409 = vunpack.c.h.b16 %v358
      %v410 = vunpack.c.l.b16 %v359
      %v411 = vunpack.c.h.b16 %v359
      %v412 = vunpack.c.l.b16 %v360
      %v413 = vunpack.c.h.b16 %v360
      %v414 = vunpack.c.l.b16 %v361
      %v415 = vunpack.c.h.b16 %v361
      %v416 = vunpack.c.l.b16 %v362
      %v417 = vunpack.c.h.b16 %v362
      %v418 = vunpack.c.l.b16 %v363
      %v419 = vunpack.c.h.b16 %v363
      %v420 = vunpack.c.l.b16 %v364
      %v421 = vunpack.c.h.b16 %v364
      %v422 = vunpack.c.l.b16 %v365
      %v423 = vunpack.c.h.b16 %v365
      %v424 = vunpack.c.l.b16 %v366
      %v425 = vunpack.c.h.b16 %v366
      %v426 = vunpack.c.l.b16 %v367
      %v427 = vunpack.c.h.b16 %v367
      %v428 = vunpack.c.l.b16 %v368
      %v429 = vunpack.c.h.b16 %v368
      %v430 = vunpack.c.l.b16 %v369
      %v431 = vunpack.c.h.b16 %v369
      %v432 = vunpack.c.l.b16 %v370
      %v433 = vunpack.c.h.b16 %v370
      %v434 = vunpack.c.l.b16 %v371
      %v435 = vunpack.c.h.b16 %v371
      %v436 = vpack.c.b16 %v406, %v404
      %v437 = vpack.c.b16 %v407, %v405
      %v438 = vpack.c.b16 %v410, %v408
      %v439 = vpack.c.b16 %v411, %v409
      %v440 = vpack.c.b16 %v414, %v412
      %v441 = vpack.c.b16 %v415, %v413
      %v442 = vpack.c.b16 %v418, %v416
      %v443 = vpack.c.b16 %v419, %v417
      %v444 = vpack.c.b16 %v422, %v420
      %v445 = vpack.c.b16 %v423, %v421
      %v446 = vpack.c.b16 %v426, %v424
      %v447 = vpack.c.b16 %v427, %v425
      %v448 = vpack.c.b16 %v430, %v428
      %v449 = vpack.c.b16 %v431, %v429
      %v450 = vpack.c.b16 %v434, %v432
      %v451 = vpack.c.b16 %v435, %v433
      %v484 = vunpack.c.l.b16 %v372
      %v485 = vunpack.c.h.b16 %v372
      %v486 = vunpack.c.l.b16 %v373
      %v487 = vunpack.c.h.b16 %v373
      %v488 = vunpack.c.l.b16 %v374
      %v489 = vunpack.c.h.b16 %v374
      %v490 = vunpack.c.l.b16 %v375
      %v491 = vunpack.c.h.b16 %v375
      %v492 = vunpack.c.l.b16 %v376
      %v493 = vunpack.c.h.b16 %v376
      %v494 = vunpack.c.l.b16 %v377
      %v495 = vunpack.c.h.b16 %v377
      %v496 = vunpack.c.l.b16 %v378
      %v497 = vunpack.c.h.b16 %v378
      %v498 = vunpack.c.l.b16 %v379
      %v499 = vunpack.c.h.b16 %v379
      %v500 = vunpack.c.l.b16 %v380
      %v501 = vunpack.c.h.b16 %v380
      %v502 = vunpack.c.l.b16 %v381
      %v503 = vunpack.c.h.b16 %v381
      %v504 = vunpack.c.l.b16 %v382
      %v505 = vunpack.c.h.b16 %v382
      %v506 = vunpack.c.l.b16 %v383
      %v507 = vunpack.c.h.b16 %v383
      %v508 = vunpack.c.l.b16 %v384
      %v509 = vunpack.c.h.b16 %v384
      %v510 = vunpack.c.l.b16 %v385
      %v511 = vunpack.c.h.b16 %v385
      %v512 = vunpack.c.l.b16 %v386
      %v513 = vunpack.c.h.b16 %v386
      %v514 = vunpack.c.l.b16 %v387
      %v515 = vunpack.c.h.b16 %v387
      %v516 = vpack.c.b16 %v486, %v484
      %v517 = vpack.c.b16 %v487, %v485
      %v518 = vpack.c.b16 %v490, %v488
      %v519 = vpack.c.b16 %v491, %v489
      %v520 = vpack.c.b16 %v494, %v492
      %v521 = vpack.c.b16 %v495, %v493
      %v522 = vpack.c.b16 %v498, %v496
      %v523 = vpack.c.b16 %v499, %v497
      %v524 = vpack.c.b16 %v502, %v500
      %v525 = vpack.c.b16 %v503, %v501
      %v526 = vpack.c.b16 %v506, %v504
      %v527 = vpack.c.b16 %v507, %v505
      %v528 = vpack.c.b16 %v510, %v508
      %v529 = vpack.c.b16 %v511, %v509
      %v530 = vpack.c.b16 %v514, %v512
      %v531 = vpack.c.b16 %v515, %v513
      %548 = vmatprep.subr.bf16.mxu0 %v517
      %549 = vmatpush1.bf16.xpose.msra.mxu0 %v516
      %550 = vmatprep.subr.bf16.mxu0 %v519
      %551 = vmatpush1.bf16.xpose.msra.mxu0 %v518
      %552 = vmatprep.subr.bf16.mxu0 %v521
      %553 = vmatpush1.bf16.xpose.msra.mxu0 %v520
      %554 = vmatprep.subr.bf16.mxu0 %v523
      %555 = vmatpush1.bf16.xpose.msra.mxu0 %v522
      %556 = vmatprep.subr.bf16.mxu0 %v525
      %557 = vmatpush1.bf16.xpose.msra.mxu0 %v524
      %558 = vmatprep.subr.bf16.mxu0 %v527
      %559 = vmatpush1.bf16.xpose.msra.mxu0 %v526
      %560 = vmatprep.subr.bf16.mxu0 %v529
      %561 = vmatpush1.bf16.xpose.msra.mxu0 %v528
      %562 = vmatprep.subr.bf16.mxu0 %v531
      %563 = vmatpush1.bf16.xpose.msra.mxu0 %v530
      %564 = vmatprep.subr.bf16.mxu0 0
      %565 = vmatpush1.bf16.xpose.msra.mxu0 0
      %566 = vmatprep.subr.bf16.mxu0 0
      %567 = vmatpush1.bf16.xpose.msra.mxu0 0
      %568 = vmatprep.subr.bf16.mxu0 0
      %569 = vmatpush1.bf16.xpose.msra.mxu0 0
      %570 = vmatprep.subr.bf16.mxu0 0
      %571 = vmatpush1.bf16.xpose.msra.mxu0 0
      %572 = vmatprep.subr.bf16.mxu0 0
      %573 = vmatpush1.bf16.xpose.msra.mxu0 0
      %574 = vmatprep.subr.bf16.mxu0 0
      %575 = vmatpush1.bf16.xpose.msra.mxu0 0
      %576 = vmatprep.subr.bf16.mxu0 0
      %577 = vmatpush1.bf16.xpose.msra.mxu0 0
      %578 = vmatprep.subr.bf16.mxu0 0
      %579 = vmatpush1.bf16.xpose.msra.mxu0 0
      %580 = vmatprep.mubr.bf16.mxu0 %v437
      %581 = vmatmul.mubr.bf16.gmra.mrb[0].mxu0 %v436
      %v582 = vpop.f32.mrb[0].mxu0
      %v583 = vadd.f32 0.0, %v582
      %v584 = vpop.f32.mrb[0].mxu0
      %v585 = vpop.f32.mrb[0].mxu0
      %v586 = vadd.f32 0.0, %v585
      %v587 = vpop.f32.mrb[0].mxu0
      %588 = vmatprep.mubr.bf16.mxu0 %v439
      %589 = vmatmul.mubr.bf16.gmra.mrb[0].mxu0 %v438
      %v590 = vpop.f32.mrb[0].mxu0
      %v591 = vadd.f32 0.0, %v590
      %v592 = vpop.f32.mrb[0].mxu0
      %v593 = vpop.f32.mrb[0].mxu0
      %v594 = vadd.f32 0.0, %v593
      %v595 = vpop.f32.mrb[0].mxu0
      %596 = vmatprep.mubr.bf16.mxu0 %v441
      %597 = vmatmul.mubr.bf16.gmra.mrb[0].mxu0 %v440
      %v598 = vpop.f32.mrb[0].mxu0
      %v599 = vadd.f32 0.0, %v598
      %v600 = vpop.f32.mrb[0].mxu0
      %v601 = vpop.f32.mrb[0].mxu0
      %v602 = vadd.f32 0.0, %v601
      %v603 = vpop.f32.mrb[0].mxu0
      %604 = vmatprep.mubr.bf16.mxu0 %v443
      %605 = vmatmul.mubr.bf16.gmra.mrb[0].mxu0 %v442
      %v606 = vpop.f32.mrb[0].mxu0
      %v607 = vadd.f32 0.0, %v606
      %v608 = vpop.f32.mrb[0].mxu0
      %v609 = vpop.f32.mrb[0].mxu0
      %v610 = vadd.f32 0.0, %v609
      %v611 = vpop.f32.mrb[0].mxu0
      %612 = vmatprep.mubr.bf16.mxu0 %v445
      %613 = vmatmul.mubr.bf16.gmra.mrb[0].mxu0 %v444
      %v614 = vpop.f32.mrb[0].mxu0
      %v615 = vadd.f32 0.0, %v614
      %v616 = vpop.f32.mrb[0].mxu0
      %v617 = vpop.f32.mrb[0].mxu0
      %v618 = vadd.f32 0.0, %v617
      %v619 = vpop.f32.mrb[0].mxu0
      %620 = vmatprep.mubr.bf16.mxu0 %v447
      %621 = vmatmul.mubr.bf16.gmra.mrb[0].mxu0 %v446
      %v622 = vpop.f32.mrb[0].mxu0
      %v623 = vadd.f32 0.0, %v622
      %v624 = vpop.f32.mrb[0].mxu0
      %v625 = vpop.f32.mrb[0].mxu0
      %v626 = vadd.f32 0.0, %v625
      %v627 = vpop.f32.mrb[0].mxu0
      %628 = vmatprep.mubr.bf16.mxu0 %v449
      %629 = vmatmul.mubr.bf16.gmra.mrb[0].mxu0 %v448
      %v630 = vpop.f32.mrb[0].mxu0
      %v631 = vadd.f32 0.0, %v630
      %v632 = vpop.f32.mrb[0].mxu0
      %v633 = vpop.f32.mrb[0].mxu0
      %v634 = vadd.f32 0.0, %v633
      %v635 = vpop.f32.mrb[0].mxu0
      %636 = vmatprep.mubr.bf16.mxu0 %v451
      %637 = vmatmul.mubr.bf16.gmra.mrb[0].mxu0 %v450
      %v638 = vpop.f32.mrb[0].mxu0
      %v639 = vadd.f32 0.0, %v638
      %v640 = vpop.f32.mrb[0].mxu0
      %v641 = vpop.f32.mrb[0].mxu0
      %v642 = vadd.f32 0.0, %v641
      %v643 = vpop.f32.mrb[0].mxu0
      %644 = vdwg.mxu0
      %v645 = vmul.f32 %v583, 0.5
      %v646 = vmul.f32 %v586, 0.5
      %v647 = vmul.f32 %v591, 0.5
      %v648 = vmul.f32 %v594, 0.5
      %v649 = vmul.f32 %v599, 0.5
      %v650 = vmul.f32 %v602, 0.5
      %v651 = vmul.f32 %v607, 0.5
      %v652 = vmul.f32 %v610, 0.5
      %v653 = vmul.f32 %v615, 0.5
      %v654 = vmul.f32 %v618, 0.5
      %v655 = vmul.f32 %v623, 0.5
      %v656 = vmul.f32 %v626, 0.5
      %v657 = vmul.f32 %v631, 0.5
      %v658 = vmul.f32 %v634, 0.5
      %v659 = vmul.f32 %v639, 0.5
      %v660 = vmul.f32 %v642, 0.5
      %v661 = vld [vmem:[%s328] sm:$0x1]
      %v663 = vlaneseq
      %v664 = vshrl.u32 %v663, 7
      %v665 = vsub.s32 0, %v664
      %v666 = vrot.slane %v661, %v665
      %667 = vset.pattern.permute.xlu0 0
      %668 = vperm.xlu0 %667, %v666
      %v669 = vpop.permute.xlu0 %668
      %vm671 = vcmp.lt.f32.partialorder %v645, %v669
      %vm672 = vcmp.lt.f32.partialorder %v646, %v669
      %vm673 = vcmp.lt.f32.partialorder %v647, %v669
      %vm674 = vcmp.lt.f32.partialorder %v648, %v669
      %vm675 = vcmp.lt.f32.partialorder %v649, %v669
      %vm676 = vcmp.lt.f32.partialorder %v650, %v669
      %vm677 = vcmp.lt.f32.partialorder %v651, %v669
      %vm678 = vcmp.lt.f32.partialorder %v652, %v669
      %vm679 = vcmp.lt.f32.partialorder %v653, %v669
      %vm680 = vcmp.lt.f32.partialorder %v654, %v669
      %vm681 = vcmp.lt.f32.partialorder %v655, %v669
      %vm682 = vcmp.lt.f32.partialorder %v656, %v669
      %vm683 = vcmp.lt.f32.partialorder %v657, %v669
      %vm684 = vcmp.lt.f32.partialorder %v658, %v669
      %vm685 = vcmp.lt.f32.partialorder %v659, %v669
      %vm686 = vcmp.lt.f32.partialorder %v660, %v669
      %v687 = vsel %vm671, 0.0, %v645
      %v688 = vsel %vm672, 0.0, %v646
      %v689 = vsel %vm673, 0.0, %v647
      %v690 = vsel %vm674, 0.0, %v648
      %v691 = vsel %vm675, 0.0, %v649
      %v692 = vsel %vm676, 0.0, %v650
      %v693 = vsel %vm677, 0.0, %v651
      %v694 = vsel %vm678, 0.0, %v652
      %v695 = vsel %vm679, 0.0, %v653
      %v696 = vsel %vm680, 0.0, %v654
      %v697 = vsel %vm681, 0.0, %v655
      %v698 = vsel %vm682, 0.0, %v656
      %v699 = vsel %vm683, 0.0, %v657
      %v700 = vsel %vm684, 0.0, %v658
      %v701 = vsel %vm685, 0.0, %v659
      %v702 = vsel %vm686, 0.0, %v660
      %v703 = vld [vmem:[%s340] sm:$0xf]
      %v704 = vld [vmem:[%s340 + $0x4] sm:$0xf]
      %v705 = vld [vmem:[%s340 + $0x8] sm:$0xf]
      %v706 = vld [vmem:[%s340 + $0xc] sm:$0xf]
      %v707 = vld [vmem:[%s340 + $0x10] sm:$0xf]
      %v708 = vld [vmem:[%s340 + $0x14] sm:$0xf]
      %v709 = vld [vmem:[%s340 + $0x18] sm:$0xf]
      %v710 = vld [vmem:[%s340 + $0x1c] sm:$0xf]
      %v711 = vld [vmem:[%s340 + $0x20] sm:$0xf]
      %v712 = vld [vmem:[%s340 + $0x24] sm:$0xf]
      %v713 = vld [vmem:[%s340 + $0x28] sm:$0xf]
      %v714 = vld [vmem:[%s340 + $0x2c] sm:$0xf]
      %v715 = vld [vmem:[%s340 + $0x30] sm:$0xf]
      %v716 = vld [vmem:[%s340 + $0x34] sm:$0xf]
      %v717 = vld [vmem:[%s340 + $0x38] sm:$0xf]
      %v718 = vld [vmem:[%s340 + $0x3c] sm:$0xf]
      %v719 = vunpack.c.l.bf16 %v703
      %v720 = vunpack.c.l.bf16 %v704
      %v721 = vunpack.c.l.bf16 %v705
      %v722 = vunpack.c.l.bf16 %v706
      %v723 = vunpack.c.l.bf16 %v707
      %v724 = vunpack.c.l.bf16 %v708
      %v725 = vunpack.c.l.bf16 %v709
      %v726 = vunpack.c.l.bf16 %v710
      %v727 = vunpack.c.l.bf16 %v711
      %v728 = vunpack.c.l.bf16 %v712
      %v729 = vunpack.c.l.bf16 %v713
      %v730 = vunpack.c.l.bf16 %v714
      %v731 = vunpack.c.l.bf16 %v715
      %v732 = vunpack.c.l.bf16 %v716
      %v733 = vunpack.c.l.bf16 %v717
      %v734 = vunpack.c.l.bf16 %v718
      %v735 = vmul.f32 %v687, %v719
      %v736 = vmul.f32 %v688, %v720
      %v737 = vmul.f32 %v689, %v721
      %v738 = vmul.f32 %v690, %v722
      %v739 = vmul.f32 %v691, %v723
      %v740 = vmul.f32 %v692, %v724
      %v741 = vmul.f32 %v693, %v725
      %v742 = vmul.f32 %v694, %v726
      %v743 = vmul.f32 %v695, %v727
      %v744 = vmul.f32 %v696, %v728
      %v745 = vmul.f32 %v697, %v729
      %v746 = vmul.f32 %v698, %v730
      %v747 = vmul.f32 %v699, %v731
      %v748 = vmul.f32 %v700, %v732
      %v749 = vmul.f32 %v701, %v733
      %v750 = vmul.f32 %v702, %v734
      %v751 = vpack.c.bf16 %v736, %v735
      %v752 = vpack.c.bf16 %v738, %v737
      %v753 = vpack.c.bf16 %v740, %v739
      %v754 = vpack.c.bf16 %v742, %v741
      %v755 = vpack.c.bf16 %v744, %v743
      %v756 = vpack.c.bf16 %v746, %v745
      %v757 = vpack.c.bf16 %v748, %v747
      %v758 = vpack.c.bf16 %v750, %v749
      %v767 = vunpack.c.l.b16 %v751
      %v768 = vunpack.c.h.b16 %v751
      %v769 = vunpack.c.l.b16 %v752
      %v770 = vunpack.c.h.b16 %v752
      %v771 = vunpack.c.l.b16 %v753
      %v772 = vunpack.c.h.b16 %v753
      %v773 = vunpack.c.l.b16 %v754
      %v774 = vunpack.c.h.b16 %v754
      %v775 = vunpack.c.l.b16 %v755
      %v776 = vunpack.c.h.b16 %v755
      %v777 = vunpack.c.l.b16 %v756
      %v778 = vunpack.c.h.b16 %v756
      %v779 = vunpack.c.l.b16 %v757
      %v780 = vunpack.c.h.b16 %v757
      %v781 = vunpack.c.l.b16 %v758
      %v782 = vunpack.c.h.b16 %v758
      %v783 = vpack.c.b16 %v767, %v767
      %v784 = vpack.c.b16 %v768, %v768
      %v785 = vpack.c.b16 %v769, %v769
      %v786 = vpack.c.b16 %v770, %v770
      %v787 = vpack.c.b16 %v771, %v771
      %v788 = vpack.c.b16 %v772, %v772
      %v789 = vpack.c.b16 %v773, %v773
      %v790 = vpack.c.b16 %v774, %v774
      %v791 = vpack.c.b16 %v775, %v775
      %v792 = vpack.c.b16 %v776, %v776
      %v793 = vpack.c.b16 %v777, %v777
      %v794 = vpack.c.b16 %v778, %v778
      %v795 = vpack.c.b16 %v779, %v779
      %v796 = vpack.c.b16 %v780, %v780
      %v797 = vpack.c.b16 %v781, %v781
      %v798 = vpack.c.b16 %v782, %v782
      %815 = vst [vmem:[%s353] sm:$0xf] %v783
      %816 = vst [vmem:[%s353 + $0x4] sm:$0xf] %v784
      %817 = vst [vmem:[%s353 + $0x8] sm:$0xf] %v785
      %818 = vst [vmem:[%s353 + $0xc] sm:$0xf] %v786
      %819 = vst [vmem:[%s353 + $0x10] sm:$0xf] %v787
      %820 = vst [vmem:[%s353 + $0x14] sm:$0xf] %v788
      %821 = vst [vmem:[%s353 + $0x18] sm:$0xf] %v789
      %822 = vst [vmem:[%s353 + $0x1c] sm:$0xf] %v790
      %823 = vst [vmem:[%s353 + $0x20] sm:$0xf] %v791
      %824 = vst [vmem:[%s353 + $0x24] sm:$0xf] %v792
      %825 = vst [vmem:[%s353 + $0x28] sm:$0xf] %v793
      %826 = vst [vmem:[%s353 + $0x2c] sm:$0xf] %v794
      %827 = vst [vmem:[%s353 + $0x30] sm:$0xf] %v795
      %828 = vst [vmem:[%s353 + $0x34] sm:$0xf] %v796
      %829 = vst [vmem:[%s353 + $0x38] sm:$0xf] %v797
      %830 = vst [vmem:[%s353 + $0x3c] sm:$0xf] %v798
      %s831 = smul.u32 16, %s21
      %p832 = scmp.lt.s32.totalorder %s20, 1
      %s833 = scalar_select %p832, %s20, 1
      %p834 = scmp.lt.s32.totalorder %s831, 15
      %s835 = scalar_select %p834, %s831, 15
      %p836 = scmp.lt.s32.totalorder %s22, 0
      %s837 = scalar_select %p836, %s22, 0
      %s838 = sadd.s32 %s837, %s835
      %s839 = smul.addr %s833, 16
      %s840 = sadd.s32 %s838, %s839
      %s841 = smul.addr %s840, 4
      %s842 = scalar_lea.vmem %s4, %s841
      // Predicated region
      $region37: #{hetgsl_forward.13} parent=35 // pred_check
        %p843 = pneg %p168
      $region38: #{hetgsl_forward.13} parent=35 // pred_check_branch
        %845 = sbr.rel (%p843) target = $region40
      $region39: #{hetgsl_forward.13} parent=35 // pred_region
        %s846 = smul.u32 16, %s21
      $region40: #{hetgsl_forward.13} parent=35 // pred_fallthru
        _
    $region36: #{hetgsl_forward.13} parent=5 // pred_fallthru
      _
    %p847 = scmp.le.s32.totalorder 2, %s10
    // Predicated region
    $region41: #{hetgsl_forward.13} parent=5 // pred_check
      %p848 = pneg %p847
    $region42: #{hetgsl_forward.13} parent=5 // pred_check_branch
      %850 = sbr.rel (%p848) target = $region44
    $region43: #{hetgsl_forward.13} parent=5 // pred_region
      %s851 = ssub.s32 %s10, 2
      // Predicated region
      $region45: #{hetgsl_forward.13} parent=43 // pred_check
        %p852 = pneg %p174
      $region46: #{hetgsl_forward.13} parent=43 // pred_check_branch
        %854 = sbr.rel (%p852) target = $region48
      $region47: #{hetgsl_forward.13} parent=43 // pred_region
        %s855 = smul.u32 16, %s24
        %p856 = scmp.lt.s32.totalorder %s23, 1
        %s857 = scalar_select %p856, %s23, 1
        %p858 = scmp.lt.s32.totalorder %s855, 15
        %s859 = scalar_select %p858, %s855, 15
        %p860 = scmp.lt.s32.totalorder %s25, 0
        %s861 = scalar_select %p860, %s25, 0
        %s862 = sadd.s32 %s861, %s859
        %s863 = smul.addr %s857, 16
        %s864 = sadd.s32 %s862, %s863
        %s865 = smul.addr %s864, 4
        %s866 = scalar_lea.vmem %s4, %s865
      $region48: #{hetgsl_forward.13} parent=43 // pred_fallthru
        _
    $region44: #{hetgsl_forward.13} parent=5 // pred_fallthru
      _
  $region6: #{hetgsl_forward.13} parent=0 // loop_footer
    %s14 = sadd.s32 1, %s10
  $region7: #{hetgsl_forward.13} parent=0 // loop_footer_branch
    %9 = sbr.rel target = $region3
  $region8: #{hetgsl_forward.13} parent=0 // loop_exit
    _

// kernel: hetgsl_forward.12
$region0: #{hetgsl_forward.12}
  #allocation0 [shape = 'u32[]', space=smem, size = 0x4, offset = 0x4, fixed_abs, tag = 'smem constant byte address 0x4 - core index']
  #allocation1 [shape = 'u32[144,128]{1,0:T(1,128)}', space=vmem, size = 0x12000, scoped, tag = 'internal scratch']
  %s0 = inlined_call_operand.vmem [shape: f32[2,128,128], index: 0, kind: input, shape index: {}]
  %s1 = inlined_call_operand.vmem [shape: f32[2,2,128], index: 1, kind: input, shape index: {}]
  %s2 = inlined_call_operand.vmem [shape: f32[2,128,256], index: 2, kind: output, shape index: {}]
  %s3 = sld [smem:[#allocation0]]
  $region41: #{hetgsl_forward.12} parent=0
    _
  %s5 = ssub.s32 1, %s3
  %s6 = scalar_select 0, %s5, %s3
  loop: start=0, step=1, limit=4
  $region2: #{hetgsl_forward.12} parent=0 // loop_pre_header
    _
  $region3: #{hetgsl_forward.12} parent=0 // loop_header
    %s8 = sphi 0, %s12
    %p9 = scmp.ge.s32.totalorder %s8, 4
    %s15 = sphi 0, %s27
    %s16 = sphi 0, %s23
    %s17 = sphi 0, %s15
    %s18 = sphi 0, %s16
    %s19 = sphi 0, %s17
    %s20 = sphi 0, %s18
    %s32 = sphi 0, %s34
    %s35 = sphi 0, %s32
    %s36 = sphi 0, %s35
    %s52 = sphi 0, %s36
    %s58 = sphi 0, %s60
    %s61 = sphi 0, %s58
    %s62 = sphi 0, %s61
    %s78 = sphi 0, %s62
    %s86 = sphi 0, %s88
    %s89 = sphi 0, %s86
    %s90 = sphi 0, %s89
    %s106 = sphi 0, %s90
  $region4: #{hetgsl_forward.12} parent=0 // loop_header_branch
    %11 = sbr.rel (%p9) target = $region8
  $region5: #{hetgsl_forward.12} parent=0 // loop_body
    %s13 = ssub.s32 %s8, 1
    %s14 = ssub.s32 %s8, 2
    %s21 = sadd.s32 1, %s16
    %p22 = scmp.ge.s32.totalorder %s21, 1
    %s23 = scalar_select %p22, 0, %s21
    %s24 = sadd.s32 1, %s15
    %s25 = scalar_select %p22, %s24, %s15
    %p26 = scmp.ge.s32.totalorder %s25, 2
    %s27 = scalar_select %p26, 0, %s25
    %s28 = ssub.s32 %s15, %s27
    %s29 = ssub.s32 %s16, %s23
    %s30 = sor.u32 %s28, %s29
    %p31 = scmp.eq.s32.totalorder %s30, 0
    %s33 = sadd.s32 %s32, 1
    %s34 = scalar_select %p31, %s32, %s33
    %p37 = pneg %p31
    %p38 = scmp.eq.s32.totalorder %s8, 1
    %p39 = por %p37, %p38
    %p40 = scmp.ne.s32.totalorder %s32, %s35
    %p41 = scmp.eq.s32.totalorder %s8, 0
    %p42 = por %p40, %p41
    %p43 = scmp.ne.s32.totalorder %s32, %s35
    %p44 = scmp.eq.s32.totalorder %s13, 1
    %p45 = por %p43, %p44
    %p46 = scmp.ne.s32.totalorder %s35, %s36
    %p47 = scmp.eq.s32.totalorder %s13, 0
    %p48 = por %p46, %p47
    %p49 = scmp.ne.s32.totalorder %s35, %s36
    %p50 = scmp.eq.s32.totalorder %s14, 1
    %p51 = por %p49, %p50
    %p53 = scmp.ne.s32.totalorder %s36, %s52
    %p54 = scmp.eq.s32.totalorder %s14, 0
    %p55 = por %p53, %p54
    %s56 = ssub.s32 %s15, %s27
    %p57 = scmp.eq.s32.totalorder %s56, 0
    %s59 = sadd.s32 %s58, 1
    %s60 = scalar_select %p57, %s58, %s59
    %p63 = pneg %p57
    %p64 = scmp.eq.s32.totalorder %s8, 1
    %p65 = por %p63, %p64
    %p66 = scmp.ne.s32.totalorder %s58, %s61
    %p67 = scmp.eq.s32.totalorder %s8, 0
    %p68 = por %p66, %p67
    %p69 = scmp.ne.s32.totalorder %s58, %s61
    %p70 = scmp.eq.s32.totalorder %s13, 1
    %p71 = por %p69, %p70
    %p72 = scmp.ne.s32.totalorder %s61, %s62
    %p73 = scmp.eq.s32.totalorder %s13, 0
    %p74 = por %p72, %p73
    %p75 = scmp.ne.s32.totalorder %s61, %s62
    %p76 = scmp.eq.s32.totalorder %s14, 1
    %p77 = por %p75, %p76
    %p79 = scmp.ne.s32.totalorder %s62, %s78
    %p80 = scmp.eq.s32.totalorder %s14, 0
    %p81 = por %p79, %p80
    %s82 = ssub.s32 %s15, %s27
    %s83 = ssub.s32 %s16, %s23
    %s84 = sor.u32 %s82, %s83
    %p85 = scmp.eq.s32.totalorder %s84, 0
    %s87 = sadd.s32 %s86, 1
    %s88 = scalar_select %p85, %s86, %s87
    %p91 = pneg %p85
    %p92 = scmp.eq.s32.totalorder %s8, 1
    %p93 = por %p91, %p92
    %p94 = scmp.ne.s32.totalorder %s86, %s89
    %p95 = scmp.eq.s32.totalorder %s8, 0
    %p96 = por %p94, %p95
    %p97 = scmp.ne.s32.totalorder %s86, %s89
    %p98 = scmp.eq.s32.totalorder %s13, 1
    %p99 = por %p97, %p98
    %p100 = scmp.ne.s32.totalorder %s89, %s90
    %p101 = scmp.eq.s32.totalorder %s13, 0
    %p102 = por %p100, %p101
    %p103 = scmp.ne.s32.totalorder %s89, %s90
    %p104 = scmp.eq.s32.totalorder %s14, 1
    %p105 = por %p103, %p104
    %p107 = scmp.ne.s32.totalorder %s90, %s106
    %p108 = scmp.eq.s32.totalorder %s14, 0
    %p109 = por %p107, %p108
    %p110 = scmp.le.s32.totalorder 1, %s8
    %p111 = scmp.lt.s32.totalorder %s8, 3
    %p112 = pnand %p110, %p111
    %p113 = pneg %p112
    // Predicated region
    $region9: #{hetgsl_forward.12} parent=5 // pred_check
      _
    $region10: #{hetgsl_forward.12} parent=5 // pred_check_branch
      %115 = sbr.rel (%p112) target = $region12
    $region11: #{hetgsl_forward.12} parent=5 // pred_region
      %s116 = ssub.s32 %s8, 1
    $region12: #{hetgsl_forward.12} parent=5 // pred_fallthru
      _
    %p117 = scmp.lt.s32.totalorder %s8, 2
    // Predicated region
    $region13: #{hetgsl_forward.12} parent=5 // pred_check
      %p118 = pneg %p117
    $region14: #{hetgsl_forward.12} parent=5 // pred_check_branch
      %120 = sbr.rel (%p118) target = $region16
    $region15: #{hetgsl_forward.12} parent=5 // pred_region
      // Predicated region
      $region17: #{hetgsl_forward.12} parent=15 // pred_check
        %p121 = pneg %p42
      $region18: #{hetgsl_forward.12} parent=15 // pred_check_branch
        %123 = sbr.rel (%p121) target = $region20
      $region19: #{hetgsl_forward.12} parent=15 // pred_region
        %s124 = smul.u32 16, %s16
        %p125 = scmp.lt.s32.totalorder %s15, 1
        %s126 = scalar_select %p125, %s15, 1
        %p127 = scmp.lt.s32.totalorder %s124, 15
        %s128 = scalar_select %p127, %s124, 15
        %s129 = smul.addr %s126, 16
        %s130 = sadd.s32 %s128, %s129
        %s131 = smul.addr %s130, 8
        %s132 = scalar_lea.vmem %s0, %s131
        %s133 = smul.u32 16, %s16
      $region20: #{hetgsl_forward.12} parent=15 // pred_fallthru
        _
      // Predicated region
      $region21: #{hetgsl_forward.12} parent=15 // pred_check
        %p134 = pneg %p68
      $region22: #{hetgsl_forward.12} parent=15 // pred_check_branch
        %136 = sbr.rel (%p134) target = $region24
      $region23: #{hetgsl_forward.12} parent=15 // pred_region
        %p137 = scmp.lt.s32.totalorder %s15, 1
        %s138 = scalar_select %p137, %s15, 1
        %s139 = smul.addr %s138, 2
        %s140 = scalar_lea.vmem %s1, %s139
      $region24: #{hetgsl_forward.12} parent=15 // pred_fallthru
        _
    $region16: #{hetgsl_forward.12} parent=5 // pred_fallthru
      _
    %p141 = scmp.le.s32.totalorder 1, %s8
    %p142 = scmp.lt.s32.totalorder %s8, 3
    %p143 = pnand %p141, %p142
    %p144 = pneg %p143
    // Predicated region
    $region25: #{hetgsl_forward.12} parent=5 // pred_check
      _
    $region26: #{hetgsl_forward.12} parent=5 // pred_check_branch
      %146 = sbr.rel (%p143) target = $region28
    $region27: #{hetgsl_forward.12} parent=5 // pred_region
      %s147 = ssub.s32 %s8, 1
      %s148 = smul.u32 16, %s18
      %p149 = scmp.lt.s32.totalorder %s17, 1
      %s150 = scalar_select %p149, %s17, 1
      %p151 = scmp.lt.s32.totalorder %s148, 15
      %s152 = scalar_select %p151, %s148, 15
      %s153 = smul.addr %s150, 16
      %s154 = sadd.s32 %s152, %s153
      %s155 = smul.addr %s154, 8
      %s156 = scalar_lea.vmem %s0, %s155
      %p157 = pneg %p48
      %p158 = pneg %p45
      %p159 = scmp.lt.s32.totalorder %s17, 1
      %s160 = scalar_select %p159, %s17, 1
      %s161 = smul.addr %s160, 2
      %s162 = scalar_lea.vmem %s1, %s161
      %p163 = pneg %p74
      %p164 = pneg %p71
      %p165 = pneg %p102
      %p166 = pneg %p99
      %s167 = smul.u32 16, %s18
      %p168 = scmp.lt.s32.totalorder %s17, 1
      %s169 = scalar_select %p168, %s17, 1
      %p170 = scmp.lt.s32.totalorder %s167, 15
      %s171 = scalar_select %p170, %s167, 15
      %s172 = smul.addr %s171, 2
      %s173 = smul.addr %s169, 32
      %s174 = sadd.s32 %s172, %s173
      %s175 = smul.addr %s174, 8
      %s176 = scalar_lea.vmem %s2, %s175
      %s177 = smul.u32 16, %s18
      %p178 = scmp.lt.s32.totalorder %s17, 1
      %s179 = scalar_select %p178, %s17, 1
      %p180 = scmp.lt.s32.totalorder %s177, 15
      %s181 = scalar_select %p180, %s177, 15
      %s182 = smul.addr %s179, 16
      %s183 = sadd.s32 %s181, %s182
      %s184 = smul.addr %s183, 8
      %s185 = scalar_lea.vmem %s0, %s184
      %s186 = smul.u32 16, %s18
      %p187 = scmp.lt.s32.totalorder %s17, 1
      %s188 = scalar_select %p187, %s17, 1
      %s189 = smul.addr %s188, 2
      %s190 = scalar_lea.vmem %s1, %s189
      %s191 = smul.u32 16, %s18
      %p192 = scmp.lt.s32.totalorder %s17, 1
      %s193 = scalar_select %p192, %s17, 1
      %p194 = scmp.lt.s32.totalorder %s191, 15
      %s195 = scalar_select %p194, %s191, 15
      %s196 = smul.addr %s195, 2
      %s197 = smul.addr %s193, 32
      %s198 = sadd.s32 %s196, %s197
      %s199 = smul.addr %s198, 8
      %s200 = scalar_lea.vmem %s2, %s199
      %s201 = smul.u32 16, %s18
      %v202 = vld [vmem:[%s185] sm:$0xff]
      %v203 = vld [vmem:[%s185 + $0x8] sm:$0xff]
      %v204 = vld [vmem:[%s185 + $0x10] sm:$0xff]
      %v205 = vld [vmem:[%s185 + $0x18] sm:$0xff]
      %v206 = vld [vmem:[%s185 + $0x20] sm:$0xff]
      %v207 = vld [vmem:[%s185 + $0x28] sm:$0xff]
      %v208 = vld [vmem:[%s185 + $0x30] sm:$0xff]
      %v209 = vld [vmem:[%s185 + $0x38] sm:$0xff]
      %v210 = vld [vmem:[%s185 + $0x40] sm:$0xff]
      %v211 = vld [vmem:[%s185 + $0x48] sm:$0xff]
      %v212 = vld [vmem:[%s185 + $0x50] sm:$0xff]
      %v213 = vld [vmem:[%s185 + $0x58] sm:$0xff]
      %v214 = vld [vmem:[%s185 + $0x60] sm:$0xff]
      %v215 = vld [vmem:[%s185 + $0x68] sm:$0xff]
      %v216 = vld [vmem:[%s185 + $0x70] sm:$0xff]
      %v217 = vld [vmem:[%s185 + $0x78] sm:$0xff]
      %v218 = vld [vmem:[%s190] sm:$0x3]
      %v219 = vlaneseq
      %v220 = vshrl.u32 %v219, 7
      %v221 = vsub.s32 0, %v220
      %v222 = vrot.slane %v218, %v221
      %v223 = vmul.f32 %v202, %v222
      %v224 = vmul.f32 %v203, %v222
      %v225 = vmul.f32 %v204, %v222
      %v226 = vmul.f32 %v205, %v222
      %v227 = vmul.f32 %v206, %v222
      %v228 = vmul.f32 %v207, %v222
      %v229 = vmul.f32 %v208, %v222
      %v230 = vmul.f32 %v209, %v222
      %v231 = vmul.f32 %v210, %v222
      %v232 = vmul.f32 %v211, %v222
      %v233 = vmul.f32 %v212, %v222
      %v234 = vmul.f32 %v213, %v222
      %v235 = vmul.f32 %v214, %v222
      %v236 = vmul.f32 %v215, %v222
      %v237 = vmul.f32 %v216, %v222
      %v238 = vmul.f32 %v217, %v222
      %v239 = vmul.f32 %v223, %v223
      %v240 = vmul.f32 %v224, %v224
      %v241 = vmul.f32 %v225, %v225
      %v242 = vmul.f32 %v226, %v226
      %v243 = vmul.f32 %v227, %v227
      %v244 = vmul.f32 %v228, %v228
      %v245 = vmul.f32 %v229, %v229
      %v246 = vmul.f32 %v230, %v230
      %v247 = vmul.f32 %v231, %v231
      %v248 = vmul.f32 %v232, %v232
      %v249 = vmul.f32 %v233, %v233
      %v250 = vmul.f32 %v234, %v234
      %v251 = vmul.f32 %v235, %v235
      %v252 = vmul.f32 %v236, %v236
      %v253 = vmul.f32 %v237, %v237
      %v254 = vmul.f32 %v238, %v238
      %255 = vadd.xlane.f32.xlu0 %v239
      %v256 = vpop.xlane.xlu0 %255
      %257 = vadd.xlane.f32.xlu0 %v240
      %v258 = vpop.xlane.xlu0 %257
      %259 = vadd.xlane.f32.xlu0 %v241
      %v260 = vpop.xlane.xlu0 %259
      %261 = vadd.xlane.f32.xlu0 %v242
      %v262 = vpop.xlane.xlu0 %261
      %263 = vadd.xlane.f32.xlu0 %v243
      %v264 = vpop.xlane.xlu0 %263
      %265 = vadd.xlane.f32.xlu0 %v244
      %v266 = vpop.xlane.xlu0 %265
      %267 = vadd.xlane.f32.xlu0 %v245
      %v268 = vpop.xlane.xlu0 %267
      %269 = vadd.xlane.f32.xlu0 %v246
      %v270 = vpop.xlane.xlu0 %269
      %271 = vadd.xlane.f32.xlu0 %v247
      %v272 = vpop.xlane.xlu0 %271
      %273 = vadd.xlane.f32.xlu0 %v248
      %v274 = vpop.xlane.xlu0 %273
      %275 = vadd.xlane.f32.xlu0 %v249
      %v276 = vpop.xlane.xlu0 %275
      %277 = vadd.xlane.f32.xlu0 %v250
      %v278 = vpop.xlane.xlu0 %277
      %279 = vadd.xlane.f32.xlu0 %v251
      %v280 = vpop.xlane.xlu0 %279
      %281 = vadd.xlane.f32.xlu0 %v252
      %v282 = vpop.xlane.xlu0 %281
      %283 = vadd.xlane.f32.xlu0 %v253
      %v284 = vpop.xlane.xlu0 %283
      %285 = vadd.xlane.f32.xlu0 %v254
      %v286 = vpop.xlane.xlu0 %285
      %v287 = vmax.f32 %v256, 1e-16
      %v288 = vmax.f32 %v258, 1e-16
      %v289 = vmax.f32 %v260, 1e-16
      %v290 = vmax.f32 %v262, 1e-16
      %v291 = vmax.f32 %v264, 1e-16
      %v292 = vmax.f32 %v266, 1e-16
      %v293 = vmax.f32 %v268, 1e-16
      %v294 = vmax.f32 %v270, 1e-16
      %v295 = vmax.f32 %v272, 1e-16
      %v296 = vmax.f32 %v274, 1e-16
      %v297 = vmax.f32 %v276, 1e-16
      %v298 = vmax.f32 %v278, 1e-16
      %v299 = vmax.f32 %v280, 1e-16
      %v300 = vmax.f32 %v282, 1e-16
      %v301 = vmax.f32 %v284, 1e-16
      %v302 = vmax.f32 %v286, 1e-16
      %v303 = vrsqrt.pop %v287
      %v304 = vrsqrt.pop %v288
      %v305 = vrsqrt.pop %v289
      %v306 = vrsqrt.pop %v290
      %v307 = vrsqrt.pop %v291
      %v308 = vrsqrt.pop %v292
      %v309 = vrsqrt.pop %v293
      %v310 = vrsqrt.pop %v294
      %v311 = vrsqrt.pop %v295
      %v312 = vrsqrt.pop %v296
      %v313 = vrsqrt.pop %v297
      %v314 = vrsqrt.pop %v298
      %v315 = vrsqrt.pop %v299
      %v316 = vrsqrt.pop %v300
      %v317 = vrsqrt.pop %v301
      %v318 = vrsqrt.pop %v302
      %v319 = vmul.f32 %v223, %v303
      %v320 = vmul.f32 %v224, %v304
      %v321 = vmul.f32 %v225, %v305
      %v322 = vmul.f32 %v226, %v306
      %v323 = vmul.f32 %v227, %v307
      %v324 = vmul.f32 %v228, %v308
      %v325 = vmul.f32 %v229, %v309
      %v326 = vmul.f32 %v230, %v310
      %v327 = vmul.f32 %v231, %v311
      %v328 = vmul.f32 %v232, %v312
      %v329 = vmul.f32 %v233, %v313
      %v330 = vmul.f32 %v234, %v314
      %v331 = vmul.f32 %v235, %v315
      %v332 = vmul.f32 %v236, %v316
      %v333 = vmul.f32 %v237, %v317
      %v334 = vmul.f32 %v238, %v318
      %335 = vst [vmem:[%s200] sm:$0xff] %v319
      %336 = vst [vmem:[%s200 + $0x10] sm:$0xff] %v320
      %337 = vst [vmem:[%s200 + $0x20] sm:$0xff] %v321
      %338 = vst [vmem:[%s200 + $0x30] sm:$0xff] %v322
      %339 = vst [vmem:[%s200 + $0x40] sm:$0xff] %v323
      %340 = vst [vmem:[%s200 + $0x50] sm:$0xff] %v324
      %341 = vst [vmem:[%s200 + $0x60] sm:$0xff] %v325
      %342 = vst [vmem:[%s200 + $0x70] sm:$0xff] %v326
      %343 = vst [vmem:[%s200 + $0x80] sm:$0xff] %v327
      %344 = vst [vmem:[%s200 + $0x90] sm:$0xff] %v328
      %345 = vst [vmem:[%s200 + $0xa0] sm:$0xff] %v329
      %346 = vst [vmem:[%s200 + $0xb0] sm:$0xff] %v330
      %347 = vst [vmem:[%s200 + $0xc0] sm:$0xff] %v331
      %348 = vst [vmem:[%s200 + $0xd0] sm:$0xff] %v332
      %349 = vst [vmem:[%s200 + $0xe0] sm:$0xff] %v333
      %350 = vst [vmem:[%s200 + $0xf0] sm:$0xff] %v334
      %v351 = vlaneseq
      %v352 = vshrl.u32 %v351, 7
      %v353 = vsub.s32 1, %v352
      %v354 = vrot.slane %v218, %v353
      %v355 = vmul.f32 %v202, %v354
      %v356 = vmul.f32 %v203, %v354
      %v357 = vmul.f32 %v204, %v354
      %v358 = vmul.f32 %v205, %v354
      %v359 = vmul.f32 %v206, %v354
      %v360 = vmul.f32 %v207, %v354
      %v361 = vmul.f32 %v208, %v354
      %v362 = vmul.f32 %v209, %v354
      %v363 = vmul.f32 %v210, %v354
      %v364 = vmul.f32 %v211, %v354
      %v365 = vmul.f32 %v212, %v354
      %v366 = vmul.f32 %v213, %v354
      %v367 = vmul.f32 %v214, %v354
      %v368 = vmul.f32 %v215, %v354
      %v369 = vmul.f32 %v216, %v354
      %v370 = vmul.f32 %v217, %v354
      %v371 = vmul.f32 %v355, %v355
      %v372 = vmul.f32 %v356, %v356
      %v373 = vmul.f32 %v357, %v357
      %v374 = vmul.f32 %v358, %v358
      %v375 = vmul.f32 %v359, %v359
      %v376 = vmul.f32 %v360, %v360
      %v377 = vmul.f32 %v361, %v361
      %v378 = vmul.f32 %v362, %v362
      %v379 = vmul.f32 %v363, %v363
      %v380 = vmul.f32 %v364, %v364
      %v381 = vmul.f32 %v365, %v365
      %v382 = vmul.f32 %v366, %v366
      %v383 = vmul.f32 %v367, %v367
      %v384 = vmul.f32 %v368, %v368
      %v385 = vmul.f32 %v369, %v369
      %v386 = vmul.f32 %v370, %v370
      %387 = vadd.xlane.f32.xlu0 %v371
      %v388 = vpop.xlane.xlu0 %387
      %389 = vadd.xlane.f32.xlu0 %v372
      %v390 = vpop.xlane.xlu0 %389
      %391 = vadd.xlane.f32.xlu0 %v373
      %v392 = vpop.xlane.xlu0 %391
      %393 = vadd.xlane.f32.xlu0 %v374
      %v394 = vpop.xlane.xlu0 %393
      %395 = vadd.xlane.f32.xlu0 %v375
      %v396 = vpop.xlane.xlu0 %395
      %397 = vadd.xlane.f32.xlu0 %v376
      %v398 = vpop.xlane.xlu0 %397
      %399 = vadd.xlane.f32.xlu0 %v377
      %v400 = vpop.xlane.xlu0 %399
      %401 = vadd.xlane.f32.xlu0 %v378
      %v402 = vpop.xlane.xlu0 %401
      %403 = vadd.xlane.f32.xlu0 %v379
      %v404 = vpop.xlane.xlu0 %403
      %405 = vadd.xlane.f32.xlu0 %v380
      %v406 = vpop.xlane.xlu0 %405
      %407 = vadd.xlane.f32.xlu0 %v381
      %v408 = vpop.xlane.xlu0 %407
      %409 = vadd.xlane.f32.xlu0 %v382
      %v410 = vpop.xlane.xlu0 %409
      %411 = vadd.xlane.f32.xlu0 %v383
      %v412 = vpop.xlane.xlu0 %411
      %413 = vadd.xlane.f32.xlu0 %v384
      %v414 = vpop.xlane.xlu0 %413
      %415 = vadd.xlane.f32.xlu0 %v385
      %v416 = vpop.xlane.xlu0 %415
      %417 = vadd.xlane.f32.xlu0 %v386
      %v418 = vpop.xlane.xlu0 %417
      %v419 = vmax.f32 %v388, 1e-16
      %v420 = vmax.f32 %v390, 1e-16
      %v421 = vmax.f32 %v392, 1e-16
      %v422 = vmax.f32 %v394, 1e-16
      %v423 = vmax.f32 %v396, 1e-16
      %v424 = vmax.f32 %v398, 1e-16
      %v425 = vmax.f32 %v400, 1e-16
      %v426 = vmax.f32 %v402, 1e-16
      %v427 = vmax.f32 %v404, 1e-16
      %v428 = vmax.f32 %v406, 1e-16
      %v429 = vmax.f32 %v408, 1e-16
      %v430 = vmax.f32 %v410, 1e-16
      %v431 = vmax.f32 %v412, 1e-16
      %v432 = vmax.f32 %v414, 1e-16
      %v433 = vmax.f32 %v416, 1e-16
      %v434 = vmax.f32 %v418, 1e-16
      %v435 = vrsqrt.pop %v419
      %v436 = vrsqrt.pop %v420
      %v437 = vrsqrt.pop %v421
      %v438 = vrsqrt.pop %v422
      %v439 = vrsqrt.pop %v423
      %v440 = vrsqrt.pop %v424
      %v441 = vrsqrt.pop %v425
      %v442 = vrsqrt.pop %v426
      %v443 = vrsqrt.pop %v427
      %v444 = vrsqrt.pop %v428
      %v445 = vrsqrt.pop %v429
      %v446 = vrsqrt.pop %v430
      %v447 = vrsqrt.pop %v431
      %v448 = vrsqrt.pop %v432
      %v449 = vrsqrt.pop %v433
      %v450 = vrsqrt.pop %v434
      %v451 = vmul.f32 %v355, %v435
      %v452 = vmul.f32 %v356, %v436
      %v453 = vmul.f32 %v357, %v437
      %v454 = vmul.f32 %v358, %v438
      %v455 = vmul.f32 %v359, %v439
      %v456 = vmul.f32 %v360, %v440
      %v457 = vmul.f32 %v361, %v441
      %v458 = vmul.f32 %v362, %v442
      %v459 = vmul.f32 %v363, %v443
      %v460 = vmul.f32 %v364, %v444
      %v461 = vmul.f32 %v365, %v445
      %v462 = vmul.f32 %v366, %v446
      %v463 = vmul.f32 %v367, %v447
      %v464 = vmul.f32 %v368, %v448
      %v465 = vmul.f32 %v369, %v449
      %v466 = vmul.f32 %v370, %v450
      %467 = vst [vmem:[%s200 + $0x8] sm:$0xff] %v451
      %468 = vst [vmem:[%s200 + $0x18] sm:$0xff] %v452
      %469 = vst [vmem:[%s200 + $0x28] sm:$0xff] %v453
      %470 = vst [vmem:[%s200 + $0x38] sm:$0xff] %v454
      %471 = vst [vmem:[%s200 + $0x48] sm:$0xff] %v455
      %472 = vst [vmem:[%s200 + $0x58] sm:$0xff] %v456
      %473 = vst [vmem:[%s200 + $0x68] sm:$0xff] %v457
      %474 = vst [vmem:[%s200 + $0x78] sm:$0xff] %v458
      %475 = vst [vmem:[%s200 + $0x88] sm:$0xff] %v459
      %476 = vst [vmem:[%s200 + $0x98] sm:$0xff] %v460
      %477 = vst [vmem:[%s200 + $0xa8] sm:$0xff] %v461
      %478 = vst [vmem:[%s200 + $0xb8] sm:$0xff] %v462
      %479 = vst [vmem:[%s200 + $0xc8] sm:$0xff] %v463
      %480 = vst [vmem:[%s200 + $0xd8] sm:$0xff] %v464
      %481 = vst [vmem:[%s200 + $0xe8] sm:$0xff] %v465
      %482 = vst [vmem:[%s200 + $0xf8] sm:$0xff] %v466
      %s483 = smul.u32 16, %s18
      %p484 = scmp.lt.s32.totalorder %s17, 1
      %s485 = scalar_select %p484, %s17, 1
      %p486 = scmp.lt.s32.totalorder %s483, 15
      %s487 = scalar_select %p486, %s483, 15
      %s488 = smul.addr %s487, 2
      %s489 = smul.addr %s485, 32
      %s490 = sadd.s32 %s488, %s489
      %s491 = smul.addr %s490, 8
      %s492 = scalar_lea.vmem %s2, %s491
      // Predicated region
      $region29: #{hetgsl_forward.12} parent=27 // pred_check
        %p493 = pneg %p99
      $region30: #{hetgsl_forward.12} parent=27 // pred_check_branch
        %495 = sbr.rel (%p493) target = $region32
      $region31: #{hetgsl_forward.12} parent=27 // pred_region
        %s496 = smul.u32 16, %s18
      $region32: #{hetgsl_forward.12} parent=27 // pred_fallthru
        _
    $region28: #{hetgsl_forward.12} parent=5 // pred_fallthru
      _
    %p497 = scmp.le.s32.totalorder 2, %s8
    // Predicated region
    $region33: #{hetgsl_forward.12} parent=5 // pred_check
      %p498 = pneg %p497
    $region34: #{hetgsl_forward.12} parent=5 // pred_check_branch
      %500 = sbr.rel (%p498) target = $region36
    $region35: #{hetgsl_forward.12} parent=5 // pred_region
      %s501 = ssub.s32 %s8, 2
      // Predicated region
      $region37: #{hetgsl_forward.12} parent=35 // pred_check
        %p502 = pneg %p105
      $region38: #{hetgsl_forward.12} parent=35 // pred_check_branch
        %504 = sbr.rel (%p502) target = $region40
      $region39: #{hetgsl_forward.12} parent=35 // pred_region
        %s505 = smul.u32 16, %s20
        %p506 = scmp.lt.s32.totalorder %s19, 1
        %s507 = scalar_select %p506, %s19, 1
        %p508 = scmp.lt.s32.totalorder %s505, 15
        %s509 = scalar_select %p508, %s505, 15
        %s510 = smul.addr %s509, 2
        %s511 = smul.addr %s507, 32
        %s512 = sadd.s32 %s510, %s511
        %s513 = smul.addr %s512, 8
        %s514 = scalar_lea.vmem %s2, %s513
      $region40: #{hetgsl_forward.12} parent=35 // pred_fallthru
        _
    $region36: #{hetgsl_forward.12} parent=5 // pred_fallthru
      _
  $region6: #{hetgsl_forward.12} parent=0 // loop_footer
    %s12 = sadd.s32 1, %s8
  $region7: #{hetgsl_forward.12} parent=0 // loop_footer_branch
    %7 = sbr.rel target = $region3
  $region8: #{hetgsl_forward.12} parent=0 // loop_exit
    _

// kernel: hetgsl_forward.14
$region0: #{hetgsl_forward.14}
  #allocation0 [shape = 'u32[]', space=smem, size = 0x4, offset = 0x4, fixed_abs, tag = 'smem constant byte address 0x4 - core index']
  #allocation1 [shape = 'u32[144,128]{1,0:T(1,128)}', space=vmem, size = 0x12000, scoped, tag = 'internal scratch']
  %s0 = inlined_call_operand.vmem [shape: f32[2,128,256], index: 0, kind: input, shape index: {}, may-alias: {0,1}]
  %s1 = inlined_call_operand.vmem [shape: f32[2,128,256], index: 1, kind: input, shape index: {}, may-alias: {0,1}]
  %s2 = inlined_call_operand.vmem [shape: f32[2,1,1], index: 2, kind: input, shape index: {}]
  %s3 = inlined_call_operand.vmem [shape: bf16[2,128,128], index: 3, kind: output, shape index: {}]
  %s4 = sld [smem:[#allocation0]]
  $region45: #{hetgsl_forward.14} parent=0
    _
  %s6 = ssub.s32 1, %s4
  %s7 = scalar_select 0, %s6, %s4
  loop: start=0, step=1, limit=4
  $region2: #{hetgsl_forward.14} parent=0 // loop_pre_header
    _
  $region3: #{hetgsl_forward.14} parent=0 // loop_header
    %s9 = sphi 0, %s13
    %p10 = scmp.ge.s32.totalorder %s9, 4
    %s16 = sphi 0, %s35
    %s17 = sphi 0, %s31
    %s18 = sphi 0, %s27
    %s19 = sphi 0, %s16
    %s20 = sphi 0, %s17
    %s21 = sphi 0, %s18
    %s22 = sphi 0, %s19
    %s23 = sphi 0, %s20
    %s24 = sphi 0, %s21
    %s40 = sphi 0, %s42
    %s43 = sphi 0, %s40
    %s44 = sphi 0, %s43
    %s60 = sphi 0, %s44
    %s68 = sphi 0, %s70
    %s71 = sphi 0, %s68
    %s72 = sphi 0, %s71
    %s88 = sphi 0, %s72
    %s94 = sphi 0, %s96
    %s97 = sphi 0, %s94
    %s98 = sphi 0, %s97
    %s114 = sphi 0, %s98
    %s124 = sphi 0, %s126
    %s127 = sphi 0, %s124
    %s128 = sphi 0, %s127
    %s144 = sphi 0, %s128
  $region4: #{hetgsl_forward.14} parent=0 // loop_header_branch
    %12 = sbr.rel (%p10) target = $region8
  $region5: #{hetgsl_forward.14} parent=0 // loop_body
    %s14 = ssub.s32 %s9, 1
    %s15 = ssub.s32 %s9, 2
    %s25 = sadd.s32 1, %s18
    %p26 = scmp.ge.s32.totalorder %s25, 1
    %s27 = scalar_select %p26, 0, %s25
    %s28 = sadd.s32 1, %s17
    %s29 = scalar_select %p26, %s28, %s17
    %p30 = scmp.ge.s32.totalorder %s29, 1
    %s31 = scalar_select %p30, 0, %s29
    %s32 = sadd.s32 1, %s16
    %s33 = scalar_select %p30, %s32, %s16
    %p34 = scmp.ge.s32.totalorder %s33, 2
    %s35 = scalar_select %p34, 0, %s33
    %s36 = ssub.s32 %s16, %s35
    %s37 = ssub.s32 %s17, %s31
    %s38 = sor.u32 %s36, %s37
    %p39 = scmp.eq.s32.totalorder %s38, 0
    %s41 = sadd.s32 %s40, 1
    %s42 = scalar_select %p39, %s40, %s41
    %p45 = pneg %p39
    %p46 = scmp.eq.s32.totalorder %s9, 1
    %p47 = por %p45, %p46
    %p48 = scmp.ne.s32.totalorder %s40, %s43
    %p49 = scmp.eq.s32.totalorder %s9, 0
    %p50 = por %p48, %p49
    %p51 = scmp.ne.s32.totalorder %s40, %s43
    %p52 = scmp.eq.s32.totalorder %s14, 1
    %p53 = por %p51, %p52
    %p54 = scmp.ne.s32.totalorder %s43, %s44
    %p55 = scmp.eq.s32.totalorder %s14, 0
    %p56 = por %p54, %p55
    %p57 = scmp.ne.s32.totalorder %s43, %s44
    %p58 = scmp.eq.s32.totalorder %s15, 1
    %p59 = por %p57, %p58
    %p61 = scmp.ne.s32.totalorder %s44, %s60
    %p62 = scmp.eq.s32.totalorder %s15, 0
    %p63 = por %p61, %p62
    %s64 = ssub.s32 %s16, %s35
    %s65 = ssub.s32 %s18, %s27
    %s66 = sor.u32 %s64, %s65
    %p67 = scmp.eq.s32.totalorder %s66, 0
    %s69 = sadd.s32 %s68, 1
    %s70 = scalar_select %p67, %s68, %s69
    %p73 = pneg %p67
    %p74 = scmp.eq.s32.totalorder %s9, 1
    %p75 = por %p73, %p74
    %p76 = scmp.ne.s32.totalorder %s68, %s71
    %p77 = scmp.eq.s32.totalorder %s9, 0
    %p78 = por %p76, %p77
    %p79 = scmp.ne.s32.totalorder %s68, %s71
    %p80 = scmp.eq.s32.totalorder %s14, 1
    %p81 = por %p79, %p80
    %p82 = scmp.ne.s32.totalorder %s71, %s72
    %p83 = scmp.eq.s32.totalorder %s14, 0
    %p84 = por %p82, %p83
    %p85 = scmp.ne.s32.totalorder %s71, %s72
    %p86 = scmp.eq.s32.totalorder %s15, 1
    %p87 = por %p85, %p86
    %p89 = scmp.ne.s32.totalorder %s72, %s88
    %p90 = scmp.eq.s32.totalorder %s15, 0
    %p91 = por %p89, %p90
    %s92 = ssub.s32 %s16, %s35
    %p93 = scmp.eq.s32.totalorder %s92, 0
    %s95 = sadd.s32 %s94, 1
    %s96 = scalar_select %p93, %s94, %s95
    %p99 = pneg %p93
    %p100 = scmp.eq.s32.totalorder %s9, 1
    %p101 = por %p99, %p100
    %p102 = scmp.ne.s32.totalorder %s94, %s97
    %p103 = scmp.eq.s32.totalorder %s9, 0
    %p104 = por %p102, %p103
    %p105 = scmp.ne.s32.totalorder %s94, %s97
    %p106 = scmp.eq.s32.totalorder %s14, 1
    %p107 = por %p105, %p106
    %p108 = scmp.ne.s32.totalorder %s97, %s98
    %p109 = scmp.eq.s32.totalorder %s14, 0
    %p110 = por %p108, %p109
    %p111 = scmp.ne.s32.totalorder %s97, %s98
    %p112 = scmp.eq.s32.totalorder %s15, 1
    %p113 = por %p111, %p112
    %p115 = scmp.ne.s32.totalorder %s98, %s114
    %p116 = scmp.eq.s32.totalorder %s15, 0
    %p117 = por %p115, %p116
    %s118 = ssub.s32 %s16, %s35
    %s119 = ssub.s32 %s17, %s31
    %s120 = sor.u32 %s118, %s119
    %s121 = ssub.s32 %s18, %s27
    %s122 = sor.u32 %s120, %s121
    %p123 = scmp.eq.s32.totalorder %s122, 0
    %s125 = sadd.s32 %s124, 1
    %s126 = scalar_select %p123, %s124, %s125
    %p129 = pneg %p123
    %p130 = scmp.eq.s32.totalorder %s9, 1
    %p131 = por %p129, %p130
    %p132 = scmp.ne.s32.totalorder %s124, %s127
    %p133 = scmp.eq.s32.totalorder %s9, 0
    %p134 = por %p132, %p133
    %p135 = scmp.ne.s32.totalorder %s124, %s127
    %p136 = scmp.eq.s32.totalorder %s14, 1
    %p137 = por %p135, %p136
    %p138 = scmp.ne.s32.totalorder %s127, %s128
    %p139 = scmp.eq.s32.totalorder %s14, 0
    %p140 = por %p138, %p139
    %p141 = scmp.ne.s32.totalorder %s127, %s128
    %p142 = scmp.eq.s32.totalorder %s15, 1
    %p143 = por %p141, %p142
    %p145 = scmp.ne.s32.totalorder %s128, %s144
    %p146 = scmp.eq.s32.totalorder %s15, 0
    %p147 = por %p145, %p146
    %p148 = scmp.le.s32.totalorder 1, %s9
    %p149 = scmp.lt.s32.totalorder %s9, 3
    %p150 = pnand %p148, %p149
    %p151 = pneg %p150
    // Predicated region
    $region9: #{hetgsl_forward.14} parent=5 // pred_check
      _
    $region10: #{hetgsl_forward.14} parent=5 // pred_check_branch
      %153 = sbr.rel (%p150) target = $region12
    $region11: #{hetgsl_forward.14} parent=5 // pred_region
      %s154 = ssub.s32 %s9, 1
    $region12: #{hetgsl_forward.14} parent=5 // pred_fallthru
      _
    %p155 = scmp.lt.s32.totalorder %s9, 2
    // Predicated region
    $region13: #{hetgsl_forward.14} parent=5 // pred_check
      %p156 = pneg %p155
    $region14: #{hetgsl_forward.14} parent=5 // pred_check_branch
      %158 = sbr.rel (%p156) target = $region16
    $region15: #{hetgsl_forward.14} parent=5 // pred_region
      // Predicated region
      $region17: #{hetgsl_forward.14} parent=15 // pred_check
        %p159 = pneg %p50
      $region18: #{hetgsl_forward.14} parent=15 // pred_check_branch
        %161 = sbr.rel (%p159) target = $region20
      $region19: #{hetgsl_forward.14} parent=15 // pred_region
        %s162 = smul.u32 16, %s17
        %p163 = scmp.lt.s32.totalorder %s16, 1
        %s164 = scalar_select %p163, %s16, 1
        %p165 = scmp.lt.s32.totalorder %s162, 15
        %s166 = scalar_select %p165, %s162, 15
        %s167 = smul.addr %s166, 2
        %s168 = smul.addr %s164, 32
        %s169 = sadd.s32 %s167, %s168
        %s170 = smul.addr %s169, 8
        %s171 = scalar_lea.vmem %s0, %s170
        %s172 = smul.u32 16, %s17
      $region20: #{hetgsl_forward.14} parent=15 // pred_fallthru
        _
      // Predicated region
      $region21: #{hetgsl_forward.14} parent=15 // pred_check
        %p173 = pneg %p78
      $region22: #{hetgsl_forward.14} parent=15 // pred_check_branch
        %175 = sbr.rel (%p173) target = $region24
      $region23: #{hetgsl_forward.14} parent=15 // pred_region
        %s176 = smul.u32 16, %s18
        %p177 = scmp.lt.s32.totalorder %s16, 1
        %s178 = scalar_select %p177, %s16, 1
        %p179 = scmp.lt.s32.totalorder %s176, 15
        %s180 = scalar_select %p179, %s176, 15
        %s181 = smul.addr %s180, 2
        %s182 = smul.addr %s178, 32
        %s183 = sadd.s32 %s181, %s182
        %s184 = smul.addr %s183, 8
        %s185 = scalar_lea.vmem %s1, %s184
        %s186 = smul.u32 16, %s18
      $region24: #{hetgsl_forward.14} parent=15 // pred_fallthru
        _
      // Predicated region
      $region25: #{hetgsl_forward.14} parent=15 // pred_check
        %p187 = pneg %p104
      $region26: #{hetgsl_forward.14} parent=15 // pred_check_branch
        %189 = sbr.rel (%p187) target = $region28
      $region27: #{hetgsl_forward.14} parent=15 // pred_region
        %p190 = scmp.lt.s32.totalorder %s16, 1
        %s191 = scalar_select %p190, %s16, 1
        %s192 = scalar_lea.vmem %s2, %s191
      $region28: #{hetgsl_forward.14} parent=15 // pred_fallthru
        _
    $region16: #{hetgsl_forward.14} parent=5 // pred_fallthru
      _
    %p193 = scmp.le.s32.totalorder 1, %s9
    %p194 = scmp.lt.s32.totalorder %s9, 3
    %p195 = pnand %p193, %p194
    %p196 = pneg %p195
    // Predicated region
    $region29: #{hetgsl_forward.14} parent=5 // pred_check
      _
    $region30: #{hetgsl_forward.14} parent=5 // pred_check_branch
      %198 = sbr.rel (%p195) target = $region32
    $region31: #{hetgsl_forward.14} parent=5 // pred_region
      %s199 = ssub.s32 %s9, 1
      %s200 = smul.u32 16, %s20
      %p201 = scmp.lt.s32.totalorder %s19, 1
      %s202 = scalar_select %p201, %s19, 1
      %p203 = scmp.lt.s32.totalorder %s200, 15
      %s204 = scalar_select %p203, %s200, 15
      %s205 = smul.addr %s204, 2
      %s206 = smul.addr %s202, 32
      %s207 = sadd.s32 %s205, %s206
      %s208 = smul.addr %s207, 8
      %s209 = scalar_lea.vmem %s0, %s208
      %p210 = pneg %p56
      %p211 = pneg %p53
      %s212 = smul.u32 16, %s21
      %p213 = scmp.lt.s32.totalorder %s19, 1
      %s214 = scalar_select %p213, %s19, 1
      %p215 = scmp.lt.s32.totalorder %s212, 15
      %s216 = scalar_select %p215, %s212, 15
      %s217 = smul.addr %s216, 2
      %s218 = smul.addr %s214, 32
      %s219 = sadd.s32 %s217, %s218
      %s220 = smul.addr %s219, 8
      %s221 = scalar_lea.vmem %s1, %s220
      %p222 = pneg %p84
      %p223 = pneg %p81
      %p224 = scmp.lt.s32.totalorder %s19, 1
      %s225 = scalar_select %p224, %s19, 1
      %s226 = scalar_lea.vmem %s2, %s225
      %p227 = pneg %p110
      %p228 = pneg %p107
      %p229 = pneg %p140
      %p230 = pneg %p137
      %s231 = smul.u32 16, %s20
      %p232 = scmp.lt.s32.totalorder %s19, 1
      %s233 = scalar_select %p232, %s19, 1
      %p234 = scmp.lt.s32.totalorder %s231, 15
      %s235 = scalar_select %p234, %s231, 15
      %p236 = scmp.lt.s32.totalorder %s21, 0
      %s237 = scalar_select %p236, %s21, 0
      %s238 = sadd.s32 %s237, %s235
      %s239 = smul.addr %s233, 16
      %s240 = sadd.s32 %s238, %s239
      %s241 = smul.addr %s240, 4
      %s242 = scalar_lea.vmem %s3, %s241
      %s243 = smul.u32 16, %s20
      %p244 = scmp.lt.s32.totalorder %s19, 1
      %s245 = scalar_select %p244, %s19, 1
      %p246 = scmp.lt.s32.totalorder %s243, 15
      %s247 = scalar_select %p246, %s243, 15
      %s248 = smul.addr %s247, 2
      %s249 = smul.addr %s245, 32
      %s250 = sadd.s32 %s248, %s249
      %s251 = smul.addr %s250, 8
      %s252 = scalar_lea.vmem %s0, %s251
      %s253 = smul.u32 16, %s20
      %s254 = smul.u32 16, %s21
      %p255 = scmp.lt.s32.totalorder %s19, 1
      %s256 = scalar_select %p255, %s19, 1
      %p257 = scmp.lt.s32.totalorder %s254, 15
      %s258 = scalar_select %p257, %s254, 15
      %s259 = smul.addr %s258, 2
      %s260 = smul.addr %s256, 32
      %s261 = sadd.s32 %s259, %s260
      %s262 = smul.addr %s261, 8
      %s263 = scalar_lea.vmem %s1, %s262
      %s264 = smul.u32 16, %s21
      %p265 = scmp.lt.s32.totalorder %s19, 1
      %s266 = scalar_select %p265, %s19, 1
      %s267 = scalar_lea.vmem %s2, %s266
      %s268 = smul.u32 16, %s20
      %p269 = scmp.lt.s32.totalorder %s19, 1
      %s270 = scalar_select %p269, %s19, 1
      %p271 = scmp.lt.s32.totalorder %s268, 15
      %s272 = scalar_select %p271, %s268, 15
      %p273 = scmp.lt.s32.totalorder %s21, 0
      %s274 = scalar_select %p273, %s21, 0
      %s275 = sadd.s32 %s274, %s272
      %s276 = smul.addr %s270, 16
      %s277 = sadd.s32 %s275, %s276
      %s278 = smul.addr %s277, 4
      %s279 = scalar_lea.vmem %s3, %s278
      %s280 = smul.u32 16, %s20
      %v281 = vld [vmem:[%s252] sm:$0xff]
      %v282 = vld [vmem:[%s252 + $0x8] sm:$0xff]
      %v283 = vld [vmem:[%s252 + $0x10] sm:$0xff]
      %v284 = vld [vmem:[%s252 + $0x18] sm:$0xff]
      %v285 = vld [vmem:[%s252 + $0x20] sm:$0xff]
      %v286 = vld [vmem:[%s252 + $0x28] sm:$0xff]
      %v287 = vld [vmem:[%s252 + $0x30] sm:$0xff]
      %v288 = vld [vmem:[%s252 + $0x38] sm:$0xff]
      %v289 = vld [vmem:[%s252 + $0x40] sm:$0xff]
      %v290 = vld [vmem:[%s252 + $0x48] sm:$0xff]
      %v291 = vld [vmem:[%s252 + $0x50] sm:$0xff]
      %v292 = vld [vmem:[%s252 + $0x58] sm:$0xff]
      %v293 = vld [vmem:[%s252 + $0x60] sm:$0xff]
      %v294 = vld [vmem:[%s252 + $0x68] sm:$0xff]
      %v295 = vld [vmem:[%s252 + $0x70] sm:$0xff]
      %v296 = vld [vmem:[%s252 + $0x78] sm:$0xff]
      %v297 = vld [vmem:[%s252 + $0x80] sm:$0xff]
      %v298 = vld [vmem:[%s252 + $0x88] sm:$0xff]
      %v299 = vld [vmem:[%s252 + $0x90] sm:$0xff]
      %v300 = vld [vmem:[%s252 + $0x98] sm:$0xff]
      %v301 = vld [vmem:[%s252 + $0xa0] sm:$0xff]
      %v302 = vld [vmem:[%s252 + $0xa8] sm:$0xff]
      %v303 = vld [vmem:[%s252 + $0xb0] sm:$0xff]
      %v304 = vld [vmem:[%s252 + $0xb8] sm:$0xff]
      %v305 = vld [vmem:[%s252 + $0xc0] sm:$0xff]
      %v306 = vld [vmem:[%s252 + $0xc8] sm:$0xff]
      %v307 = vld [vmem:[%s252 + $0xd0] sm:$0xff]
      %v308 = vld [vmem:[%s252 + $0xd8] sm:$0xff]
      %v309 = vld [vmem:[%s252 + $0xe0] sm:$0xff]
      %v310 = vld [vmem:[%s252 + $0xe8] sm:$0xff]
      %v311 = vld [vmem:[%s252 + $0xf0] sm:$0xff]
      %v312 = vld [vmem:[%s252 + $0xf8] sm:$0xff]
      %v313 = vld [vmem:[%s263] sm:$0xff]
      %v314 = vld [vmem:[%s263 + $0x8] sm:$0xff]
      %v315 = vld [vmem:[%s263 + $0x10] sm:$0xff]
      %v316 = vld [vmem:[%s263 + $0x18] sm:$0xff]
      %v317 = vld [vmem:[%s263 + $0x20] sm:$0xff]
      %v318 = vld [vmem:[%s263 + $0x28] sm:$0xff]
      %v319 = vld [vmem:[%s263 + $0x30] sm:$0xff]
      %v320 = vld [vmem:[%s263 + $0x38] sm:$0xff]
      %v321 = vld [vmem:[%s263 + $0x40] sm:$0xff]
      %v322 = vld [vmem:[%s263 + $0x48] sm:$0xff]
      %v323 = vld [vmem:[%s263 + $0x50] sm:$0xff]
      %v324 = vld [vmem:[%s263 + $0x58] sm:$0xff]
      %v325 = vld [vmem:[%s263 + $0x60] sm:$0xff]
      %v326 = vld [vmem:[%s263 + $0x68] sm:$0xff]
      %v327 = vld [vmem:[%s263 + $0x70] sm:$0xff]
      %v328 = vld [vmem:[%s263 + $0x78] sm:$0xff]
      %v329 = vld [vmem:[%s263 + $0x80] sm:$0xff]
      %v330 = vld [vmem:[%s263 + $0x88] sm:$0xff]
      %v331 = vld [vmem:[%s263 + $0x90] sm:$0xff]
      %v332 = vld [vmem:[%s263 + $0x98] sm:$0xff]
      %v333 = vld [vmem:[%s263 + $0xa0] sm:$0xff]
      %v334 = vld [vmem:[%s263 + $0xa8] sm:$0xff]
      %v335 = vld [vmem:[%s263 + $0xb0] sm:$0xff]
      %v336 = vld [vmem:[%s263 + $0xb8] sm:$0xff]
      %v337 = vld [vmem:[%s263 + $0xc0] sm:$0xff]
      %v338 = vld [vmem:[%s263 + $0xc8] sm:$0xff]
      %v339 = vld [vmem:[%s263 + $0xd0] sm:$0xff]
      %v340 = vld [vmem:[%s263 + $0xd8] sm:$0xff]
      %v341 = vld [vmem:[%s263 + $0xe0] sm:$0xff]
      %v342 = vld [vmem:[%s263 + $0xe8] sm:$0xff]
      %v343 = vld [vmem:[%s263 + $0xf0] sm:$0xff]
      %v344 = vld [vmem:[%s263 + $0xf8] sm:$0xff]
      %345 = vmatprep.subr.mxu0 %v314
      %346 = vmatpush1.xpose.msra.mxu0 %v313
      %347 = vmatprep.subr.mxu0 %v316
      %348 = vmatpush1.xpose.msra.mxu0 %v315
      %349 = vmatprep.subr.mxu0 %v318
      %350 = vmatpush1.xpose.msra.mxu0 %v317
      %351 = vmatprep.subr.mxu0 %v320
      %352 = vmatpush1.xpose.msra.mxu0 %v319
      %353 = vmatprep.subr.mxu0 %v322
      %354 = vmatpush1.xpose.msra.mxu0 %v321
      %355 = vmatprep.subr.mxu0 %v324
      %356 = vmatpush1.xpose.msra.mxu0 %v323
      %357 = vmatprep.subr.mxu0 %v326
      %358 = vmatpush1.xpose.msra.mxu0 %v325
      %359 = vmatprep.subr.mxu0 %v328
      %360 = vmatpush1.xpose.msra.mxu0 %v327
      %361 = vmatprep.subr.mxu0 %v330
      %362 = vmatpush1.xpose.msra.mxu0 %v329
      %363 = vmatprep.subr.mxu0 %v332
      %364 = vmatpush1.xpose.msra.mxu0 %v331
      %365 = vmatprep.subr.mxu0 %v334
      %366 = vmatpush1.xpose.msra.mxu0 %v333
      %367 = vmatprep.subr.mxu0 %v336
      %368 = vmatpush1.xpose.msra.mxu0 %v335
      %369 = vmatprep.subr.mxu0 %v338
      %370 = vmatpush1.xpose.msra.mxu0 %v337
      %371 = vmatprep.subr.mxu0 %v340
      %372 = vmatpush1.xpose.msra.mxu0 %v339
      %373 = vmatprep.subr.mxu0 %v342
      %374 = vmatpush1.xpose.msra.mxu0 %v341
      %375 = vmatprep.subr.mxu0 %v344
      %376 = vmatpush1.xpose.msra.mxu0 %v343
      %377 = vmatprep.subr.mxu0 0.0
      %378 = vmatpush1.xpose.msra.mxu0 0.0
      %379 = vmatprep.subr.mxu0 0.0
      %380 = vmatpush1.xpose.msra.mxu0 0.0
      %381 = vmatprep.subr.mxu0 0.0
      %382 = vmatpush1.xpose.msra.mxu0 0.0
      %383 = vmatprep.subr.mxu0 0.0
      %384 = vmatpush1.xpose.msra.mxu0 0.0
      %385 = vmatprep.subr.mxu0 0.0
      %386 = vmatpush1.xpose.msra.mxu0 0.0
      %387 = vmatprep.subr.mxu0 0.0
      %388 = vmatpush1.xpose.msra.mxu0 0.0
      %389 = vmatprep.subr.mxu0 0.0
      %390 = vmatpush1.xpose.msra.mxu0 0.0
      %391 = vmatprep.subr.mxu0 0.0
      %392 = vmatpush1.xpose.msra.mxu0 0.0
      %393 = vmatprep.subr.mxu0 0.0
      %394 = vmatpush1.xpose.msra.mxu0 0.0
      %395 = vmatprep.subr.mxu0 0.0
      %396 = vmatpush1.xpose.msra.mxu0 0.0
      %397 = vmatprep.subr.mxu0 0.0
      %398 = vmatpush1.xpose.msra.mxu0 0.0
      %399 = vmatprep.subr.mxu0 0.0
      %400 = vmatpush1.xpose.msra.mxu0 0.0
      %401 = vmatprep.subr.mxu0 0.0
      %402 = vmatpush1.xpose.msra.mxu0 0.0
      %403 = vmatprep.subr.mxu0 0.0
      %404 = vmatpush1.xpose.msra.mxu0 0.0
      %405 = vmatprep.subr.mxu0 0.0
      %406 = vmatpush1.xpose.msra.mxu0 0.0
      %407 = vmatprep.subr.mxu0 0.0
      %408 = vmatpush1.xpose.msra.mxu0 0.0
      %409 = vmatprep.mubr.f32.mxu0 %v282
      %410 = vmatmul.mubr.f32.gmra.mrb[0].mxu0 %v281
      %v411 = vpop.f32.mrb[0].mxu0
      %v412 = vadd.f32 0.0, %v411
      %v413 = vpop.f32.mrb[0].mxu0
      %414 = vmatprep.mubr.f32.mxu0 %v284
      %415 = vmatmul.mubr.f32.gmra.mrb[0].mxu0 %v283
      %v416 = vpop.f32.mrb[0].mxu0
      %v417 = vadd.f32 0.0, %v416
      %v418 = vpop.f32.mrb[0].mxu0
      %419 = vmatprep.mubr.f32.mxu0 %v286
      %420 = vmatmul.mubr.f32.gmra.mrb[0].mxu0 %v285
      %v421 = vpop.f32.mrb[0].mxu0
      %v422 = vadd.f32 0.0, %v421
      %v423 = vpop.f32.mrb[0].mxu0
      %424 = vmatprep.mubr.f32.mxu0 %v288
      %425 = vmatmul.mubr.f32.gmra.mrb[0].mxu0 %v287
      %v426 = vpop.f32.mrb[0].mxu0
      %v427 = vadd.f32 0.0, %v426
      %v428 = vpop.f32.mrb[0].mxu0
      %429 = vmatprep.mubr.f32.mxu0 %v290
      %430 = vmatmul.mubr.f32.gmra.mrb[0].mxu0 %v289
      %v431 = vpop.f32.mrb[0].mxu0
      %v432 = vadd.f32 0.0, %v431
      %v433 = vpop.f32.mrb[0].mxu0
      %434 = vmatprep.mubr.f32.mxu0 %v292
      %435 = vmatmul.mubr.f32.gmra.mrb[0].mxu0 %v291
      %v436 = vpop.f32.mrb[0].mxu0
      %v437 = vadd.f32 0.0, %v436
      %v438 = vpop.f32.mrb[0].mxu0
      %439 = vmatprep.mubr.f32.mxu0 %v294
      %440 = vmatmul.mubr.f32.gmra.mrb[0].mxu0 %v293
      %v441 = vpop.f32.mrb[0].mxu0
      %v442 = vadd.f32 0.0, %v441
      %v443 = vpop.f32.mrb[0].mxu0
      %444 = vmatprep.mubr.f32.mxu0 %v296
      %445 = vmatmul.mubr.f32.gmra.mrb[0].mxu0 %v295
      %v446 = vpop.f32.mrb[0].mxu0
      %v447 = vadd.f32 0.0, %v446
      %v448 = vpop.f32.mrb[0].mxu0
      %449 = vmatprep.mubr.f32.mxu0 %v298
      %450 = vmatmul.mubr.f32.gmra.mrb[0].mxu0 %v297
      %v451 = vpop.f32.mrb[0].mxu0
      %v452 = vadd.f32 0.0, %v451
      %v453 = vpop.f32.mrb[0].mxu0
      %454 = vmatprep.mubr.f32.mxu0 %v300
      %455 = vmatmul.mubr.f32.gmra.mrb[0].mxu0 %v299
      %v456 = vpop.f32.mrb[0].mxu0
      %v457 = vadd.f32 0.0, %v456
      %v458 = vpop.f32.mrb[0].mxu0
      %459 = vmatprep.mubr.f32.mxu0 %v302
      %460 = vmatmul.mubr.f32.gmra.mrb[0].mxu0 %v301
      %v461 = vpop.f32.mrb[0].mxu0
      %v462 = vadd.f32 0.0, %v461
      %v463 = vpop.f32.mrb[0].mxu0
      %464 = vmatprep.mubr.f32.mxu0 %v304
      %465 = vmatmul.mubr.f32.gmra.mrb[0].mxu0 %v303
      %v466 = vpop.f32.mrb[0].mxu0
      %v467 = vadd.f32 0.0, %v466
      %v468 = vpop.f32.mrb[0].mxu0
      %469 = vmatprep.mubr.f32.mxu0 %v306
      %470 = vmatmul.mubr.f32.gmra.mrb[0].mxu0 %v305
      %v471 = vpop.f32.mrb[0].mxu0
      %v472 = vadd.f32 0.0, %v471
      %v473 = vpop.f32.mrb[0].mxu0
      %474 = vmatprep.mubr.f32.mxu0 %v308
      %475 = vmatmul.mubr.f32.gmra.mrb[0].mxu0 %v307
      %v476 = vpop.f32.mrb[0].mxu0
      %v477 = vadd.f32 0.0, %v476
      %v478 = vpop.f32.mrb[0].mxu0
      %479 = vmatprep.mubr.f32.mxu0 %v310
      %480 = vmatmul.mubr.f32.gmra.mrb[0].mxu0 %v309
      %v481 = vpop.f32.mrb[0].mxu0
      %v482 = vadd.f32 0.0, %v481
      %v483 = vpop.f32.mrb[0].mxu0
      %484 = vmatprep.mubr.f32.mxu0 %v312
      %485 = vmatmul.mubr.f32.gmra.mrb[0].mxu0 %v311
      %v486 = vpop.f32.mrb[0].mxu0
      %v487 = vadd.f32 0.0, %v486
      %v488 = vpop.f32.mrb[0].mxu0
      %489 = vdwg.mxu0
      %v490 = vmul.f32 %v412, 0.5
      %v491 = vmul.f32 %v417, 0.5
      %v492 = vmul.f32 %v422, 0.5
      %v493 = vmul.f32 %v427, 0.5
      %v494 = vmul.f32 %v432, 0.5
      %v495 = vmul.f32 %v437, 0.5
      %v496 = vmul.f32 %v442, 0.5
      %v497 = vmul.f32 %v447, 0.5
      %v498 = vmul.f32 %v452, 0.5
      %v499 = vmul.f32 %v457, 0.5
      %v500 = vmul.f32 %v462, 0.5
      %v501 = vmul.f32 %v467, 0.5
      %v502 = vmul.f32 %v472, 0.5
      %v503 = vmul.f32 %v477, 0.5
      %v504 = vmul.f32 %v482, 0.5
      %v505 = vmul.f32 %v487, 0.5
      %v506 = vld [vmem:[%s267] sm:$0x1]
      %v508 = vlaneseq
      %v509 = vshrl.u32 %v508, 7
      %v510 = vsub.s32 0, %v509
      %v511 = vrot.slane %v506, %v510
      %512 = vset.pattern.permute.xlu0 0
      %513 = vperm.xlu0 %512, %v511
      %v514 = vpop.permute.xlu0 %513
      %vm516 = vcmp.lt.f32.partialorder %v490, %v514
      %vm517 = vcmp.lt.f32.partialorder %v491, %v514
      %vm518 = vcmp.lt.f32.partialorder %v492, %v514
      %vm519 = vcmp.lt.f32.partialorder %v493, %v514
      %vm520 = vcmp.lt.f32.partialorder %v494, %v514
      %vm521 = vcmp.lt.f32.partialorder %v495, %v514
      %vm522 = vcmp.lt.f32.partialorder %v496, %v514
      %vm523 = vcmp.lt.f32.partialorder %v497, %v514
      %vm524 = vcmp.lt.f32.partialorder %v498, %v514
      %vm525 = vcmp.lt.f32.partialorder %v499, %v514
      %vm526 = vcmp.lt.f32.partialorder %v500, %v514
      %vm527 = vcmp.lt.f32.partialorder %v501, %v514
      %vm528 = vcmp.lt.f32.partialorder %v502, %v514
      %vm529 = vcmp.lt.f32.partialorder %v503, %v514
      %vm530 = vcmp.lt.f32.partialorder %v504, %v514
      %vm531 = vcmp.lt.f32.partialorder %v505, %v514
      %v532 = vsel %vm516, 0.0, %v490
      %v533 = vsel %vm517, 0.0, %v491
      %v534 = vsel %vm518, 0.0, %v492
      %v535 = vsel %vm519, 0.0, %v493
      %v536 = vsel %vm520, 0.0, %v494
      %v537 = vsel %vm521, 0.0, %v495
      %v538 = vsel %vm522, 0.0, %v496
      %v539 = vsel %vm523, 0.0, %v497
      %v540 = vsel %vm524, 0.0, %v498
      %v541 = vsel %vm525, 0.0, %v499
      %v542 = vsel %vm526, 0.0, %v500
      %v543 = vsel %vm527, 0.0, %v501
      %v544 = vsel %vm528, 0.0, %v502
      %v545 = vsel %vm529, 0.0, %v503
      %v546 = vsel %vm530, 0.0, %v504
      %v547 = vsel %vm531, 0.0, %v505
      %v548 = vpack.c.bf16 %v533, %v532
      %v549 = vpack.c.bf16 %v535, %v534
      %v550 = vpack.c.bf16 %v537, %v536
      %v551 = vpack.c.bf16 %v539, %v538
      %v552 = vpack.c.bf16 %v541, %v540
      %v553 = vpack.c.bf16 %v543, %v542
      %v554 = vpack.c.bf16 %v545, %v544
      %v555 = vpack.c.bf16 %v547, %v546
      %v564 = vunpack.c.l.b16 %v548
      %v565 = vunpack.c.h.b16 %v548
      %v566 = vunpack.c.l.b16 %v549
      %v567 = vunpack.c.h.b16 %v549
      %v568 = vunpack.c.l.b16 %v550
      %v569 = vunpack.c.h.b16 %v550
      %v570 = vunpack.c.l.b16 %v551
      %v571 = vunpack.c.h.b16 %v551
      %v572 = vunpack.c.l.b16 %v552
      %v573 = vunpack.c.h.b16 %v552
      %v574 = vunpack.c.l.b16 %v553
      %v575 = vunpack.c.h.b16 %v553
      %v576 = vunpack.c.l.b16 %v554
      %v577 = vunpack.c.h.b16 %v554
      %v578 = vunpack.c.l.b16 %v555
      %v579 = vunpack.c.h.b16 %v555
      %v580 = vpack.c.b16 %v564, %v564
      %v581 = vpack.c.b16 %v565, %v565
      %v582 = vpack.c.b16 %v566, %v566
      %v583 = vpack.c.b16 %v567, %v567
      %v584 = vpack.c.b16 %v568, %v568
      %v585 = vpack.c.b16 %v569, %v569
      %v586 = vpack.c.b16 %v570, %v570
      %v587 = vpack.c.b16 %v571, %v571
      %v588 = vpack.c.b16 %v572, %v572
      %v589 = vpack.c.b16 %v573, %v573
      %v590 = vpack.c.b16 %v574, %v574
      %v591 = vpack.c.b16 %v575, %v575
      %v592 = vpack.c.b16 %v576, %v576
      %v593 = vpack.c.b16 %v577, %v577
      %v594 = vpack.c.b16 %v578, %v578
      %v595 = vpack.c.b16 %v579, %v579
      %612 = vst [vmem:[%s279] sm:$0xf] %v580
      %613 = vst [vmem:[%s279 + $0x4] sm:$0xf] %v581
      %614 = vst [vmem:[%s279 + $0x8] sm:$0xf] %v582
      %615 = vst [vmem:[%s279 + $0xc] sm:$0xf] %v583
      %616 = vst [vmem:[%s279 + $0x10] sm:$0xf] %v584
      %617 = vst [vmem:[%s279 + $0x14] sm:$0xf] %v585
      %618 = vst [vmem:[%s279 + $0x18] sm:$0xf] %v586
      %619 = vst [vmem:[%s279 + $0x1c] sm:$0xf] %v587
      %620 = vst [vmem:[%s279 + $0x20] sm:$0xf] %v588
      %621 = vst [vmem:[%s279 + $0x24] sm:$0xf] %v589
      %622 = vst [vmem:[%s279 + $0x28] sm:$0xf] %v590
      %623 = vst [vmem:[%s279 + $0x2c] sm:$0xf] %v591
      %624 = vst [vmem:[%s279 + $0x30] sm:$0xf] %v592
      %625 = vst [vmem:[%s279 + $0x34] sm:$0xf] %v593
      %626 = vst [vmem:[%s279 + $0x38] sm:$0xf] %v594
      %627 = vst [vmem:[%s279 + $0x3c] sm:$0xf] %v595
      %s628 = smul.u32 16, %s20
      %p629 = scmp.lt.s32.totalorder %s19, 1
      %s630 = scalar_select %p629, %s19, 1
      %p631 = scmp.lt.s32.totalorder %s628, 15
      %s632 = scalar_select %p631, %s628, 15
      %p633 = scmp.lt.s32.totalorder %s21, 0
      %s634 = scalar_select %p633, %s21, 0
      %s635 = sadd.s32 %s634, %s632
      %s636 = smul.addr %s630, 16
      %s637 = sadd.s32 %s635, %s636
      %s638 = smul.addr %s637, 4
      %s639 = scalar_lea.vmem %s3, %s638
      // Predicated region
      $region33: #{hetgsl_forward.14} parent=31 // pred_check
        %p640 = pneg %p137
      $region34: #{hetgsl_forward.14} parent=31 // pred_check_branch
        %642 = sbr.rel (%p640) target = $region36
      $region35: #{hetgsl_forward.14} parent=31 // pred_region
        %s643 = smul.u32 16, %s20
      $region36: #{hetgsl_forward.14} parent=31 // pred_fallthru
        _
    $region32: #{hetgsl_forward.14} parent=5 // pred_fallthru
      _
    %p644 = scmp.le.s32.totalorder 2, %s9
    // Predicated region
    $region37: #{hetgsl_forward.14} parent=5 // pred_check
      %p645 = pneg %p644
    $region38: #{hetgsl_forward.14} parent=5 // pred_check_branch
      %647 = sbr.rel (%p645) target = $region40
    $region39: #{hetgsl_forward.14} parent=5 // pred_region
      %s648 = ssub.s32 %s9, 2
      // Predicated region
      $region41: #{hetgsl_forward.14} parent=39 // pred_check
        %p649 = pneg %p143
      $region42: #{hetgsl_forward.14} parent=39 // pred_check_branch
        %651 = sbr.rel (%p649) target = $region44
      $region43: #{hetgsl_forward.14} parent=39 // pred_region
        %s652 = smul.u32 16, %s23
        %p653 = scmp.lt.s32.totalorder %s22, 1
        %s654 = scalar_select %p653, %s22, 1
        %p655 = scmp.lt.s32.totalorder %s652, 15
        %s656 = scalar_select %p655, %s652, 15
        %p657 = scmp.lt.s32.totalorder %s24, 0
        %s658 = scalar_select %p657, %s24, 0
        %s659 = sadd.s32 %s658, %s656
        %s660 = smul.addr %s654, 16
        %s661 = sadd.s32 %s659, %s660
        %s662 = smul.addr %s661, 4
        %s663 = scalar_lea.vmem %s3, %s662
      $region44: #{hetgsl_forward.14} parent=39 // pred_fallthru
        _
    $region40: #{hetgsl_forward.14} parent=5 // pred_fallthru
      _
  $region6: #{hetgsl_forward.14} parent=0 // loop_footer
    %s13 = sadd.s32 1, %s9
  $region7: #{hetgsl_forward.14} parent=0 // loop_footer_branch
    %8 = sbr.rel target = $region3
  $region8: #{hetgsl_forward.14} parent=0 // loop_exit
    _

// kernel: hetgsl_forward.15
$region0: #{hetgsl_forward.15}
  #allocation0 [shape = 'u32[]', space=smem, size = 0x4, offset = 0x4, fixed_abs, tag = 'smem constant byte address 0x4 - core index']
  #allocation1 [shape = 'u32[144,128]{1,0:T(1,128)}', space=vmem, size = 0x12000, scoped, tag = 'internal scratch']
  %s0 = inlined_call_operand.vmem [shape: bf16[2,128,128], index: 0, kind: input, shape index: {}]
  %s1 = inlined_call_operand.vmem [shape: bf16[2,128,128], index: 1, kind: input, shape index: {}]
  %s2 = inlined_call_operand.vmem [shape: f32[2,128,1], index: 2, kind: output, shape index: {0}]
  %s3 = inlined_call_operand.vmem [shape: f32[2,128,1], index: 3, kind: output, shape index: {1}]
  %4 = xla_tuple %s2, %s3
  %s5 = sld [smem:[#allocation0]]
  $region53: #{hetgsl_forward.15} parent=0
    _
  %s7 = ssub.s32 1, %s5
  %s8 = scalar_select 0, %s7, %s5
  loop: start=0, step=1, limit=4
  $region2: #{hetgsl_forward.15} parent=0 // loop_pre_header
    _
  $region3: #{hetgsl_forward.15} parent=0 // loop_header
    %s10 = sphi 0, %s14
    %p11 = scmp.ge.s32.totalorder %s10, 4
    %s17 = sphi 0, %s36
    %s18 = sphi 0, %s32
    %s19 = sphi 0, %s28
    %s20 = sphi 0, %s17
    %s21 = sphi 0, %s18
    %s22 = sphi 0, %s19
    %s23 = sphi 0, %s20
    %s24 = sphi 0, %s21
    %s25 = sphi 0, %s22
    %s43 = sphi 0, %s45
    %s46 = sphi 0, %s43
    %s47 = sphi 0, %s46
    %s63 = sphi 0, %s47
    %s73 = sphi 0, %s75
    %s76 = sphi 0, %s73
    %s77 = sphi 0, %s76
    %s93 = sphi 0, %s77
    %s101 = sphi 0, %s103
    %s104 = sphi 0, %s101
    %s105 = sphi 0, %s104
    %s121 = sphi 0, %s105
    %s129 = sphi 0, %s131
    %s132 = sphi 0, %s129
    %s133 = sphi 0, %s132
    %s149 = sphi 0, %s133
  $region4: #{hetgsl_forward.15} parent=0 // loop_header_branch
    %13 = sbr.rel (%p11) target = $region8
  $region5: #{hetgsl_forward.15} parent=0 // loop_body
    %s15 = ssub.s32 %s10, 1
    %s16 = ssub.s32 %s10, 2
    %s26 = sadd.s32 1, %s19
    %p27 = scmp.ge.s32.totalorder %s26, 1
    %s28 = scalar_select %p27, 0, %s26
    %s29 = sadd.s32 1, %s18
    %s30 = scalar_select %p27, %s29, %s18
    %p31 = scmp.ge.s32.totalorder %s30, 1
    %s32 = scalar_select %p31, 0, %s30
    %s33 = sadd.s32 1, %s17
    %s34 = scalar_select %p31, %s33, %s17
    %p35 = scmp.ge.s32.totalorder %s34, 2
    %s36 = scalar_select %p35, 0, %s34
    %s37 = ssub.s32 %s17, %s36
    %s38 = ssub.s32 %s18, %s32
    %s39 = sor.u32 %s37, %s38
    %s40 = ssub.s32 %s19, %s28
    %s41 = sor.u32 %s39, %s40
    %p42 = scmp.eq.s32.totalorder %s41, 0
    %s44 = sadd.s32 %s43, 1
    %s45 = scalar_select %p42, %s43, %s44
    %p48 = pneg %p42
    %p49 = scmp.eq.s32.totalorder %s10, 1
    %p50 = por %p48, %p49
    %p51 = scmp.ne.s32.totalorder %s43, %s46
    %p52 = scmp.eq.s32.totalorder %s10, 0
    %p53 = por %p51, %p52
    %p54 = scmp.ne.s32.totalorder %s43, %s46
    %p55 = scmp.eq.s32.totalorder %s15, 1
    %p56 = por %p54, %p55
    %p57 = scmp.ne.s32.totalorder %s46, %s47
    %p58 = scmp.eq.s32.totalorder %s15, 0
    %p59 = por %p57, %p58
    %p60 = scmp.ne.s32.totalorder %s46, %s47
    %p61 = scmp.eq.s32.totalorder %s16, 1
    %p62 = por %p60, %p61
    %p64 = scmp.ne.s32.totalorder %s47, %s63
    %p65 = scmp.eq.s32.totalorder %s16, 0
    %p66 = por %p64, %p65
    %s67 = ssub.s32 %s17, %s36
    %s68 = ssub.s32 %s18, %s32
    %s69 = sor.u32 %s67, %s68
    %s70 = ssub.s32 %s19, %s28
    %s71 = sor.u32 %s69, %s70
    %p72 = scmp.eq.s32.totalorder %s71, 0
    %s74 = sadd.s32 %s73, 1
    %s75 = scalar_select %p72, %s73, %s74
    %p78 = pneg %p72
    %p79 = scmp.eq.s32.totalorder %s10, 1
    %p80 = por %p78, %p79
    %p81 = scmp.ne.s32.totalorder %s73, %s76
    %p82 = scmp.eq.s32.totalorder %s10, 0
    %p83 = por %p81, %p82
    %p84 = scmp.ne.s32.totalorder %s73, %s76
    %p85 = scmp.eq.s32.totalorder %s15, 1
    %p86 = por %p84, %p85
    %p87 = scmp.ne.s32.totalorder %s76, %s77
    %p88 = scmp.eq.s32.totalorder %s15, 0
    %p89 = por %p87, %p88
    %p90 = scmp.ne.s32.totalorder %s76, %s77
    %p91 = scmp.eq.s32.totalorder %s16, 1
    %p92 = por %p90, %p91
    %p94 = scmp.ne.s32.totalorder %s77, %s93
    %p95 = scmp.eq.s32.totalorder %s16, 0
    %p96 = por %p94, %p95
    %s97 = ssub.s32 %s17, %s36
    %s98 = ssub.s32 %s18, %s32
    %s99 = sor.u32 %s97, %s98
    %p100 = scmp.eq.s32.totalorder %s99, 0
    %s102 = sadd.s32 %s101, 1
    %s103 = scalar_select %p100, %s101, %s102
    %p106 = pneg %p100
    %p107 = scmp.eq.s32.totalorder %s10, 1
    %p108 = por %p106, %p107
    %p109 = scmp.ne.s32.totalorder %s101, %s104
    %p110 = scmp.eq.s32.totalorder %s10, 0
    %p111 = por %p109, %p110
    %p112 = scmp.ne.s32.totalorder %s101, %s104
    %p113 = scmp.eq.s32.totalorder %s15, 1
    %p114 = por %p112, %p113
    %p115 = scmp.ne.s32.totalorder %s104, %s105
    %p116 = scmp.eq.s32.totalorder %s15, 0
    %p117 = por %p115, %p116
    %p118 = scmp.ne.s32.totalorder %s104, %s105
    %p119 = scmp.eq.s32.totalorder %s16, 1
    %p120 = por %p118, %p119
    %p122 = scmp.ne.s32.totalorder %s105, %s121
    %p123 = scmp.eq.s32.totalorder %s16, 0
    %p124 = por %p122, %p123
    %s125 = ssub.s32 %s17, %s36
    %s126 = ssub.s32 %s18, %s32
    %s127 = sor.u32 %s125, %s126
    %p128 = scmp.eq.s32.totalorder %s127, 0
    %s130 = sadd.s32 %s129, 1
    %s131 = scalar_select %p128, %s129, %s130
    %p134 = pneg %p128
    %p135 = scmp.eq.s32.totalorder %s10, 1
    %p136 = por %p134, %p135
    %p137 = scmp.ne.s32.totalorder %s129, %s132
    %p138 = scmp.eq.s32.totalorder %s10, 0
    %p139 = por %p137, %p138
    %p140 = scmp.ne.s32.totalorder %s129, %s132
    %p141 = scmp.eq.s32.totalorder %s15, 1
    %p142 = por %p140, %p141
    %p143 = scmp.ne.s32.totalorder %s132, %s133
    %p144 = scmp.eq.s32.totalorder %s15, 0
    %p145 = por %p143, %p144
    %p146 = scmp.ne.s32.totalorder %s132, %s133
    %p147 = scmp.eq.s32.totalorder %s16, 1
    %p148 = por %p146, %p147
    %p150 = scmp.ne.s32.totalorder %s133, %s149
    %p151 = scmp.eq.s32.totalorder %s16, 0
    %p152 = por %p150, %p151
    %p153 = scmp.le.s32.totalorder 1, %s10
    %p154 = scmp.lt.s32.totalorder %s10, 3
    %p155 = pnand %p153, %p154
    %p156 = pneg %p155
    // Predicated region
    $region9: #{hetgsl_forward.15} parent=5 // pred_check
      _
    $region10: #{hetgsl_forward.15} parent=5 // pred_check_branch
      %158 = sbr.rel (%p155) target = $region12
    $region11: #{hetgsl_forward.15} parent=5 // pred_region
      %s159 = ssub.s32 %s10, 1
    $region12: #{hetgsl_forward.15} parent=5 // pred_fallthru
      _
    %p160 = scmp.lt.s32.totalorder %s10, 2
    // Predicated region
    $region13: #{hetgsl_forward.15} parent=5 // pred_check
      %p161 = pneg %p160
    $region14: #{hetgsl_forward.15} parent=5 // pred_check_branch
      %163 = sbr.rel (%p161) target = $region16
    $region15: #{hetgsl_forward.15} parent=5 // pred_region
      // Predicated region
      $region17: #{hetgsl_forward.15} parent=15 // pred_check
        %p164 = pneg %p53
      $region18: #{hetgsl_forward.15} parent=15 // pred_check_branch
        %166 = sbr.rel (%p164) target = $region20
      $region19: #{hetgsl_forward.15} parent=15 // pred_region
        %s167 = smul.u32 16, %s18
        %p168 = scmp.lt.s32.totalorder %s17, 1
        %s169 = scalar_select %p168, %s17, 1
        %p170 = scmp.lt.s32.totalorder %s167, 15
        %s171 = scalar_select %p170, %s167, 15
        %p172 = scmp.lt.s32.totalorder %s19, 0
        %s173 = scalar_select %p172, %s19, 0
        %s174 = sadd.s32 %s173, %s171
        %s175 = smul.addr %s169, 16
        %s176 = sadd.s32 %s174, %s175
        %s177 = smul.addr %s176, 4
        %s178 = scalar_lea.vmem %s0, %s177
        %s179 = smul.u32 16, %s18
      $region20: #{hetgsl_forward.15} parent=15 // pred_fallthru
        _
      // Predicated region
      $region21: #{hetgsl_forward.15} parent=15 // pred_check
        %p180 = pneg %p83
      $region22: #{hetgsl_forward.15} parent=15 // pred_check_branch
        %182 = sbr.rel (%p180) target = $region24
      $region23: #{hetgsl_forward.15} parent=15 // pred_region
        %s183 = smul.u32 16, %s18
        %p184 = scmp.lt.s32.totalorder %s17, 1
        %s185 = scalar_select %p184, %s17, 1
        %p186 = scmp.lt.s32.totalorder %s183, 15
        %s187 = scalar_select %p186, %s183, 15
        %p188 = scmp.lt.s32.totalorder %s19, 0
        %s189 = scalar_select %p188, %s19, 0
        %s190 = sadd.s32 %s189, %s187
        %s191 = smul.addr %s185, 16
        %s192 = sadd.s32 %s190, %s191
        %s193 = smul.addr %s192, 4
        %s194 = scalar_lea.vmem %s1, %s193
        %s195 = smul.u32 16, %s18
      $region24: #{hetgsl_forward.15} parent=15 // pred_fallthru
        _
    $region16: #{hetgsl_forward.15} parent=5 // pred_fallthru
      _
    %p196 = scmp.le.s32.totalorder 1, %s10
    %p197 = scmp.lt.s32.totalorder %s10, 3
    %p198 = pnand %p196, %p197
    %p199 = pneg %p198
    // Predicated region
    $region25: #{hetgsl_forward.15} parent=5 // pred_check
      _
    $region26: #{hetgsl_forward.15} parent=5 // pred_check_branch
      %201 = sbr.rel (%p198) target = $region28
    $region27: #{hetgsl_forward.15} parent=5 // pred_region
      %s202 = ssub.s32 %s10, 1
      %s203 = smul.u32 16, %s21
      %p204 = scmp.lt.s32.totalorder %s20, 1
      %s205 = scalar_select %p204, %s20, 1
      %p206 = scmp.lt.s32.totalorder %s203, 15
      %s207 = scalar_select %p206, %s203, 15
      %p208 = scmp.lt.s32.totalorder %s22, 0
      %s209 = scalar_select %p208, %s22, 0
      %s210 = sadd.s32 %s209, %s207
      %s211 = smul.addr %s205, 16
      %s212 = sadd.s32 %s210, %s211
      %s213 = smul.addr %s212, 4
      %s214 = scalar_lea.vmem %s0, %s213
      %p215 = pneg %p59
      %p216 = pneg %p56
      %s217 = smul.u32 16, %s21
      %p218 = scmp.lt.s32.totalorder %s20, 1
      %s219 = scalar_select %p218, %s20, 1
      %p220 = scmp.lt.s32.totalorder %s217, 15
      %s221 = scalar_select %p220, %s217, 15
      %p222 = scmp.lt.s32.totalorder %s22, 0
      %s223 = scalar_select %p222, %s22, 0
      %s224 = sadd.s32 %s223, %s221
      %s225 = smul.addr %s219, 16
      %s226 = sadd.s32 %s224, %s225
      %s227 = smul.addr %s226, 4
      %s228 = scalar_lea.vmem %s1, %s227
      %p229 = pneg %p89
      %p230 = pneg %p86
      %p231 = pneg %p117
      %p232 = pneg %p114
      %s233 = smul.u32 16, %s21
      %p234 = scmp.lt.s32.totalorder %s20, 1
      %s235 = scalar_select %p234, %s20, 1
      %p236 = scmp.lt.s32.totalorder %s233, 15
      %s237 = scalar_select %p236, %s233, 15
      %s238 = smul.addr %s235, 16
      %s239 = sadd.s32 %s237, %s238
      %s240 = smul.addr %s239, 8
      %s241 = scalar_lea.vmem %s2, %s240
      %p242 = pneg %p145
      %p243 = pneg %p142
      %s244 = smul.u32 16, %s21
      %p245 = scmp.lt.s32.totalorder %s20, 1
      %s246 = scalar_select %p245, %s20, 1
      %p247 = scmp.lt.s32.totalorder %s244, 15
      %s248 = scalar_select %p247, %s244, 15
      %s249 = smul.addr %s246, 16
      %s250 = sadd.s32 %s248, %s249
      %s251 = smul.addr %s250, 8
      %s252 = scalar_lea.vmem %s3, %s251
      %s253 = smul.u32 16, %s21
      %p254 = scmp.lt.s32.totalorder %s20, 1
      %s255 = scalar_select %p254, %s20, 1
      %p256 = scmp.lt.s32.totalorder %s253, 15
      %s257 = scalar_select %p256, %s253, 15
      %p258 = scmp.lt.s32.totalorder %s22, 0
      %s259 = scalar_select %p258, %s22, 0
      %s260 = sadd.s32 %s259, %s257
      %s261 = smul.addr %s255, 16
      %s262 = sadd.s32 %s260, %s261
      %s263 = smul.addr %s262, 4
      %s264 = scalar_lea.vmem %s0, %s263
      %s265 = smul.u32 16, %s21
      %s266 = smul.u32 16, %s21
      %p267 = scmp.lt.s32.totalorder %s20, 1
      %s268 = scalar_select %p267, %s20, 1
      %p269 = scmp.lt.s32.totalorder %s266, 15
      %s270 = scalar_select %p269, %s266, 15
      %p271 = scmp.lt.s32.totalorder %s22, 0
      %s272 = scalar_select %p271, %s22, 0
      %s273 = sadd.s32 %s272, %s270
      %s274 = smul.addr %s268, 16
      %s275 = sadd.s32 %s273, %s274
      %s276 = smul.addr %s275, 4
      %s277 = scalar_lea.vmem %s1, %s276
      %s278 = smul.u32 16, %s21
      %s279 = smul.u32 16, %s21
      %p280 = scmp.lt.s32.totalorder %s20, 1
      %s281 = scalar_select %p280, %s20, 1
      %p282 = scmp.lt.s32.totalorder %s279, 15
      %s283 = scalar_select %p282, %s279, 15
      %s284 = smul.addr %s281, 16
      %s285 = sadd.s32 %s283, %s284
      %s286 = smul.addr %s285, 8
      %s287 = scalar_lea.vmem %s2, %s286
      %s288 = smul.u32 16, %s21
      %s289 = smul.u32 16, %s21
      %p290 = scmp.lt.s32.totalorder %s20, 1
      %s291 = scalar_select %p290, %s20, 1
      %p292 = scmp.lt.s32.totalorder %s289, 15
      %s293 = scalar_select %p292, %s289, 15
      %s294 = smul.addr %s291, 16
      %s295 = sadd.s32 %s293, %s294
      %s296 = smul.addr %s295, 8
      %s297 = scalar_lea.vmem %s3, %s296
      %s298 = smul.u32 16, %s21
      %p299 = scmp.eq.s32.totalorder %s22, 0
      // Predicated region
      $region29: #{hetgsl_forward.15} parent=27 // pred_check
        %p300 = pneg %p299
      $region30: #{hetgsl_forward.15} parent=27 // pred_check_branch
        %302 = sbr.rel (%p300) target = $region32
      $region31: #{hetgsl_forward.15} parent=27 // pred_region
        %vm303 = vcmask 7168
        %304 = vst.msk [vmem:[%s287] sm:$0xff] %vm303, 0.0
        %305 = vst.msk [vmem:[%s287 + $0x8] sm:$0xff] %vm303, 0.0
        %306 = vst.msk [vmem:[%s287 + $0x10] sm:$0xff] %vm303, 0.0
        %307 = vst.msk [vmem:[%s287 + $0x18] sm:$0xff] %vm303, 0.0
        %308 = vst.msk [vmem:[%s287 + $0x20] sm:$0xff] %vm303, 0.0
        %309 = vst.msk [vmem:[%s287 + $0x28] sm:$0xff] %vm303, 0.0
        %310 = vst.msk [vmem:[%s287 + $0x30] sm:$0xff] %vm303, 0.0
        %311 = vst.msk [vmem:[%s287 + $0x38] sm:$0xff] %vm303, 0.0
        %312 = vst.msk [vmem:[%s287 + $0x40] sm:$0xff] %vm303, 0.0
        %313 = vst.msk [vmem:[%s287 + $0x48] sm:$0xff] %vm303, 0.0
        %314 = vst.msk [vmem:[%s287 + $0x50] sm:$0xff] %vm303, 0.0
        %315 = vst.msk [vmem:[%s287 + $0x58] sm:$0xff] %vm303, 0.0
        %316 = vst.msk [vmem:[%s287 + $0x60] sm:$0xff] %vm303, 0.0
        %317 = vst.msk [vmem:[%s287 + $0x68] sm:$0xff] %vm303, 0.0
        %318 = vst.msk [vmem:[%s287 + $0x70] sm:$0xff] %vm303, 0.0
        %319 = vst.msk [vmem:[%s287 + $0x78] sm:$0xff] %vm303, 0.0
        %320 = vst.msk [vmem:[%s297] sm:$0xff] %vm303, 0.0
        %321 = vst.msk [vmem:[%s297 + $0x8] sm:$0xff] %vm303, 0.0
        %322 = vst.msk [vmem:[%s297 + $0x10] sm:$0xff] %vm303, 0.0
        %323 = vst.msk [vmem:[%s297 + $0x18] sm:$0xff] %vm303, 0.0
        %324 = vst.msk [vmem:[%s297 + $0x20] sm:$0xff] %vm303, 0.0
        %325 = vst.msk [vmem:[%s297 + $0x28] sm:$0xff] %vm303, 0.0
        %326 = vst.msk [vmem:[%s297 + $0x30] sm:$0xff] %vm303, 0.0
        %327 = vst.msk [vmem:[%s297 + $0x38] sm:$0xff] %vm303, 0.0
        %328 = vst.msk [vmem:[%s297 + $0x40] sm:$0xff] %vm303, 0.0
        %329 = vst.msk [vmem:[%s297 + $0x48] sm:$0xff] %vm303, 0.0
        %330 = vst.msk [vmem:[%s297 + $0x50] sm:$0xff] %vm303, 0.0
        %331 = vst.msk [vmem:[%s297 + $0x58] sm:$0xff] %vm303, 0.0
        %332 = vst.msk [vmem:[%s297 + $0x60] sm:$0xff] %vm303, 0.0
        %333 = vst.msk [vmem:[%s297 + $0x68] sm:$0xff] %vm303, 0.0
        %334 = vst.msk [vmem:[%s297 + $0x70] sm:$0xff] %vm303, 0.0
        %335 = vst.msk [vmem:[%s297 + $0x78] sm:$0xff] %vm303, 0.0
      $region32: #{hetgsl_forward.15} parent=27 // pred_fallthru
        _
      %v336 = vld [vmem:[%s264] sm:$0xf]
      %v337 = vld [vmem:[%s264 + $0x4] sm:$0xf]
      %v338 = vld [vmem:[%s264 + $0x8] sm:$0xf]
      %v339 = vld [vmem:[%s264 + $0xc] sm:$0xf]
      %v340 = vld [vmem:[%s264 + $0x10] sm:$0xf]
      %v341 = vld [vmem:[%s264 + $0x14] sm:$0xf]
      %v342 = vld [vmem:[%s264 + $0x18] sm:$0xf]
      %v343 = vld [vmem:[%s264 + $0x1c] sm:$0xf]
      %v344 = vld [vmem:[%s264 + $0x20] sm:$0xf]
      %v345 = vld [vmem:[%s264 + $0x24] sm:$0xf]
      %v346 = vld [vmem:[%s264 + $0x28] sm:$0xf]
      %v347 = vld [vmem:[%s264 + $0x2c] sm:$0xf]
      %v348 = vld [vmem:[%s264 + $0x30] sm:$0xf]
      %v349 = vld [vmem:[%s264 + $0x34] sm:$0xf]
      %v350 = vld [vmem:[%s264 + $0x38] sm:$0xf]
      %v351 = vld [vmem:[%s264 + $0x3c] sm:$0xf]
      %v352 = vunpack.c.l.bf16 %v336
      %v353 = vunpack.c.l.bf16 %v337
      %v354 = vunpack.c.l.bf16 %v338
      %v355 = vunpack.c.l.bf16 %v339
      %v356 = vunpack.c.l.bf16 %v340
      %v357 = vunpack.c.l.bf16 %v341
      %v358 = vunpack.c.l.bf16 %v342
      %v359 = vunpack.c.l.bf16 %v343
      %v360 = vunpack.c.l.bf16 %v344
      %v361 = vunpack.c.l.bf16 %v345
      %v362 = vunpack.c.l.bf16 %v346
      %v363 = vunpack.c.l.bf16 %v347
      %v364 = vunpack.c.l.bf16 %v348
      %v365 = vunpack.c.l.bf16 %v349
      %v366 = vunpack.c.l.bf16 %v350
      %v367 = vunpack.c.l.bf16 %v351
      %v368 = vld [vmem:[%s287] sm:$0xff]
      %v369 = vld [vmem:[%s287 + $0x8] sm:$0xff]
      %v370 = vld [vmem:[%s287 + $0x10] sm:$0xff]
      %v371 = vld [vmem:[%s287 + $0x18] sm:$0xff]
      %v372 = vld [vmem:[%s287 + $0x20] sm:$0xff]
      %v373 = vld [vmem:[%s287 + $0x28] sm:$0xff]
      %v374 = vld [vmem:[%s287 + $0x30] sm:$0xff]
      %v375 = vld [vmem:[%s287 + $0x38] sm:$0xff]
      %v376 = vld [vmem:[%s287 + $0x40] sm:$0xff]
      %v377 = vld [vmem:[%s287 + $0x48] sm:$0xff]
      %v378 = vld [vmem:[%s287 + $0x50] sm:$0xff]
      %v379 = vld [vmem:[%s287 + $0x58] sm:$0xff]
      %v380 = vld [vmem:[%s287 + $0x60] sm:$0xff]
      %v381 = vld [vmem:[%s287 + $0x68] sm:$0xff]
      %v382 = vld [vmem:[%s287 + $0x70] sm:$0xff]
      %v383 = vld [vmem:[%s287 + $0x78] sm:$0xff]
      %v384 = vmul.f32 %v352, %v352
      %v385 = vmul.f32 %v353, %v353
      %v386 = vmul.f32 %v354, %v354
      %v387 = vmul.f32 %v355, %v355
      %v388 = vmul.f32 %v356, %v356
      %v389 = vmul.f32 %v357, %v357
      %v390 = vmul.f32 %v358, %v358
      %v391 = vmul.f32 %v359, %v359
      %v392 = vmul.f32 %v360, %v360
      %v393 = vmul.f32 %v361, %v361
      %v394 = vmul.f32 %v362, %v362
      %v395 = vmul.f32 %v363, %v363
      %v396 = vmul.f32 %v364, %v364
      %v397 = vmul.f32 %v365, %v365
      %v398 = vmul.f32 %v366, %v366
      %v399 = vmul.f32 %v367, %v367
      %400 = vadd.xlane.f32.xlu0 %v384
      %v401 = vpop.xlane.xlu0 %400
      %402 = vadd.xlane.f32.xlu0 %v385
      %v403 = vpop.xlane.xlu0 %402
      %404 = vadd.xlane.f32.xlu0 %v386
      %v405 = vpop.xlane.xlu0 %404
      %406 = vadd.xlane.f32.xlu0 %v387
      %v407 = vpop.xlane.xlu0 %406
      %408 = vadd.xlane.f32.xlu0 %v388
      %v409 = vpop.xlane.xlu0 %408
      %410 = vadd.xlane.f32.xlu0 %v389
      %v411 = vpop.xlane.xlu0 %410
      %412 = vadd.xlane.f32.xlu0 %v390
      %v413 = vpop.xlane.xlu0 %412
      %414 = vadd.xlane.f32.xlu0 %v391
      %v415 = vpop.xlane.xlu0 %414
      %416 = vadd.xlane.f32.xlu0 %v392
      %v417 = vpop.xlane.xlu0 %416
      %418 = vadd.xlane.f32.xlu0 %v393
      %v419 = vpop.xlane.xlu0 %418
      %420 = vadd.xlane.f32.xlu0 %v394
      %v421 = vpop.xlane.xlu0 %420
      %422 = vadd.xlane.f32.xlu0 %v395
      %v423 = vpop.xlane.xlu0 %422
      %424 = vadd.xlane.f32.xlu0 %v396
      %v425 = vpop.xlane.xlu0 %424
      %426 = vadd.xlane.f32.xlu0 %v397
      %v427 = vpop.xlane.xlu0 %426
      %428 = vadd.xlane.f32.xlu0 %v398
      %v429 = vpop.xlane.xlu0 %428
      %430 = vadd.xlane.f32.xlu0 %v399
      %v431 = vpop.xlane.xlu0 %430
      %v432 = vadd.f32 %v368, %v401
      %v433 = vadd.f32 %v369, %v403
      %v434 = vadd.f32 %v370, %v405
      %v435 = vadd.f32 %v371, %v407
      %v436 = vadd.f32 %v372, %v409
      %v437 = vadd.f32 %v373, %v411
      %v438 = vadd.f32 %v374, %v413
      %v439 = vadd.f32 %v375, %v415
      %v440 = vadd.f32 %v376, %v417
      %v441 = vadd.f32 %v377, %v419
      %v442 = vadd.f32 %v378, %v421
      %v443 = vadd.f32 %v379, %v423
      %v444 = vadd.f32 %v380, %v425
      %v445 = vadd.f32 %v381, %v427
      %v446 = vadd.f32 %v382, %v429
      %v447 = vadd.f32 %v383, %v431
      %vm448 = vcmask 7168
      %449 = vst.msk [vmem:[%s287] sm:$0xff] %vm448, %v432
      %450 = vst.msk [vmem:[%s287 + $0x8] sm:$0xff] %vm448, %v433
      %451 = vst.msk [vmem:[%s287 + $0x10] sm:$0xff] %vm448, %v434
      %452 = vst.msk [vmem:[%s287 + $0x18] sm:$0xff] %vm448, %v435
      %453 = vst.msk [vmem:[%s287 + $0x20] sm:$0xff] %vm448, %v436
      %454 = vst.msk [vmem:[%s287 + $0x28] sm:$0xff] %vm448, %v437
      %455 = vst.msk [vmem:[%s287 + $0x30] sm:$0xff] %vm448, %v438
      %456 = vst.msk [vmem:[%s287 + $0x38] sm:$0xff] %vm448, %v439
      %457 = vst.msk [vmem:[%s287 + $0x40] sm:$0xff] %vm448, %v440
      %458 = vst.msk [vmem:[%s287 + $0x48] sm:$0xff] %vm448, %v441
      %459 = vst.msk [vmem:[%s287 + $0x50] sm:$0xff] %vm448, %v442
      %460 = vst.msk [vmem:[%s287 + $0x58] sm:$0xff] %vm448, %v443
      %461 = vst.msk [vmem:[%s287 + $0x60] sm:$0xff] %vm448, %v444
      %462 = vst.msk [vmem:[%s287 + $0x68] sm:$0xff] %vm448, %v445
      %463 = vst.msk [vmem:[%s287 + $0x70] sm:$0xff] %vm448, %v446
      %464 = vst.msk [vmem:[%s287 + $0x78] sm:$0xff] %vm448, %v447
      %v465 = vld [vmem:[%s297] sm:$0xff]
      %v466 = vld [vmem:[%s297 + $0x8] sm:$0xff]
      %v467 = vld [vmem:[%s297 + $0x10] sm:$0xff]
      %v468 = vld [vmem:[%s297 + $0x18] sm:$0xff]
      %v469 = vld [vmem:[%s297 + $0x20] sm:$0xff]
      %v470 = vld [vmem:[%s297 + $0x28] sm:$0xff]
      %v471 = vld [vmem:[%s297 + $0x30] sm:$0xff]
      %v472 = vld [vmem:[%s297 + $0x38] sm:$0xff]
      %v473 = vld [vmem:[%s297 + $0x40] sm:$0xff]
      %v474 = vld [vmem:[%s297 + $0x48] sm:$0xff]
      %v475 = vld [vmem:[%s297 + $0x50] sm:$0xff]
      %v476 = vld [vmem:[%s297 + $0x58] sm:$0xff]
      %v477 = vld [vmem:[%s297 + $0x60] sm:$0xff]
      %v478 = vld [vmem:[%s297 + $0x68] sm:$0xff]
      %v479 = vld [vmem:[%s297 + $0x70] sm:$0xff]
      %v480 = vld [vmem:[%s297 + $0x78] sm:$0xff]
      %v481 = vld [vmem:[%s277] sm:$0xf]
      %v482 = vld [vmem:[%s277 + $0x4] sm:$0xf]
      %v483 = vld [vmem:[%s277 + $0x8] sm:$0xf]
      %v484 = vld [vmem:[%s277 + $0xc] sm:$0xf]
      %v485 = vld [vmem:[%s277 + $0x10] sm:$0xf]
      %v486 = vld [vmem:[%s277 + $0x14] sm:$0xf]
      %v487 = vld [vmem:[%s277 + $0x18] sm:$0xf]
      %v488 = vld [vmem:[%s277 + $0x1c] sm:$0xf]
      %v489 = vld [vmem:[%s277 + $0x20] sm:$0xf]
      %v490 = vld [vmem:[%s277 + $0x24] sm:$0xf]
      %v491 = vld [vmem:[%s277 + $0x28] sm:$0xf]
      %v492 = vld [vmem:[%s277 + $0x2c] sm:$0xf]
      %v493 = vld [vmem:[%s277 + $0x30] sm:$0xf]
      %v494 = vld [vmem:[%s277 + $0x34] sm:$0xf]
      %v495 = vld [vmem:[%s277 + $0x38] sm:$0xf]
      %v496 = vld [vmem:[%s277 + $0x3c] sm:$0xf]
      %v497 = vunpack.c.l.bf16 %v481
      %v498 = vunpack.c.l.bf16 %v482
      %v499 = vunpack.c.l.bf16 %v483
      %v500 = vunpack.c.l.bf16 %v484
      %v501 = vunpack.c.l.bf16 %v485
      %v502 = vunpack.c.l.bf16 %v486
      %v503 = vunpack.c.l.bf16 %v487
      %v504 = vunpack.c.l.bf16 %v488
      %v505 = vunpack.c.l.bf16 %v489
      %v506 = vunpack.c.l.bf16 %v490
      %v507 = vunpack.c.l.bf16 %v491
      %v508 = vunpack.c.l.bf16 %v492
      %v509 = vunpack.c.l.bf16 %v493
      %v510 = vunpack.c.l.bf16 %v494
      %v511 = vunpack.c.l.bf16 %v495
      %v512 = vunpack.c.l.bf16 %v496
      %v513 = vand.u32 2147483647, %v497
      %v514 = vand.u32 2147483647, %v498
      %v515 = vand.u32 2147483647, %v499
      %v516 = vand.u32 2147483647, %v500
      %v517 = vand.u32 2147483647, %v501
      %v518 = vand.u32 2147483647, %v502
      %v519 = vand.u32 2147483647, %v503
      %v520 = vand.u32 2147483647, %v504
      %v521 = vand.u32 2147483647, %v505
      %v522 = vand.u32 2147483647, %v506
      %v523 = vand.u32 2147483647, %v507
      %v524 = vand.u32 2147483647, %v508
      %v525 = vand.u32 2147483647, %v509
      %v526 = vand.u32 2147483647, %v510
      %v527 = vand.u32 2147483647, %v511
      %v528 = vand.u32 2147483647, %v512
      %529 = vadd.xlane.f32.xlu0 %v513
      %v530 = vpop.xlane.xlu0 %529
      %531 = vadd.xlane.f32.xlu0 %v514
      %v532 = vpop.xlane.xlu0 %531
      %533 = vadd.xlane.f32.xlu0 %v515
      %v534 = vpop.xlane.xlu0 %533
      %535 = vadd.xlane.f32.xlu0 %v516
      %v536 = vpop.xlane.xlu0 %535
      %537 = vadd.xlane.f32.xlu0 %v517
      %v538 = vpop.xlane.xlu0 %537
      %539 = vadd.xlane.f32.xlu0 %v518
      %v540 = vpop.xlane.xlu0 %539
      %541 = vadd.xlane.f32.xlu0 %v519
      %v542 = vpop.xlane.xlu0 %541
      %543 = vadd.xlane.f32.xlu0 %v520
      %v544 = vpop.xlane.xlu0 %543
      %545 = vadd.xlane.f32.xlu0 %v521
      %v546 = vpop.xlane.xlu0 %545
      %547 = vadd.xlane.f32.xlu0 %v522
      %v548 = vpop.xlane.xlu0 %547
      %549 = vadd.xlane.f32.xlu0 %v523
      %v550 = vpop.xlane.xlu0 %549
      %551 = vadd.xlane.f32.xlu0 %v524
      %v552 = vpop.xlane.xlu0 %551
      %553 = vadd.xlane.f32.xlu0 %v525
      %v554 = vpop.xlane.xlu0 %553
      %555 = vadd.xlane.f32.xlu0 %v526
      %v556 = vpop.xlane.xlu0 %555
      %557 = vadd.xlane.f32.xlu0 %v527
      %v558 = vpop.xlane.xlu0 %557
      %559 = vadd.xlane.f32.xlu0 %v528
      %v560 = vpop.xlane.xlu0 %559
      %v561 = vadd.f32 %v465, %v530
      %v562 = vadd.f32 %v466, %v532
      %v563 = vadd.f32 %v467, %v534
      %v564 = vadd.f32 %v468, %v536
      %v565 = vadd.f32 %v469, %v538
      %v566 = vadd.f32 %v470, %v540
      %v567 = vadd.f32 %v471, %v542
      %v568 = vadd.f32 %v472, %v544
      %v569 = vadd.f32 %v473, %v546
      %v570 = vadd.f32 %v474, %v548
      %v571 = vadd.f32 %v475, %v550
      %v572 = vadd.f32 %v476, %v552
      %v573 = vadd.f32 %v477, %v554
      %v574 = vadd.f32 %v478, %v556
      %v575 = vadd.f32 %v479, %v558
      %v576 = vadd.f32 %v480, %v560
      %577 = vst.msk [vmem:[%s297] sm:$0xff] %vm448, %v561
      %578 = vst.msk [vmem:[%s297 + $0x8] sm:$0xff] %vm448, %v562
      %579 = vst.msk [vmem:[%s297 + $0x10] sm:$0xff] %vm448, %v563
      %580 = vst.msk [vmem:[%s297 + $0x18] sm:$0xff] %vm448, %v564
      %581 = vst.msk [vmem:[%s297 + $0x20] sm:$0xff] %vm448, %v565
      %582 = vst.msk [vmem:[%s297 + $0x28] sm:$0xff] %vm448, %v566
      %583 = vst.msk [vmem:[%s297 + $0x30] sm:$0xff] %vm448, %v567
      %584 = vst.msk [vmem:[%s297 + $0x38] sm:$0xff] %vm448, %v568
      %585 = vst.msk [vmem:[%s297 + $0x40] sm:$0xff] %vm448, %v569
      %586 = vst.msk [vmem:[%s297 + $0x48] sm:$0xff] %vm448, %v570
      %587 = vst.msk [vmem:[%s297 + $0x50] sm:$0xff] %vm448, %v571
      %588 = vst.msk [vmem:[%s297 + $0x58] sm:$0xff] %vm448, %v572
      %589 = vst.msk [vmem:[%s297 + $0x60] sm:$0xff] %vm448, %v573
      %590 = vst.msk [vmem:[%s297 + $0x68] sm:$0xff] %vm448, %v574
      %591 = vst.msk [vmem:[%s297 + $0x70] sm:$0xff] %vm448, %v575
      %592 = vst.msk [vmem:[%s297 + $0x78] sm:$0xff] %vm448, %v576
      %s593 = smul.u32 16, %s21
      %p594 = scmp.lt.s32.totalorder %s20, 1
      %s595 = scalar_select %p594, %s20, 1
      %p596 = scmp.lt.s32.totalorder %s593, 15
      %s597 = scalar_select %p596, %s593, 15
      %s598 = smul.addr %s595, 16
      %s599 = sadd.s32 %s597, %s598
      %s600 = smul.addr %s599, 8
      %s601 = scalar_lea.vmem %s2, %s600
      %s602 = smul.u32 16, %s21
      %p603 = scmp.lt.s32.totalorder %s20, 1
      %s604 = scalar_select %p603, %s20, 1
      %p605 = scmp.lt.s32.totalorder %s602, 15
      %s606 = scalar_select %p605, %s602, 15
      %s607 = smul.addr %s604, 16
      %s608 = sadd.s32 %s606, %s607
      %s609 = smul.addr %s608, 8
      %s610 = scalar_lea.vmem %s3, %s609
      // Predicated region
      $region33: #{hetgsl_forward.15} parent=27 // pred_check
        %p611 = pneg %p114
      $region34: #{hetgsl_forward.15} parent=27 // pred_check_branch
        %613 = sbr.rel (%p611) target = $region36
      $region35: #{hetgsl_forward.15} parent=27 // pred_region
        %s614 = smul.u32 16, %s21
      $region36: #{hetgsl_forward.15} parent=27 // pred_fallthru
        _
      // Predicated region
      $region37: #{hetgsl_forward.15} parent=27 // pred_check
        %p615 = pneg %p142
      $region38: #{hetgsl_forward.15} parent=27 // pred_check_branch
        %617 = sbr.rel (%p615) target = $region40
      $region39: #{hetgsl_forward.15} parent=27 // pred_region
        %s618 = smul.u32 16, %s21
      $region40: #{hetgsl_forward.15} parent=27 // pred_fallthru
        _
    $region28: #{hetgsl_forward.15} parent=5 // pred_fallthru
      _
    %p619 = scmp.le.s32.totalorder 2, %s10
    // Predicated region
    $region41: #{hetgsl_forward.15} parent=5 // pred_check
      %p620 = pneg %p619
    $region42: #{hetgsl_forward.15} parent=5 // pred_check_branch
      %622 = sbr.rel (%p620) target = $region44
    $region43: #{hetgsl_forward.15} parent=5 // pred_region
      %s623 = ssub.s32 %s10, 2
      // Predicated region
      $region45: #{hetgsl_forward.15} parent=43 // pred_check
        %p624 = pneg %p120
      $region46: #{hetgsl_forward.15} parent=43 // pred_check_branch
        %626 = sbr.rel (%p624) target = $region48
      $region47: #{hetgsl_forward.15} parent=43 // pred_region
        %s627 = smul.u32 16, %s24
        %p628 = scmp.lt.s32.totalorder %s23, 1
        %s629 = scalar_select %p628, %s23, 1
        %p630 = scmp.lt.s32.totalorder %s627, 15
        %s631 = scalar_select %p630, %s627, 15
        %s632 = smul.addr %s629, 16
        %s633 = sadd.s32 %s631, %s632
        %s634 = smul.addr %s633, 8
        %s635 = scalar_lea.vmem %s2, %s634
      $region48: #{hetgsl_forward.15} parent=43 // pred_fallthru
        _
      // Predicated region
      $region49: #{hetgsl_forward.15} parent=43 // pred_check
        %p636 = pneg %p148
      $region50: #{hetgsl_forward.15} parent=43 // pred_check_branch
        %638 = sbr.rel (%p636) target = $region52
      $region51: #{hetgsl_forward.15} parent=43 // pred_region
        %s639 = smul.u32 16, %s24
        %p640 = scmp.lt.s32.totalorder %s23, 1
        %s641 = scalar_select %p640, %s23, 1
        %p642 = scmp.lt.s32.totalorder %s639, 15
        %s643 = scalar_select %p642, %s639, 15
        %s644 = smul.addr %s641, 16
        %s645 = sadd.s32 %s643, %s644
        %s646 = smul.addr %s645, 8
        %s647 = scalar_lea.vmem %s3, %s646
      $region52: #{hetgsl_forward.15} parent=43 // pred_fallthru
        _
    $region44: #{hetgsl_forward.15} parent=5 // pred_fallthru
      _
  $region6: #{hetgsl_forward.15} parent=0 // loop_footer
    %s14 = sadd.s32 1, %s10
  $region7: #{hetgsl_forward.15} parent=0 // loop_footer_branch
    %9 = sbr.rel target = $region3
  $region8: #{hetgsl_forward.15} parent=0 // loop_exit
    _

// kernel: hetgsl_forward.16
$region0: #{hetgsl_forward.16}
  #allocation0 [shape = 'u32[]', space=smem, size = 0x4, offset = 0x4, fixed_abs, tag = 'smem constant byte address 0x4 - core index']
  #allocation1 [shape = 'u32[144,128]{1,0:T(1,128)}', space=vmem, size = 0x12000, scoped, tag = 'internal scratch']
  %s0 = inlined_call_operand.vmem [shape: bf16[2,128,128], index: 0, kind: input, shape index: {}]
  %s1 = inlined_call_operand.vmem [shape: bf16[2,128,128], index: 1, kind: input, shape index: {}]
  %s2 = inlined_call_operand.vmem [shape: bf16[2,128,128], index: 2, kind: input, shape index: {}]
  %s3 = inlined_call_operand.vmem [shape: f32[2,128,1], index: 3, kind: input, shape index: {}]
  %s4 = inlined_call_operand.vmem [shape: f32[2,128,1], index: 4, kind: input, shape index: {}]
  %s5 = inlined_call_operand.vmem [shape: f32[2,1,128], index: 5, kind: output, shape index: {0}]
  %s6 = inlined_call_operand.vmem [shape: f32[2,1,128], index: 6, kind: output, shape index: {1}]
  %s7 = inlined_call_operand.vmem [shape: f32[2,1,128], index: 7, kind: output, shape index: {2}]
  %8 = xla_tuple %s5, %s6, %s7
  %s9 = sld [smem:[#allocation0]]
  $region73: #{hetgsl_forward.16} parent=0
    _
  %s11 = ssub.s32 1, %s9
  %s12 = scalar_select 0, %s11, %s9
  loop: start=0, step=1, limit=4
  $region2: #{hetgsl_forward.16} parent=0 // loop_pre_header
    _
  $region3: #{hetgsl_forward.16} parent=0 // loop_header
    %s14 = sphi 0, %s18
    %p15 = scmp.ge.s32.totalorder %s14, 4
    %s21 = sphi 0, %s40
    %s22 = sphi 0, %s36
    %s23 = sphi 0, %s32
    %s24 = sphi 0, %s21
    %s25 = sphi 0, %s22
    %s26 = sphi 0, %s23
    %s27 = sphi 0, %s24
    %s28 = sphi 0, %s25
    %s29 = sphi 0, %s26
    %s47 = sphi 0, %s49
    %s50 = sphi 0, %s47
    %s51 = sphi 0, %s50
    %s67 = sphi 0, %s51
    %s77 = sphi 0, %s79
    %s80 = sphi 0, %s77
    %s81 = sphi 0, %s80
    %s97 = sphi 0, %s81
    %s107 = sphi 0, %s109
    %s110 = sphi 0, %s107
    %s111 = sphi 0, %s110
    %s127 = sphi 0, %s111
    %s135 = sphi 0, %s137
    %s138 = sphi 0, %s135
    %s139 = sphi 0, %s138
    %s155 = sphi 0, %s139
    %s163 = sphi 0, %s165
    %s166 = sphi 0, %s163
    %s167 = sphi 0, %s166
    %s183 = sphi 0, %s167
    %s191 = sphi 0, %s193
    %s194 = sphi 0, %s191
    %s195 = sphi 0, %s194
    %s211 = sphi 0, %s195
    %s219 = sphi 0, %s221
    %s222 = sphi 0, %s219
    %s223 = sphi 0, %s222
    %s239 = sphi 0, %s223
    %s247 = sphi 0, %s249
    %s250 = sphi 0, %s247
    %s251 = sphi 0, %s250
    %s267 = sphi 0, %s251
  $region4: #{hetgsl_forward.16} parent=0 // loop_header_branch
    %17 = sbr.rel (%p15) target = $region8
  $region5: #{hetgsl_forward.16} parent=0 // loop_body
    %s19 = ssub.s32 %s14, 1
    %s20 = ssub.s32 %s14, 2
    %s30 = sadd.s32 1, %s23
    %p31 = scmp.ge.s32.totalorder %s30, 1
    %s32 = scalar_select %p31, 0, %s30
    %s33 = sadd.s32 1, %s22
    %s34 = scalar_select %p31, %s33, %s22
    %p35 = scmp.ge.s32.totalorder %s34, 1
    %s36 = scalar_select %p35, 0, %s34
    %s37 = sadd.s32 1, %s21
    %s38 = scalar_select %p35, %s37, %s21
    %p39 = scmp.ge.s32.totalorder %s38, 2
    %s40 = scalar_select %p39, 0, %s38
    %s41 = ssub.s32 %s21, %s40
    %s42 = ssub.s32 %s23, %s32
    %s43 = sor.u32 %s41, %s42
    %s44 = ssub.s32 %s22, %s36
    %s45 = sor.u32 %s43, %s44
    %p46 = scmp.eq.s32.totalorder %s45, 0
    %s48 = sadd.s32 %s47, 1
    %s49 = scalar_select %p46, %s47, %s48
    %p52 = pneg %p46
    %p53 = scmp.eq.s32.totalorder %s14, 1
    %p54 = por %p52, %p53
    %p55 = scmp.ne.s32.totalorder %s47, %s50
    %p56 = scmp.eq.s32.totalorder %s14, 0
    %p57 = por %p55, %p56
    %p58 = scmp.ne.s32.totalorder %s47, %s50
    %p59 = scmp.eq.s32.totalorder %s19, 1
    %p60 = por %p58, %p59
    %p61 = scmp.ne.s32.totalorder %s50, %s51
    %p62 = scmp.eq.s32.totalorder %s19, 0
    %p63 = por %p61, %p62
    %p64 = scmp.ne.s32.totalorder %s50, %s51
    %p65 = scmp.eq.s32.totalorder %s20, 1
    %p66 = por %p64, %p65
    %p68 = scmp.ne.s32.totalorder %s51, %s67
    %p69 = scmp.eq.s32.totalorder %s20, 0
    %p70 = por %p68, %p69
    %s71 = ssub.s32 %s21, %s40
    %s72 = ssub.s32 %s23, %s32
    %s73 = sor.u32 %s71, %s72
    %s74 = ssub.s32 %s22, %s36
    %s75 = sor.u32 %s73, %s74
    %p76 = scmp.eq.s32.totalorder %s75, 0
    %s78 = sadd.s32 %s77, 1
    %s79 = scalar_select %p76, %s77, %s78
    %p82 = pneg %p76
    %p83 = scmp.eq.s32.totalorder %s14, 1
    %p84 = por %p82, %p83
    %p85 = scmp.ne.s32.totalorder %s77, %s80
    %p86 = scmp.eq.s32.totalorder %s14, 0
    %p87 = por %p85, %p86
    %p88 = scmp.ne.s32.totalorder %s77, %s80
    %p89 = scmp.eq.s32.totalorder %s19, 1
    %p90 = por %p88, %p89
    %p91 = scmp.ne.s32.totalorder %s80, %s81
    %p92 = scmp.eq.s32.totalorder %s19, 0
    %p93 = por %p91, %p92
    %p94 = scmp.ne.s32.totalorder %s80, %s81
    %p95 = scmp.eq.s32.totalorder %s20, 1
    %p96 = por %p94, %p95
    %p98 = scmp.ne.s32.totalorder %s81, %s97
    %p99 = scmp.eq.s32.totalorder %s20, 0
    %p100 = por %p98, %p99
    %s101 = ssub.s32 %s21, %s40
    %s102 = ssub.s32 %s23, %s32
    %s103 = sor.u32 %s101, %s102
    %s104 = ssub.s32 %s22, %s36
    %s105 = sor.u32 %s103, %s104
    %p106 = scmp.eq.s32.totalorder %s105, 0
    %s108 = sadd.s32 %s107, 1
    %s109 = scalar_select %p106, %s107, %s108
    %p112 = pneg %p106
    %p113 = scmp.eq.s32.totalorder %s14, 1
    %p114 = por %p112, %p113
    %p115 = scmp.ne.s32.totalorder %s107, %s110
    %p116 = scmp.eq.s32.totalorder %s14, 0
    %p117 = por %p115, %p116
    %p118 = scmp.ne.s32.totalorder %s107, %s110
    %p119 = scmp.eq.s32.totalorder %s19, 1
    %p120 = por %p118, %p119
    %p121 = scmp.ne.s32.totalorder %s110, %s111
    %p122 = scmp.eq.s32.totalorder %s19, 0
    %p123 = por %p121, %p122
    %p124 = scmp.ne.s32.totalorder %s110, %s111
    %p125 = scmp.eq.s32.totalorder %s20, 1
    %p126 = por %p124, %p125
    %p128 = scmp.ne.s32.totalorder %s111, %s127
    %p129 = scmp.eq.s32.totalorder %s20, 0
    %p130 = por %p128, %p129
    %s131 = ssub.s32 %s21, %s40
    %s132 = ssub.s32 %s23, %s32
    %s133 = sor.u32 %s131, %s132
    %p134 = scmp.eq.s32.totalorder %s133, 0
    %s136 = sadd.s32 %s135, 1
    %s137 = scalar_select %p134, %s135, %s136
    %p140 = pneg %p134
    %p141 = scmp.eq.s32.totalorder %s14, 1
    %p142 = por %p140, %p141
    %p143 = scmp.ne.s32.totalorder %s135, %s138
    %p144 = scmp.eq.s32.totalorder %s14, 0
    %p145 = por %p143, %p144
    %p146 = scmp.ne.s32.totalorder %s135, %s138
    %p147 = scmp.eq.s32.totalorder %s19, 1
    %p148 = por %p146, %p147
    %p149 = scmp.ne.s32.totalorder %s138, %s139
    %p150 = scmp.eq.s32.totalorder %s19, 0
    %p151 = por %p149, %p150
    %p152 = scmp.ne.s32.totalorder %s138, %s139
    %p153 = scmp.eq.s32.totalorder %s20, 1
    %p154 = por %p152, %p153
    %p156 = scmp.ne.s32.totalorder %s139, %s155
    %p157 = scmp.eq.s32.totalorder %s20, 0
    %p158 = por %p156, %p157
    %s159 = ssub.s32 %s21, %s40
    %s160 = ssub.s32 %s23, %s32
    %s161 = sor.u32 %s159, %s160
    %p162 = scmp.eq.s32.totalorder %s161, 0
    %s164 = sadd.s32 %s163, 1
    %s165 = scalar_select %p162, %s163, %s164
    %p168 = pneg %p162
    %p169 = scmp.eq.s32.totalorder %s14, 1
    %p170 = por %p168, %p169
    %p171 = scmp.ne.s32.totalorder %s163, %s166
    %p172 = scmp.eq.s32.totalorder %s14, 0
    %p173 = por %p171, %p172
    %p174 = scmp.ne.s32.totalorder %s163, %s166
    %p175 = scmp.eq.s32.totalorder %s19, 1
    %p176 = por %p174, %p175
    %p177 = scmp.ne.s32.totalorder %s166, %s167
    %p178 = scmp.eq.s32.totalorder %s19, 0
    %p179 = por %p177, %p178
    %p180 = scmp.ne.s32.totalorder %s166, %s167
    %p181 = scmp.eq.s32.totalorder %s20, 1
    %p182 = por %p180, %p181
    %p184 = scmp.ne.s32.totalorder %s167, %s183
    %p185 = scmp.eq.s32.totalorder %s20, 0
    %p186 = por %p184, %p185
    %s187 = ssub.s32 %s21, %s40
    %s188 = ssub.s32 %s22, %s36
    %s189 = sor.u32 %s187, %s188
    %p190 = scmp.eq.s32.totalorder %s189, 0
    %s192 = sadd.s32 %s191, 1
    %s193 = scalar_select %p190, %s191, %s192
    %p196 = pneg %p190
    %p197 = scmp.eq.s32.totalorder %s14, 1
    %p198 = por %p196, %p197
    %p199 = scmp.ne.s32.totalorder %s191, %s194
    %p200 = scmp.eq.s32.totalorder %s14, 0
    %p201 = por %p199, %p200
    %p202 = scmp.ne.s32.totalorder %s191, %s194
    %p203 = scmp.eq.s32.totalorder %s19, 1
    %p204 = por %p202, %p203
    %p205 = scmp.ne.s32.totalorder %s194, %s195
    %p206 = scmp.eq.s32.totalorder %s19, 0
    %p207 = por %p205, %p206
    %p208 = scmp.ne.s32.totalorder %s194, %s195
    %p209 = scmp.eq.s32.totalorder %s20, 1
    %p210 = por %p208, %p209
    %p212 = scmp.ne.s32.totalorder %s195, %s211
    %p213 = scmp.eq.s32.totalorder %s20, 0
    %p214 = por %p212, %p213
    %s215 = ssub.s32 %s21, %s40
    %s216 = ssub.s32 %s22, %s36
    %s217 = sor.u32 %s215, %s216
    %p218 = scmp.eq.s32.totalorder %s217, 0
    %s220 = sadd.s32 %s219, 1
    %s221 = scalar_select %p218, %s219, %s220
    %p224 = pneg %p218
    %p225 = scmp.eq.s32.totalorder %s14, 1
    %p226 = por %p224, %p225
    %p227 = scmp.ne.s32.totalorder %s219, %s222
    %p228 = scmp.eq.s32.totalorder %s14, 0
    %p229 = por %p227, %p228
    %p230 = scmp.ne.s32.totalorder %s219, %s222
    %p231 = scmp.eq.s32.totalorder %s19, 1
    %p232 = por %p230, %p231
    %p233 = scmp.ne.s32.totalorder %s222, %s223
    %p234 = scmp.eq.s32.totalorder %s19, 0
    %p235 = por %p233, %p234
    %p236 = scmp.ne.s32.totalorder %s222, %s223
    %p237 = scmp.eq.s32.totalorder %s20, 1
    %p238 = por %p236, %p237
    %p240 = scmp.ne.s32.totalorder %s223, %s239
    %p241 = scmp.eq.s32.totalorder %s20, 0
    %p242 = por %p240, %p241
    %s243 = ssub.s32 %s21, %s40
    %s244 = ssub.s32 %s22, %s36
    %s245 = sor.u32 %s243, %s244
    %p246 = scmp.eq.s32.totalorder %s245, 0
    %s248 = sadd.s32 %s247, 1
    %s249 = scalar_select %p246, %s247, %s248
    %p252 = pneg %p246
    %p253 = scmp.eq.s32.totalorder %s14, 1
    %p254 = por %p252, %p253
    %p255 = scmp.ne.s32.totalorder %s247, %s250
    %p256 = scmp.eq.s32.totalorder %s14, 0
    %p257 = por %p255, %p256
    %p258 = scmp.ne.s32.totalorder %s247, %s250
    %p259 = scmp.eq.s32.totalorder %s19, 1
    %p260 = por %p258, %p259
    %p261 = scmp.ne.s32.totalorder %s250, %s251
    %p262 = scmp.eq.s32.totalorder %s19, 0
    %p263 = por %p261, %p262
    %p264 = scmp.ne.s32.totalorder %s250, %s251
    %p265 = scmp.eq.s32.totalorder %s20, 1
    %p266 = por %p264, %p265
    %p268 = scmp.ne.s32.totalorder %s251, %s267
    %p269 = scmp.eq.s32.totalorder %s20, 0
    %p270 = por %p268, %p269
    %p271 = scmp.le.s32.totalorder 1, %s14
    %p272 = scmp.lt.s32.totalorder %s14, 3
    %p273 = pnand %p271, %p272
    %p274 = pneg %p273
    // Predicated region
    $region9: #{hetgsl_forward.16} parent=5 // pred_check
      _
    $region10: #{hetgsl_forward.16} parent=5 // pred_check_branch
      %276 = sbr.rel (%p273) target = $region12
    $region11: #{hetgsl_forward.16} parent=5 // pred_region
      %s277 = ssub.s32 %s14, 1
    $region12: #{hetgsl_forward.16} parent=5 // pred_fallthru
      _
    %p278 = scmp.lt.s32.totalorder %s14, 2
    // Predicated region
    $region13: #{hetgsl_forward.16} parent=5 // pred_check
      %p279 = pneg %p278
    $region14: #{hetgsl_forward.16} parent=5 // pred_check_branch
      %281 = sbr.rel (%p279) target = $region16
    $region15: #{hetgsl_forward.16} parent=5 // pred_region
      // Predicated region
      $region17: #{hetgsl_forward.16} parent=15 // pred_check
        %p282 = pneg %p57
      $region18: #{hetgsl_forward.16} parent=15 // pred_check_branch
        %284 = sbr.rel (%p282) target = $region20
      $region19: #{hetgsl_forward.16} parent=15 // pred_region
        %s285 = smul.u32 16, %s23
        %p286 = scmp.lt.s32.totalorder %s21, 1
        %s287 = scalar_select %p286, %s21, 1
        %p288 = scmp.lt.s32.totalorder %s285, 15
        %s289 = scalar_select %p288, %s285, 15
        %p290 = scmp.lt.s32.totalorder %s22, 0
        %s291 = scalar_select %p290, %s22, 0
        %s292 = sadd.s32 %s291, %s289
        %s293 = smul.addr %s287, 16
        %s294 = sadd.s32 %s292, %s293
        %s295 = smul.addr %s294, 4
        %s296 = scalar_lea.vmem %s0, %s295
        %s297 = smul.u32 16, %s23
      $region20: #{hetgsl_forward.16} parent=15 // pred_fallthru
        _
      // Predicated region
      $region21: #{hetgsl_forward.16} parent=15 // pred_check
        %p298 = pneg %p87
      $region22: #{hetgsl_forward.16} parent=15 // pred_check_branch
        %300 = sbr.rel (%p298) target = $region24
      $region23: #{hetgsl_forward.16} parent=15 // pred_region
        %s301 = smul.u32 16, %s23
        %p302 = scmp.lt.s32.totalorder %s21, 1
        %s303 = scalar_select %p302, %s21, 1
        %p304 = scmp.lt.s32.totalorder %s301, 15
        %s305 = scalar_select %p304, %s301, 15
        %p306 = scmp.lt.s32.totalorder %s22, 0
        %s307 = scalar_select %p306, %s22, 0
        %s308 = sadd.s32 %s307, %s305
        %s309 = smul.addr %s303, 16
        %s310 = sadd.s32 %s308, %s309
        %s311 = smul.addr %s310, 4
        %s312 = scalar_lea.vmem %s1, %s311
        %s313 = smul.u32 16, %s23
      $region24: #{hetgsl_forward.16} parent=15 // pred_fallthru
        _
      // Predicated region
      $region25: #{hetgsl_forward.16} parent=15 // pred_check
        %p314 = pneg %p117
      $region26: #{hetgsl_forward.16} parent=15 // pred_check_branch
        %316 = sbr.rel (%p314) target = $region28
      $region27: #{hetgsl_forward.16} parent=15 // pred_region
        %s317 = smul.u32 16, %s23
        %p318 = scmp.lt.s32.totalorder %s21, 1
        %s319 = scalar_select %p318, %s21, 1
        %p320 = scmp.lt.s32.totalorder %s317, 15
        %s321 = scalar_select %p320, %s317, 15
        %p322 = scmp.lt.s32.totalorder %s22, 0
        %s323 = scalar_select %p322, %s22, 0
        %s324 = sadd.s32 %s323, %s321
        %s325 = smul.addr %s319, 16
        %s326 = sadd.s32 %s324, %s325
        %s327 = smul.addr %s326, 4
        %s328 = scalar_lea.vmem %s2, %s327
        %s329 = smul.u32 16, %s23
      $region28: #{hetgsl_forward.16} parent=15 // pred_fallthru
        _
      // Predicated region
      $region29: #{hetgsl_forward.16} parent=15 // pred_check
        %p330 = pneg %p145
      $region30: #{hetgsl_forward.16} parent=15 // pred_check_branch
        %332 = sbr.rel (%p330) target = $region32
      $region31: #{hetgsl_forward.16} parent=15 // pred_region
        %s333 = smul.u32 16, %s23
        %p334 = scmp.lt.s32.totalorder %s21, 1
        %s335 = scalar_select %p334, %s21, 1
        %p336 = scmp.lt.s32.totalorder %s333, 15
        %s337 = scalar_select %p336, %s333, 15
        %s338 = smul.addr %s335, 16
        %s339 = sadd.s32 %s337, %s338
        %s340 = smul.addr %s339, 8
        %s341 = scalar_lea.vmem %s3, %s340
        %s342 = smul.u32 16, %s23
      $region32: #{hetgsl_forward.16} parent=15 // pred_fallthru
        _
      // Predicated region
      $region33: #{hetgsl_forward.16} parent=15 // pred_check
        %p343 = pneg %p173
      $region34: #{hetgsl_forward.16} parent=15 // pred_check_branch
        %345 = sbr.rel (%p343) target = $region36
      $region35: #{hetgsl_forward.16} parent=15 // pred_region
        %s346 = smul.u32 16, %s23
        %p347 = scmp.lt.s32.totalorder %s21, 1
        %s348 = scalar_select %p347, %s21, 1
        %p349 = scmp.lt.s32.totalorder %s346, 15
        %s350 = scalar_select %p349, %s346, 15
        %s351 = smul.addr %s348, 16
        %s352 = sadd.s32 %s350, %s351
        %s353 = smul.addr %s352, 8
        %s354 = scalar_lea.vmem %s4, %s353
        %s355 = smul.u32 16, %s23
      $region36: #{hetgsl_forward.16} parent=15 // pred_fallthru
        _
    $region16: #{hetgsl_forward.16} parent=5 // pred_fallthru
      _
    %p356 = scmp.le.s32.totalorder 1, %s14
    %p357 = scmp.lt.s32.totalorder %s14, 3
    %p358 = pnand %p356, %p357
    %p359 = pneg %p358
    // Predicated region
    $region37: #{hetgsl_forward.16} parent=5 // pred_check
      _
    $region38: #{hetgsl_forward.16} parent=5 // pred_check_branch
      %361 = sbr.rel (%p358) target = $region40
    $region39: #{hetgsl_forward.16} parent=5 // pred_region
      %s362 = ssub.s32 %s14, 1
      %s363 = smul.u32 16, %s26
      %p364 = scmp.lt.s32.totalorder %s24, 1
      %s365 = scalar_select %p364, %s24, 1
      %p366 = scmp.lt.s32.totalorder %s363, 15
      %s367 = scalar_select %p366, %s363, 15
      %p368 = scmp.lt.s32.totalorder %s25, 0
      %s369 = scalar_select %p368, %s25, 0
      %s370 = sadd.s32 %s369, %s367
      %s371 = smul.addr %s365, 16
      %s372 = sadd.s32 %s370, %s371
      %s373 = smul.addr %s372, 4
      %s374 = scalar_lea.vmem %s0, %s373
      %p375 = pneg %p63
      %p376 = pneg %p60
      %s377 = smul.u32 16, %s26
      %p378 = scmp.lt.s32.totalorder %s24, 1
      %s379 = scalar_select %p378, %s24, 1
      %p380 = scmp.lt.s32.totalorder %s377, 15
      %s381 = scalar_select %p380, %s377, 15
      %p382 = scmp.lt.s32.totalorder %s25, 0
      %s383 = scalar_select %p382, %s25, 0
      %s384 = sadd.s32 %s383, %s381
      %s385 = smul.addr %s379, 16
      %s386 = sadd.s32 %s384, %s385
      %s387 = smul.addr %s386, 4
      %s388 = scalar_lea.vmem %s1, %s387
      %p389 = pneg %p93
      %p390 = pneg %p90
      %s391 = smul.u32 16, %s26
      %p392 = scmp.lt.s32.totalorder %s24, 1
      %s393 = scalar_select %p392, %s24, 1
      %p394 = scmp.lt.s32.totalorder %s391, 15
      %s395 = scalar_select %p394, %s391, 15
      %p396 = scmp.lt.s32.totalorder %s25, 0
      %s397 = scalar_select %p396, %s25, 0
      %s398 = sadd.s32 %s397, %s395
      %s399 = smul.addr %s393, 16
      %s400 = sadd.s32 %s398, %s399
      %s401 = smul.addr %s400, 4
      %s402 = scalar_lea.vmem %s2, %s401
      %p403 = pneg %p123
      %p404 = pneg %p120
      %s405 = smul.u32 16, %s26
      %p406 = scmp.lt.s32.totalorder %s24, 1
      %s407 = scalar_select %p406, %s24, 1
      %p408 = scmp.lt.s32.totalorder %s405, 15
      %s409 = scalar_select %p408, %s405, 15
      %s410 = smul.addr %s407, 16
      %s411 = sadd.s32 %s409, %s410
      %s412 = smul.addr %s411, 8
      %s413 = scalar_lea.vmem %s3, %s412
      %p414 = pneg %p151
      %p415 = pneg %p148
      %s416 = smul.u32 16, %s26
      %p417 = scmp.lt.s32.totalorder %s24, 1
      %s418 = scalar_select %p417, %s24, 1
      %p419 = scmp.lt.s32.totalorder %s416, 15
      %s420 = scalar_select %p419, %s416, 15
      %s421 = smul.addr %s418, 16
      %s422 = sadd.s32 %s420, %s421
      %s423 = smul.addr %s422, 8
      %s424 = scalar_lea.vmem %s4, %s423
      %p425 = pneg %p179
      %p426 = pneg %p176
      %p427 = pneg %p207
      %p428 = pneg %p204
      %p429 = scmp.lt.s32.totalorder %s24, 1
      %s430 = scalar_select %p429, %s24, 1
      %p431 = scmp.lt.s32.totalorder %s25, 0
      %s432 = scalar_select %p431, %s25, 0
      %s433 = sadd.s32 %s432, %s430
      %s434 = scalar_lea.vmem %s5, %s433
      %p435 = pneg %p235
      %p436 = pneg %p232
      %p437 = scmp.lt.s32.totalorder %s24, 1
      %s438 = scalar_select %p437, %s24, 1
      %p439 = scmp.lt.s32.totalorder %s25, 0
      %s440 = scalar_select %p439, %s25, 0
      %s441 = sadd.s32 %s440, %s438
      %s442 = scalar_lea.vmem %s6, %s441
      %p443 = pneg %p263
      %p444 = pneg %p260
      %p445 = scmp.lt.s32.totalorder %s24, 1
      %s446 = scalar_select %p445, %s24, 1
      %p447 = scmp.lt.s32.totalorder %s25, 0
      %s448 = scalar_select %p447, %s25, 0
      %s449 = sadd.s32 %s448, %s446
      %s450 = scalar_lea.vmem %s7, %s449
      %s451 = smul.u32 16, %s26
      %p452 = scmp.lt.s32.totalorder %s24, 1
      %s453 = scalar_select %p452, %s24, 1
      %p454 = scmp.lt.s32.totalorder %s451, 15
      %s455 = scalar_select %p454, %s451, 15
      %p456 = scmp.lt.s32.totalorder %s25, 0
      %s457 = scalar_select %p456, %s25, 0
      %s458 = sadd.s32 %s457, %s455
      %s459 = smul.addr %s453, 16
      %s460 = sadd.s32 %s458, %s459
      %s461 = smul.addr %s460, 4
      %s462 = scalar_lea.vmem %s0, %s461
      %s463 = smul.u32 16, %s26
      %s464 = smul.u32 16, %s26
      %p465 = scmp.lt.s32.totalorder %s24, 1
      %s466 = scalar_select %p465, %s24, 1
      %p467 = scmp.lt.s32.totalorder %s464, 15
      %s468 = scalar_select %p467, %s464, 15
      %p469 = scmp.lt.s32.totalorder %s25, 0
      %s470 = scalar_select %p469, %s25, 0
      %s471 = sadd.s32 %s470, %s468
      %s472 = smul.addr %s466, 16
      %s473 = sadd.s32 %s471, %s472
      %s474 = smul.addr %s473, 4
      %s475 = scalar_lea.vmem %s1, %s474
      %s476 = smul.u32 16, %s26
      %s477 = smul.u32 16, %s26
      %p478 = scmp.lt.s32.totalorder %s24, 1
      %s479 = scalar_select %p478, %s24, 1
      %p480 = scmp.lt.s32.totalorder %s477, 15
      %s481 = scalar_select %p480, %s477, 15
      %p482 = scmp.lt.s32.totalorder %s25, 0
      %s483 = scalar_select %p482, %s25, 0
      %s484 = sadd.s32 %s483, %s481
      %s485 = smul.addr %s479, 16
      %s486 = sadd.s32 %s484, %s485
      %s487 = smul.addr %s486, 4
      %s488 = scalar_lea.vmem %s2, %s487
      %s489 = smul.u32 16, %s26
      %s490 = smul.u32 16, %s26
      %p491 = scmp.lt.s32.totalorder %s24, 1
      %s492 = scalar_select %p491, %s24, 1
      %p493 = scmp.lt.s32.totalorder %s490, 15
      %s494 = scalar_select %p493, %s490, 15
      %s495 = smul.addr %s492, 16
      %s496 = sadd.s32 %s494, %s495
      %s497 = smul.addr %s496, 8
      %s498 = scalar_lea.vmem %s3, %s497
      %s499 = smul.u32 16, %s26
      %s500 = smul.u32 16, %s26
      %p501 = scmp.lt.s32.totalorder %s24, 1
      %s502 = scalar_select %p501, %s24, 1
      %p503 = scmp.lt.s32.totalorder %s500, 15
      %s504 = scalar_select %p503, %s500, 15
      %s505 = smul.addr %s502, 16
      %s506 = sadd.s32 %s504, %s505
      %s507 = smul.addr %s506, 8
      %s508 = scalar_lea.vmem %s4, %s507
      %s509 = smul.u32 16, %s26
      %p510 = scmp.lt.s32.totalorder %s24, 1
      %s511 = scalar_select %p510, %s24, 1
      %p512 = scmp.lt.s32.totalorder %s25, 0
      %s513 = scalar_select %p512, %s25, 0
      %s514 = sadd.s32 %s513, %s511
      %s515 = scalar_lea.vmem %s5, %s514
      %p516 = scmp.lt.s32.totalorder %s24, 1
      %s517 = scalar_select %p516, %s24, 1
      %p518 = scmp.lt.s32.totalorder %s25, 0
      %s519 = scalar_select %p518, %s25, 0
      %s520 = sadd.s32 %s519, %s517
      %s521 = scalar_lea.vmem %s6, %s520
      %p522 = scmp.lt.s32.totalorder %s24, 1
      %s523 = scalar_select %p522, %s24, 1
      %p524 = scmp.lt.s32.totalorder %s25, 0
      %s525 = scalar_select %p524, %s25, 0
      %s526 = sadd.s32 %s525, %s523
      %s527 = scalar_lea.vmem %s7, %s526
      %p528 = scmp.eq.s32.totalorder %s26, 0
      // Predicated region
      $region41: #{hetgsl_forward.16} parent=39 // pred_check
        %p529 = pneg %p528
      $region42: #{hetgsl_forward.16} parent=39 // pred_check_branch
        %531 = sbr.rel (%p529) target = $region44
      $region43: #{hetgsl_forward.16} parent=39 // pred_region
        %532 = vst [vmem:[%s515] sm:$0x1] 0.0
        %533 = vst [vmem:[%s521] sm:$0x1] 0.0
        %534 = vst [vmem:[%s527] sm:$0x1] 0.0
      $region44: #{hetgsl_forward.16} parent=39 // pred_fallthru
        _
      %v535 = vld [vmem:[%s462] sm:$0xf]
      %v536 = vld [vmem:[%s462 + $0x4] sm:$0xf]
      %v537 = vld [vmem:[%s462 + $0x8] sm:$0xf]
      %v538 = vld [vmem:[%s462 + $0xc] sm:$0xf]
      %v539 = vld [vmem:[%s462 + $0x10] sm:$0xf]
      %v540 = vld [vmem:[%s462 + $0x14] sm:$0xf]
      %v541 = vld [vmem:[%s462 + $0x18] sm:$0xf]
      %v542 = vld [vmem:[%s462 + $0x1c] sm:$0xf]
      %v543 = vld [vmem:[%s462 + $0x20] sm:$0xf]
      %v544 = vld [vmem:[%s462 + $0x24] sm:$0xf]
      %v545 = vld [vmem:[%s462 + $0x28] sm:$0xf]
      %v546 = vld [vmem:[%s462 + $0x2c] sm:$0xf]
      %v547 = vld [vmem:[%s462 + $0x30] sm:$0xf]
      %v548 = vld [vmem:[%s462 + $0x34] sm:$0xf]
      %v549 = vld [vmem:[%s462 + $0x38] sm:$0xf]
      %v550 = vld [vmem:[%s462 + $0x3c] sm:$0xf]
      %v551 = vunpack.c.l.bf16 %v535
      %v552 = vunpack.c.l.bf16 %v536
      %v553 = vunpack.c.l.bf16 %v537
      %v554 = vunpack.c.l.bf16 %v538
      %v555 = vunpack.c.l.bf16 %v539
      %v556 = vunpack.c.l.bf16 %v540
      %v557 = vunpack.c.l.bf16 %v541
      %v558 = vunpack.c.l.bf16 %v542
      %v559 = vunpack.c.l.bf16 %v543
      %v560 = vunpack.c.l.bf16 %v544
      %v561 = vunpack.c.l.bf16 %v545
      %v562 = vunpack.c.l.bf16 %v546
      %v563 = vunpack.c.l.bf16 %v547
      %v564 = vunpack.c.l.bf16 %v548
      %v565 = vunpack.c.l.bf16 %v549
      %v566 = vunpack.c.l.bf16 %v550
      %v567 = vld [vmem:[%s498] sm:$0xff]
      %v568 = vld [vmem:[%s498 + $0x8] sm:$0xff]
      %v569 = vld [vmem:[%s498 + $0x10] sm:$0xff]
      %v570 = vld [vmem:[%s498 + $0x18] sm:$0xff]
      %v571 = vld [vmem:[%s498 + $0x20] sm:$0xff]
      %v572 = vld [vmem:[%s498 + $0x28] sm:$0xff]
      %v573 = vld [vmem:[%s498 + $0x30] sm:$0xff]
      %v574 = vld [vmem:[%s498 + $0x38] sm:$0xff]
      %v575 = vld [vmem:[%s498 + $0x40] sm:$0xff]
      %v576 = vld [vmem:[%s498 + $0x48] sm:$0xff]
      %v577 = vld [vmem:[%s498 + $0x50] sm:$0xff]
      %v578 = vld [vmem:[%s498 + $0x58] sm:$0xff]
      %v579 = vld [vmem:[%s498 + $0x60] sm:$0xff]
      %v580 = vld [vmem:[%s498 + $0x68] sm:$0xff]
      %v581 = vld [vmem:[%s498 + $0x70] sm:$0xff]
      %v582 = vld [vmem:[%s498 + $0x78] sm:$0xff]
      %584 = vset.pattern.permute.xlu0 0
      %585 = vperm.xlu0 %584, %v567
      %v586 = vpop.permute.xlu0 %585
      %589 = vset.pattern.permute.xlu0 0
      %590 = vperm.xlu0 %589, %v568
      %v591 = vpop.permute.xlu0 %590
      %594 = vset.pattern.permute.xlu0 0
      %595 = vperm.xlu0 %594, %v569
      %v596 = vpop.permute.xlu0 %595
      %599 = vset.pattern.permute.xlu0 0
      %600 = vperm.xlu0 %599, %v570
      %v601 = vpop.permute.xlu0 %600
      %604 = vset.pattern.permute.xlu0 0
      %605 = vperm.xlu0 %604, %v571
      %v606 = vpop.permute.xlu0 %605
      %609 = vset.pattern.permute.xlu0 0
      %610 = vperm.xlu0 %609, %v572
      %v611 = vpop.permute.xlu0 %610
      %614 = vset.pattern.permute.xlu0 0
      %615 = vperm.xlu0 %614, %v573
      %v616 = vpop.permute.xlu0 %615
      %619 = vset.pattern.permute.xlu0 0
      %620 = vperm.xlu0 %619, %v574
      %v621 = vpop.permute.xlu0 %620
      %624 = vset.pattern.permute.xlu0 0
      %625 = vperm.xlu0 %624, %v575
      %v626 = vpop.permute.xlu0 %625
      %629 = vset.pattern.permute.xlu0 0
      %630 = vperm.xlu0 %629, %v576
      %v631 = vpop.permute.xlu0 %630
      %634 = vset.pattern.permute.xlu0 0
      %635 = vperm.xlu0 %634, %v577
      %v636 = vpop.permute.xlu0 %635
      %639 = vset.pattern.permute.xlu0 0
      %640 = vperm.xlu0 %639, %v578
      %v641 = vpop.permute.xlu0 %640
      %644 = vset.pattern.permute.xlu0 0
      %645 = vperm.xlu0 %644, %v579
      %v646 = vpop.permute.xlu0 %645
      %649 = vset.pattern.permute.xlu0 0
      %650 = vperm.xlu0 %649, %v580
      %v651 = vpop.permute.xlu0 %650
      %654 = vset.pattern.permute.xlu0 0
      %655 = vperm.xlu0 %654, %v581
      %v656 = vpop.permute.xlu0 %655
      %659 = vset.pattern.permute.xlu0 0
      %660 = vperm.xlu0 %659, %v582
      %v661 = vpop.permute.xlu0 %660
      %v663 = vmul.f32 %v551, %v586
      %v664 = vmul.f32 %v552, %v591
      %v665 = vmul.f32 %v553, %v596
      %v666 = vmul.f32 %v554, %v601
      %v667 = vmul.f32 %v555, %v606
      %v668 = vmul.f32 %v556, %v611
      %v669 = vmul.f32 %v557, %v616
      %v670 = vmul.f32 %v558, %v621
      %v671 = vmul.f32 %v559, %v626
      %v672 = vmul.f32 %v560, %v631
      %v673 = vmul.f32 %v561, %v636
      %v674 = vmul.f32 %v562, %v641
      %v675 = vmul.f32 %v563, %v646
      %v676 = vmul.f32 %v564, %v651
      %v677 = vmul.f32 %v565, %v656
      %v678 = vmul.f32 %v566, %v661
      %v679 = vld [vmem:[%s515] sm:$0x1]
      %v680 = vmul.f32 %v663, %v663
      %v681 = vmul.f32 %v664, %v664
      %v682 = vmul.f32 %v665, %v665
      %v683 = vmul.f32 %v666, %v666
      %v684 = vmul.f32 %v667, %v667
      %v685 = vmul.f32 %v668, %v668
      %v686 = vmul.f32 %v669, %v669
      %v687 = vmul.f32 %v670, %v670
      %v688 = vmul.f32 %v671, %v671
      %v689 = vmul.f32 %v672, %v672
      %v690 = vmul.f32 %v673, %v673
      %v691 = vmul.f32 %v674, %v674
      %v692 = vmul.f32 %v675, %v675
      %v693 = vmul.f32 %v676, %v676
      %v694 = vmul.f32 %v677, %v677
      %v695 = vmul.f32 %v678, %v678
      %v696 = vadd.f32 %v680, %v681
      %v697 = vadd.f32 %v696, %v682
      %v698 = vadd.f32 %v697, %v683
      %v699 = vadd.f32 %v698, %v684
      %v700 = vadd.f32 %v699, %v685
      %v701 = vadd.f32 %v700, %v686
      %v702 = vadd.f32 %v701, %v687
      %v703 = vadd.f32 %v702, %v688
      %v704 = vadd.f32 %v703, %v689
      %v705 = vadd.f32 %v704, %v690
      %v706 = vadd.f32 %v705, %v691
      %v707 = vadd.f32 %v706, %v692
      %v708 = vadd.f32 %v707, %v693
      %v709 = vadd.f32 %v708, %v694
      %v710 = vadd.f32 %v709, %v695
      %v711 = vrot.slane %v710, 4
      %v712 = vadd.f32 %v710, %v711
      %v713 = vrot.slane %v712, 2
      %v714 = vadd.f32 %v712, %v713
      %v715 = vrot.slane %v714, 1
      %v716 = vadd.f32 %v714, %v715
      %v717 = vadd.f32 %v679, %v716
      %718 = vst [vmem:[%s515] sm:$0x1] %v717
      %v719 = vld [vmem:[%s475] sm:$0xf]
      %v720 = vld [vmem:[%s475 + $0x4] sm:$0xf]
      %v721 = vld [vmem:[%s475 + $0x8] sm:$0xf]
      %v722 = vld [vmem:[%s475 + $0xc] sm:$0xf]
      %v723 = vld [vmem:[%s475 + $0x10] sm:$0xf]
      %v724 = vld [vmem:[%s475 + $0x14] sm:$0xf]
      %v725 = vld [vmem:[%s475 + $0x18] sm:$0xf]
      %v726 = vld [vmem:[%s475 + $0x1c] sm:$0xf]
      %v727 = vld [vmem:[%s475 + $0x20] sm:$0xf]
      %v728 = vld [vmem:[%s475 + $0x24] sm:$0xf]
      %v729 = vld [vmem:[%s475 + $0x28] sm:$0xf]
      %v730 = vld [vmem:[%s475 + $0x2c] sm:$0xf]
      %v731 = vld [vmem:[%s475 + $0x30] sm:$0xf]
      %v732 = vld [vmem:[%s475 + $0x34] sm:$0xf]
      %v733 = vld [vmem:[%s475 + $0x38] sm:$0xf]
      %v734 = vld [vmem:[%s475 + $0x3c] sm:$0xf]
      %v735 = vunpack.c.l.bf16 %v719
      %v736 = vunpack.c.l.bf16 %v720
      %v737 = vunpack.c.l.bf16 %v721
      %v738 = vunpack.c.l.bf16 %v722
      %v739 = vunpack.c.l.bf16 %v723
      %v740 = vunpack.c.l.bf16 %v724
      %v741 = vunpack.c.l.bf16 %v725
      %v742 = vunpack.c.l.bf16 %v726
      %v743 = vunpack.c.l.bf16 %v727
      %v744 = vunpack.c.l.bf16 %v728
      %v745 = vunpack.c.l.bf16 %v729
      %v746 = vunpack.c.l.bf16 %v730
      %v747 = vunpack.c.l.bf16 %v731
      %v748 = vunpack.c.l.bf16 %v732
      %v749 = vunpack.c.l.bf16 %v733
      %v750 = vunpack.c.l.bf16 %v734
      %v751 = vld [vmem:[%s508] sm:$0xff]
      %v752 = vld [vmem:[%s508 + $0x8] sm:$0xff]
      %v753 = vld [vmem:[%s508 + $0x10] sm:$0xff]
      %v754 = vld [vmem:[%s508 + $0x18] sm:$0xff]
      %v755 = vld [vmem:[%s508 + $0x20] sm:$0xff]
      %v756 = vld [vmem:[%s508 + $0x28] sm:$0xff]
      %v757 = vld [vmem:[%s508 + $0x30] sm:$0xff]
      %v758 = vld [vmem:[%s508 + $0x38] sm:$0xff]
      %v759 = vld [vmem:[%s508 + $0x40] sm:$0xff]
      %v760 = vld [vmem:[%s508 + $0x48] sm:$0xff]
      %v761 = vld [vmem:[%s508 + $0x50] sm:$0xff]
      %v762 = vld [vmem:[%s508 + $0x58] sm:$0xff]
      %v763 = vld [vmem:[%s508 + $0x60] sm:$0xff]
      %v764 = vld [vmem:[%s508 + $0x68] sm:$0xff]
      %v765 = vld [vmem:[%s508 + $0x70] sm:$0xff]
      %v766 = vld [vmem:[%s508 + $0x78] sm:$0xff]
      %768 = vset.pattern.permute.xlu0 0
      %769 = vperm.xlu0 %768, %v751
      %v770 = vpop.permute.xlu0 %769
      %773 = vset.pattern.permute.xlu0 0
      %774 = vperm.xlu0 %773, %v752
      %v775 = vpop.permute.xlu0 %774
      %778 = vset.pattern.permute.xlu0 0
      %779 = vperm.xlu0 %778, %v753
      %v780 = vpop.permute.xlu0 %779
      %783 = vset.pattern.permute.xlu0 0
      %784 = vperm.xlu0 %783, %v754
      %v785 = vpop.permute.xlu0 %784
      %788 = vset.pattern.permute.xlu0 0
      %789 = vperm.xlu0 %788, %v755
      %v790 = vpop.permute.xlu0 %789
      %793 = vset.pattern.permute.xlu0 0
      %794 = vperm.xlu0 %793, %v756
      %v795 = vpop.permute.xlu0 %794
      %798 = vset.pattern.permute.xlu0 0
      %799 = vperm.xlu0 %798, %v757
      %v800 = vpop.permute.xlu0 %799
      %803 = vset.pattern.permute.xlu0 0
      %804 = vperm.xlu0 %803, %v758
      %v805 = vpop.permute.xlu0 %804
      %808 = vset.pattern.permute.xlu0 0
      %809 = vperm.xlu0 %808, %v759
      %v810 = vpop.permute.xlu0 %809
      %813 = vset.pattern.permute.xlu0 0
      %814 = vperm.xlu0 %813, %v760
      %v815 = vpop.permute.xlu0 %814
      %818 = vset.pattern.permute.xlu0 0
      %819 = vperm.xlu0 %818, %v761
      %v820 = vpop.permute.xlu0 %819
      %823 = vset.pattern.permute.xlu0 0
      %824 = vperm.xlu0 %823, %v762
      %v825 = vpop.permute.xlu0 %824
      %828 = vset.pattern.permute.xlu0 0
      %829 = vperm.xlu0 %828, %v763
      %v830 = vpop.permute.xlu0 %829
      %833 = vset.pattern.permute.xlu0 0
      %834 = vperm.xlu0 %833, %v764
      %v835 = vpop.permute.xlu0 %834
      %838 = vset.pattern.permute.xlu0 0
      %839 = vperm.xlu0 %838, %v765
      %v840 = vpop.permute.xlu0 %839
      %843 = vset.pattern.permute.xlu0 0
      %844 = vperm.xlu0 %843, %v766
      %v845 = vpop.permute.xlu0 %844
      %v847 = vmul.f32 %v735, %v770
      %v848 = vmul.f32 %v736, %v775
      %v849 = vmul.f32 %v737, %v780
      %v850 = vmul.f32 %v738, %v785
      %v851 = vmul.f32 %v739, %v790
      %v852 = vmul.f32 %v740, %v795
      %v853 = vmul.f32 %v741, %v800
      %v854 = vmul.f32 %v742, %v805
      %v855 = vmul.f32 %v743, %v810
      %v856 = vmul.f32 %v744, %v815
      %v857 = vmul.f32 %v745, %v820
      %v858 = vmul.f32 %v746, %v825
      %v859 = vmul.f32 %v747, %v830
      %v860 = vmul.f32 %v748, %v835
      %v861 = vmul.f32 %v749, %v840
      %v862 = vmul.f32 %v750, %v845
      %v863 = vld [vmem:[%s521] sm:$0x1]
      %v864 = vmul.f32 %v847, %v847
      %v865 = vmul.f32 %v848, %v848
      %v866 = vmul.f32 %v849, %v849
      %v867 = vmul.f32 %v850, %v850
      %v868 = vmul.f32 %v851, %v851
      %v869 = vmul.f32 %v852, %v852
      %v870 = vmul.f32 %v853, %v853
      %v871 = vmul.f32 %v854, %v854
      %v872 = vmul.f32 %v855, %v855
      %v873 = vmul.f32 %v856, %v856
      %v874 = vmul.f32 %v857, %v857
      %v875 = vmul.f32 %v858, %v858
      %v876 = vmul.f32 %v859, %v859
      %v877 = vmul.f32 %v860, %v860
      %v878 = vmul.f32 %v861, %v861
      %v879 = vmul.f32 %v862, %v862
      %v880 = vadd.f32 %v864, %v865
      %v881 = vadd.f32 %v880, %v866
      %v882 = vadd.f32 %v881, %v867
      %v883 = vadd.f32 %v882, %v868
      %v884 = vadd.f32 %v883, %v869
      %v885 = vadd.f32 %v884, %v870
      %v886 = vadd.f32 %v885, %v871
      %v887 = vadd.f32 %v886, %v872
      %v888 = vadd.f32 %v887, %v873
      %v889 = vadd.f32 %v888, %v874
      %v890 = vadd.f32 %v889, %v875
      %v891 = vadd.f32 %v890, %v876
      %v892 = vadd.f32 %v891, %v877
      %v893 = vadd.f32 %v892, %v878
      %v894 = vadd.f32 %v893, %v879
      %v895 = vrot.slane %v894, 4
      %v896 = vadd.f32 %v894, %v895
      %v897 = vrot.slane %v896, 2
      %v898 = vadd.f32 %v896, %v897
      %v899 = vrot.slane %v898, 1
      %v900 = vadd.f32 %v898, %v899
      %v901 = vadd.f32 %v863, %v900
      %902 = vst [vmem:[%s521] sm:$0x1] %v901
      %v903 = vld [vmem:[%s488] sm:$0xf]
      %v904 = vld [vmem:[%s488 + $0x4] sm:$0xf]
      %v905 = vld [vmem:[%s488 + $0x8] sm:$0xf]
      %v906 = vld [vmem:[%s488 + $0xc] sm:$0xf]
      %v907 = vld [vmem:[%s488 + $0x10] sm:$0xf]
      %v908 = vld [vmem:[%s488 + $0x14] sm:$0xf]
      %v909 = vld [vmem:[%s488 + $0x18] sm:$0xf]
      %v910 = vld [vmem:[%s488 + $0x1c] sm:$0xf]
      %v911 = vld [vmem:[%s488 + $0x20] sm:$0xf]
      %v912 = vld [vmem:[%s488 + $0x24] sm:$0xf]
      %v913 = vld [vmem:[%s488 + $0x28] sm:$0xf]
      %v914 = vld [vmem:[%s488 + $0x2c] sm:$0xf]
      %v915 = vld [vmem:[%s488 + $0x30] sm:$0xf]
      %v916 = vld [vmem:[%s488 + $0x34] sm:$0xf]
      %v917 = vld [vmem:[%s488 + $0x38] sm:$0xf]
      %v918 = vld [vmem:[%s488 + $0x3c] sm:$0xf]
      %v919 = vunpack.c.l.bf16 %v903
      %v920 = vunpack.c.l.bf16 %v904
      %v921 = vunpack.c.l.bf16 %v905
      %v922 = vunpack.c.l.bf16 %v906
      %v923 = vunpack.c.l.bf16 %v907
      %v924 = vunpack.c.l.bf16 %v908
      %v925 = vunpack.c.l.bf16 %v909
      %v926 = vunpack.c.l.bf16 %v910
      %v927 = vunpack.c.l.bf16 %v911
      %v928 = vunpack.c.l.bf16 %v912
      %v929 = vunpack.c.l.bf16 %v913
      %v930 = vunpack.c.l.bf16 %v914
      %v931 = vunpack.c.l.bf16 %v915
      %v932 = vunpack.c.l.bf16 %v916
      %v933 = vunpack.c.l.bf16 %v917
      %v934 = vunpack.c.l.bf16 %v918
      %v935 = vld [vmem:[%s527] sm:$0x1]
      %v936 = vmul.f32 %v919, %v919
      %v937 = vmul.f32 %v920, %v920
      %v938 = vmul.f32 %v921, %v921
      %v939 = vmul.f32 %v922, %v922
      %v940 = vmul.f32 %v923, %v923
      %v941 = vmul.f32 %v924, %v924
      %v942 = vmul.f32 %v925, %v925
      %v943 = vmul.f32 %v926, %v926
      %v944 = vmul.f32 %v927, %v927
      %v945 = vmul.f32 %v928, %v928
      %v946 = vmul.f32 %v929, %v929
      %v947 = vmul.f32 %v930, %v930
      %v948 = vmul.f32 %v931, %v931
      %v949 = vmul.f32 %v932, %v932
      %v950 = vmul.f32 %v933, %v933
      %v951 = vmul.f32 %v934, %v934
      %v952 = vadd.f32 %v936, %v937
      %v953 = vadd.f32 %v952, %v938
      %v954 = vadd.f32 %v953, %v939
      %v955 = vadd.f32 %v954, %v940
      %v956 = vadd.f32 %v955, %v941
      %v957 = vadd.f32 %v956, %v942
      %v958 = vadd.f32 %v957, %v943
      %v959 = vadd.f32 %v958, %v944
      %v960 = vadd.f32 %v959, %v945
      %v961 = vadd.f32 %v960, %v946
      %v962 = vadd.f32 %v961, %v947
      %v963 = vadd.f32 %v962, %v948
      %v964 = vadd.f32 %v963, %v949
      %v965 = vadd.f32 %v964, %v950
      %v966 = vadd.f32 %v965, %v951
      %v967 = vrot.slane %v966, 4
      %v968 = vadd.f32 %v966, %v967
      %v969 = vrot.slane %v968, 2
      %v970 = vadd.f32 %v968, %v969
      %v971 = vrot.slane %v970, 1
      %v972 = vadd.f32 %v970, %v971
      %v973 = vadd.f32 %v935, %v972
      %974 = vst [vmem:[%s527] sm:$0x1] %v973
      %p975 = scmp.lt.s32.totalorder %s24, 1
      %s976 = scalar_select %p975, %s24, 1
      %p977 = scmp.lt.s32.totalorder %s25, 0
      %s978 = scalar_select %p977, %s25, 0
      %s979 = sadd.s32 %s978, %s976
      %s980 = scalar_lea.vmem %s5, %s979
      %p981 = scmp.lt.s32.totalorder %s24, 1
      %s982 = scalar_select %p981, %s24, 1
      %p983 = scmp.lt.s32.totalorder %s25, 0
      %s984 = scalar_select %p983, %s25, 0
      %s985 = sadd.s32 %s984, %s982
      %s986 = scalar_lea.vmem %s6, %s985
      %p987 = scmp.lt.s32.totalorder %s24, 1
      %s988 = scalar_select %p987, %s24, 1
      %p989 = scmp.lt.s32.totalorder %s25, 0
      %s990 = scalar_select %p989, %s25, 0
      %s991 = sadd.s32 %s990, %s988
      %s992 = scalar_lea.vmem %s7, %s991
      // Predicated region
      $region45: #{hetgsl_forward.16} parent=39 // pred_check
        %p993 = pneg %p204
      $region46: #{hetgsl_forward.16} parent=39 // pred_check_branch
        %995 = sbr.rel (%p993) target = $region48
      $region47: #{hetgsl_forward.16} parent=39 // pred_region
        _
      $region48: #{hetgsl_forward.16} parent=39 // pred_fallthru
        _
      // Predicated region
      $region49: #{hetgsl_forward.16} parent=39 // pred_check
        %p996 = pneg %p232
      $region50: #{hetgsl_forward.16} parent=39 // pred_check_branch
        %998 = sbr.rel (%p996) target = $region52
      $region51: #{hetgsl_forward.16} parent=39 // pred_region
        _
      $region52: #{hetgsl_forward.16} parent=39 // pred_fallthru
        _
      // Predicated region
      $region53: #{hetgsl_forward.16} parent=39 // pred_check
        %p999 = pneg %p260
      $region54: #{hetgsl_forward.16} parent=39 // pred_check_branch
        %1001 = sbr.rel (%p999) target = $region56
      $region55: #{hetgsl_forward.16} parent=39 // pred_region
        _
      $region56: #{hetgsl_forward.16} parent=39 // pred_fallthru
        _
    $region40: #{hetgsl_forward.16} parent=5 // pred_fallthru
      _
    %p1002 = scmp.le.s32.totalorder 2, %s14
    // Predicated region
    $region57: #{hetgsl_forward.16} parent=5 // pred_check
      %p1003 = pneg %p1002
    $region58: #{hetgsl_forward.16} parent=5 // pred_check_branch
      %1005 = sbr.rel (%p1003) target = $region60
    $region59: #{hetgsl_forward.16} parent=5 // pred_region
      %s1006 = ssub.s32 %s14, 2
      // Predicated region
      $region61: #{hetgsl_forward.16} parent=59 // pred_check
        %p1007 = pneg %p210
      $region62: #{hetgsl_forward.16} parent=59 // pred_check_branch
        %1009 = sbr.rel (%p1007) target = $region64
      $region63: #{hetgsl_forward.16} parent=59 // pred_region
        %p1010 = scmp.lt.s32.totalorder %s27, 1
        %s1011 = scalar_select %p1010, %s27, 1
        %p1012 = scmp.lt.s32.totalorder %s28, 0
        %s1013 = scalar_select %p1012, %s28, 0
        %s1014 = sadd.s32 %s1013, %s1011
        %s1015 = scalar_lea.vmem %s5, %s1014
      $region64: #{hetgsl_forward.16} parent=59 // pred_fallthru
        _
      // Predicated region
      $region65: #{hetgsl_forward.16} parent=59 // pred_check
        %p1016 = pneg %p238
      $region66: #{hetgsl_forward.16} parent=59 // pred_check_branch
        %1018 = sbr.rel (%p1016) target = $region68
      $region67: #{hetgsl_forward.16} parent=59 // pred_region
        %p1019 = scmp.lt.s32.totalorder %s27, 1
        %s1020 = scalar_select %p1019, %s27, 1
        %p1021 = scmp.lt.s32.totalorder %s28, 0
        %s1022 = scalar_select %p1021, %s28, 0
        %s1023 = sadd.s32 %s1022, %s1020
        %s1024 = scalar_lea.vmem %s6, %s1023
      $region68: #{hetgsl_forward.16} parent=59 // pred_fallthru
        _
      // Predicated region
      $region69: #{hetgsl_forward.16} parent=59 // pred_check
        %p1025 = pneg %p266
      $region70: #{hetgsl_forward.16} parent=59 // pred_check_branch
        %1027 = sbr.rel (%p1025) target = $region72
      $region71: #{hetgsl_forward.16} parent=59 // pred_region
        %p1028 = scmp.lt.s32.totalorder %s27, 1
        %s1029 = scalar_select %p1028, %s27, 1
        %p1030 = scmp.lt.s32.totalorder %s28, 0
        %s1031 = scalar_select %p1030, %s28, 0
        %s1032 = sadd.s32 %s1031, %s1029
        %s1033 = scalar_lea.vmem %s7, %s1032
      $region72: #{hetgsl_forward.16} parent=59 // pred_fallthru
        _
    $region60: #{hetgsl_forward.16} parent=5 // pred_fallthru
      _
  $region6: #{hetgsl_forward.16} parent=0 // loop_footer
    %s18 = sadd.s32 1, %s14
  $region7: #{hetgsl_forward.16} parent=0 // loop_footer_branch
    %13 = sbr.rel target = $region3
  $region8: #{hetgsl_forward.16} parent=0 // loop_exit
    _

// kernel: hetgsl_forward.17
$region0: #{hetgsl_forward.17}
  #allocation0 [shape = 'u32[]', space=smem, size = 0x4, offset = 0x4, fixed_abs, tag = 'smem constant byte address 0x4 - core index']
  #allocation1 [shape = 'u32[144,128]{1,0:T(1,128)}', space=vmem, size = 0x12000, scoped, tag = 'internal scratch']
  %s0 = inlined_call_operand.vmem [shape: bf16[2,128,128], index: 0, kind: input, shape index: {}]
  %s1 = inlined_call_operand.vmem [shape: bf16[2,128,128], index: 1, kind: input, shape index: {}]
  %s2 = inlined_call_operand.vmem [shape: bf16[2,128,128], index: 2, kind: input, shape index: {}]
  %s3 = inlined_call_operand.vmem [shape: f32[2,128,1], index: 3, kind: input, shape index: {}]
  %s4 = inlined_call_operand.vmem [shape: f32[2,128,1], index: 4, kind: input, shape index: {}]
  %s5 = inlined_call_operand.vmem [shape: f32[2,1,128], index: 5, kind: input, shape index: {}]
  %s6 = inlined_call_operand.vmem [shape: f32[2,1,128], index: 6, kind: input, shape index: {}]
  %s7 = inlined_call_operand.vmem [shape: f32[2,1,128], index: 7, kind: input, shape index: {}]
  %s8 = inlined_call_operand.vmem [shape: bf16[2,128,128], index: 8, kind: output, shape index: {}]
  %s9 = sld [smem:[#allocation0]]
  $region65: #{hetgsl_forward.17} parent=0
    _
  %s11 = ssub.s32 1, %s9
  %s12 = scalar_select 0, %s11, %s9
  loop: start=0, step=1, limit=4
  $region2: #{hetgsl_forward.17} parent=0 // loop_pre_header
    _
  $region3: #{hetgsl_forward.17} parent=0 // loop_header
    %s14 = sphi 0, %s18
    %p15 = scmp.ge.s32.totalorder %s14, 4
    %s21 = sphi 0, %s40
    %s22 = sphi 0, %s36
    %s23 = sphi 0, %s32
    %s24 = sphi 0, %s21
    %s25 = sphi 0, %s22
    %s26 = sphi 0, %s23
    %s27 = sphi 0, %s24
    %s28 = sphi 0, %s25
    %s29 = sphi 0, %s26
    %s47 = sphi 0, %s49
    %s50 = sphi 0, %s47
    %s51 = sphi 0, %s50
    %s67 = sphi 0, %s51
    %s77 = sphi 0, %s79
    %s80 = sphi 0, %s77
    %s81 = sphi 0, %s80
    %s97 = sphi 0, %s81
    %s107 = sphi 0, %s109
    %s110 = sphi 0, %s107
    %s111 = sphi 0, %s110
    %s127 = sphi 0, %s111
    %s135 = sphi 0, %s137
    %s138 = sphi 0, %s135
    %s139 = sphi 0, %s138
    %s155 = sphi 0, %s139
    %s163 = sphi 0, %s165
    %s166 = sphi 0, %s163
    %s167 = sphi 0, %s166
    %s183 = sphi 0, %s167
    %s191 = sphi 0, %s193
    %s194 = sphi 0, %s191
    %s195 = sphi 0, %s194
    %s211 = sphi 0, %s195
    %s219 = sphi 0, %s221
    %s222 = sphi 0, %s219
    %s223 = sphi 0, %s222
    %s239 = sphi 0, %s223
    %s247 = sphi 0, %s249
    %s250 = sphi 0, %s247
    %s251 = sphi 0, %s250
    %s267 = sphi 0, %s251
    %s277 = sphi 0, %s279
    %s280 = sphi 0, %s277
    %s281 = sphi 0, %s280
    %s297 = sphi 0, %s281
  $region4: #{hetgsl_forward.17} parent=0 // loop_header_branch
    %17 = sbr.rel (%p15) target = $region8
  $region5: #{hetgsl_forward.17} parent=0 // loop_body
    %s19 = ssub.s32 %s14, 1
    %s20 = ssub.s32 %s14, 2
    %s30 = sadd.s32 1, %s23
    %p31 = scmp.ge.s32.totalorder %s30, 1
    %s32 = scalar_select %p31, 0, %s30
    %s33 = sadd.s32 1, %s22
    %s34 = scalar_select %p31, %s33, %s22
    %p35 = scmp.ge.s32.totalorder %s34, 1
    %s36 = scalar_select %p35, 0, %s34
    %s37 = sadd.s32 1, %s21
    %s38 = scalar_select %p35, %s37, %s21
    %p39 = scmp.ge.s32.totalorder %s38, 2
    %s40 = scalar_select %p39, 0, %s38
    %s41 = ssub.s32 %s21, %s40
    %s42 = ssub.s32 %s22, %s36
    %s43 = sor.u32 %s41, %s42
    %s44 = ssub.s32 %s23, %s32
    %s45 = sor.u32 %s43, %s44
    %p46 = scmp.eq.s32.totalorder %s45, 0
    %s48 = sadd.s32 %s47, 1
    %s49 = scalar_select %p46, %s47, %s48
    %p52 = pneg %p46
    %p53 = scmp.eq.s32.totalorder %s14, 1
    %p54 = por %p52, %p53
    %p55 = scmp.ne.s32.totalorder %s47, %s50
    %p56 = scmp.eq.s32.totalorder %s14, 0
    %p57 = por %p55, %p56
    %p58 = scmp.ne.s32.totalorder %s47, %s50
    %p59 = scmp.eq.s32.totalorder %s19, 1
    %p60 = por %p58, %p59
    %p61 = scmp.ne.s32.totalorder %s50, %s51
    %p62 = scmp.eq.s32.totalorder %s19, 0
    %p63 = por %p61, %p62
    %p64 = scmp.ne.s32.totalorder %s50, %s51
    %p65 = scmp.eq.s32.totalorder %s20, 1
    %p66 = por %p64, %p65
    %p68 = scmp.ne.s32.totalorder %s51, %s67
    %p69 = scmp.eq.s32.totalorder %s20, 0
    %p70 = por %p68, %p69
    %s71 = ssub.s32 %s21, %s40
    %s72 = ssub.s32 %s22, %s36
    %s73 = sor.u32 %s71, %s72
    %s74 = ssub.s32 %s23, %s32
    %s75 = sor.u32 %s73, %s74
    %p76 = scmp.eq.s32.totalorder %s75, 0
    %s78 = sadd.s32 %s77, 1
    %s79 = scalar_select %p76, %s77, %s78
    %p82 = pneg %p76
    %p83 = scmp.eq.s32.totalorder %s14, 1
    %p84 = por %p82, %p83
    %p85 = scmp.ne.s32.totalorder %s77, %s80
    %p86 = scmp.eq.s32.totalorder %s14, 0
    %p87 = por %p85, %p86
    %p88 = scmp.ne.s32.totalorder %s77, %s80
    %p89 = scmp.eq.s32.totalorder %s19, 1
    %p90 = por %p88, %p89
    %p91 = scmp.ne.s32.totalorder %s80, %s81
    %p92 = scmp.eq.s32.totalorder %s19, 0
    %p93 = por %p91, %p92
    %p94 = scmp.ne.s32.totalorder %s80, %s81
    %p95 = scmp.eq.s32.totalorder %s20, 1
    %p96 = por %p94, %p95
    %p98 = scmp.ne.s32.totalorder %s81, %s97
    %p99 = scmp.eq.s32.totalorder %s20, 0
    %p100 = por %p98, %p99
    %s101 = ssub.s32 %s21, %s40
    %s102 = ssub.s32 %s22, %s36
    %s103 = sor.u32 %s101, %s102
    %s104 = ssub.s32 %s23, %s32
    %s105 = sor.u32 %s103, %s104
    %p106 = scmp.eq.s32.totalorder %s105, 0
    %s108 = sadd.s32 %s107, 1
    %s109 = scalar_select %p106, %s107, %s108
    %p112 = pneg %p106
    %p113 = scmp.eq.s32.totalorder %s14, 1
    %p114 = por %p112, %p113
    %p115 = scmp.ne.s32.totalorder %s107, %s110
    %p116 = scmp.eq.s32.totalorder %s14, 0
    %p117 = por %p115, %p116
    %p118 = scmp.ne.s32.totalorder %s107, %s110
    %p119 = scmp.eq.s32.totalorder %s19, 1
    %p120 = por %p118, %p119
    %p121 = scmp.ne.s32.totalorder %s110, %s111
    %p122 = scmp.eq.s32.totalorder %s19, 0
    %p123 = por %p121, %p122
    %p124 = scmp.ne.s32.totalorder %s110, %s111
    %p125 = scmp.eq.s32.totalorder %s20, 1
    %p126 = por %p124, %p125
    %p128 = scmp.ne.s32.totalorder %s111, %s127
    %p129 = scmp.eq.s32.totalorder %s20, 0
    %p130 = por %p128, %p129
    %s131 = ssub.s32 %s21, %s40
    %s132 = ssub.s32 %s22, %s36
    %s133 = sor.u32 %s131, %s132
    %p134 = scmp.eq.s32.totalorder %s133, 0
    %s136 = sadd.s32 %s135, 1
    %s137 = scalar_select %p134, %s135, %s136
    %p140 = pneg %p134
    %p141 = scmp.eq.s32.totalorder %s14, 1
    %p142 = por %p140, %p141
    %p143 = scmp.ne.s32.totalorder %s135, %s138
    %p144 = scmp.eq.s32.totalorder %s14, 0
    %p145 = por %p143, %p144
    %p146 = scmp.ne.s32.totalorder %s135, %s138
    %p147 = scmp.eq.s32.totalorder %s19, 1
    %p148 = por %p146, %p147
    %p149 = scmp.ne.s32.totalorder %s138, %s139
    %p150 = scmp.eq.s32.totalorder %s19, 0
    %p151 = por %p149, %p150
    %p152 = scmp.ne.s32.totalorder %s138, %s139
    %p153 = scmp.eq.s32.totalorder %s20, 1
    %p154 = por %p152, %p153
    %p156 = scmp.ne.s32.totalorder %s139, %s155
    %p157 = scmp.eq.s32.totalorder %s20, 0
    %p158 = por %p156, %p157
    %s159 = ssub.s32 %s21, %s40
    %s160 = ssub.s32 %s22, %s36
    %s161 = sor.u32 %s159, %s160
    %p162 = scmp.eq.s32.totalorder %s161, 0
    %s164 = sadd.s32 %s163, 1
    %s165 = scalar_select %p162, %s163, %s164
    %p168 = pneg %p162
    %p169 = scmp.eq.s32.totalorder %s14, 1
    %p170 = por %p168, %p169
    %p171 = scmp.ne.s32.totalorder %s163, %s166
    %p172 = scmp.eq.s32.totalorder %s14, 0
    %p173 = por %p171, %p172
    %p174 = scmp.ne.s32.totalorder %s163, %s166
    %p175 = scmp.eq.s32.totalorder %s19, 1
    %p176 = por %p174, %p175
    %p177 = scmp.ne.s32.totalorder %s166, %s167
    %p178 = scmp.eq.s32.totalorder %s19, 0
    %p179 = por %p177, %p178
    %p180 = scmp.ne.s32.totalorder %s166, %s167
    %p181 = scmp.eq.s32.totalorder %s20, 1
    %p182 = por %p180, %p181
    %p184 = scmp.ne.s32.totalorder %s167, %s183
    %p185 = scmp.eq.s32.totalorder %s20, 0
    %p186 = por %p184, %p185
    %s187 = ssub.s32 %s21, %s40
    %s188 = ssub.s32 %s23, %s32
    %s189 = sor.u32 %s187, %s188
    %p190 = scmp.eq.s32.totalorder %s189, 0
    %s192 = sadd.s32 %s191, 1
    %s193 = scalar_select %p190, %s191, %s192
    %p196 = pneg %p190
    %p197 = scmp.eq.s32.totalorder %s14, 1
    %p198 = por %p196, %p197
    %p199 = scmp.ne.s32.totalorder %s191, %s194
    %p200 = scmp.eq.s32.totalorder %s14, 0
    %p201 = por %p199, %p200
    %p202 = scmp.ne.s32.totalorder %s191, %s194
    %p203 = scmp.eq.s32.totalorder %s19, 1
    %p204 = por %p202, %p203
    %p205 = scmp.ne.s32.totalorder %s194, %s195
    %p206 = scmp.eq.s32.totalorder %s19, 0
    %p207 = por %p205, %p206
    %p208 = scmp.ne.s32.totalorder %s194, %s195
    %p209 = scmp.eq.s32.totalorder %s20, 1
    %p210 = por %p208, %p209
    %p212 = scmp.ne.s32.totalorder %s195, %s211
    %p213 = scmp.eq.s32.totalorder %s20, 0
    %p214 = por %p212, %p213
    %s215 = ssub.s32 %s21, %s40
    %s216 = ssub.s32 %s23, %s32
    %s217 = sor.u32 %s215, %s216
    %p218 = scmp.eq.s32.totalorder %s217, 0
    %s220 = sadd.s32 %s219, 1
    %s221 = scalar_select %p218, %s219, %s220
    %p224 = pneg %p218
    %p225 = scmp.eq.s32.totalorder %s14, 1
    %p226 = por %p224, %p225
    %p227 = scmp.ne.s32.totalorder %s219, %s222
    %p228 = scmp.eq.s32.totalorder %s14, 0
    %p229 = por %p227, %p228
    %p230 = scmp.ne.s32.totalorder %s219, %s222
    %p231 = scmp.eq.s32.totalorder %s19, 1
    %p232 = por %p230, %p231
    %p233 = scmp.ne.s32.totalorder %s222, %s223
    %p234 = scmp.eq.s32.totalorder %s19, 0
    %p235 = por %p233, %p234
    %p236 = scmp.ne.s32.totalorder %s222, %s223
    %p237 = scmp.eq.s32.totalorder %s20, 1
    %p238 = por %p236, %p237
    %p240 = scmp.ne.s32.totalorder %s223, %s239
    %p241 = scmp.eq.s32.totalorder %s20, 0
    %p242 = por %p240, %p241
    %s243 = ssub.s32 %s21, %s40
    %s244 = ssub.s32 %s23, %s32
    %s245 = sor.u32 %s243, %s244
    %p246 = scmp.eq.s32.totalorder %s245, 0
    %s248 = sadd.s32 %s247, 1
    %s249 = scalar_select %p246, %s247, %s248
    %p252 = pneg %p246
    %p253 = scmp.eq.s32.totalorder %s14, 1
    %p254 = por %p252, %p253
    %p255 = scmp.ne.s32.totalorder %s247, %s250
    %p256 = scmp.eq.s32.totalorder %s14, 0
    %p257 = por %p255, %p256
    %p258 = scmp.ne.s32.totalorder %s247, %s250
    %p259 = scmp.eq.s32.totalorder %s19, 1
    %p260 = por %p258, %p259
    %p261 = scmp.ne.s32.totalorder %s250, %s251
    %p262 = scmp.eq.s32.totalorder %s19, 0
    %p263 = por %p261, %p262
    %p264 = scmp.ne.s32.totalorder %s250, %s251
    %p265 = scmp.eq.s32.totalorder %s20, 1
    %p266 = por %p264, %p265
    %p268 = scmp.ne.s32.totalorder %s251, %s267
    %p269 = scmp.eq.s32.totalorder %s20, 0
    %p270 = por %p268, %p269
    %s271 = ssub.s32 %s21, %s40
    %s272 = ssub.s32 %s22, %s36
    %s273 = sor.u32 %s271, %s272
    %s274 = ssub.s32 %s23, %s32
    %s275 = sor.u32 %s273, %s274
    %p276 = scmp.eq.s32.totalorder %s275, 0
    %s278 = sadd.s32 %s277, 1
    %s279 = scalar_select %p276, %s277, %s278
    %p282 = pneg %p276
    %p283 = scmp.eq.s32.totalorder %s14, 1
    %p284 = por %p282, %p283
    %p285 = scmp.ne.s32.totalorder %s277, %s280
    %p286 = scmp.eq.s32.totalorder %s14, 0
    %p287 = por %p285, %p286
    %p288 = scmp.ne.s32.totalorder %s277, %s280
    %p289 = scmp.eq.s32.totalorder %s19, 1
    %p290 = por %p288, %p289
    %p291 = scmp.ne.s32.totalorder %s280, %s281
    %p292 = scmp.eq.s32.totalorder %s19, 0
    %p293 = por %p291, %p292
    %p294 = scmp.ne.s32.totalorder %s280, %s281
    %p295 = scmp.eq.s32.totalorder %s20, 1
    %p296 = por %p294, %p295
    %p298 = scmp.ne.s32.totalorder %s281, %s297
    %p299 = scmp.eq.s32.totalorder %s20, 0
    %p300 = por %p298, %p299
    %p301 = scmp.le.s32.totalorder 1, %s14
    %p302 = scmp.lt.s32.totalorder %s14, 3
    %p303 = pnand %p301, %p302
    %p304 = pneg %p303
    // Predicated region
    $region9: #{hetgsl_forward.17} parent=5 // pred_check
      _
    $region10: #{hetgsl_forward.17} parent=5 // pred_check_branch
      %306 = sbr.rel (%p303) target = $region12
    $region11: #{hetgsl_forward.17} parent=5 // pred_region
      %s307 = ssub.s32 %s14, 1
    $region12: #{hetgsl_forward.17} parent=5 // pred_fallthru
      _
    %p308 = scmp.lt.s32.totalorder %s14, 2
    // Predicated region
    $region13: #{hetgsl_forward.17} parent=5 // pred_check
      %p309 = pneg %p308
    $region14: #{hetgsl_forward.17} parent=5 // pred_check_branch
      %311 = sbr.rel (%p309) target = $region16
    $region15: #{hetgsl_forward.17} parent=5 // pred_region
      // Predicated region
      $region17: #{hetgsl_forward.17} parent=15 // pred_check
        %p312 = pneg %p57
      $region18: #{hetgsl_forward.17} parent=15 // pred_check_branch
        %314 = sbr.rel (%p312) target = $region20
      $region19: #{hetgsl_forward.17} parent=15 // pred_region
        %s315 = smul.u32 16, %s22
        %p316 = scmp.lt.s32.totalorder %s21, 1
        %s317 = scalar_select %p316, %s21, 1
        %p318 = scmp.lt.s32.totalorder %s315, 15
        %s319 = scalar_select %p318, %s315, 15
        %p320 = scmp.lt.s32.totalorder %s23, 0
        %s321 = scalar_select %p320, %s23, 0
        %s322 = sadd.s32 %s321, %s319
        %s323 = smul.addr %s317, 16
        %s324 = sadd.s32 %s322, %s323
        %s325 = smul.addr %s324, 4
        %s326 = scalar_lea.vmem %s0, %s325
        %s327 = smul.u32 16, %s22
      $region20: #{hetgsl_forward.17} parent=15 // pred_fallthru
        _
      // Predicated region
      $region21: #{hetgsl_forward.17} parent=15 // pred_check
        %p328 = pneg %p87
      $region22: #{hetgsl_forward.17} parent=15 // pred_check_branch
        %330 = sbr.rel (%p328) target = $region24
      $region23: #{hetgsl_forward.17} parent=15 // pred_region
        %s331 = smul.u32 16, %s22
        %p332 = scmp.lt.s32.totalorder %s21, 1
        %s333 = scalar_select %p332, %s21, 1
        %p334 = scmp.lt.s32.totalorder %s331, 15
        %s335 = scalar_select %p334, %s331, 15
        %p336 = scmp.lt.s32.totalorder %s23, 0
        %s337 = scalar_select %p336, %s23, 0
        %s338 = sadd.s32 %s337, %s335
        %s339 = smul.addr %s333, 16
        %s340 = sadd.s32 %s338, %s339
        %s341 = smul.addr %s340, 4
        %s342 = scalar_lea.vmem %s1, %s341
        %s343 = smul.u32 16, %s22
      $region24: #{hetgsl_forward.17} parent=15 // pred_fallthru
        _
      // Predicated region
      $region25: #{hetgsl_forward.17} parent=15 // pred_check
        %p344 = pneg %p117
      $region26: #{hetgsl_forward.17} parent=15 // pred_check_branch
        %346 = sbr.rel (%p344) target = $region28
      $region27: #{hetgsl_forward.17} parent=15 // pred_region
        %s347 = smul.u32 16, %s22
        %p348 = scmp.lt.s32.totalorder %s21, 1
        %s349 = scalar_select %p348, %s21, 1
        %p350 = scmp.lt.s32.totalorder %s347, 15
        %s351 = scalar_select %p350, %s347, 15
        %p352 = scmp.lt.s32.totalorder %s23, 0
        %s353 = scalar_select %p352, %s23, 0
        %s354 = sadd.s32 %s353, %s351
        %s355 = smul.addr %s349, 16
        %s356 = sadd.s32 %s354, %s355
        %s357 = smul.addr %s356, 4
        %s358 = scalar_lea.vmem %s2, %s357
        %s359 = smul.u32 16, %s22
      $region28: #{hetgsl_forward.17} parent=15 // pred_fallthru
        _
      // Predicated region
      $region29: #{hetgsl_forward.17} parent=15 // pred_check
        %p360 = pneg %p145
      $region30: #{hetgsl_forward.17} parent=15 // pred_check_branch
        %362 = sbr.rel (%p360) target = $region32
      $region31: #{hetgsl_forward.17} parent=15 // pred_region
        %s363 = smul.u32 16, %s22
        %p364 = scmp.lt.s32.totalorder %s21, 1
        %s365 = scalar_select %p364, %s21, 1
        %p366 = scmp.lt.s32.totalorder %s363, 15
        %s367 = scalar_select %p366, %s363, 15
        %s368 = smul.addr %s365, 16
        %s369 = sadd.s32 %s367, %s368
        %s370 = smul.addr %s369, 8
        %s371 = scalar_lea.vmem %s3, %s370
        %s372 = smul.u32 16, %s22
      $region32: #{hetgsl_forward.17} parent=15 // pred_fallthru
        _
      // Predicated region
      $region33: #{hetgsl_forward.17} parent=15 // pred_check
        %p373 = pneg %p173
      $region34: #{hetgsl_forward.17} parent=15 // pred_check_branch
        %375 = sbr.rel (%p373) target = $region36
      $region35: #{hetgsl_forward.17} parent=15 // pred_region
        %s376 = smul.u32 16, %s22
        %p377 = scmp.lt.s32.totalorder %s21, 1
        %s378 = scalar_select %p377, %s21, 1
        %p379 = scmp.lt.s32.totalorder %s376, 15
        %s380 = scalar_select %p379, %s376, 15
        %s381 = smul.addr %s378, 16
        %s382 = sadd.s32 %s380, %s381
        %s383 = smul.addr %s382, 8
        %s384 = scalar_lea.vmem %s4, %s383
        %s385 = smul.u32 16, %s22
      $region36: #{hetgsl_forward.17} parent=15 // pred_fallthru
        _
      // Predicated region
      $region37: #{hetgsl_forward.17} parent=15 // pred_check
        %p386 = pneg %p201
      $region38: #{hetgsl_forward.17} parent=15 // pred_check_branch
        %388 = sbr.rel (%p386) target = $region40
      $region39: #{hetgsl_forward.17} parent=15 // pred_region
        %p389 = scmp.lt.s32.totalorder %s21, 1
        %s390 = scalar_select %p389, %s21, 1
        %p391 = scmp.lt.s32.totalorder %s23, 0
        %s392 = scalar_select %p391, %s23, 0
        %s393 = sadd.s32 %s392, %s390
        %s394 = scalar_lea.vmem %s5, %s393
      $region40: #{hetgsl_forward.17} parent=15 // pred_fallthru
        _
      // Predicated region
      $region41: #{hetgsl_forward.17} parent=15 // pred_check
        %p395 = pneg %p229
      $region42: #{hetgsl_forward.17} parent=15 // pred_check_branch
        %397 = sbr.rel (%p395) target = $region44
      $region43: #{hetgsl_forward.17} parent=15 // pred_region
        %p398 = scmp.lt.s32.totalorder %s21, 1
        %s399 = scalar_select %p398, %s21, 1
        %p400 = scmp.lt.s32.totalorder %s23, 0
        %s401 = scalar_select %p400, %s23, 0
        %s402 = sadd.s32 %s401, %s399
        %s403 = scalar_lea.vmem %s6, %s402
      $region44: #{hetgsl_forward.17} parent=15 // pred_fallthru
        _
      // Predicated region
      $region45: #{hetgsl_forward.17} parent=15 // pred_check
        %p404 = pneg %p257
      $region46: #{hetgsl_forward.17} parent=15 // pred_check_branch
        %406 = sbr.rel (%p404) target = $region48
      $region47: #{hetgsl_forward.17} parent=15 // pred_region
        %p407 = scmp.lt.s32.totalorder %s21, 1
        %s408 = scalar_select %p407, %s21, 1
        %p409 = scmp.lt.s32.totalorder %s23, 0
        %s410 = scalar_select %p409, %s23, 0
        %s411 = sadd.s32 %s410, %s408
        %s412 = scalar_lea.vmem %s7, %s411
      $region48: #{hetgsl_forward.17} parent=15 // pred_fallthru
        _
    $region16: #{hetgsl_forward.17} parent=5 // pred_fallthru
      _
    %p413 = scmp.le.s32.totalorder 1, %s14
    %p414 = scmp.lt.s32.totalorder %s14, 3
    %p415 = pnand %p413, %p414
    %p416 = pneg %p415
    // Predicated region
    $region49: #{hetgsl_forward.17} parent=5 // pred_check
      _
    $region50: #{hetgsl_forward.17} parent=5 // pred_check_branch
      %418 = sbr.rel (%p415) target = $region52
    $region51: #{hetgsl_forward.17} parent=5 // pred_region
      %s419 = ssub.s32 %s14, 1
      %s420 = smul.u32 16, %s25
      %p421 = scmp.lt.s32.totalorder %s24, 1
      %s422 = scalar_select %p421, %s24, 1
      %p423 = scmp.lt.s32.totalorder %s420, 15
      %s424 = scalar_select %p423, %s420, 15
      %p425 = scmp.lt.s32.totalorder %s26, 0
      %s426 = scalar_select %p425, %s26, 0
      %s427 = sadd.s32 %s426, %s424
      %s428 = smul.addr %s422, 16
      %s429 = sadd.s32 %s427, %s428
      %s430 = smul.addr %s429, 4
      %s431 = scalar_lea.vmem %s0, %s430
      %p432 = pneg %p63
      %p433 = pneg %p60
      %s434 = smul.u32 16, %s25
      %p435 = scmp.lt.s32.totalorder %s24, 1
      %s436 = scalar_select %p435, %s24, 1
      %p437 = scmp.lt.s32.totalorder %s434, 15
      %s438 = scalar_select %p437, %s434, 15
      %p439 = scmp.lt.s32.totalorder %s26, 0
      %s440 = scalar_select %p439, %s26, 0
      %s441 = sadd.s32 %s440, %s438
      %s442 = smul.addr %s436, 16
      %s443 = sadd.s32 %s441, %s442
      %s444 = smul.addr %s443, 4
      %s445 = scalar_lea.vmem %s1, %s444
      %p446 = pneg %p93
      %p447 = pneg %p90
      %s448 = smul.u32 16, %s25
      %p449 = scmp.lt.s32.totalorder %s24, 1
      %s450 = scalar_select %p449, %s24, 1
      %p451 = scmp.lt.s32.totalorder %s448, 15
      %s452 = scalar_select %p451, %s448, 15
      %p453 = scmp.lt.s32.totalorder %s26, 0
      %s454 = scalar_select %p453, %s26, 0
      %s455 = sadd.s32 %s454, %s452
      %s456 = smul.addr %s450, 16
      %s457 = sadd.s32 %s455, %s456
      %s458 = smul.addr %s457, 4
      %s459 = scalar_lea.vmem %s2, %s458
      %p460 = pneg %p123
      %p461 = pneg %p120
      %s462 = smul.u32 16, %s25
      %p463 = scmp.lt.s32.totalorder %s24, 1
      %s464 = scalar_select %p463, %s24, 1
      %p465 = scmp.lt.s32.totalorder %s462, 15
      %s466 = scalar_select %p465, %s462, 15
      %s467 = smul.addr %s464, 16
      %s468 = sadd.s32 %s466, %s467
      %s469 = smul.addr %s468, 8
      %s470 = scalar_lea.vmem %s3, %s469
      %p471 = pneg %p151
      %p472 = pneg %p148
      %s473 = smul.u32 16, %s25
      %p474 = scmp.lt.s32.totalorder %s24, 1
      %s475 = scalar_select %p474, %s24, 1
      %p476 = scmp.lt.s32.totalorder %s473, 15
      %s477 = scalar_select %p476, %s473, 15
      %s478 = smul.addr %s475, 16
      %s479 = sadd.s32 %s477, %s478
      %s480 = smul.addr %s479, 8
      %s481 = scalar_lea.vmem %s4, %s480
      %p482 = pneg %p179
      %p483 = pneg %p176
      %p484 = scmp.lt.s32.totalorder %s24, 1
      %s485 = scalar_select %p484, %s24, 1
      %p486 = scmp.lt.s32.totalorder %s26, 0
      %s487 = scalar_select %p486, %s26, 0
      %s488 = sadd.s32 %s487, %s485
      %s489 = scalar_lea.vmem %s5, %s488
      %p490 = pneg %p207
      %p491 = pneg %p204
      %p492 = scmp.lt.s32.totalorder %s24, 1
      %s493 = scalar_select %p492, %s24, 1
      %p494 = scmp.lt.s32.totalorder %s26, 0
      %s495 = scalar_select %p494, %s26, 0
      %s496 = sadd.s32 %s495, %s493
      %s497 = scalar_lea.vmem %s6, %s496
      %p498 = pneg %p235
      %p499 = pneg %p232
      %p500 = scmp.lt.s32.totalorder %s24, 1
      %s501 = scalar_select %p500, %s24, 1
      %p502 = scmp.lt.s32.totalorder %s26, 0
      %s503 = scalar_select %p502, %s26, 0
      %s504 = sadd.s32 %s503, %s501
      %s505 = scalar_lea.vmem %s7, %s504
      %p506 = pneg %p263
      %p507 = pneg %p260
      %p508 = pneg %p293
      %p509 = pneg %p290
      %s510 = smul.u32 16, %s25
      %p511 = scmp.lt.s32.totalorder %s24, 1
      %s512 = scalar_select %p511, %s24, 1
      %p513 = scmp.lt.s32.totalorder %s510, 15
      %s514 = scalar_select %p513, %s510, 15
      %p515 = scmp.lt.s32.totalorder %s26, 0
      %s516 = scalar_select %p515, %s26, 0
      %s517 = sadd.s32 %s516, %s514
      %s518 = smul.addr %s512, 16
      %s519 = sadd.s32 %s517, %s518
      %s520 = smul.addr %s519, 4
      %s521 = scalar_lea.vmem %s8, %s520
      %s522 = smul.u32 16, %s25
      %p523 = scmp.lt.s32.totalorder %s24, 1
      %s524 = scalar_select %p523, %s24, 1
      %p525 = scmp.lt.s32.totalorder %s522, 15
      %s526 = scalar_select %p525, %s522, 15
      %p527 = scmp.lt.s32.totalorder %s26, 0
      %s528 = scalar_select %p527, %s26, 0
      %s529 = sadd.s32 %s528, %s526
      %s530 = smul.addr %s524, 16
      %s531 = sadd.s32 %s529, %s530
      %s532 = smul.addr %s531, 4
      %s533 = scalar_lea.vmem %s0, %s532
      %s534 = smul.u32 16, %s25
      %s535 = smul.u32 16, %s25
      %p536 = scmp.lt.s32.totalorder %s24, 1
      %s537 = scalar_select %p536, %s24, 1
      %p538 = scmp.lt.s32.totalorder %s535, 15
      %s539 = scalar_select %p538, %s535, 15
      %p540 = scmp.lt.s32.totalorder %s26, 0
      %s541 = scalar_select %p540, %s26, 0
      %s542 = sadd.s32 %s541, %s539
      %s543 = smul.addr %s537, 16
      %s544 = sadd.s32 %s542, %s543
      %s545 = smul.addr %s544, 4
      %s546 = scalar_lea.vmem %s1, %s545
      %s547 = smul.u32 16, %s25
      %s548 = smul.u32 16, %s25
      %p549 = scmp.lt.s32.totalorder %s24, 1
      %s550 = scalar_select %p549, %s24, 1
      %p551 = scmp.lt.s32.totalorder %s548, 15
      %s552 = scalar_select %p551, %s548, 15
      %p553 = scmp.lt.s32.totalorder %s26, 0
      %s554 = scalar_select %p553, %s26, 0
      %s555 = sadd.s32 %s554, %s552
      %s556 = smul.addr %s550, 16
      %s557 = sadd.s32 %s555, %s556
      %s558 = smul.addr %s557, 4
      %s559 = scalar_lea.vmem %s2, %s558
      %s560 = smul.u32 16, %s25
      %s561 = smul.u32 16, %s25
      %p562 = scmp.lt.s32.totalorder %s24, 1
      %s563 = scalar_select %p562, %s24, 1
      %p564 = scmp.lt.s32.totalorder %s561, 15
      %s565 = scalar_select %p564, %s561, 15
      %s566 = smul.addr %s563, 16
      %s567 = sadd.s32 %s565, %s566
      %s568 = smul.addr %s567, 8
      %s569 = scalar_lea.vmem %s3, %s568
      %s570 = smul.u32 16, %s25
      %s571 = smul.u32 16, %s25
      %p572 = scmp.lt.s32.totalorder %s24, 1
      %s573 = scalar_select %p572, %s24, 1
      %p574 = scmp.lt.s32.totalorder %s571, 15
      %s575 = scalar_select %p574, %s571, 15
      %s576 = smul.addr %s573, 16
      %s577 = sadd.s32 %s575, %s576
      %s578 = smul.addr %s577, 8
      %s579 = scalar_lea.vmem %s4, %s578
      %s580 = smul.u32 16, %s25
      %p581 = scmp.lt.s32.totalorder %s24, 1
      %s582 = scalar_select %p581, %s24, 1
      %p583 = scmp.lt.s32.totalorder %s26, 0
      %s584 = scalar_select %p583, %s26, 0
      %s585 = sadd.s32 %s584, %s582
      %s586 = scalar_lea.vmem %s5, %s585
      %p587 = scmp.lt.s32.totalorder %s24, 1
      %s588 = scalar_select %p587, %s24, 1
      %p589 = scmp.lt.s32.totalorder %s26, 0
      %s590 = scalar_select %p589, %s26, 0
      %s591 = sadd.s32 %s590, %s588
      %s592 = scalar_lea.vmem %s6, %s591
      %p593 = scmp.lt.s32.totalorder %s24, 1
      %s594 = scalar_select %p593, %s24, 1
      %p595 = scmp.lt.s32.totalorder %s26, 0
      %s596 = scalar_select %p595, %s26, 0
      %s597 = sadd.s32 %s596, %s594
      %s598 = scalar_lea.vmem %s7, %s597
      %s599 = smul.u32 16, %s25
      %p600 = scmp.lt.s32.totalorder %s24, 1
      %s601 = scalar_select %p600, %s24, 1
      %p602 = scmp.lt.s32.totalorder %s599, 15
      %s603 = scalar_select %p602, %s599, 15
      %p604 = scmp.lt.s32.totalorder %s26, 0
      %s605 = scalar_select %p604, %s26, 0
      %s606 = sadd.s32 %s605, %s603
      %s607 = smul.addr %s601, 16
      %s608 = sadd.s32 %s606, %s607
      %s609 = smul.addr %s608, 4
      %s610 = scalar_lea.vmem %s8, %s609
      %s611 = smul.u32 16, %s25
      %v612 = vld [vmem:[%s533] sm:$0xf]
      %v613 = vld [vmem:[%s533 + $0x4] sm:$0xf]
      %v614 = vld [vmem:[%s533 + $0x8] sm:$0xf]
      %v615 = vld [vmem:[%s533 + $0xc] sm:$0xf]
      %v616 = vld [vmem:[%s533 + $0x10] sm:$0xf]
      %v617 = vld [vmem:[%s533 + $0x14] sm:$0xf]
      %v618 = vld [vmem:[%s533 + $0x18] sm:$0xf]
      %v619 = vld [vmem:[%s533 + $0x1c] sm:$0xf]
      %v620 = vld [vmem:[%s533 + $0x20] sm:$0xf]
      %v621 = vld [vmem:[%s533 + $0x24] sm:$0xf]
      %v622 = vld [vmem:[%s533 + $0x28] sm:$0xf]
      %v623 = vld [vmem:[%s533 + $0x2c] sm:$0xf]
      %v624 = vld [vmem:[%s533 + $0x30] sm:$0xf]
      %v625 = vld [vmem:[%s533 + $0x34] sm:$0xf]
      %v626 = vld [vmem:[%s533 + $0x38] sm:$0xf]
      %v627 = vld [vmem:[%s533 + $0x3c] sm:$0xf]
      %v628 = vunpack.c.l.bf16 %v612
      %v629 = vunpack.c.l.bf16 %v613
      %v630 = vunpack.c.l.bf16 %v614
      %v631 = vunpack.c.l.bf16 %v615
      %v632 = vunpack.c.l.bf16 %v616
      %v633 = vunpack.c.l.bf16 %v617
      %v634 = vunpack.c.l.bf16 %v618
      %v635 = vunpack.c.l.bf16 %v619
      %v636 = vunpack.c.l.bf16 %v620
      %v637 = vunpack.c.l.bf16 %v621
      %v638 = vunpack.c.l.bf16 %v622
      %v639 = vunpack.c.l.bf16 %v623
      %v640 = vunpack.c.l.bf16 %v624
      %v641 = vunpack.c.l.bf16 %v625
      %v642 = vunpack.c.l.bf16 %v626
      %v643 = vunpack.c.l.bf16 %v627
      %v644 = vld [vmem:[%s569] sm:$0xff]
      %v645 = vld [vmem:[%s569 + $0x8] sm:$0xff]
      %v646 = vld [vmem:[%s569 + $0x10] sm:$0xff]
      %v647 = vld [vmem:[%s569 + $0x18] sm:$0xff]
      %v648 = vld [vmem:[%s569 + $0x20] sm:$0xff]
      %v649 = vld [vmem:[%s569 + $0x28] sm:$0xff]
      %v650 = vld [vmem:[%s569 + $0x30] sm:$0xff]
      %v651 = vld [vmem:[%s569 + $0x38] sm:$0xff]
      %v652 = vld [vmem:[%s569 + $0x40] sm:$0xff]
      %v653 = vld [vmem:[%s569 + $0x48] sm:$0xff]
      %v654 = vld [vmem:[%s569 + $0x50] sm:$0xff]
      %v655 = vld [vmem:[%s569 + $0x58] sm:$0xff]
      %v656 = vld [vmem:[%s569 + $0x60] sm:$0xff]
      %v657 = vld [vmem:[%s569 + $0x68] sm:$0xff]
      %v658 = vld [vmem:[%s569 + $0x70] sm:$0xff]
      %v659 = vld [vmem:[%s569 + $0x78] sm:$0xff]
      %661 = vset.pattern.permute.xlu0 0
      %662 = vperm.xlu0 %661, %v644
      %v663 = vpop.permute.xlu0 %662
      %666 = vset.pattern.permute.xlu0 0
      %667 = vperm.xlu0 %666, %v645
      %v668 = vpop.permute.xlu0 %667
      %671 = vset.pattern.permute.xlu0 0
      %672 = vperm.xlu0 %671, %v646
      %v673 = vpop.permute.xlu0 %672
      %676 = vset.pattern.permute.xlu0 0
      %677 = vperm.xlu0 %676, %v647
      %v678 = vpop.permute.xlu0 %677
      %681 = vset.pattern.permute.xlu0 0
      %682 = vperm.xlu0 %681, %v648
      %v683 = vpop.permute.xlu0 %682
      %686 = vset.pattern.permute.xlu0 0
      %687 = vperm.xlu0 %686, %v649
      %v688 = vpop.permute.xlu0 %687
      %691 = vset.pattern.permute.xlu0 0
      %692 = vperm.xlu0 %691, %v650
      %v693 = vpop.permute.xlu0 %692
      %696 = vset.pattern.permute.xlu0 0
      %697 = vperm.xlu0 %696, %v651
      %v698 = vpop.permute.xlu0 %697
      %701 = vset.pattern.permute.xlu0 0
      %702 = vperm.xlu0 %701, %v652
      %v703 = vpop.permute.xlu0 %702
      %706 = vset.pattern.permute.xlu0 0
      %707 = vperm.xlu0 %706, %v653
      %v708 = vpop.permute.xlu0 %707
      %711 = vset.pattern.permute.xlu0 0
      %712 = vperm.xlu0 %711, %v654
      %v713 = vpop.permute.xlu0 %712
      %716 = vset.pattern.permute.xlu0 0
      %717 = vperm.xlu0 %716, %v655
      %v718 = vpop.permute.xlu0 %717
      %721 = vset.pattern.permute.xlu0 0
      %722 = vperm.xlu0 %721, %v656
      %v723 = vpop.permute.xlu0 %722
      %726 = vset.pattern.permute.xlu0 0
      %727 = vperm.xlu0 %726, %v657
      %v728 = vpop.permute.xlu0 %727
      %731 = vset.pattern.permute.xlu0 0
      %732 = vperm.xlu0 %731, %v658
      %v733 = vpop.permute.xlu0 %732
      %736 = vset.pattern.permute.xlu0 0
      %737 = vperm.xlu0 %736, %v659
      %v738 = vpop.permute.xlu0 %737
      %v740 = vmul.f32 %v628, %v663
      %v741 = vmul.f32 %v629, %v668
      %v742 = vmul.f32 %v630, %v673
      %v743 = vmul.f32 %v631, %v678
      %v744 = vmul.f32 %v632, %v683
      %v745 = vmul.f32 %v633, %v688
      %v746 = vmul.f32 %v634, %v693
      %v747 = vmul.f32 %v635, %v698
      %v748 = vmul.f32 %v636, %v703
      %v749 = vmul.f32 %v637, %v708
      %v750 = vmul.f32 %v638, %v713
      %v751 = vmul.f32 %v639, %v718
      %v752 = vmul.f32 %v640, %v723
      %v753 = vmul.f32 %v641, %v728
      %v754 = vmul.f32 %v642, %v733
      %v755 = vmul.f32 %v643, %v738
      %v756 = vld [vmem:[%s546] sm:$0xf]
      %v757 = vld [vmem:[%s546 + $0x4] sm:$0xf]
      %v758 = vld [vmem:[%s546 + $0x8] sm:$0xf]
      %v759 = vld [vmem:[%s546 + $0xc] sm:$0xf]
      %v760 = vld [vmem:[%s546 + $0x10] sm:$0xf]
      %v761 = vld [vmem:[%s546 + $0x14] sm:$0xf]
      %v762 = vld [vmem:[%s546 + $0x18] sm:$0xf]
      %v763 = vld [vmem:[%s546 + $0x1c] sm:$0xf]
      %v764 = vld [vmem:[%s546 + $0x20] sm:$0xf]
      %v765 = vld [vmem:[%s546 + $0x24] sm:$0xf]
      %v766 = vld [vmem:[%s546 + $0x28] sm:$0xf]
      %v767 = vld [vmem:[%s546 + $0x2c] sm:$0xf]
      %v768 = vld [vmem:[%s546 + $0x30] sm:$0xf]
      %v769 = vld [vmem:[%s546 + $0x34] sm:$0xf]
      %v770 = vld [vmem:[%s546 + $0x38] sm:$0xf]
      %v771 = vld [vmem:[%s546 + $0x3c] sm:$0xf]
      %v772 = vunpack.c.l.bf16 %v756
      %v773 = vunpack.c.l.bf16 %v757
      %v774 = vunpack.c.l.bf16 %v758
      %v775 = vunpack.c.l.bf16 %v759
      %v776 = vunpack.c.l.bf16 %v760
      %v777 = vunpack.c.l.bf16 %v761
      %v778 = vunpack.c.l.bf16 %v762
      %v779 = vunpack.c.l.bf16 %v763
      %v780 = vunpack.c.l.bf16 %v764
      %v781 = vunpack.c.l.bf16 %v765
      %v782 = vunpack.c.l.bf16 %v766
      %v783 = vunpack.c.l.bf16 %v767
      %v784 = vunpack.c.l.bf16 %v768
      %v785 = vunpack.c.l.bf16 %v769
      %v786 = vunpack.c.l.bf16 %v770
      %v787 = vunpack.c.l.bf16 %v771
      %v788 = vld [vmem:[%s579] sm:$0xff]
      %v789 = vld [vmem:[%s579 + $0x8] sm:$0xff]
      %v790 = vld [vmem:[%s579 + $0x10] sm:$0xff]
      %v791 = vld [vmem:[%s579 + $0x18] sm:$0xff]
      %v792 = vld [vmem:[%s579 + $0x20] sm:$0xff]
      %v793 = vld [vmem:[%s579 + $0x28] sm:$0xff]
      %v794 = vld [vmem:[%s579 + $0x30] sm:$0xff]
      %v795 = vld [vmem:[%s579 + $0x38] sm:$0xff]
      %v796 = vld [vmem:[%s579 + $0x40] sm:$0xff]
      %v797 = vld [vmem:[%s579 + $0x48] sm:$0xff]
      %v798 = vld [vmem:[%s579 + $0x50] sm:$0xff]
      %v799 = vld [vmem:[%s579 + $0x58] sm:$0xff]
      %v800 = vld [vmem:[%s579 + $0x60] sm:$0xff]
      %v801 = vld [vmem:[%s579 + $0x68] sm:$0xff]
      %v802 = vld [vmem:[%s579 + $0x70] sm:$0xff]
      %v803 = vld [vmem:[%s579 + $0x78] sm:$0xff]
      %805 = vset.pattern.permute.xlu0 0
      %806 = vperm.xlu0 %805, %v788
      %v807 = vpop.permute.xlu0 %806
      %810 = vset.pattern.permute.xlu0 0
      %811 = vperm.xlu0 %810, %v789
      %v812 = vpop.permute.xlu0 %811
      %815 = vset.pattern.permute.xlu0 0
      %816 = vperm.xlu0 %815, %v790
      %v817 = vpop.permute.xlu0 %816
      %820 = vset.pattern.permute.xlu0 0
      %821 = vperm.xlu0 %820, %v791
      %v822 = vpop.permute.xlu0 %821
      %825 = vset.pattern.permute.xlu0 0
      %826 = vperm.xlu0 %825, %v792
      %v827 = vpop.permute.xlu0 %826
      %830 = vset.pattern.permute.xlu0 0
      %831 = vperm.xlu0 %830, %v793
      %v832 = vpop.permute.xlu0 %831
      %835 = vset.pattern.permute.xlu0 0
      %836 = vperm.xlu0 %835, %v794
      %v837 = vpop.permute.xlu0 %836
      %840 = vset.pattern.permute.xlu0 0
      %841 = vperm.xlu0 %840, %v795
      %v842 = vpop.permute.xlu0 %841
      %845 = vset.pattern.permute.xlu0 0
      %846 = vperm.xlu0 %845, %v796
      %v847 = vpop.permute.xlu0 %846
      %850 = vset.pattern.permute.xlu0 0
      %851 = vperm.xlu0 %850, %v797
      %v852 = vpop.permute.xlu0 %851
      %855 = vset.pattern.permute.xlu0 0
      %856 = vperm.xlu0 %855, %v798
      %v857 = vpop.permute.xlu0 %856
      %860 = vset.pattern.permute.xlu0 0
      %861 = vperm.xlu0 %860, %v799
      %v862 = vpop.permute.xlu0 %861
      %865 = vset.pattern.permute.xlu0 0
      %866 = vperm.xlu0 %865, %v800
      %v867 = vpop.permute.xlu0 %866
      %870 = vset.pattern.permute.xlu0 0
      %871 = vperm.xlu0 %870, %v801
      %v872 = vpop.permute.xlu0 %871
      %875 = vset.pattern.permute.xlu0 0
      %876 = vperm.xlu0 %875, %v802
      %v877 = vpop.permute.xlu0 %876
      %880 = vset.pattern.permute.xlu0 0
      %881 = vperm.xlu0 %880, %v803
      %v882 = vpop.permute.xlu0 %881
      %v884 = vmul.f32 %v772, %v807
      %v885 = vmul.f32 %v773, %v812
      %v886 = vmul.f32 %v774, %v817
      %v887 = vmul.f32 %v775, %v822
      %v888 = vmul.f32 %v776, %v827
      %v889 = vmul.f32 %v777, %v832
      %v890 = vmul.f32 %v778, %v837
      %v891 = vmul.f32 %v779, %v842
      %v892 = vmul.f32 %v780, %v847
      %v893 = vmul.f32 %v781, %v852
      %v894 = vmul.f32 %v782, %v857
      %v895 = vmul.f32 %v783, %v862
      %v896 = vmul.f32 %v784, %v867
      %v897 = vmul.f32 %v785, %v872
      %v898 = vmul.f32 %v786, %v877
      %v899 = vmul.f32 %v787, %v882
      %v900 = vld [vmem:[%s559] sm:$0xf]
      %v901 = vld [vmem:[%s559 + $0x4] sm:$0xf]
      %v902 = vld [vmem:[%s559 + $0x8] sm:$0xf]
      %v903 = vld [vmem:[%s559 + $0xc] sm:$0xf]
      %v904 = vld [vmem:[%s559 + $0x10] sm:$0xf]
      %v905 = vld [vmem:[%s559 + $0x14] sm:$0xf]
      %v906 = vld [vmem:[%s559 + $0x18] sm:$0xf]
      %v907 = vld [vmem:[%s559 + $0x1c] sm:$0xf]
      %v908 = vld [vmem:[%s559 + $0x20] sm:$0xf]
      %v909 = vld [vmem:[%s559 + $0x24] sm:$0xf]
      %v910 = vld [vmem:[%s559 + $0x28] sm:$0xf]
      %v911 = vld [vmem:[%s559 + $0x2c] sm:$0xf]
      %v912 = vld [vmem:[%s559 + $0x30] sm:$0xf]
      %v913 = vld [vmem:[%s559 + $0x34] sm:$0xf]
      %v914 = vld [vmem:[%s559 + $0x38] sm:$0xf]
      %v915 = vld [vmem:[%s559 + $0x3c] sm:$0xf]
      %v916 = vunpack.c.l.bf16 %v900
      %v917 = vunpack.c.l.bf16 %v901
      %v918 = vunpack.c.l.bf16 %v902
      %v919 = vunpack.c.l.bf16 %v903
      %v920 = vunpack.c.l.bf16 %v904
      %v921 = vunpack.c.l.bf16 %v905
      %v922 = vunpack.c.l.bf16 %v906
      %v923 = vunpack.c.l.bf16 %v907
      %v924 = vunpack.c.l.bf16 %v908
      %v925 = vunpack.c.l.bf16 %v909
      %v926 = vunpack.c.l.bf16 %v910
      %v927 = vunpack.c.l.bf16 %v911
      %v928 = vunpack.c.l.bf16 %v912
      %v929 = vunpack.c.l.bf16 %v913
      %v930 = vunpack.c.l.bf16 %v914
      %v931 = vunpack.c.l.bf16 %v915
      %v932 = vld [vmem:[%s586] sm:$0x1]
      %v934 = vlaneseq
      %v935 = vshrl.u32 %v934, 7
      %v936 = vsub.s32 0, %v935
      %v937 = vrot.slane %v932, %v936
      %v939 = vmul.f32 %v740, %v937
      %v940 = vmul.f32 %v741, %v937
      %v941 = vmul.f32 %v742, %v937
      %v942 = vmul.f32 %v743, %v937
      %v943 = vmul.f32 %v744, %v937
      %v944 = vmul.f32 %v745, %v937
      %v945 = vmul.f32 %v746, %v937
      %v946 = vmul.f32 %v747, %v937
      %v947 = vmul.f32 %v748, %v937
      %v948 = vmul.f32 %v749, %v937
      %v949 = vmul.f32 %v750, %v937
      %v950 = vmul.f32 %v751, %v937
      %v951 = vmul.f32 %v752, %v937
      %v952 = vmul.f32 %v753, %v937
      %v953 = vmul.f32 %v754, %v937
      %v954 = vmul.f32 %v755, %v937
      %v955 = vld [vmem:[%s592] sm:$0x1]
      %v957 = vlaneseq
      %v958 = vshrl.u32 %v957, 7
      %v959 = vsub.s32 0, %v958
      %v960 = vrot.slane %v955, %v959
      %v962 = vmul.f32 %v884, %v960
      %v963 = vmul.f32 %v885, %v960
      %v964 = vmul.f32 %v886, %v960
      %v965 = vmul.f32 %v887, %v960
      %v966 = vmul.f32 %v888, %v960
      %v967 = vmul.f32 %v889, %v960
      %v968 = vmul.f32 %v890, %v960
      %v969 = vmul.f32 %v891, %v960
      %v970 = vmul.f32 %v892, %v960
      %v971 = vmul.f32 %v893, %v960
      %v972 = vmul.f32 %v894, %v960
      %v973 = vmul.f32 %v895, %v960
      %v974 = vmul.f32 %v896, %v960
      %v975 = vmul.f32 %v897, %v960
      %v976 = vmul.f32 %v898, %v960
      %v977 = vmul.f32 %v899, %v960
      %v978 = vadd.f32 %v939, %v962
      %v979 = vadd.f32 %v940, %v963
      %v980 = vadd.f32 %v941, %v964
      %v981 = vadd.f32 %v942, %v965
      %v982 = vadd.f32 %v943, %v966
      %v983 = vadd.f32 %v944, %v967
      %v984 = vadd.f32 %v945, %v968
      %v985 = vadd.f32 %v946, %v969
      %v986 = vadd.f32 %v947, %v970
      %v987 = vadd.f32 %v948, %v971
      %v988 = vadd.f32 %v949, %v972
      %v989 = vadd.f32 %v950, %v973
      %v990 = vadd.f32 %v951, %v974
      %v991 = vadd.f32 %v952, %v975
      %v992 = vadd.f32 %v953, %v976
      %v993 = vadd.f32 %v954, %v977
      %v994 = vld [vmem:[%s598] sm:$0x1]
      %v996 = vlaneseq
      %v997 = vshrl.u32 %v996, 7
      %v998 = vsub.s32 0, %v997
      %v999 = vrot.slane %v994, %v998
      %v1001 = vmul.f32 %v916, %v999
      %v1002 = vmul.f32 %v917, %v999
      %v1003 = vmul.f32 %v918, %v999
      %v1004 = vmul.f32 %v919, %v999
      %v1005 = vmul.f32 %v920, %v999
      %v1006 = vmul.f32 %v921, %v999
      %v1007 = vmul.f32 %v922, %v999
      %v1008 = vmul.f32 %v923, %v999
      %v1009 = vmul.f32 %v924, %v999
      %v1010 = vmul.f32 %v925, %v999
      %v1011 = vmul.f32 %v926, %v999
      %v1012 = vmul.f32 %v927, %v999
      %v1013 = vmul.f32 %v928, %v999
      %v1014 = vmul.f32 %v929, %v999
      %v1015 = vmul.f32 %v930, %v999
      %v1016 = vmul.f32 %v931, %v999
      %v1017 = vadd.f32 %v978, %v1001
      %v1018 = vadd.f32 %v979, %v1002
      %v1019 = vadd.f32 %v980, %v1003
      %v1020 = vadd.f32 %v981, %v1004
      %v1021 = vadd.f32 %v982, %v1005
      %v1022 = vadd.f32 %v983, %v1006
      %v1023 = vadd.f32 %v984, %v1007
      %v1024 = vadd.f32 %v985, %v1008
      %v1025 = vadd.f32 %v986, %v1009
      %v1026 = vadd.f32 %v987, %v1010
      %v1027 = vadd.f32 %v988, %v1011
      %v1028 = vadd.f32 %v989, %v1012
      %v1029 = vadd.f32 %v990, %v1013
      %v1030 = vadd.f32 %v991, %v1014
      %v1031 = vadd.f32 %v992, %v1015
      %v1032 = vadd.f32 %v993, %v1016
      %v1033 = vpack.c.bf16 %v1018, %v1017
      %v1034 = vpack.c.bf16 %v1020, %v1019
      %v1035 = vpack.c.bf16 %v1022, %v1021
      %v1036 = vpack.c.bf16 %v1024, %v1023
      %v1037 = vpack.c.bf16 %v1026, %v1025
      %v1038 = vpack.c.bf16 %v1028, %v1027
      %v1039 = vpack.c.bf16 %v1030, %v1029
      %v1040 = vpack.c.bf16 %v1032, %v1031
      %v1049 = vunpack.c.l.b16 %v1033
      %v1050 = vunpack.c.h.b16 %v1033
      %v1051 = vunpack.c.l.b16 %v1034
      %v1052 = vunpack.c.h.b16 %v1034
      %v1053 = vunpack.c.l.b16 %v1035
      %v1054 = vunpack.c.h.b16 %v1035
      %v1055 = vunpack.c.l.b16 %v1036
      %v1056 = vunpack.c.h.b16 %v1036
      %v1057 = vunpack.c.l.b16 %v1037
      %v1058 = vunpack.c.h.b16 %v1037
      %v1059 = vunpack.c.l.b16 %v1038
      %v1060 = vunpack.c.h.b16 %v1038
      %v1061 = vunpack.c.l.b16 %v1039
      %v1062 = vunpack.c.h.b16 %v1039
      %v1063 = vunpack.c.l.b16 %v1040
      %v1064 = vunpack.c.h.b16 %v1040
      %v1065 = vpack.c.b16 %v1049, %v1049
      %v1066 = vpack.c.b16 %v1050, %v1050
      %v1067 = vpack.c.b16 %v1051, %v1051
      %v1068 = vpack.c.b16 %v1052, %v1052
      %v1069 = vpack.c.b16 %v1053, %v1053
      %v1070 = vpack.c.b16 %v1054, %v1054
      %v1071 = vpack.c.b16 %v1055, %v1055
      %v1072 = vpack.c.b16 %v1056, %v1056
      %v1073 = vpack.c.b16 %v1057, %v1057
      %v1074 = vpack.c.b16 %v1058, %v1058
      %v1075 = vpack.c.b16 %v1059, %v1059
      %v1076 = vpack.c.b16 %v1060, %v1060
      %v1077 = vpack.c.b16 %v1061, %v1061
      %v1078 = vpack.c.b16 %v1062, %v1062
      %v1079 = vpack.c.b16 %v1063, %v1063
      %v1080 = vpack.c.b16 %v1064, %v1064
      %1097 = vst [vmem:[%s610] sm:$0xf] %v1065
      %1098 = vst [vmem:[%s610 + $0x4] sm:$0xf] %v1066
      %1099 = vst [vmem:[%s610 + $0x8] sm:$0xf] %v1067
      %1100 = vst [vmem:[%s610 + $0xc] sm:$0xf] %v1068
      %1101 = vst [vmem:[%s610 + $0x10] sm:$0xf] %v1069
      %1102 = vst [vmem:[%s610 + $0x14] sm:$0xf] %v1070
      %1103 = vst [vmem:[%s610 + $0x18] sm:$0xf] %v1071
      %1104 = vst [vmem:[%s610 + $0x1c] sm:$0xf] %v1072
      %1105 = vst [vmem:[%s610 + $0x20] sm:$0xf] %v1073
      %1106 = vst [vmem:[%s610 + $0x24] sm:$0xf] %v1074
      %1107 = vst [vmem:[%s610 + $0x28] sm:$0xf] %v1075
      %1108 = vst [vmem:[%s610 + $0x2c] sm:$0xf] %v1076
      %1109 = vst [vmem:[%s610 + $0x30] sm:$0xf] %v1077
      %1110 = vst [vmem:[%s610 + $0x34] sm:$0xf] %v1078
      %1111 = vst [vmem:[%s610 + $0x38] sm:$0xf] %v1079
      %1112 = vst [vmem:[%s610 + $0x3c] sm:$0xf] %v1080
      %s1113 = smul.u32 16, %s25
      %p1114 = scmp.lt.s32.totalorder %s24, 1
      %s1115 = scalar_select %p1114, %s24, 1
      %p1116 = scmp.lt.s32.totalorder %s1113, 15
      %s1117 = scalar_select %p1116, %s1113, 15
      %p1118 = scmp.lt.s32.totalorder %s26, 0
      %s1119 = scalar_select %p1118, %s26, 0
      %s1120 = sadd.s32 %s1119, %s1117
      %s1121 = smul.addr %s1115, 16
      %s1122 = sadd.s32 %s1120, %s1121
      %s1123 = smul.addr %s1122, 4
      %s1124 = scalar_lea.vmem %s8, %s1123
      // Predicated region
      $region53: #{hetgsl_forward.17} parent=51 // pred_check
        %p1125 = pneg %p290
      $region54: #{hetgsl_forward.17} parent=51 // pred_check_branch
        %1127 = sbr.rel (%p1125) target = $region56
      $region55: #{hetgsl_forward.17} parent=51 // pred_region
        %s1128 = smul.u32 16, %s25
      $region56: #{hetgsl_forward.17} parent=51 // pred_fallthru
        _
    $region52: #{hetgsl_forward.17} parent=5 // pred_fallthru
      _
    %p1129 = scmp.le.s32.totalorder 2, %s14
    // Predicated region
    $region57: #{hetgsl_forward.17} parent=5 // pred_check
      %p1130 = pneg %p1129
    $region58: #{hetgsl_forward.17} parent=5 // pred_check_branch
      %1132 = sbr.rel (%p1130) target = $region60
    $region59: #{hetgsl_forward.17} parent=5 // pred_region
      %s1133 = ssub.s32 %s14, 2
      // Predicated region
      $region61: #{hetgsl_forward.17} parent=59 // pred_check
        %p1134 = pneg %p296
      $region62: #{hetgsl_forward.17} parent=59 // pred_check_branch
        %1136 = sbr.rel (%p1134) target = $region64
      $region63: #{hetgsl_forward.17} parent=59 // pred_region
        %s1137 = smul.u32 16, %s28
        %p1138 = scmp.lt.s32.totalorder %s27, 1
        %s1139 = scalar_select %p1138, %s27, 1
        %p1140 = scmp.lt.s32.totalorder %s1137, 15
        %s1141 = scalar_select %p1140, %s1137, 15
        %p1142 = scmp.lt.s32.totalorder %s29, 0
        %s1143 = scalar_select %p1142, %s29, 0
        %s1144 = sadd.s32 %s1143, %s1141
        %s1145 = smul.addr %s1139, 16
        %s1146 = sadd.s32 %s1144, %s1145
        %s1147 = smul.addr %s1146, 4
        %s1148 = scalar_lea.vmem %s8, %s1147
      $region64: #{hetgsl_forward.17} parent=59 // pred_fallthru
        _
    $region60: #{hetgsl_forward.17} parent=5 // pred_fallthru
      _
  $region6: #{hetgsl_forward.17} parent=0 // loop_footer
    %s18 = sadd.s32 1, %s14
  $region7: #{hetgsl_forward.17} parent=0 // loop_footer_branch
    %13 = sbr.rel target = $region3
  $region8: #{hetgsl_forward.17} parent=0 // loop_exit
    _

// kernel: hetgsl_forward.18
$region0: #{hetgsl_forward.18}
  #allocation0 [shape = 'u32[]', space=smem, size = 0x4, offset = 0x4, fixed_abs, tag = 'smem constant byte address 0x4 - core index']
  #allocation1 [shape = 'u32[144,128]{1,0:T(1,128)}', space=vmem, size = 0x12000, scoped, tag = 'internal scratch']
  %s0 = inlined_call_operand.vmem [shape: bf16[2,128,128], index: 0, kind: input, shape index: {}, may-alias: {0,1}]
  %s1 = inlined_call_operand.vmem [shape: bf16[2,128,128], index: 1, kind: input, shape index: {}, may-alias: {0,1}]
  %s2 = inlined_call_operand.vmem [shape: f32[2,128,1], index: 2, kind: output, shape index: {}]
  %s3 = sld [smem:[#allocation0]]
  $region45: #{hetgsl_forward.18} parent=0
    _
  %s5 = ssub.s32 1, %s3
  %s6 = scalar_select 0, %s5, %s3
  loop: start=0, step=1, limit=4
  $region2: #{hetgsl_forward.18} parent=0 // loop_pre_header
    _
  $region3: #{hetgsl_forward.18} parent=0 // loop_header
    %s8 = sphi 0, %s12
    %p9 = scmp.ge.s32.totalorder %s8, 4
    %s15 = sphi 0, %s34
    %s16 = sphi 0, %s30
    %s17 = sphi 0, %s26
    %s18 = sphi 0, %s15
    %s19 = sphi 0, %s16
    %s20 = sphi 0, %s17
    %s21 = sphi 0, %s18
    %s22 = sphi 0, %s19
    %s23 = sphi 0, %s20
    %s41 = sphi 0, %s43
    %s44 = sphi 0, %s41
    %s45 = sphi 0, %s44
    %s61 = sphi 0, %s45
    %s71 = sphi 0, %s73
    %s74 = sphi 0, %s71
    %s75 = sphi 0, %s74
    %s91 = sphi 0, %s75
    %s99 = sphi 0, %s101
    %s102 = sphi 0, %s99
    %s103 = sphi 0, %s102
    %s119 = sphi 0, %s103
  $region4: #{hetgsl_forward.18} parent=0 // loop_header_branch
    %11 = sbr.rel (%p9) target = $region8
  $region5: #{hetgsl_forward.18} parent=0 // loop_body
    %s13 = ssub.s32 %s8, 1
    %s14 = ssub.s32 %s8, 2
    %s24 = sadd.s32 1, %s17
    %p25 = scmp.ge.s32.totalorder %s24, 1
    %s26 = scalar_select %p25, 0, %s24
    %s27 = sadd.s32 1, %s16
    %s28 = scalar_select %p25, %s27, %s16
    %p29 = scmp.ge.s32.totalorder %s28, 1
    %s30 = scalar_select %p29, 0, %s28
    %s31 = sadd.s32 1, %s15
    %s32 = scalar_select %p29, %s31, %s15
    %p33 = scmp.ge.s32.totalorder %s32, 2
    %s34 = scalar_select %p33, 0, %s32
    %s35 = ssub.s32 %s15, %s34
    %s36 = ssub.s32 %s16, %s30
    %s37 = sor.u32 %s35, %s36
    %s38 = ssub.s32 %s17, %s26
    %s39 = sor.u32 %s37, %s38
    %p40 = scmp.eq.s32.totalorder %s39, 0
    %s42 = sadd.s32 %s41, 1
    %s43 = scalar_select %p40, %s41, %s42
    %p46 = pneg %p40
    %p47 = scmp.eq.s32.totalorder %s8, 1
    %p48 = por %p46, %p47
    %p49 = scmp.ne.s32.totalorder %s41, %s44
    %p50 = scmp.eq.s32.totalorder %s8, 0
    %p51 = por %p49, %p50
    %p52 = scmp.ne.s32.totalorder %s41, %s44
    %p53 = scmp.eq.s32.totalorder %s13, 1
    %p54 = por %p52, %p53
    %p55 = scmp.ne.s32.totalorder %s44, %s45
    %p56 = scmp.eq.s32.totalorder %s13, 0
    %p57 = por %p55, %p56
    %p58 = scmp.ne.s32.totalorder %s44, %s45
    %p59 = scmp.eq.s32.totalorder %s14, 1
    %p60 = por %p58, %p59
    %p62 = scmp.ne.s32.totalorder %s45, %s61
    %p63 = scmp.eq.s32.totalorder %s14, 0
    %p64 = por %p62, %p63
    %s65 = ssub.s32 %s15, %s34
    %s66 = ssub.s32 %s17, %s26
    %s67 = sor.u32 %s65, %s66
    %s68 = ssub.s32 %s16, %s30
    %s69 = sor.u32 %s67, %s68
    %p70 = scmp.eq.s32.totalorder %s69, 0
    %s72 = sadd.s32 %s71, 1
    %s73 = scalar_select %p70, %s71, %s72
    %p76 = pneg %p70
    %p77 = scmp.eq.s32.totalorder %s8, 1
    %p78 = por %p76, %p77
    %p79 = scmp.ne.s32.totalorder %s71, %s74
    %p80 = scmp.eq.s32.totalorder %s8, 0
    %p81 = por %p79, %p80
    %p82 = scmp.ne.s32.totalorder %s71, %s74
    %p83 = scmp.eq.s32.totalorder %s13, 1
    %p84 = por %p82, %p83
    %p85 = scmp.ne.s32.totalorder %s74, %s75
    %p86 = scmp.eq.s32.totalorder %s13, 0
    %p87 = por %p85, %p86
    %p88 = scmp.ne.s32.totalorder %s74, %s75
    %p89 = scmp.eq.s32.totalorder %s14, 1
    %p90 = por %p88, %p89
    %p92 = scmp.ne.s32.totalorder %s75, %s91
    %p93 = scmp.eq.s32.totalorder %s14, 0
    %p94 = por %p92, %p93
    %s95 = ssub.s32 %s15, %s34
    %s96 = ssub.s32 %s16, %s30
    %s97 = sor.u32 %s95, %s96
    %p98 = scmp.eq.s32.totalorder %s97, 0
    %s100 = sadd.s32 %s99, 1
    %s101 = scalar_select %p98, %s99, %s100
    %p104 = pneg %p98
    %p105 = scmp.eq.s32.totalorder %s8, 1
    %p106 = por %p104, %p105
    %p107 = scmp.ne.s32.totalorder %s99, %s102
    %p108 = scmp.eq.s32.totalorder %s8, 0
    %p109 = por %p107, %p108
    %p110 = scmp.ne.s32.totalorder %s99, %s102
    %p111 = scmp.eq.s32.totalorder %s13, 1
    %p112 = por %p110, %p111
    %p113 = scmp.ne.s32.totalorder %s102, %s103
    %p114 = scmp.eq.s32.totalorder %s13, 0
    %p115 = por %p113, %p114
    %p116 = scmp.ne.s32.totalorder %s102, %s103
    %p117 = scmp.eq.s32.totalorder %s14, 1
    %p118 = por %p116, %p117
    %p120 = scmp.ne.s32.totalorder %s103, %s119
    %p121 = scmp.eq.s32.totalorder %s14, 0
    %p122 = por %p120, %p121
    %p123 = scmp.le.s32.totalorder 1, %s8
    %p124 = scmp.lt.s32.totalorder %s8, 3
    %p125 = pnand %p123, %p124
    %p126 = pneg %p125
    // Predicated region
    $region9: #{hetgsl_forward.18} parent=5 // pred_check
      _
    $region10: #{hetgsl_forward.18} parent=5 // pred_check_branch
      %128 = sbr.rel (%p125) target = $region12
    $region11: #{hetgsl_forward.18} parent=5 // pred_region
      %s129 = ssub.s32 %s8, 1
    $region12: #{hetgsl_forward.18} parent=5 // pred_fallthru
      _
    %p130 = scmp.lt.s32.totalorder %s8, 2
    // Predicated region
    $region13: #{hetgsl_forward.18} parent=5 // pred_check
      %p131 = pneg %p130
    $region14: #{hetgsl_forward.18} parent=5 // pred_check_branch
      %133 = sbr.rel (%p131) target = $region16
    $region15: #{hetgsl_forward.18} parent=5 // pred_region
      // Predicated region
      $region17: #{hetgsl_forward.18} parent=15 // pred_check
        %p134 = pneg %p51
      $region18: #{hetgsl_forward.18} parent=15 // pred_check_branch
        %136 = sbr.rel (%p134) target = $region20
      $region19: #{hetgsl_forward.18} parent=15 // pred_region
        %s137 = smul.u32 16, %s16
        %p138 = scmp.lt.s32.totalorder %s15, 1
        %s139 = scalar_select %p138, %s15, 1
        %p140 = scmp.lt.s32.totalorder %s137, 15
        %s141 = scalar_select %p140, %s137, 15
        %p142 = scmp.lt.s32.totalorder %s17, 0
        %s143 = scalar_select %p142, %s17, 0
        %s144 = sadd.s32 %s143, %s141
        %s145 = smul.addr %s139, 16
        %s146 = sadd.s32 %s144, %s145
        %s147 = smul.addr %s146, 4
        %s148 = scalar_lea.vmem %s0, %s147
        %s149 = smul.u32 16, %s16
      $region20: #{hetgsl_forward.18} parent=15 // pred_fallthru
        _
      // Predicated region
      $region21: #{hetgsl_forward.18} parent=15 // pred_check
        %p150 = pneg %p81
      $region22: #{hetgsl_forward.18} parent=15 // pred_check_branch
        %152 = sbr.rel (%p150) target = $region24
      $region23: #{hetgsl_forward.18} parent=15 // pred_region
        %s153 = smul.u32 16, %s17
        %p154 = scmp.lt.s32.totalorder %s15, 1
        %s155 = scalar_select %p154, %s15, 1
        %p156 = scmp.lt.s32.totalorder %s153, 15
        %s157 = scalar_select %p156, %s153, 15
        %p158 = scmp.lt.s32.totalorder %s16, 0
        %s159 = scalar_select %p158, %s16, 0
        %s160 = sadd.s32 %s159, %s157
        %s161 = smul.addr %s155, 16
        %s162 = sadd.s32 %s160, %s161
        %s163 = smul.addr %s162, 4
        %s164 = scalar_lea.vmem %s1, %s163
        %s165 = smul.u32 16, %s17
      $region24: #{hetgsl_forward.18} parent=15 // pred_fallthru
        _
    $region16: #{hetgsl_forward.18} parent=5 // pred_fallthru
      _
    %p166 = scmp.le.s32.totalorder 1, %s8
    %p167 = scmp.lt.s32.totalorder %s8, 3
    %p168 = pnand %p166, %p167
    %p169 = pneg %p168
    // Predicated region
    $region25: #{hetgsl_forward.18} parent=5 // pred_check
      _
    $region26: #{hetgsl_forward.18} parent=5 // pred_check_branch
      %171 = sbr.rel (%p168) target = $region28
    $region27: #{hetgsl_forward.18} parent=5 // pred_region
      %s172 = ssub.s32 %s8, 1
      %s173 = smul.u32 16, %s19
      %p174 = scmp.lt.s32.totalorder %s18, 1
      %s175 = scalar_select %p174, %s18, 1
      %p176 = scmp.lt.s32.totalorder %s173, 15
      %s177 = scalar_select %p176, %s173, 15
      %p178 = scmp.lt.s32.totalorder %s20, 0
      %s179 = scalar_select %p178, %s20, 0
      %s180 = sadd.s32 %s179, %s177
      %s181 = smul.addr %s175, 16
      %s182 = sadd.s32 %s180, %s181
      %s183 = smul.addr %s182, 4
      %s184 = scalar_lea.vmem %s0, %s183
      %p185 = pneg %p57
      %p186 = pneg %p54
      %s187 = smul.u32 16, %s20
      %p188 = scmp.lt.s32.totalorder %s18, 1
      %s189 = scalar_select %p188, %s18, 1
      %p190 = scmp.lt.s32.totalorder %s187, 15
      %s191 = scalar_select %p190, %s187, 15
      %p192 = scmp.lt.s32.totalorder %s19, 0
      %s193 = scalar_select %p192, %s19, 0
      %s194 = sadd.s32 %s193, %s191
      %s195 = smul.addr %s189, 16
      %s196 = sadd.s32 %s194, %s195
      %s197 = smul.addr %s196, 4
      %s198 = scalar_lea.vmem %s1, %s197
      %p199 = pneg %p87
      %p200 = pneg %p84
      %p201 = pneg %p115
      %p202 = pneg %p112
      %s203 = smul.u32 16, %s19
      %p204 = scmp.lt.s32.totalorder %s18, 1
      %s205 = scalar_select %p204, %s18, 1
      %p206 = scmp.lt.s32.totalorder %s203, 15
      %s207 = scalar_select %p206, %s203, 15
      %s208 = smul.addr %s205, 16
      %s209 = sadd.s32 %s207, %s208
      %s210 = smul.addr %s209, 8
      %s211 = scalar_lea.vmem %s2, %s210
      %s212 = smul.u32 16, %s19
      %p213 = scmp.lt.s32.totalorder %s18, 1
      %s214 = scalar_select %p213, %s18, 1
      %p215 = scmp.lt.s32.totalorder %s212, 15
      %s216 = scalar_select %p215, %s212, 15
      %p217 = scmp.lt.s32.totalorder %s20, 0
      %s218 = scalar_select %p217, %s20, 0
      %s219 = sadd.s32 %s218, %s216
      %s220 = smul.addr %s214, 16
      %s221 = sadd.s32 %s219, %s220
      %s222 = smul.addr %s221, 4
      %s223 = scalar_lea.vmem %s0, %s222
      %s224 = smul.u32 16, %s19
      %s225 = smul.u32 16, %s20
      %p226 = scmp.lt.s32.totalorder %s18, 1
      %s227 = scalar_select %p226, %s18, 1
      %p228 = scmp.lt.s32.totalorder %s225, 15
      %s229 = scalar_select %p228, %s225, 15
      %p230 = scmp.lt.s32.totalorder %s19, 0
      %s231 = scalar_select %p230, %s19, 0
      %s232 = sadd.s32 %s231, %s229
      %s233 = smul.addr %s227, 16
      %s234 = sadd.s32 %s232, %s233
      %s235 = smul.addr %s234, 4
      %s236 = scalar_lea.vmem %s1, %s235
      %s237 = smul.u32 16, %s20
      %s238 = smul.u32 16, %s19
      %p239 = scmp.lt.s32.totalorder %s18, 1
      %s240 = scalar_select %p239, %s18, 1
      %p241 = scmp.lt.s32.totalorder %s238, 15
      %s242 = scalar_select %p241, %s238, 15
      %s243 = smul.addr %s240, 16
      %s244 = sadd.s32 %s242, %s243
      %s245 = smul.addr %s244, 8
      %s246 = scalar_lea.vmem %s2, %s245
      %s247 = smul.u32 16, %s19
      %p248 = scmp.eq.s32.totalorder %s20, 0
      // Predicated region
      $region29: #{hetgsl_forward.18} parent=27 // pred_check
        %p249 = pneg %p248
      $region30: #{hetgsl_forward.18} parent=27 // pred_check_branch
        %251 = sbr.rel (%p249) target = $region32
      $region31: #{hetgsl_forward.18} parent=27 // pred_region
        %vm252 = vcmask 7168
        %253 = vst.msk [vmem:[%s246] sm:$0xff] %vm252, 0.0
        %254 = vst.msk [vmem:[%s246 + $0x8] sm:$0xff] %vm252, 0.0
        %255 = vst.msk [vmem:[%s246 + $0x10] sm:$0xff] %vm252, 0.0
        %256 = vst.msk [vmem:[%s246 + $0x18] sm:$0xff] %vm252, 0.0
        %257 = vst.msk [vmem:[%s246 + $0x20] sm:$0xff] %vm252, 0.0
        %258 = vst.msk [vmem:[%s246 + $0x28] sm:$0xff] %vm252, 0.0
        %259 = vst.msk [vmem:[%s246 + $0x30] sm:$0xff] %vm252, 0.0
        %260 = vst.msk [vmem:[%s246 + $0x38] sm:$0xff] %vm252, 0.0
        %261 = vst.msk [vmem:[%s246 + $0x40] sm:$0xff] %vm252, 0.0
        %262 = vst.msk [vmem:[%s246 + $0x48] sm:$0xff] %vm252, 0.0
        %263 = vst.msk [vmem:[%s246 + $0x50] sm:$0xff] %vm252, 0.0
        %264 = vst.msk [vmem:[%s246 + $0x58] sm:$0xff] %vm252, 0.0
        %265 = vst.msk [vmem:[%s246 + $0x60] sm:$0xff] %vm252, 0.0
        %266 = vst.msk [vmem:[%s246 + $0x68] sm:$0xff] %vm252, 0.0
        %267 = vst.msk [vmem:[%s246 + $0x70] sm:$0xff] %vm252, 0.0
        %268 = vst.msk [vmem:[%s246 + $0x78] sm:$0xff] %vm252, 0.0
      $region32: #{hetgsl_forward.18} parent=27 // pred_fallthru
        _
      %v269 = vld [vmem:[%s223] sm:$0xf]
      %v270 = vld [vmem:[%s223 + $0x4] sm:$0xf]
      %v271 = vld [vmem:[%s223 + $0x8] sm:$0xf]
      %v272 = vld [vmem:[%s223 + $0xc] sm:$0xf]
      %v273 = vld [vmem:[%s223 + $0x10] sm:$0xf]
      %v274 = vld [vmem:[%s223 + $0x14] sm:$0xf]
      %v275 = vld [vmem:[%s223 + $0x18] sm:$0xf]
      %v276 = vld [vmem:[%s223 + $0x1c] sm:$0xf]
      %v277 = vld [vmem:[%s223 + $0x20] sm:$0xf]
      %v278 = vld [vmem:[%s223 + $0x24] sm:$0xf]
      %v279 = vld [vmem:[%s223 + $0x28] sm:$0xf]
      %v280 = vld [vmem:[%s223 + $0x2c] sm:$0xf]
      %v281 = vld [vmem:[%s223 + $0x30] sm:$0xf]
      %v282 = vld [vmem:[%s223 + $0x34] sm:$0xf]
      %v283 = vld [vmem:[%s223 + $0x38] sm:$0xf]
      %v284 = vld [vmem:[%s223 + $0x3c] sm:$0xf]
      %v285 = vunpack.c.l.bf16 %v269
      %v286 = vunpack.c.l.bf16 %v270
      %v287 = vunpack.c.l.bf16 %v271
      %v288 = vunpack.c.l.bf16 %v272
      %v289 = vunpack.c.l.bf16 %v273
      %v290 = vunpack.c.l.bf16 %v274
      %v291 = vunpack.c.l.bf16 %v275
      %v292 = vunpack.c.l.bf16 %v276
      %v293 = vunpack.c.l.bf16 %v277
      %v294 = vunpack.c.l.bf16 %v278
      %v295 = vunpack.c.l.bf16 %v279
      %v296 = vunpack.c.l.bf16 %v280
      %v297 = vunpack.c.l.bf16 %v281
      %v298 = vunpack.c.l.bf16 %v282
      %v299 = vunpack.c.l.bf16 %v283
      %v300 = vunpack.c.l.bf16 %v284
      %v301 = vld [vmem:[%s236] sm:$0xf]
      %v302 = vld [vmem:[%s236 + $0x4] sm:$0xf]
      %v303 = vld [vmem:[%s236 + $0x8] sm:$0xf]
      %v304 = vld [vmem:[%s236 + $0xc] sm:$0xf]
      %v305 = vld [vmem:[%s236 + $0x10] sm:$0xf]
      %v306 = vld [vmem:[%s236 + $0x14] sm:$0xf]
      %v307 = vld [vmem:[%s236 + $0x18] sm:$0xf]
      %v308 = vld [vmem:[%s236 + $0x1c] sm:$0xf]
      %v309 = vld [vmem:[%s236 + $0x20] sm:$0xf]
      %v310 = vld [vmem:[%s236 + $0x24] sm:$0xf]
      %v311 = vld [vmem:[%s236 + $0x28] sm:$0xf]
      %v312 = vld [vmem:[%s236 + $0x2c] sm:$0xf]
      %v313 = vld [vmem:[%s236 + $0x30] sm:$0xf]
      %v314 = vld [vmem:[%s236 + $0x34] sm:$0xf]
      %v315 = vld [vmem:[%s236 + $0x38] sm:$0xf]
      %v316 = vld [vmem:[%s236 + $0x3c] sm:$0xf]
      %v317 = vunpack.c.l.bf16 %v301
      %v318 = vunpack.c.l.bf16 %v302
      %v319 = vunpack.c.l.bf16 %v303
      %v320 = vunpack.c.l.bf16 %v304
      %v321 = vunpack.c.l.bf16 %v305
      %v322 = vunpack.c.l.bf16 %v306
      %v323 = vunpack.c.l.bf16 %v307
      %v324 = vunpack.c.l.bf16 %v308
      %v325 = vunpack.c.l.bf16 %v309
      %v326 = vunpack.c.l.bf16 %v310
      %v327 = vunpack.c.l.bf16 %v311
      %v328 = vunpack.c.l.bf16 %v312
      %v329 = vunpack.c.l.bf16 %v313
      %v330 = vunpack.c.l.bf16 %v314
      %v331 = vunpack.c.l.bf16 %v315
      %v332 = vunpack.c.l.bf16 %v316
      %333 = vxpose.xlu0.b32.start [1/16] %v317, 128
      %334 = vxpose.xlu0.b32.cont [2/16] %v318, 128
      %335 = vxpose.xlu0.b32.cont [3/16] %v319, 128
      %336 = vxpose.xlu0.b32.cont [4/16] %v320, 128
      %337 = vxpose.xlu0.b32.cont [5/16] %v321, 128
      %338 = vxpose.xlu0.b32.cont [6/16] %v322, 128
      %339 = vxpose.xlu0.b32.cont [7/16] %v323, 128
      %340 = vxpose.xlu0.b32.cont [8/16] %v324, 128
      %341 = vxpose.xlu0.b32.cont [9/16] %v325, 128
      %342 = vxpose.xlu0.b32.cont [10/16] %v326, 128
      %343 = vxpose.xlu0.b32.cont [11/16] %v327, 128
      %344 = vxpose.xlu0.b32.cont [12/16] %v328, 128
      %345 = vxpose.xlu0.b32.cont [13/16] %v329, 128
      %346 = vxpose.xlu0.b32.cont [14/16] %v330, 128
      %347 = vxpose.xlu0.b32.cont [15/16] %v331, 128
      %348 = vxpose.xlu0.b32.end [16/16] %v332, 128
      %v349 = vpop.trf.xlu0
      %v350 = vpop.trf.xlu0
      %v351 = vpop.trf.xlu0
      %v352 = vpop.trf.xlu0
      %v353 = vpop.trf.xlu0
      %v354 = vpop.trf.xlu0
      %v355 = vpop.trf.xlu0
      %v356 = vpop.trf.xlu0
      %v357 = vpop.trf.xlu0
      %v358 = vpop.trf.xlu0
      %v359 = vpop.trf.xlu0
      %v360 = vpop.trf.xlu0
      %v361 = vpop.trf.xlu0
      %v362 = vpop.trf.xlu0
      %v363 = vpop.trf.xlu0
      %v364 = vpop.trf.xlu0
      %v365 = vadd.f32 %v285, %v349
      %v366 = vadd.f32 %v286, %v350
      %v367 = vadd.f32 %v287, %v351
      %v368 = vadd.f32 %v288, %v352
      %v369 = vadd.f32 %v289, %v353
      %v370 = vadd.f32 %v290, %v354
      %v371 = vadd.f32 %v291, %v355
      %v372 = vadd.f32 %v292, %v356
      %v373 = vadd.f32 %v293, %v357
      %v374 = vadd.f32 %v294, %v358
      %v375 = vadd.f32 %v295, %v359
      %v376 = vadd.f32 %v296, %v360
      %v377 = vadd.f32 %v297, %v361
      %v378 = vadd.f32 %v298, %v362
      %v379 = vadd.f32 %v299, %v363
      %v380 = vadd.f32 %v300, %v364
      %v381 = vld [vmem:[%s246] sm:$0xff]
      %v382 = vld [vmem:[%s246 + $0x8] sm:$0xff]
      %v383 = vld [vmem:[%s246 + $0x10] sm:$0xff]
      %v384 = vld [vmem:[%s246 + $0x18] sm:$0xff]
      %v385 = vld [vmem:[%s246 + $0x20] sm:$0xff]
      %v386 = vld [vmem:[%s246 + $0x28] sm:$0xff]
      %v387 = vld [vmem:[%s246 + $0x30] sm:$0xff]
      %v388 = vld [vmem:[%s246 + $0x38] sm:$0xff]
      %v389 = vld [vmem:[%s246 + $0x40] sm:$0xff]
      %v390 = vld [vmem:[%s246 + $0x48] sm:$0xff]
      %v391 = vld [vmem:[%s246 + $0x50] sm:$0xff]
      %v392 = vld [vmem:[%s246 + $0x58] sm:$0xff]
      %v393 = vld [vmem:[%s246 + $0x60] sm:$0xff]
      %v394 = vld [vmem:[%s246 + $0x68] sm:$0xff]
      %v395 = vld [vmem:[%s246 + $0x70] sm:$0xff]
      %v396 = vld [vmem:[%s246 + $0x78] sm:$0xff]
      %v397 = vand.u32 2147483647, %v365
      %v398 = vand.u32 2147483647, %v366
      %v399 = vand.u32 2147483647, %v367
      %v400 = vand.u32 2147483647, %v368
      %v401 = vand.u32 2147483647, %v369
      %v402 = vand.u32 2147483647, %v370
      %v403 = vand.u32 2147483647, %v371
      %v404 = vand.u32 2147483647, %v372
      %v405 = vand.u32 2147483647, %v373
      %v406 = vand.u32 2147483647, %v374
      %v407 = vand.u32 2147483647, %v375
      %v408 = vand.u32 2147483647, %v376
      %v409 = vand.u32 2147483647, %v377
      %v410 = vand.u32 2147483647, %v378
      %v411 = vand.u32 2147483647, %v379
      %v412 = vand.u32 2147483647, %v380
      %413 = vadd.xlane.f32.xlu0 %v397
      %v414 = vpop.xlane.xlu0 %413
      %415 = vadd.xlane.f32.xlu0 %v398
      %v416 = vpop.xlane.xlu0 %415
      %417 = vadd.xlane.f32.xlu0 %v399
      %v418 = vpop.xlane.xlu0 %417
      %419 = vadd.xlane.f32.xlu0 %v400
      %v420 = vpop.xlane.xlu0 %419
      %421 = vadd.xlane.f32.xlu0 %v401
      %v422 = vpop.xlane.xlu0 %421
      %423 = vadd.xlane.f32.xlu0 %v402
      %v424 = vpop.xlane.xlu0 %423
      %425 = vadd.xlane.f32.xlu0 %v403
      %v426 = vpop.xlane.xlu0 %425
      %427 = vadd.xlane.f32.xlu0 %v404
      %v428 = vpop.xlane.xlu0 %427
      %429 = vadd.xlane.f32.xlu0 %v405
      %v430 = vpop.xlane.xlu0 %429
      %431 = vadd.xlane.f32.xlu0 %v406
      %v432 = vpop.xlane.xlu0 %431
      %433 = vadd.xlane.f32.xlu0 %v407
      %v434 = vpop.xlane.xlu0 %433
      %435 = vadd.xlane.f32.xlu0 %v408
      %v436 = vpop.xlane.xlu0 %435
      %437 = vadd.xlane.f32.xlu0 %v409
      %v438 = vpop.xlane.xlu0 %437
      %439 = vadd.xlane.f32.xlu0 %v410
      %v440 = vpop.xlane.xlu0 %439
      %441 = vadd.xlane.f32.xlu0 %v411
      %v442 = vpop.xlane.xlu0 %441
      %443 = vadd.xlane.f32.xlu0 %v412
      %v444 = vpop.xlane.xlu0 %443
      %v445 = vadd.f32 %v381, %v414
      %v446 = vadd.f32 %v382, %v416
      %v447 = vadd.f32 %v383, %v418
      %v448 = vadd.f32 %v384, %v420
      %v449 = vadd.f32 %v385, %v422
      %v450 = vadd.f32 %v386, %v424
      %v451 = vadd.f32 %v387, %v426
      %v452 = vadd.f32 %v388, %v428
      %v453 = vadd.f32 %v389, %v430
      %v454 = vadd.f32 %v390, %v432
      %v455 = vadd.f32 %v391, %v434
      %v456 = vadd.f32 %v392, %v436
      %v457 = vadd.f32 %v393, %v438
      %v458 = vadd.f32 %v394, %v440
      %v459 = vadd.f32 %v395, %v442
      %v460 = vadd.f32 %v396, %v444
      %vm461 = vcmask 7168
      %462 = vst.msk [vmem:[%s246] sm:$0xff] %vm461, %v445
      %463 = vst.msk [vmem:[%s246 + $0x8] sm:$0xff] %vm461, %v446
      %464 = vst.msk [vmem:[%s246 + $0x10] sm:$0xff] %vm461, %v447
      %465 = vst.msk [vmem:[%s246 + $0x18] sm:$0xff] %vm461, %v448
      %466 = vst.msk [vmem:[%s246 + $0x20] sm:$0xff] %vm461, %v449
      %467 = vst.msk [vmem:[%s246 + $0x28] sm:$0xff] %vm461, %v450
      %468 = vst.msk [vmem:[%s246 + $0x30] sm:$0xff] %vm461, %v451
      %469 = vst.msk [vmem:[%s246 + $0x38] sm:$0xff] %vm461, %v452
      %470 = vst.msk [vmem:[%s246 + $0x40] sm:$0xff] %vm461, %v453
      %471 = vst.msk [vmem:[%s246 + $0x48] sm:$0xff] %vm461, %v454
      %472 = vst.msk [vmem:[%s246 + $0x50] sm:$0xff] %vm461, %v455
      %473 = vst.msk [vmem:[%s246 + $0x58] sm:$0xff] %vm461, %v456
      %474 = vst.msk [vmem:[%s246 + $0x60] sm:$0xff] %vm461, %v457
      %475 = vst.msk [vmem:[%s246 + $0x68] sm:$0xff] %vm461, %v458
      %476 = vst.msk [vmem:[%s246 + $0x70] sm:$0xff] %vm461, %v459
      %477 = vst.msk [vmem:[%s246 + $0x78] sm:$0xff] %vm461, %v460
      %s478 = smul.u32 16, %s19
      %p479 = scmp.lt.s32.totalorder %s18, 1
      %s480 = scalar_select %p479, %s18, 1
      %p481 = scmp.lt.s32.totalorder %s478, 15
      %s482 = scalar_select %p481, %s478, 15
      %s483 = smul.addr %s480, 16
      %s484 = sadd.s32 %s482, %s483
      %s485 = smul.addr %s484, 8
      %s486 = scalar_lea.vmem %s2, %s485
      // Predicated region
      $region33: #{hetgsl_forward.18} parent=27 // pred_check
        %p487 = pneg %p112
      $region34: #{hetgsl_forward.18} parent=27 // pred_check_branch
        %489 = sbr.rel (%p487) target = $region36
      $region35: #{hetgsl_forward.18} parent=27 // pred_region
        %s490 = smul.u32 16, %s19
      $region36: #{hetgsl_forward.18} parent=27 // pred_fallthru
        _
    $region28: #{hetgsl_forward.18} parent=5 // pred_fallthru
      _
    %p491 = scmp.le.s32.totalorder 2, %s8
    // Predicated region
    $region37: #{hetgsl_forward.18} parent=5 // pred_check
      %p492 = pneg %p491
    $region38: #{hetgsl_forward.18} parent=5 // pred_check_branch
      %494 = sbr.rel (%p492) target = $region40
    $region39: #{hetgsl_forward.18} parent=5 // pred_region
      %s495 = ssub.s32 %s8, 2
      // Predicated region
      $region41: #{hetgsl_forward.18} parent=39 // pred_check
        %p496 = pneg %p118
      $region42: #{hetgsl_forward.18} parent=39 // pred_check_branch
        %498 = sbr.rel (%p496) target = $region44
      $region43: #{hetgsl_forward.18} parent=39 // pred_region
        %s499 = smul.u32 16, %s22
        %p500 = scmp.lt.s32.totalorder %s21, 1
        %s501 = scalar_select %p500, %s21, 1
        %p502 = scmp.lt.s32.totalorder %s499, 15
        %s503 = scalar_select %p502, %s499, 15
        %s504 = smul.addr %s501, 16
        %s505 = sadd.s32 %s503, %s504
        %s506 = smul.addr %s505, 8
        %s507 = scalar_lea.vmem %s2, %s506
      $region44: #{hetgsl_forward.18} parent=39 // pred_fallthru
        _
    $region40: #{hetgsl_forward.18} parent=5 // pred_fallthru
      _
  $region6: #{hetgsl_forward.18} parent=0 // loop_footer
    %s12 = sadd.s32 1, %s8
  $region7: #{hetgsl_forward.18} parent=0 // loop_footer_branch
    %7 = sbr.rel target = $region3
  $region8: #{hetgsl_forward.18} parent=0 // loop_exit
    _

// kernel: hetgsl_forward.19
$region0: #{hetgsl_forward.19}
  #allocation0 [shape = 'u32[]', space=smem, size = 0x4, offset = 0x4, fixed_abs, tag = 'smem constant byte address 0x4 - core index']
  #allocation1 [shape = 'u32[144,128]{1,0:T(1,128)}', space=vmem, size = 0x12000, scoped, tag = 'internal scratch']
  %s0 = inlined_call_operand.vmem [shape: bf16[2,128,128], index: 0, kind: input, shape index: {}, may-alias: {0,1}]
  %s1 = inlined_call_operand.vmem [shape: bf16[2,128,128], index: 1, kind: input, shape index: {}, may-alias: {0,1}]
  %s2 = inlined_call_operand.vmem [shape: f32[2,128,1], index: 2, kind: input, shape index: {}]
  %s3 = inlined_call_operand.vmem [shape: f32[2,128,128], index: 3, kind: output, shape index: {}]
  %s4 = sld [smem:[#allocation0]]
  $region45: #{hetgsl_forward.19} parent=0
    _
  %s6 = ssub.s32 1, %s4
  %s7 = scalar_select 0, %s6, %s4
  loop: start=0, step=1, limit=4
  $region2: #{hetgsl_forward.19} parent=0 // loop_pre_header
    _
  $region3: #{hetgsl_forward.19} parent=0 // loop_header
    %s9 = sphi 0, %s13
    %p10 = scmp.ge.s32.totalorder %s9, 4
    %s16 = sphi 0, %s35
    %s17 = sphi 0, %s31
    %s18 = sphi 0, %s27
    %s19 = sphi 0, %s16
    %s20 = sphi 0, %s17
    %s21 = sphi 0, %s18
    %s22 = sphi 0, %s19
    %s23 = sphi 0, %s20
    %s24 = sphi 0, %s21
    %s42 = sphi 0, %s44
    %s45 = sphi 0, %s42
    %s46 = sphi 0, %s45
    %s62 = sphi 0, %s46
    %s72 = sphi 0, %s74
    %s75 = sphi 0, %s72
    %s76 = sphi 0, %s75
    %s92 = sphi 0, %s76
    %s100 = sphi 0, %s102
    %s103 = sphi 0, %s100
    %s104 = sphi 0, %s103
    %s120 = sphi 0, %s104
    %s130 = sphi 0, %s132
    %s133 = sphi 0, %s130
    %s134 = sphi 0, %s133
    %s150 = sphi 0, %s134
  $region4: #{hetgsl_forward.19} parent=0 // loop_header_branch
    %12 = sbr.rel (%p10) target = $region8
  $region5: #{hetgsl_forward.19} parent=0 // loop_body
    %s14 = ssub.s32 %s9, 1
    %s15 = ssub.s32 %s9, 2
    %s25 = sadd.s32 1, %s18
    %p26 = scmp.ge.s32.totalorder %s25, 1
    %s27 = scalar_select %p26, 0, %s25
    %s28 = sadd.s32 1, %s17
    %s29 = scalar_select %p26, %s28, %s17
    %p30 = scmp.ge.s32.totalorder %s29, 1
    %s31 = scalar_select %p30, 0, %s29
    %s32 = sadd.s32 1, %s16
    %s33 = scalar_select %p30, %s32, %s16
    %p34 = scmp.ge.s32.totalorder %s33, 2
    %s35 = scalar_select %p34, 0, %s33
    %s36 = ssub.s32 %s16, %s35
    %s37 = ssub.s32 %s17, %s31
    %s38 = sor.u32 %s36, %s37
    %s39 = ssub.s32 %s18, %s27
    %s40 = sor.u32 %s38, %s39
    %p41 = scmp.eq.s32.totalorder %s40, 0
    %s43 = sadd.s32 %s42, 1
    %s44 = scalar_select %p41, %s42, %s43
    %p47 = pneg %p41
    %p48 = scmp.eq.s32.totalorder %s9, 1
    %p49 = por %p47, %p48
    %p50 = scmp.ne.s32.totalorder %s42, %s45
    %p51 = scmp.eq.s32.totalorder %s9, 0
    %p52 = por %p50, %p51
    %p53 = scmp.ne.s32.totalorder %s42, %s45
    %p54 = scmp.eq.s32.totalorder %s14, 1
    %p55 = por %p53, %p54
    %p56 = scmp.ne.s32.totalorder %s45, %s46
    %p57 = scmp.eq.s32.totalorder %s14, 0
    %p58 = por %p56, %p57
    %p59 = scmp.ne.s32.totalorder %s45, %s46
    %p60 = scmp.eq.s32.totalorder %s15, 1
    %p61 = por %p59, %p60
    %p63 = scmp.ne.s32.totalorder %s46, %s62
    %p64 = scmp.eq.s32.totalorder %s15, 0
    %p65 = por %p63, %p64
    %s66 = ssub.s32 %s16, %s35
    %s67 = ssub.s32 %s18, %s27
    %s68 = sor.u32 %s66, %s67
    %s69 = ssub.s32 %s17, %s31
    %s70 = sor.u32 %s68, %s69
    %p71 = scmp.eq.s32.totalorder %s70, 0
    %s73 = sadd.s32 %s72, 1
    %s74 = scalar_select %p71, %s72, %s73
    %p77 = pneg %p71
    %p78 = scmp.eq.s32.totalorder %s9, 1
    %p79 = por %p77, %p78
    %p80 = scmp.ne.s32.totalorder %s72, %s75
    %p81 = scmp.eq.s32.totalorder %s9, 0
    %p82 = por %p80, %p81
    %p83 = scmp.ne.s32.totalorder %s72, %s75
    %p84 = scmp.eq.s32.totalorder %s14, 1
    %p85 = por %p83, %p84
    %p86 = scmp.ne.s32.totalorder %s75, %s76
    %p87 = scmp.eq.s32.totalorder %s14, 0
    %p88 = por %p86, %p87
    %p89 = scmp.ne.s32.totalorder %s75, %s76
    %p90 = scmp.eq.s32.totalorder %s15, 1
    %p91 = por %p89, %p90
    %p93 = scmp.ne.s32.totalorder %s76, %s92
    %p94 = scmp.eq.s32.totalorder %s15, 0
    %p95 = por %p93, %p94
    %s96 = ssub.s32 %s16, %s35
    %s97 = ssub.s32 %s17, %s31
    %s98 = sor.u32 %s96, %s97
    %p99 = scmp.eq.s32.totalorder %s98, 0
    %s101 = sadd.s32 %s100, 1
    %s102 = scalar_select %p99, %s100, %s101
    %p105 = pneg %p99
    %p106 = scmp.eq.s32.totalorder %s9, 1
    %p107 = por %p105, %p106
    %p108 = scmp.ne.s32.totalorder %s100, %s103
    %p109 = scmp.eq.s32.totalorder %s9, 0
    %p110 = por %p108, %p109
    %p111 = scmp.ne.s32.totalorder %s100, %s103
    %p112 = scmp.eq.s32.totalorder %s14, 1
    %p113 = por %p111, %p112
    %p114 = scmp.ne.s32.totalorder %s103, %s104
    %p115 = scmp.eq.s32.totalorder %s14, 0
    %p116 = por %p114, %p115
    %p117 = scmp.ne.s32.totalorder %s103, %s104
    %p118 = scmp.eq.s32.totalorder %s15, 1
    %p119 = por %p117, %p118
    %p121 = scmp.ne.s32.totalorder %s104, %s120
    %p122 = scmp.eq.s32.totalorder %s15, 0
    %p123 = por %p121, %p122
    %s124 = ssub.s32 %s16, %s35
    %s125 = ssub.s32 %s17, %s31
    %s126 = sor.u32 %s124, %s125
    %s127 = ssub.s32 %s18, %s27
    %s128 = sor.u32 %s126, %s127
    %p129 = scmp.eq.s32.totalorder %s128, 0
    %s131 = sadd.s32 %s130, 1
    %s132 = scalar_select %p129, %s130, %s131
    %p135 = pneg %p129
    %p136 = scmp.eq.s32.totalorder %s9, 1
    %p137 = por %p135, %p136
    %p138 = scmp.ne.s32.totalorder %s130, %s133
    %p139 = scmp.eq.s32.totalorder %s9, 0
    %p140 = por %p138, %p139
    %p141 = scmp.ne.s32.totalorder %s130, %s133
    %p142 = scmp.eq.s32.totalorder %s14, 1
    %p143 = por %p141, %p142
    %p144 = scmp.ne.s32.totalorder %s133, %s134
    %p145 = scmp.eq.s32.totalorder %s14, 0
    %p146 = por %p144, %p145
    %p147 = scmp.ne.s32.totalorder %s133, %s134
    %p148 = scmp.eq.s32.totalorder %s15, 1
    %p149 = por %p147, %p148
    %p151 = scmp.ne.s32.totalorder %s134, %s150
    %p152 = scmp.eq.s32.totalorder %s15, 0
    %p153 = por %p151, %p152
    %p154 = scmp.le.s32.totalorder 1, %s9
    %p155 = scmp.lt.s32.totalorder %s9, 3
    %p156 = pnand %p154, %p155
    %p157 = pneg %p156
    // Predicated region
    $region9: #{hetgsl_forward.19} parent=5 // pred_check
      _
    $region10: #{hetgsl_forward.19} parent=5 // pred_check_branch
      %159 = sbr.rel (%p156) target = $region12
    $region11: #{hetgsl_forward.19} parent=5 // pred_region
      %s160 = ssub.s32 %s9, 1
    $region12: #{hetgsl_forward.19} parent=5 // pred_fallthru
      _
    %p161 = scmp.lt.s32.totalorder %s9, 2
    // Predicated region
    $region13: #{hetgsl_forward.19} parent=5 // pred_check
      %p162 = pneg %p161
    $region14: #{hetgsl_forward.19} parent=5 // pred_check_branch
      %164 = sbr.rel (%p162) target = $region16
    $region15: #{hetgsl_forward.19} parent=5 // pred_region
      // Predicated region
      $region17: #{hetgsl_forward.19} parent=15 // pred_check
        %p165 = pneg %p52
      $region18: #{hetgsl_forward.19} parent=15 // pred_check_branch
        %167 = sbr.rel (%p165) target = $region20
      $region19: #{hetgsl_forward.19} parent=15 // pred_region
        %s168 = smul.u32 16, %s17
        %p169 = scmp.lt.s32.totalorder %s16, 1
        %s170 = scalar_select %p169, %s16, 1
        %p171 = scmp.lt.s32.totalorder %s168, 15
        %s172 = scalar_select %p171, %s168, 15
        %p173 = scmp.lt.s32.totalorder %s18, 0
        %s174 = scalar_select %p173, %s18, 0
        %s175 = sadd.s32 %s174, %s172
        %s176 = smul.addr %s170, 16
        %s177 = sadd.s32 %s175, %s176
        %s178 = smul.addr %s177, 4
        %s179 = scalar_lea.vmem %s0, %s178
        %s180 = smul.u32 16, %s17
      $region20: #{hetgsl_forward.19} parent=15 // pred_fallthru
        _
      // Predicated region
      $region21: #{hetgsl_forward.19} parent=15 // pred_check
        %p181 = pneg %p82
      $region22: #{hetgsl_forward.19} parent=15 // pred_check_branch
        %183 = sbr.rel (%p181) target = $region24
      $region23: #{hetgsl_forward.19} parent=15 // pred_region
        %s184 = smul.u32 16, %s18
        %p185 = scmp.lt.s32.totalorder %s16, 1
        %s186 = scalar_select %p185, %s16, 1
        %p187 = scmp.lt.s32.totalorder %s184, 15
        %s188 = scalar_select %p187, %s184, 15
        %p189 = scmp.lt.s32.totalorder %s17, 0
        %s190 = scalar_select %p189, %s17, 0
        %s191 = sadd.s32 %s190, %s188
        %s192 = smul.addr %s186, 16
        %s193 = sadd.s32 %s191, %s192
        %s194 = smul.addr %s193, 4
        %s195 = scalar_lea.vmem %s1, %s194
        %s196 = smul.u32 16, %s18
      $region24: #{hetgsl_forward.19} parent=15 // pred_fallthru
        _
      // Predicated region
      $region25: #{hetgsl_forward.19} parent=15 // pred_check
        %p197 = pneg %p110
      $region26: #{hetgsl_forward.19} parent=15 // pred_check_branch
        %199 = sbr.rel (%p197) target = $region28
      $region27: #{hetgsl_forward.19} parent=15 // pred_region
        %s200 = smul.u32 16, %s17
        %p201 = scmp.lt.s32.totalorder %s16, 1
        %s202 = scalar_select %p201, %s16, 1
        %p203 = scmp.lt.s32.totalorder %s200, 15
        %s204 = scalar_select %p203, %s200, 15
        %s205 = smul.addr %s202, 16
        %s206 = sadd.s32 %s204, %s205
        %s207 = smul.addr %s206, 8
        %s208 = scalar_lea.vmem %s2, %s207
        %s209 = smul.u32 16, %s17
      $region28: #{hetgsl_forward.19} parent=15 // pred_fallthru
        _
    $region16: #{hetgsl_forward.19} parent=5 // pred_fallthru
      _
    %p210 = scmp.le.s32.totalorder 1, %s9
    %p211 = scmp.lt.s32.totalorder %s9, 3
    %p212 = pnand %p210, %p211
    %p213 = pneg %p212
    // Predicated region
    $region29: #{hetgsl_forward.19} parent=5 // pred_check
      _
    $region30: #{hetgsl_forward.19} parent=5 // pred_check_branch
      %215 = sbr.rel (%p212) target = $region32
    $region31: #{hetgsl_forward.19} parent=5 // pred_region
      %s216 = ssub.s32 %s9, 1
      %s217 = smul.u32 16, %s20
      %p218 = scmp.lt.s32.totalorder %s19, 1
      %s219 = scalar_select %p218, %s19, 1
      %p220 = scmp.lt.s32.totalorder %s217, 15
      %s221 = scalar_select %p220, %s217, 15
      %p222 = scmp.lt.s32.totalorder %s21, 0
      %s223 = scalar_select %p222, %s21, 0
      %s224 = sadd.s32 %s223, %s221
      %s225 = smul.addr %s219, 16
      %s226 = sadd.s32 %s224, %s225
      %s227 = smul.addr %s226, 4
      %s228 = scalar_lea.vmem %s0, %s227
      %p229 = pneg %p58
      %p230 = pneg %p55
      %s231 = smul.u32 16, %s21
      %p232 = scmp.lt.s32.totalorder %s19, 1
      %s233 = scalar_select %p232, %s19, 1
      %p234 = scmp.lt.s32.totalorder %s231, 15
      %s235 = scalar_select %p234, %s231, 15
      %p236 = scmp.lt.s32.totalorder %s20, 0
      %s237 = scalar_select %p236, %s20, 0
      %s238 = sadd.s32 %s237, %s235
      %s239 = smul.addr %s233, 16
      %s240 = sadd.s32 %s238, %s239
      %s241 = smul.addr %s240, 4
      %s242 = scalar_lea.vmem %s1, %s241
      %p243 = pneg %p88
      %p244 = pneg %p85
      %s245 = smul.u32 16, %s20
      %p246 = scmp.lt.s32.totalorder %s19, 1
      %s247 = scalar_select %p246, %s19, 1
      %p248 = scmp.lt.s32.totalorder %s245, 15
      %s249 = scalar_select %p248, %s245, 15
      %s250 = smul.addr %s247, 16
      %s251 = sadd.s32 %s249, %s250
      %s252 = smul.addr %s251, 8
      %s253 = scalar_lea.vmem %s2, %s252
      %p254 = pneg %p116
      %p255 = pneg %p113
      %p256 = pneg %p146
      %p257 = pneg %p143
      %s258 = smul.u32 16, %s20
      %p259 = scmp.lt.s32.totalorder %s19, 1
      %s260 = scalar_select %p259, %s19, 1
      %p261 = scmp.lt.s32.totalorder %s258, 15
      %s262 = scalar_select %p261, %s258, 15
      %p263 = scmp.lt.s32.totalorder %s21, 0
      %s264 = scalar_select %p263, %s21, 0
      %s265 = sadd.s32 %s264, %s262
      %s266 = smul.addr %s260, 16
      %s267 = sadd.s32 %s265, %s266
      %s268 = smul.addr %s267, 8
      %s269 = scalar_lea.vmem %s3, %s268
      %s270 = smul.u32 16, %s20
      %p271 = scmp.lt.s32.totalorder %s19, 1
      %s272 = scalar_select %p271, %s19, 1
      %p273 = scmp.lt.s32.totalorder %s270, 15
      %s274 = scalar_select %p273, %s270, 15
      %p275 = scmp.lt.s32.totalorder %s21, 0
      %s276 = scalar_select %p275, %s21, 0
      %s277 = sadd.s32 %s276, %s274
      %s278 = smul.addr %s272, 16
      %s279 = sadd.s32 %s277, %s278
      %s280 = smul.addr %s279, 4
      %s281 = scalar_lea.vmem %s0, %s280
      %s282 = smul.u32 16, %s20
      %s283 = smul.u32 16, %s21
      %p284 = scmp.lt.s32.totalorder %s19, 1
      %s285 = scalar_select %p284, %s19, 1
      %p286 = scmp.lt.s32.totalorder %s283, 15
      %s287 = scalar_select %p286, %s283, 15
      %p288 = scmp.lt.s32.totalorder %s20, 0
      %s289 = scalar_select %p288, %s20, 0
      %s290 = sadd.s32 %s289, %s287
      %s291 = smul.addr %s285, 16
      %s292 = sadd.s32 %s290, %s291
      %s293 = smul.addr %s292, 4
      %s294 = scalar_lea.vmem %s1, %s293
      %s295 = smul.u32 16, %s21
      %s296 = smul.u32 16, %s20
      %p297 = scmp.lt.s32.totalorder %s19, 1
      %s298 = scalar_select %p297, %s19, 1
      %p299 = scmp.lt.s32.totalorder %s296, 15
      %s300 = scalar_select %p299, %s296, 15
      %s301 = smul.addr %s298, 16
      %s302 = sadd.s32 %s300, %s301
      %s303 = smul.addr %s302, 8
      %s304 = scalar_lea.vmem %s2, %s303
      %s305 = smul.u32 16, %s20
      %s306 = smul.u32 16, %s20
      %p307 = scmp.lt.s32.totalorder %s19, 1
      %s308 = scalar_select %p307, %s19, 1
      %p309 = scmp.lt.s32.totalorder %s306, 15
      %s310 = scalar_select %p309, %s306, 15
      %p311 = scmp.lt.s32.totalorder %s21, 0
      %s312 = scalar_select %p311, %s21, 0
      %s313 = sadd.s32 %s312, %s310
      %s314 = smul.addr %s308, 16
      %s315 = sadd.s32 %s313, %s314
      %s316 = smul.addr %s315, 8
      %s317 = scalar_lea.vmem %s3, %s316
      %s318 = smul.u32 16, %s20
      %v319 = vld [vmem:[%s281] sm:$0xf]
      %v320 = vld [vmem:[%s281 + $0x4] sm:$0xf]
      %v321 = vld [vmem:[%s281 + $0x8] sm:$0xf]
      %v322 = vld [vmem:[%s281 + $0xc] sm:$0xf]
      %v323 = vld [vmem:[%s281 + $0x10] sm:$0xf]
      %v324 = vld [vmem:[%s281 + $0x14] sm:$0xf]
      %v325 = vld [vmem:[%s281 + $0x18] sm:$0xf]
      %v326 = vld [vmem:[%s281 + $0x1c] sm:$0xf]
      %v327 = vld [vmem:[%s281 + $0x20] sm:$0xf]
      %v328 = vld [vmem:[%s281 + $0x24] sm:$0xf]
      %v329 = vld [vmem:[%s281 + $0x28] sm:$0xf]
      %v330 = vld [vmem:[%s281 + $0x2c] sm:$0xf]
      %v331 = vld [vmem:[%s281 + $0x30] sm:$0xf]
      %v332 = vld [vmem:[%s281 + $0x34] sm:$0xf]
      %v333 = vld [vmem:[%s281 + $0x38] sm:$0xf]
      %v334 = vld [vmem:[%s281 + $0x3c] sm:$0xf]
      %v335 = vunpack.c.l.bf16 %v319
      %v336 = vunpack.c.l.bf16 %v320
      %v337 = vunpack.c.l.bf16 %v321
      %v338 = vunpack.c.l.bf16 %v322
      %v339 = vunpack.c.l.bf16 %v323
      %v340 = vunpack.c.l.bf16 %v324
      %v341 = vunpack.c.l.bf16 %v325
      %v342 = vunpack.c.l.bf16 %v326
      %v343 = vunpack.c.l.bf16 %v327
      %v344 = vunpack.c.l.bf16 %v328
      %v345 = vunpack.c.l.bf16 %v329
      %v346 = vunpack.c.l.bf16 %v330
      %v347 = vunpack.c.l.bf16 %v331
      %v348 = vunpack.c.l.bf16 %v332
      %v349 = vunpack.c.l.bf16 %v333
      %v350 = vunpack.c.l.bf16 %v334
      %v351 = vld [vmem:[%s294] sm:$0xf]
      %v352 = vld [vmem:[%s294 + $0x4] sm:$0xf]
      %v353 = vld [vmem:[%s294 + $0x8] sm:$0xf]
      %v354 = vld [vmem:[%s294 + $0xc] sm:$0xf]
      %v355 = vld [vmem:[%s294 + $0x10] sm:$0xf]
      %v356 = vld [vmem:[%s294 + $0x14] sm:$0xf]
      %v357 = vld [vmem:[%s294 + $0x18] sm:$0xf]
      %v358 = vld [vmem:[%s294 + $0x1c] sm:$0xf]
      %v359 = vld [vmem:[%s294 + $0x20] sm:$0xf]
      %v360 = vld [vmem:[%s294 + $0x24] sm:$0xf]
      %v361 = vld [vmem:[%s294 + $0x28] sm:$0xf]
      %v362 = vld [vmem:[%s294 + $0x2c] sm:$0xf]
      %v363 = vld [vmem:[%s294 + $0x30] sm:$0xf]
      %v364 = vld [vmem:[%s294 + $0x34] sm:$0xf]
      %v365 = vld [vmem:[%s294 + $0x38] sm:$0xf]
      %v366 = vld [vmem:[%s294 + $0x3c] sm:$0xf]
      %v367 = vunpack.c.l.bf16 %v351
      %v368 = vunpack.c.l.bf16 %v352
      %v369 = vunpack.c.l.bf16 %v353
      %v370 = vunpack.c.l.bf16 %v354
      %v371 = vunpack.c.l.bf16 %v355
      %v372 = vunpack.c.l.bf16 %v356
      %v373 = vunpack.c.l.bf16 %v357
      %v374 = vunpack.c.l.bf16 %v358
      %v375 = vunpack.c.l.bf16 %v359
      %v376 = vunpack.c.l.bf16 %v360
      %v377 = vunpack.c.l.bf16 %v361
      %v378 = vunpack.c.l.bf16 %v362
      %v379 = vunpack.c.l.bf16 %v363
      %v380 = vunpack.c.l.bf16 %v364
      %v381 = vunpack.c.l.bf16 %v365
      %v382 = vunpack.c.l.bf16 %v366
      %383 = vxpose.xlu0.b32.start [1/16] %v367, 128
      %384 = vxpose.xlu0.b32.cont [2/16] %v368, 128
      %385 = vxpose.xlu0.b32.cont [3/16] %v369, 128
      %386 = vxpose.xlu0.b32.cont [4/16] %v370, 128
      %387 = vxpose.xlu0.b32.cont [5/16] %v371, 128
      %388 = vxpose.xlu0.b32.cont [6/16] %v372, 128
      %389 = vxpose.xlu0.b32.cont [7/16] %v373, 128
      %390 = vxpose.xlu0.b32.cont [8/16] %v374, 128
      %391 = vxpose.xlu0.b32.cont [9/16] %v375, 128
      %392 = vxpose.xlu0.b32.cont [10/16] %v376, 128
      %393 = vxpose.xlu0.b32.cont [11/16] %v377, 128
      %394 = vxpose.xlu0.b32.cont [12/16] %v378, 128
      %395 = vxpose.xlu0.b32.cont [13/16] %v379, 128
      %396 = vxpose.xlu0.b32.cont [14/16] %v380, 128
      %397 = vxpose.xlu0.b32.cont [15/16] %v381, 128
      %398 = vxpose.xlu0.b32.end [16/16] %v382, 128
      %v399 = vpop.trf.xlu0
      %v400 = vpop.trf.xlu0
      %v401 = vpop.trf.xlu0
      %v402 = vpop.trf.xlu0
      %v403 = vpop.trf.xlu0
      %v404 = vpop.trf.xlu0
      %v405 = vpop.trf.xlu0
      %v406 = vpop.trf.xlu0
      %v407 = vpop.trf.xlu0
      %v408 = vpop.trf.xlu0
      %v409 = vpop.trf.xlu0
      %v410 = vpop.trf.xlu0
      %v411 = vpop.trf.xlu0
      %v412 = vpop.trf.xlu0
      %v413 = vpop.trf.xlu0
      %v414 = vpop.trf.xlu0
      %v415 = vadd.f32 %v335, %v399
      %v416 = vadd.f32 %v336, %v400
      %v417 = vadd.f32 %v337, %v401
      %v418 = vadd.f32 %v338, %v402
      %v419 = vadd.f32 %v339, %v403
      %v420 = vadd.f32 %v340, %v404
      %v421 = vadd.f32 %v341, %v405
      %v422 = vadd.f32 %v342, %v406
      %v423 = vadd.f32 %v343, %v407
      %v424 = vadd.f32 %v344, %v408
      %v425 = vadd.f32 %v345, %v409
      %v426 = vadd.f32 %v346, %v410
      %v427 = vadd.f32 %v347, %v411
      %v428 = vadd.f32 %v348, %v412
      %v429 = vadd.f32 %v349, %v413
      %v430 = vadd.f32 %v350, %v414
      %v431 = vld [vmem:[%s304] sm:$0xff]
      %v432 = vld [vmem:[%s304 + $0x8] sm:$0xff]
      %v433 = vld [vmem:[%s304 + $0x10] sm:$0xff]
      %v434 = vld [vmem:[%s304 + $0x18] sm:$0xff]
      %v435 = vld [vmem:[%s304 + $0x20] sm:$0xff]
      %v436 = vld [vmem:[%s304 + $0x28] sm:$0xff]
      %v437 = vld [vmem:[%s304 + $0x30] sm:$0xff]
      %v438 = vld [vmem:[%s304 + $0x38] sm:$0xff]
      %v439 = vld [vmem:[%s304 + $0x40] sm:$0xff]
      %v440 = vld [vmem:[%s304 + $0x48] sm:$0xff]
      %v441 = vld [vmem:[%s304 + $0x50] sm:$0xff]
      %v442 = vld [vmem:[%s304 + $0x58] sm:$0xff]
      %v443 = vld [vmem:[%s304 + $0x60] sm:$0xff]
      %v444 = vld [vmem:[%s304 + $0x68] sm:$0xff]
      %v445 = vld [vmem:[%s304 + $0x70] sm:$0xff]
      %v446 = vld [vmem:[%s304 + $0x78] sm:$0xff]
      %448 = vset.pattern.permute.xlu0 0
      %449 = vperm.xlu0 %448, %v431
      %v450 = vpop.permute.xlu0 %449
      %453 = vset.pattern.permute.xlu0 0
      %454 = vperm.xlu0 %453, %v432
      %v455 = vpop.permute.xlu0 %454
      %458 = vset.pattern.permute.xlu0 0
      %459 = vperm.xlu0 %458, %v433
      %v460 = vpop.permute.xlu0 %459
      %463 = vset.pattern.permute.xlu0 0
      %464 = vperm.xlu0 %463, %v434
      %v465 = vpop.permute.xlu0 %464
      %468 = vset.pattern.permute.xlu0 0
      %469 = vperm.xlu0 %468, %v435
      %v470 = vpop.permute.xlu0 %469
      %473 = vset.pattern.permute.xlu0 0
      %474 = vperm.xlu0 %473, %v436
      %v475 = vpop.permute.xlu0 %474
      %478 = vset.pattern.permute.xlu0 0
      %479 = vperm.xlu0 %478, %v437
      %v480 = vpop.permute.xlu0 %479
      %483 = vset.pattern.permute.xlu0 0
      %484 = vperm.xlu0 %483, %v438
      %v485 = vpop.permute.xlu0 %484
      %488 = vset.pattern.permute.xlu0 0
      %489 = vperm.xlu0 %488, %v439
      %v490 = vpop.permute.xlu0 %489
      %493 = vset.pattern.permute.xlu0 0
      %494 = vperm.xlu0 %493, %v440
      %v495 = vpop.permute.xlu0 %494
      %498 = vset.pattern.permute.xlu0 0
      %499 = vperm.xlu0 %498, %v441
      %v500 = vpop.permute.xlu0 %499
      %503 = vset.pattern.permute.xlu0 0
      %504 = vperm.xlu0 %503, %v442
      %v505 = vpop.permute.xlu0 %504
      %508 = vset.pattern.permute.xlu0 0
      %509 = vperm.xlu0 %508, %v443
      %v510 = vpop.permute.xlu0 %509
      %513 = vset.pattern.permute.xlu0 0
      %514 = vperm.xlu0 %513, %v444
      %v515 = vpop.permute.xlu0 %514
      %518 = vset.pattern.permute.xlu0 0
      %519 = vperm.xlu0 %518, %v445
      %v520 = vpop.permute.xlu0 %519
      %523 = vset.pattern.permute.xlu0 0
      %524 = vperm.xlu0 %523, %v446
      %v525 = vpop.permute.xlu0 %524
      %v527 = vmul.f32 %v415, %v450
      %v528 = vmul.f32 %v416, %v455
      %v529 = vmul.f32 %v417, %v460
      %v530 = vmul.f32 %v418, %v465
      %v531 = vmul.f32 %v419, %v470
      %v532 = vmul.f32 %v420, %v475
      %v533 = vmul.f32 %v421, %v480
      %v534 = vmul.f32 %v422, %v485
      %v535 = vmul.f32 %v423, %v490
      %v536 = vmul.f32 %v424, %v495
      %v537 = vmul.f32 %v425, %v500
      %v538 = vmul.f32 %v426, %v505
      %v539 = vmul.f32 %v427, %v510
      %v540 = vmul.f32 %v428, %v515
      %v541 = vmul.f32 %v429, %v520
      %v542 = vmul.f32 %v430, %v525
      %543 = vst [vmem:[%s317] sm:$0xff] %v527
      %544 = vst [vmem:[%s317 + $0x8] sm:$0xff] %v528
      %545 = vst [vmem:[%s317 + $0x10] sm:$0xff] %v529
      %546 = vst [vmem:[%s317 + $0x18] sm:$0xff] %v530
      %547 = vst [vmem:[%s317 + $0x20] sm:$0xff] %v531
      %548 = vst [vmem:[%s317 + $0x28] sm:$0xff] %v532
      %549 = vst [vmem:[%s317 + $0x30] sm:$0xff] %v533
      %550 = vst [vmem:[%s317 + $0x38] sm:$0xff] %v534
      %551 = vst [vmem:[%s317 + $0x40] sm:$0xff] %v535
      %552 = vst [vmem:[%s317 + $0x48] sm:$0xff] %v536
      %553 = vst [vmem:[%s317 + $0x50] sm:$0xff] %v537
      %554 = vst [vmem:[%s317 + $0x58] sm:$0xff] %v538
      %555 = vst [vmem:[%s317 + $0x60] sm:$0xff] %v539
      %556 = vst [vmem:[%s317 + $0x68] sm:$0xff] %v540
      %557 = vst [vmem:[%s317 + $0x70] sm:$0xff] %v541
      %558 = vst [vmem:[%s317 + $0x78] sm:$0xff] %v542
      %s559 = smul.u32 16, %s20
      %p560 = scmp.lt.s32.totalorder %s19, 1
      %s561 = scalar_select %p560, %s19, 1
      %p562 = scmp.lt.s32.totalorder %s559, 15
      %s563 = scalar_select %p562, %s559, 15
      %p564 = scmp.lt.s32.totalorder %s21, 0
      %s565 = scalar_select %p564, %s21, 0
      %s566 = sadd.s32 %s565, %s563
      %s567 = smul.addr %s561, 16
      %s568 = sadd.s32 %s566, %s567
      %s569 = smul.addr %s568, 8
      %s570 = scalar_lea.vmem %s3, %s569
      // Predicated region
      $region33: #{hetgsl_forward.19} parent=31 // pred_check
        %p571 = pneg %p143
      $region34: #{hetgsl_forward.19} parent=31 // pred_check_branch
        %573 = sbr.rel (%p571) target = $region36
      $region35: #{hetgsl_forward.19} parent=31 // pred_region
        %s574 = smul.u32 16, %s20
      $region36: #{hetgsl_forward.19} parent=31 // pred_fallthru
        _
    $region32: #{hetgsl_forward.19} parent=5 // pred_fallthru
      _
    %p575 = scmp.le.s32.totalorder 2, %s9
    // Predicated region
    $region37: #{hetgsl_forward.19} parent=5 // pred_check
      %p576 = pneg %p575
    $region38: #{hetgsl_forward.19} parent=5 // pred_check_branch
      %578 = sbr.rel (%p576) target = $region40
    $region39: #{hetgsl_forward.19} parent=5 // pred_region
      %s579 = ssub.s32 %s9, 2
      // Predicated region
      $region41: #{hetgsl_forward.19} parent=39 // pred_check
        %p580 = pneg %p149
      $region42: #{hetgsl_forward.19} parent=39 // pred_check_branch
        %582 = sbr.rel (%p580) target = $region44
      $region43: #{hetgsl_forward.19} parent=39 // pred_region
        %s583 = smul.u32 16, %s23
        %p584 = scmp.lt.s32.totalorder %s22, 1
        %s585 = scalar_select %p584, %s22, 1
        %p586 = scmp.lt.s32.totalorder %s583, 15
        %s587 = scalar_select %p586, %s583, 15
        %p588 = scmp.lt.s32.totalorder %s24, 0
        %s589 = scalar_select %p588, %s24, 0
        %s590 = sadd.s32 %s589, %s587
        %s591 = smul.addr %s585, 16
        %s592 = sadd.s32 %s590, %s591
        %s593 = smul.addr %s592, 8
        %s594 = scalar_lea.vmem %s3, %s593
      $region44: #{hetgsl_forward.19} parent=39 // pred_fallthru
        _
    $region40: #{hetgsl_forward.19} parent=5 // pred_fallthru
      _
  $region6: #{hetgsl_forward.19} parent=0 // loop_footer
    %s13 = sadd.s32 1, %s9
  $region7: #{hetgsl_forward.19} parent=0 // loop_footer_branch
    %8 = sbr.rel target = $region3
  $region8: #{hetgsl_forward.19} parent=0 // loop_exit
    _

</llo_original>
